<compile_context>
chip_gen: v6e
topology: v6e:2x2x1
jax: 0.10.0
libtpu: 0.0.40
codegen_flags: <defaults>
</compile_context>

<pallas_src>
import jax
import jax.numpy as jnp
from jax.experimental import pallas as pl
from jax.experimental.pallas import tpu as pltpu

# MLP dims from the module: 784 -> 520 -> 320 -> 240 -> 120 -> 10
DIMS = [784, 520, 320, 240, 120, 10]
LANE = 128
SUBLANE = 16          # bf16 sublane packing: keep batch-tile rows a multiple of 16
BASE_TILE_N = 1024    # rows per grid step for large batches


def _round_up(n, m):
    return ((n + m - 1) // m) * m


# Lane-padded output widths for each layer: 640, 384, 256, 128, 128
PADDED_OUT = [_round_up(d, LANE) for d in DIMS[1:]]


def mlp_kernel(x_ref,
               w1_ref, b1_ref,
               w2_ref, b2_ref,
               w3_ref, b3_ref,
               w4_ref, b4_ref,
               w5_ref, b5_ref,
               out_ref):
    # Whole 5-layer forward fused for one batch tile: 5 bf16 MXU matmuls with
    # f32 accumulation, VPU bias-add/ReLU in f32, activations carried as bf16.
    def layer(h_bf16, w_ref, b_ref, relu):
        acc = jnp.dot(h_bf16, w_ref[...], preferred_element_type=jnp.float32)
        acc = acc + b_ref[...]
        if relu:
            acc = jnp.maximum(acc, 0.0)
        return acc

    h = x_ref[...]                                            # (T, 784) bf16
    h = layer(h, w1_ref, b1_ref, True).astype(jnp.bfloat16)   # (T, 640)
    h = layer(h, w2_ref, b2_ref, True).astype(jnp.bfloat16)   # (T, 384)
    h = layer(h, w3_ref, b3_ref, True).astype(jnp.bfloat16)   # (T, 256)
    h = layer(h, w4_ref, b4_ref, True).astype(jnp.bfloat16)   # (T, 128)
    h = layer(h, w5_ref, b5_ref, False)                       # (T, 128) f32
    out_ref[...] = h.astype(out_ref.dtype)                    # real logits in [:, :10]


def _choose_tile(n):
    """Adaptive batch tile: small batches are not padded to the base tile, and
    mid-size batches are split into >=2 grid steps so both v7x TCs get work."""
    tile = min(BASE_TILE_N, _round_up(max(n, 1), SUBLANE))
    if n >= 2 * SUBLANE and _round_up(n, tile) // tile < 2:
        tile = min(tile, _round_up((n + 1) // 2, SUBLANE))
    return tile


def _build_call(n_pad, tile, kernel_params, single_buffer_weights):
    in_specs = [pl.BlockSpec((tile, DIMS[0]), lambda i: (i, 0))]
    for w, b in kernel_params:
        # Full-shape blocks with a constant block index: weights/biases stay
        # resident in VMEM across all grid steps (fetched from HBM once).
        if single_buffer_weights:
            in_specs.append(pl.BlockSpec(w.shape, lambda i: (0, 0),
                                         pipeline_mode=pl.Buffered(1)))
            in_specs.append(pl.BlockSpec(b.shape, lambda i: (0, 0),
                                         pipeline_mode=pl.Buffered(1)))
        else:
            in_specs.append(pl.BlockSpec(w.shape, lambda i: (0, 0)))
            in_specs.append(pl.BlockSpec(b.shape, lambda i: (0, 0)))

    return pl.pallas_call(
        mlp_kernel,
        out_shape=jax.ShapeDtypeStruct((n_pad, PADDED_OUT[-1]), jnp.float32),
        grid=(n_pad // tile,),
        in_specs=in_specs,
        out_specs=pl.BlockSpec((tile, PADDED_OUT[-1]), lambda i: (i, 0)),
        compiler_params=pltpu.CompilerParams(
            dimension_semantics=("parallel",),      # megacore sharding on v7x
            vmem_limit_bytes=48 * 1024 * 1024,      # < 64 MiB/TC (v7x), << 128 MiB (v5e/v6e)
        ),
    )


def net_forward(x, kernel_params):
    """x: (N, 784) or (N, 1, 28, 28) float32 (or bf16).

    kernel_params: list of (W_i, b_i) from prepare_kernel_params:
      W_i bf16 of shape (padded_in, padded_out), b_i f32 of shape (1, padded_out).
    Returns (N, 10) float32 logits.
    """
    x = x.reshape(-1, DIMS[0]).astype(jnp.bfloat16)   # x.view(-1, 784); cast ONCE
    n = x.shape[0]
    tile = _choose_tile(n)
    n_pad = _round_up(n, tile)
    if n_pad != n:
        x = jnp.pad(x, ((0, n_pad - n), (0, 0)))

    flat_params = [p for wb in kernel_params for p in wb]

    try:
        out_padded = _build_call(n_pad, tile, kernel_params, True)(x, *flat_params)
    except Exception:
        # Fallback if single-buffered resident specs (pl.Buffered(1)) are not
        # supported by this JAX version; double-buffered weights are only ~3.6 MiB.
        out_padded = _build_call(n_pad, tile, kernel_params, False)(x, *flat_params)

    return out_padded[:n, :DIMS[-1]]


def init_params(key):
    """Deterministic init mimicking nn.Linear's U(-1/sqrt(fan_in), 1/sqrt(fan_in)).

    Returns unpadded f32 params: W_i (in, out), b_i (1, out) so x @ W + b matches
    PyTorch's nn.Linear (which computes x @ W.T with W of shape (out, in)).
    """
    params = []
    for i in range(len(DIMS) - 1):
        fan_in, fan_out = DIMS[i], DIMS[i + 1]
        key, kw, kb = jax.random.split(key, 3)
        bound = 1.0 / (fan_in ** 0.5)
        w = jax.random.uniform(kw, (fan_in, fan_out), jnp.float32, -bound, bound)
        b = jax.random.uniform(kb, (1, fan_out), jnp.float32, -bound, bound)
        params.append((w, b))
    return params


def prepare_kernel_params(params):
    """Zero-pad widths to lane multiples of 128 and cast weights to bf16 (once).

    Zero columns stay zero through bias-add(0) and ReLU, and zero rows multiply
    zero activations, so numerics of the real lanes are unchanged.
    """
    kernel_params = []
    in_pad = DIMS[0]  # input width 784 is left unpadded (full-dim block is legal)
    for (w, b), out_pad in zip(params, PADDED_OUT):
        fan_in, fan_out = w.shape
        w_p = jnp.zeros((in_pad, out_pad), jnp.bfloat16)
        w_p = w_p.at[:fan_in, :fan_out].set(w.astype(jnp.bfloat16))
        b_p = jnp.zeros((1, out_pad), jnp.float32)
        b_p = b_p.at[:, :fan_out].set(b)
        kernel_params.append((w_p, b_p))
        in_pad = out_pad
    return kernel_params


def reference_forward(x, params):
    h = x.reshape(-1, DIMS[0])
    for i, (w, b) in enumerate(params):
        h = h @ w + b
        if i < len(params) - 1:
            h = jnp.maximum(h, 0.0)
    return h


if __name__ == "__main__":
    key = jax.random.PRNGKey(0)
    key, kx = jax.random.split(key)

    batch = 8
    # MNIST-like input (N, 1, 28, 28) -> flattened to (N, 784), as x.view(-1, 784)
    x_img = jax.random.normal(kx, (batch, 1, 28, 28), jnp.float32)

    params = init_params(key)                      # f32, PyTorch-equivalent
    kernel_params = prepare_kernel_params(params)  # padded + bf16, built once

    out = net_forward(x_img, kernel_params)
    out = jax.block_until_ready(out)

    ref = reference_forward(x_img, params)         # pure f32 reference
    assert out.shape == (batch, 10), out.shape
    max_err = jnp.max(jnp.abs(out - ref))
    # bf16 matmul inputs/activations with f32 accumulation -> looser tolerance.
    assert jnp.allclose(out, ref, atol=5e-2, rtol=5e-2), \
        f"mismatch vs reference, max abs err={max_err}"

    print("KERNEL_OK")
</pallas_src>

<mosaic_0001>
module attributes {stable_mosaic.version = 11 : i64} {
  func.func @mlp_kernel(%arg0: i32, %arg1: memref<16x784xbf16, #tpu.memory_space<vmem>>, %arg2: memref<784x640xbf16, #tpu.memory_space<vmem>>, %arg3: memref<1x640xf32, #tpu.memory_space<vmem>>, %arg4: memref<640x384xbf16, #tpu.memory_space<vmem>>, %arg5: memref<1x384xf32, #tpu.memory_space<vmem>>, %arg6: memref<384x256xbf16, #tpu.memory_space<vmem>>, %arg7: memref<1x256xf32, #tpu.memory_space<vmem>>, %arg8: memref<256x128xbf16, #tpu.memory_space<vmem>>, %arg9: memref<1x128xf32, #tpu.memory_space<vmem>>, %arg10: memref<128x128xbf16, #tpu.memory_space<vmem>>, %arg11: memref<1x128xf32, #tpu.memory_space<vmem>>, %arg12: memref<16x128xf32, #tpu.memory_space<vmem>>) attributes {dimension_semantics = [#tpu.dimension_semantics<parallel>], iteration_bounds = array<i64: 1>, scalar_prefetch = 0 : i64, scratch_operands = 0 : i64, tpu.core_type = #tpu.core_type<tc>, window_params = [{transform_indices = @transform_0, window_bounds = array<i64: 16, 784>}, {pipeline_mode = #tpu.pipeline_mode<synchronous>, transform_indices = @transform_1, window_bounds = array<i64: 784, 640>}, {pipeline_mode = #tpu.pipeline_mode<synchronous>, transform_indices = @transform_2, window_bounds = array<i64: 1, 640>}, {pipeline_mode = #tpu.pipeline_mode<synchronous>, transform_indices = @transform_3, window_bounds = array<i64: 640, 384>}, {pipeline_mode = #tpu.pipeline_mode<synchronous>, transform_indices = @transform_4, window_bounds = array<i64: 1, 384>}, {pipeline_mode = #tpu.pipeline_mode<synchronous>, transform_indices = @transform_5, window_bounds = array<i64: 384, 256>}, {pipeline_mode = #tpu.pipeline_mode<synchronous>, transform_indices = @transform_6, window_bounds = array<i64: 1, 256>}, {pipeline_mode = #tpu.pipeline_mode<synchronous>, transform_indices = @transform_7, window_bounds = array<i64: 256, 128>}, {pipeline_mode = #tpu.pipeline_mode<synchronous>, transform_indices = @transform_8, window_bounds = array<i64: 1, 128>}, {pipeline_mode = #tpu.pipeline_mode<synchronous>, transform_indices = @transform_9, window_bounds = array<i64: 128, 128>}, {pipeline_mode = #tpu.pipeline_mode<synchronous>, transform_indices = @transform_10, window_bounds = array<i64: 1, 128>}, {transform_indices = @transform_11, window_bounds = array<i64: 16, 128>}]} {
    %c0 = arith.constant 0 : index
    %c0_0 = arith.constant 0 : index
    %0 = vector.load %arg1[%c0, %c0_0] : memref<16x784xbf16, #tpu.memory_space<vmem>>, vector<16x784xbf16>
    %c0_1 = arith.constant 0 : index
    %c0_2 = arith.constant 0 : index
    %1 = vector.load %arg2[%c0_1, %c0_2] : memref<784x640xbf16, #tpu.memory_space<vmem>>, vector<784x640xbf16>
    %cst = arith.constant dense<0.000000e+00> : vector<16x640xf32>
    %2 = tpu.matmul %0, %1, %cst {dimension_numbers = #tpu.dot_dimension_numbers<[1], [0], [0], [1], [0, 0, 1, 1], [], []>} : vector<16x784xbf16>, vector<784x640xbf16>, vector<16x640xf32> -> vector<16x640xf32>
    %c0_3 = arith.constant 0 : index
    %c0_4 = arith.constant 0 : index
    %3 = vector.load %arg3[%c0_3, %c0_4] : memref<1x640xf32, #tpu.memory_space<vmem>>, vector<1x640xf32>
    %4 = vector.broadcast %3 : vector<1x640xf32> to vector<16x640xf32>
    %5 = arith.addf %2, %4 : vector<16x640xf32>
    %cst_5 = arith.constant 0.000000e+00 : f32
    %6 = vector.broadcast %cst_5 : f32 to vector<16x640xf32>
    %7 = arith.maximumf %5, %6 : vector<16x640xf32>
    %8 = arith.truncf %7 : vector<16x640xf32> to vector<16x640xbf16>
    %c0_6 = arith.constant 0 : index
    %c0_7 = arith.constant 0 : index
    %9 = vector.load %arg4[%c0_6, %c0_7] : memref<640x384xbf16, #tpu.memory_space<vmem>>, vector<640x384xbf16>
    %cst_8 = arith.constant dense<0.000000e+00> : vector<16x384xf32>
    %10 = tpu.matmul %8, %9, %cst_8 {dimension_numbers = #tpu.dot_dimension_numbers<[1], [0], [0], [1], [0, 0, 1, 1], [], []>} : vector<16x640xbf16>, vector<640x384xbf16>, vector<16x384xf32> -> vector<16x384xf32>
    %c0_9 = arith.constant 0 : index
    %c0_10 = arith.constant 0 : index
    %11 = vector.load %arg5[%c0_9, %c0_10] : memref<1x384xf32, #tpu.memory_space<vmem>>, vector<1x384xf32>
    %12 = vector.broadcast %11 : vector<1x384xf32> to vector<16x384xf32>
    %13 = arith.addf %10, %12 : vector<16x384xf32>
    %cst_11 = arith.constant 0.000000e+00 : f32
    %14 = vector.broadcast %cst_11 : f32 to vector<16x384xf32>
    %15 = arith.maximumf %13, %14 : vector<16x384xf32>
    %16 = arith.truncf %15 : vector<16x384xf32> to vector<16x384xbf16>
    %c0_12 = arith.constant 0 : index
    %c0_13 = arith.constant 0 : index
    %17 = vector.load %arg6[%c0_12, %c0_13] : memref<384x256xbf16, #tpu.memory_space<vmem>>, vector<384x256xbf16>
    %cst_14 = arith.constant dense<0.000000e+00> : vector<16x256xf32>
    %18 = tpu.matmul %16, %17, %cst_14 {dimension_numbers = #tpu.dot_dimension_numbers<[1], [0], [0], [1], [0, 0, 1, 1], [], []>} : vector<16x384xbf16>, vector<384x256xbf16>, vector<16x256xf32> -> vector<16x256xf32>
    %c0_15 = arith.constant 0 : index
    %c0_16 = arith.constant 0 : index
    %19 = vector.load %arg7[%c0_15, %c0_16] : memref<1x256xf32, #tpu.memory_space<vmem>>, vector<1x256xf32>
    %20 = vector.broadcast %19 : vector<1x256xf32> to vector<16x256xf32>
    %21 = arith.addf %18, %20 : vector<16x256xf32>
    %cst_17 = arith.constant 0.000000e+00 : f32
    %22 = vector.broadcast %cst_17 : f32 to vector<16x256xf32>
    %23 = arith.maximumf %21, %22 : vector<16x256xf32>
    %24 = arith.truncf %23 : vector<16x256xf32> to vector<16x256xbf16>
    %c0_18 = arith.constant 0 : index
    %c0_19 = arith.constant 0 : index
    %25 = vector.load %arg8[%c0_18, %c0_19] : memref<256x128xbf16, #tpu.memory_space<vmem>>, vector<256x128xbf16>
    %cst_20 = arith.constant dense<0.000000e+00> : vector<16x128xf32>
    %26 = tpu.matmul %24, %25, %cst_20 {dimension_numbers = #tpu.dot_dimension_numbers<[1], [0], [0], [1], [0, 0, 1, 1], [], []>} : vector<16x256xbf16>, vector<256x128xbf16>, vector<16x128xf32> -> vector<16x128xf32>
    %c0_21 = arith.constant 0 : index
    %c0_22 = arith.constant 0 : index
    %27 = vector.load %arg9[%c0_21, %c0_22] : memref<1x128xf32, #tpu.memory_space<vmem>>, vector<1x128xf32>
    %28 = vector.broadcast %27 : vector<1x128xf32> to vector<16x128xf32>
    %29 = arith.addf %26, %28 : vector<16x128xf32>
    %cst_23 = arith.constant 0.000000e+00 : f32
    %30 = vector.broadcast %cst_23 : f32 to vector<16x128xf32>
    %31 = arith.maximumf %29, %30 : vector<16x128xf32>
    %32 = arith.truncf %31 : vector<16x128xf32> to vector<16x128xbf16>
    %c0_24 = arith.constant 0 : index
    %c0_25 = arith.constant 0 : index
    %33 = vector.load %arg10[%c0_24, %c0_25] : memref<128x128xbf16, #tpu.memory_space<vmem>>, vector<128x128xbf16>
    %cst_26 = arith.constant dense<0.000000e+00> : vector<16x128xf32>
    %34 = tpu.matmul %32, %33, %cst_26 {dimension_numbers = #tpu.dot_dimension_numbers<[1], [0], [0], [1], [0, 0, 1, 1], [], []>} : vector<16x128xbf16>, vector<128x128xbf16>, vector<16x128xf32> -> vector<16x128xf32>
    %c0_27 = arith.constant 0 : index
    %c0_28 = arith.constant 0 : index
    %35 = vector.load %arg11[%c0_27, %c0_28] : memref<1x128xf32, #tpu.memory_space<vmem>>, vector<1x128xf32>
    %36 = vector.broadcast %35 : vector<1x128xf32> to vector<16x128xf32>
    %37 = arith.addf %34, %36 : vector<16x128xf32>
    %c0_29 = arith.constant 0 : index
    %c0_30 = arith.constant 0 : index
    %38 = vector.load %arg12[%c0_29, %c0_30] : memref<16x128xf32, #tpu.memory_space<vmem>>, vector<16x128xf32>
    tpu.vector_store %arg12[%c0_29, %c0_30], %37 {strides = array<i32>} : memref<16x128xf32, #tpu.memory_space<vmem>>, vector<16x128xf32>,
    return
  }
  func.func @transform_0(%arg0: i32) -> (i32, i32) {
    %c0_i32 = arith.constant 0 : i32
    %c0_i32_0 = arith.constant 0 : i32
    return %arg0, %c0_i32 : i32, i32
  }
  func.func @transform_1(%arg0: i32) -> (i32, i32) {
    %c0_i32 = arith.constant 0 : i32
    %c0_i32_0 = arith.constant 0 : i32
    %c0_i32_1 = arith.constant 0 : i32
    return %c0_i32, %c0_i32_0 : i32, i32
  }
  func.func @transform_2(%arg0: i32) -> (i32, i32) {
    %c0_i32 = arith.constant 0 : i32
    %c0_i32_0 = arith.constant 0 : i32
    %c0_i32_1 = arith.constant 0 : i32
    return %c0_i32, %c0_i32_0 : i32, i32
  }
  func.func @transform_3(%arg0: i32) -> (i32, i32) {
    %c0_i32 = arith.constant 0 : i32
    %c0_i32_0 = arith.constant 0 : i32
    %c0_i32_1 = arith.constant 0 : i32
    return %c0_i32, %c0_i32_0 : i32, i32
  }
  func.func @transform_4(%arg0: i32) -> (i32, i32) {
    %c0_i32 = arith.constant 0 : i32
    %c0_i32_0 = arith.constant 0 : i32
    %c0_i32_1 = arith.constant 0 : i32
    return %c0_i32, %c0_i32_0 : i32, i32
  }
  func.func @transform_5(%arg0: i32) -> (i32, i32) {
    %c0_i32 = arith.constant 0 : i32
    %c0_i32_0 = arith.constant 0 : i32
    %c0_i32_1 = arith.constant 0 : i32
    return %c0_i32, %c0_i32_0 : i32, i32
  }
  func.func @transform_6(%arg0: i32) -> (i32, i32) {
    %c0_i32 = arith.constant 0 : i32
    %c0_i32_0 = arith.constant 0 : i32
    %c0_i32_1 = arith.constant 0 : i32
    return %c0_i32, %c0_i32_0 : i32, i32
  }
  func.func @transform_7(%arg0: i32) -> (i32, i32) {
    %c0_i32 = arith.constant 0 : i32
    %c0_i32_0 = arith.constant 0 : i32
    %c0_i32_1 = arith.constant 0 : i32
    return %c0_i32, %c0_i32_0 : i32, i32
  }
  func.func @transform_8(%arg0: i32) -> (i32, i32) {
    %c0_i32 = arith.constant 0 : i32
    %c0_i32_0 = arith.constant 0 : i32
    %c0_i32_1 = arith.constant 0 : i32
    return %c0_i32, %c0_i32_0 : i32, i32
  }
  func.func @transform_9(%arg0: i32) -> (i32, i32) {
    %c0_i32 = arith.constant 0 : i32
    %c0_i32_0 = arith.constant 0 : i32
    %c0_i32_1 = arith.constant 0 : i32
    return %c0_i32, %c0_i32_0 : i32, i32
  }
  func.func @transform_10(%arg0: i32) -> (i32, i32) {
    %c0_i32 = arith.constant 0 : i32
    %c0_i32_0 = arith.constant 0 : i32
    %c0_i32_1 = arith.constant 0 : i32
    return %c0_i32, %c0_i32_0 : i32, i32
  }
  func.func @transform_11(%arg0: i32) -> (i32, i32) {
    %c0_i32 = arith.constant 0 : i32
    %c0_i32_0 = arith.constant 0 : i32
    return %arg0, %c0_i32 : i32, i32
  }
}

module attributes {stable_mosaic.version = 11 : i64} {
  func.func @mlp_kernel(%arg0: i32, %arg1: memref<16x784xbf16, #tpu.memory_space<vmem>>, %arg2: memref<784x640xbf16, #tpu.memory_space<vmem>>, %arg3: memref<1x640xf32, #tpu.memory_space<vmem>>, %arg4: memref<640x384xbf16, #tpu.memory_space<vmem>>, %arg5: memref<1x384xf32, #tpu.memory_space<vmem>>, %arg6: memref<384x256xbf16, #tpu.memory_space<vmem>>, %arg7: memref<1x256xf32, #tpu.memory_space<vmem>>, %arg8: memref<256x128xbf16, #tpu.memory_space<vmem>>, %arg9: memref<1x128xf32, #tpu.memory_space<vmem>>, %arg10: memref<128x128xbf16, #tpu.memory_space<vmem>>, %arg11: memref<1x128xf32, #tpu.memory_space<vmem>>, %arg12: memref<16x128xf32, #tpu.memory_space<vmem>>) attributes {dimension_semantics = [#tpu.dimension_semantics<parallel>], iteration_bounds = array<i64: 1>, scalar_prefetch = 0 : i64, scratch_operands = 0 : i64, tpu.core_type = #tpu.core_type<tc>, window_params = [{transform_indices = @transform_0, window_bounds = array<i64: 16, 784>}, {pipeline_mode = #tpu.pipeline_mode<synchronous>, transform_indices = @transform_1, window_bounds = array<i64: 784, 640>}, {pipeline_mode = #tpu.pipeline_mode<synchronous>, transform_indices = @transform_2, window_bounds = array<i64: 1, 640>}, {pipeline_mode = #tpu.pipeline_mode<synchronous>, transform_indices = @transform_3, window_bounds = array<i64: 640, 384>}, {pipeline_mode = #tpu.pipeline_mode<synchronous>, transform_indices = @transform_4, window_bounds = array<i64: 1, 384>}, {pipeline_mode = #tpu.pipeline_mode<synchronous>, transform_indices = @transform_5, window_bounds = array<i64: 384, 256>}, {pipeline_mode = #tpu.pipeline_mode<synchronous>, transform_indices = @transform_6, window_bounds = array<i64: 1, 256>}, {pipeline_mode = #tpu.pipeline_mode<synchronous>, transform_indices = @transform_7, window_bounds = array<i64: 256, 128>}, {pipeline_mode = #tpu.pipeline_mode<synchronous>, transform_indices = @transform_8, window_bounds = array<i64: 1, 128>}, {pipeline_mode = #tpu.pipeline_mode<synchronous>, transform_indices = @transform_9, window_bounds = array<i64: 128, 128>}, {pipeline_mode = #tpu.pipeline_mode<synchronous>, transform_indices = @transform_10, window_bounds = array<i64: 1, 128>}, {transform_indices = @transform_11, window_bounds = array<i64: 16, 128>}]} {
    %c0 = arith.constant 0 : index
    %c0_0 = arith.constant 0 : index
    %0 = vector.load %arg1[%c0, %c0_0] : memref<16x784xbf16, #tpu.memory_space<vmem>>, vector<16x784xbf16>
    %c0_1 = arith.constant 0 : index
    %c0_2 = arith.constant 0 : index
    %1 = vector.load %arg2[%c0_1, %c0_2] : memref<784x640xbf16, #tpu.memory_space<vmem>>, vector<784x640xbf16>
    %cst = arith.constant dense<0.000000e+00> : vector<16x640xf32>
    %2 = tpu.matmul %0, %1, %cst {dimension_numbers = #tpu.dot_dimension_numbers<[1], [0], [0], [1], [0, 0, 1, 1], [], []>} : vector<16x784xbf16>, vector<784x640xbf16>, vector<16x640xf32> -> vector<16x640xf32>
    %c0_3 = arith.constant 0 : index
    %c0_4 = arith.constant 0 : index
    %3 = vector.load %arg3[%c0_3, %c0_4] : memref<1x640xf32, #tpu.memory_space<vmem>>, vector<1x640xf32>
    %4 = vector.broadcast %3 : vector<1x640xf32> to vector<16x640xf32>
    %5 = arith.addf %2, %4 : vector<16x640xf32>
    %cst_5 = arith.constant 0.000000e+00 : f32
    %6 = vector.broadcast %cst_5 : f32 to vector<16x640xf32>
    %7 = arith.maximumf %5, %6 : vector<16x640xf32>
    %8 = arith.truncf %7 : vector<16x640xf32> to vector<16x640xbf16>
    %c0_6 = arith.constant 0 : index
    %c0_7 = arith.constant 0 : index
    %9 = vector.load %arg4[%c0_6, %c0_7] : memref<640x384xbf16, #tpu.memory_space<vmem>>, vector<640x384xbf16>
    %cst_8 = arith.constant dense<0.000000e+00> : vector<16x384xf32>
    %10 = tpu.matmul %8, %9, %cst_8 {dimension_numbers = #tpu.dot_dimension_numbers<[1], [0], [0], [1], [0, 0, 1, 1], [], []>} : vector<16x640xbf16>, vector<640x384xbf16>, vector<16x384xf32> -> vector<16x384xf32>
    %c0_9 = arith.constant 0 : index
    %c0_10 = arith.constant 0 : index
    %11 = vector.load %arg5[%c0_9, %c0_10] : memref<1x384xf32, #tpu.memory_space<vmem>>, vector<1x384xf32>
    %12 = vector.broadcast %11 : vector<1x384xf32> to vector<16x384xf32>
    %13 = arith.addf %10, %12 : vector<16x384xf32>
    %cst_11 = arith.constant 0.000000e+00 : f32
    %14 = vector.broadcast %cst_11 : f32 to vector<16x384xf32>
    %15 = arith.maximumf %13, %14 : vector<16x384xf32>
    %16 = arith.truncf %15 : vector<16x384xf32> to vector<16x384xbf16>
    %c0_12 = arith.constant 0 : index
    %c0_13 = arith.constant 0 : index
    %17 = vector.load %arg6[%c0_12, %c0_13] : memref<384x256xbf16, #tpu.memory_space<vmem>>, vector<384x256xbf16>
    %cst_14 = arith.constant dense<0.000000e+00> : vector<16x256xf32>
    %18 = tpu.matmul %16, %17, %cst_14 {dimension_numbers = #tpu.dot_dimension_numbers<[1], [0], [0], [1], [0, 0, 1, 1], [], []>} : vector<16x384xbf16>, vector<384x256xbf16>, vector<16x256xf32> -> vector<16x256xf32>
    %c0_15 = arith.constant 0 : index
    %c0_16 = arith.constant 0 : index
    %19 = vector.load %arg7[%c0_15, %c0_16] : memref<1x256xf32, #tpu.memory_space<vmem>>, vector<1x256xf32>
    %20 = vector.broadcast %19 : vector<1x256xf32> to vector<16x256xf32>
    %21 = arith.addf %18, %20 : vector<16x256xf32>
    %cst_17 = arith.constant 0.000000e+00 : f32
    %22 = vector.broadcast %cst_17 : f32 to vector<16x256xf32>
    %23 = arith.maximumf %21, %22 : vector<16x256xf32>
    %24 = arith.truncf %23 : vector<16x256xf32> to vector<16x256xbf16>
    %c0_18 = arith.constant 0 : index
    %c0_19 = arith.constant 0 : index
    %25 = vector.load %arg8[%c0_18, %c0_19] : memref<256x128xbf16, #tpu.memory_space<vmem>>, vector<256x128xbf16>
    %cst_20 = arith.constant dense<0.000000e+00> : vector<16x128xf32>
    %26 = tpu.matmul %24, %25, %cst_20 {dimension_numbers = #tpu.dot_dimension_numbers<[1], [0], [0], [1], [0, 0, 1, 1], [], []>} : vector<16x256xbf16>, vector<256x128xbf16>, vector<16x128xf32> -> vector<16x128xf32>
    %c0_21 = arith.constant 0 : index
    %c0_22 = arith.constant 0 : index
    %27 = vector.load %arg9[%c0_21, %c0_22] : memref<1x128xf32, #tpu.memory_space<vmem>>, vector<1x128xf32>
    %28 = vector.broadcast %27 : vector<1x128xf32> to vector<16x128xf32>
    %29 = arith.addf %26, %28 : vector<16x128xf32>
    %cst_23 = arith.constant 0.000000e+00 : f32
    %30 = vector.broadcast %cst_23 : f32 to vector<16x128xf32>
    %31 = arith.maximumf %29, %30 : vector<16x128xf32>
    %32 = arith.truncf %31 : vector<16x128xf32> to vector<16x128xbf16>
    %c0_24 = arith.constant 0 : index
    %c0_25 = arith.constant 0 : index
    %33 = vector.load %arg10[%c0_24, %c0_25] : memref<128x128xbf16, #tpu.memory_space<vmem>>, vector<128x128xbf16>
    %cst_26 = arith.constant dense<0.000000e+00> : vector<16x128xf32>
    %34 = tpu.matmul %32, %33, %cst_26 {dimension_numbers = #tpu.dot_dimension_numbers<[1], [0], [0], [1], [0, 0, 1, 1], [], []>} : vector<16x128xbf16>, vector<128x128xbf16>, vector<16x128xf32> -> vector<16x128xf32>
    %c0_27 = arith.constant 0 : index
    %c0_28 = arith.constant 0 : index
    %35 = vector.load %arg11[%c0_27, %c0_28] : memref<1x128xf32, #tpu.memory_space<vmem>>, vector<1x128xf32>
    %36 = vector.broadcast %35 : vector<1x128xf32> to vector<16x128xf32>
    %37 = arith.addf %34, %36 : vector<16x128xf32>
    %c0_29 = arith.constant 0 : index
    %c0_30 = arith.constant 0 : index
    %38 = vector.load %arg12[%c0_29, %c0_30] : memref<16x128xf32, #tpu.memory_space<vmem>>, vector<16x128xf32>
    tpu.vector_store %arg12[%c0_29, %c0_30], %37 {strides = array<i32>} : memref<16x128xf32, #tpu.memory_space<vmem>>, vector<16x128xf32>,
    return
  }
  func.func @transform_0(%arg0: i32) -> (i32, i32) {
    %c0_i32 = arith.constant 0 : i32
    %c0_i32_0 = arith.constant 0 : i32
    return %arg0, %c0_i32 : i32, i32
  }
  func.func @transform_1(%arg0: i32) -> (i32, i32) {
    %c0_i32 = arith.constant 0 : i32
    %c0_i32_0 = arith.constant 0 : i32
    %c0_i32_1 = arith.constant 0 : i32
    return %c0_i32, %c0_i32_0 : i32, i32
  }
  func.func @transform_2(%arg0: i32) -> (i32, i32) {
    %c0_i32 = arith.constant 0 : i32
    %c0_i32_0 = arith.constant 0 : i32
    %c0_i32_1 = arith.constant 0 : i32
    return %c0_i32, %c0_i32_0 : i32, i32
  }
  func.func @transform_3(%arg0: i32) -> (i32, i32) {
    %c0_i32 = arith.constant 0 : i32
    %c0_i32_0 = arith.constant 0 : i32
    %c0_i32_1 = arith.constant 0 : i32
    return %c0_i32, %c0_i32_0 : i32, i32
  }
  func.func @transform_4(%arg0: i32) -> (i32, i32) {
    %c0_i32 = arith.constant 0 : i32
    %c0_i32_0 = arith.constant 0 : i32
    %c0_i32_1 = arith.constant 0 : i32
    return %c0_i32, %c0_i32_0 : i32, i32
  }
  func.func @transform_5(%arg0: i32) -> (i32, i32) {
    %c0_i32 = arith.constant 0 : i32
    %c0_i32_0 = arith.constant 0 : i32
    %c0_i32_1 = arith.constant 0 : i32
    return %c0_i32, %c0_i32_0 : i32, i32
  }
  func.func @transform_6(%arg0: i32) -> (i32, i32) {
    %c0_i32 = arith.constant 0 : i32
    %c0_i32_0 = arith.constant 0 : i32
    %c0_i32_1 = arith.constant 0 : i32
    return %c0_i32, %c0_i32_0 : i32, i32
  }
  func.func @transform_7(%arg0: i32) -> (i32, i32) {
    %c0_i32 = arith.constant 0 : i32
    %c0_i32_0 = arith.constant 0 : i32
    %c0_i32_1 = arith.constant 0 : i32
    return %c0_i32, %c0_i32_0 : i32, i32
  }
  func.func @transform_8(%arg0: i32) -> (i32, i32) {
    %c0_i32 = arith.constant 0 : i32
    %c0_i32_0 = arith.constant 0 : i32
    %c0_i32_1 = arith.constant 0 : i32
    return %c0_i32, %c0_i32_0 : i32, i32
  }
  func.func @transform_9(%arg0: i32) -> (i32, i32) {
    %c0_i32 = arith.constant 0 : i32
    %c0_i32_0 = arith.constant 0 : i32
    %c0_i32_1 = arith.constant 0 : i32
    return %c0_i32, %c0_i32_0 : i32, i32
  }
  func.func @transform_10(%arg0: i32) -> (i32, i32) {
    %c0_i32 = arith.constant 0 : i32
    %c0_i32_0 = arith.constant 0 : i32
    %c0_i32_1 = arith.constant 0 : i32
    return %c0_i32, %c0_i32_0 : i32, i32
  }
  func.func @transform_11(%arg0: i32) -> (i32, i32) {
    %c0_i32 = arith.constant 0 : i32
    %c0_i32_0 = arith.constant 0 : i32
    return %arg0, %c0_i32 : i32, i32
  }
}

</mosaic_0001>

<llo_original>
// kernel: tpu_custom_call.1
$region0: #{tpu_custom_call.1}
  #allocation0 [shape = 'u32[]', space=smem, size = 0x4, offset = 0x4, fixed_abs, tag = 'smem constant byte address 0x4 - core index']
  #allocation1 [shape = 'u32[144,128]{1,0:T(1,128)}', space=vmem, size = 0x12000, scoped, tag = 'internal scratch']
  %s0 = inlined_call_operand.hbm [shape: bf16[16,784], index: 0, kind: input, shape index: {}]
  %s1 = inlined_call_operand.hbm [shape: bf16[784,640], index: 1, kind: input, shape index: {}]
  %s2 = inlined_call_operand.hbm [shape: f32[1,640], index: 2, kind: input, shape index: {}]
  %s3 = inlined_call_operand.hbm [shape: bf16[640,384], index: 3, kind: input, shape index: {}]
  %s4 = inlined_call_operand.vmem [shape: f32[1,384], index: 4, kind: input, shape index: {}]
  %s5 = inlined_call_operand.hbm [shape: bf16[384,256], index: 5, kind: input, shape index: {}]
  %s6 = inlined_call_operand.vmem [shape: f32[1,256], index: 6, kind: input, shape index: {}]
  %s7 = inlined_call_operand.hbm [shape: bf16[256,128], index: 7, kind: input, shape index: {}]
  %s8 = inlined_call_operand.vmem [shape: f32[1,128], index: 8, kind: input, shape index: {}]
  %s9 = inlined_call_operand.hbm [shape: bf16[128,128], index: 9, kind: input, shape index: {}]
  %s10 = inlined_call_operand.vmem [shape: f32[1,128], index: 10, kind: input, shape index: {}]
  %s11 = inlined_call_operand.hbm [shape: f32[16,128], index: 11, kind: output, shape index: {}]
  %s12 = sld [smem:[#allocation0]]
  $region82: #{tpu_custom_call.1} parent=0
    _
  %s14 = ssub.s32 1, %s12
  %s15 = scalar_select 0, %s14, %s12
  $region1: #{tpu_custom_call.1} parent=0
    #allocation2 [shape = 'u8[28672]{0}', space=vmem, size = 0x7000, scoped, tag = 'input window, operand 0, single buffered']
    #allocation3 [shape = 's32[1]{0}', space=sflag, size = 0x4, scoped, tag = 'scoped memory for tpu_custom_call.1']
    #allocation4 [shape = 's32[1]{0}', space=sflag, size = 0x4, scoped, tag = 'scoped memory for tpu_custom_call.1']
    #allocation5 [shape = 'u8[1003520]{0}', space=vmem, size = 0xf5000, scoped, tag = 'input window, operand 1, single buffered']
    #allocation6 [shape = 's32[1]{0}', space=sflag, size = 0x4, scoped, tag = 'scoped memory for tpu_custom_call.1']
    #allocation7 [shape = 'u8[2560]{0}', space=vmem, size = 0xc00, scoped, tag = 'input window, operand 2, single buffered']
    #allocation8 [shape = 'u8[491520]{0}', space=vmem, size = 0x78000, scoped, tag = 'input window, operand 3, single buffered']
    #allocation9 [shape = 's32[1]{0}', space=sflag, size = 0x4, scoped, tag = 'scoped memory for tpu_custom_call.1']
    #allocation10 [shape = 'u8[196608]{0}', space=vmem, size = 0x30000, scoped, tag = 'input window, operand 5, single buffered']
    #allocation11 [shape = 'u8[65536]{0}', space=vmem, size = 0x10000, scoped, tag = 'input window, operand 7, single buffered']
    #allocation12 [shape = 's32[1]{0}', space=sflag, size = 0x4, scoped, tag = 'scoped memory for tpu_custom_call.1']
    #allocation13 [shape = 'u8[32768]{0}', space=vmem, size = 0x8000, scoped, tag = 'input window, operand 9, single buffered']
    #allocation14 [shape = 'u8[8192]{0}', space=vmem, size = 0x2000, scoped, tag = 'output window, operand 0, single buffered']
    %16 = vsyncpa [#allocation3], 0
    %17 = vsyncpa [#allocation6], 0
    %18 = vsyncpa [#allocation9], 0
    %19 = vsyncpa [#allocation12], 0
    %20 = vsyncpa [#allocation4], 0
    // Predicated region
    $region2: #{tpu_custom_call.1} parent=1 // pred_check
      _
    $region3: #{tpu_custom_call.1} parent=1 // pred_check_branch
      %22 = sbr.rel (0) target = $region5
    $region4: #{tpu_custom_call.1} parent=1 // pred_region
      %s24 = ssub.s32 896, 896
      %25 = vsyncadd [#allocation3], %s24
      %s26 = sshll.u32 [#allocation2], 4
      %s27 = int_to_ptr.vmem [resolvable:$true] %s26
      %32 = dma.hbm_to_vmem [thread:$0]  %s0, 896, %s27, [#allocation3], 448, 448, 28
    $region5: #{tpu_custom_call.1} parent=1 // pred_fallthru
      _
    // Predicated region
    $region6: #{tpu_custom_call.1} parent=1 // pred_check
      _
    $region7: #{tpu_custom_call.1} parent=1 // pred_check_branch
      %34 = sbr.rel (0) target = $region9
    $region8: #{tpu_custom_call.1} parent=1 // pred_region
      %s36 = ssub.s32 31360, 31360
      %37 = vsyncadd [#allocation6], %s36
      %s38 = sshll.u32 [#allocation5], 4
      %s39 = int_to_ptr.vmem [resolvable:$true] %s38
      %44 = dma.hbm_to_vmem [thread:$0]  %s1, 31360, %s39, [#allocation6], 320, 320, 20
    $region9: #{tpu_custom_call.1} parent=1 // pred_fallthru
      _
    // Predicated region
    $region10: #{tpu_custom_call.1} parent=1 // pred_check
      _
    $region11: #{tpu_custom_call.1} parent=1 // pred_check_branch
      %46 = sbr.rel (0) target = $region13
    $region12: #{tpu_custom_call.1} parent=1 // pred_region
      %s48 = ssub.s32 80, 80
      %49 = vsyncadd [#allocation6], %s48
      %s51 = sshll.u32 [#allocation7], 4
      %s52 = int_to_ptr.vmem [resolvable:$true] %s51
      %54 = dma.hbm_to_vmem [thread:$0]  %s2, 80, %s52, [#allocation6]
    $region13: #{tpu_custom_call.1} parent=1 // pred_fallthru
      _
    // Predicated region
    $region14: #{tpu_custom_call.1} parent=1 // pred_check
      _
    $region15: #{tpu_custom_call.1} parent=1 // pred_check_branch
      %56 = sbr.rel (0) target = $region17
    $region16: #{tpu_custom_call.1} parent=1 // pred_region
      %s58 = ssub.s32 15360, 15360
      %59 = vsyncadd [#allocation9], %s58
      %s60 = sshll.u32 [#allocation8], 4
      %s61 = int_to_ptr.vmem [resolvable:$true] %s60
      %66 = dma.hbm_to_vmem [thread:$0]  %s3, 15360, %s61, [#allocation9], 192, 192, 12
    $region17: #{tpu_custom_call.1} parent=1 // pred_fallthru
      _
    // Predicated region
    $region18: #{tpu_custom_call.1} parent=1 // pred_check
      _
    $region19: #{tpu_custom_call.1} parent=1 // pred_check_branch
      %68 = sbr.rel (0) target = $region21
    $region20: #{tpu_custom_call.1} parent=1 // pred_region
      _
    $region21: #{tpu_custom_call.1} parent=1 // pred_fallthru
      _
    // Predicated region
    $region22: #{tpu_custom_call.1} parent=1 // pred_check
      _
    $region23: #{tpu_custom_call.1} parent=1 // pred_check_branch
      %70 = sbr.rel (0) target = $region25
    $region24: #{tpu_custom_call.1} parent=1 // pred_region
      %s72 = ssub.s32 6144, 6144
      %73 = vsyncadd [#allocation9], %s72
      %s74 = sshll.u32 [#allocation10], 4
      %s75 = int_to_ptr.vmem [resolvable:$true] %s74
      %80 = dma.hbm_to_vmem [thread:$0]  %s5, 6144, %s75, [#allocation9], 128, 128, 8
    $region25: #{tpu_custom_call.1} parent=1 // pred_fallthru
      _
    // Predicated region
    $region26: #{tpu_custom_call.1} parent=1 // pred_check
      _
    $region27: #{tpu_custom_call.1} parent=1 // pred_check_branch
      %82 = sbr.rel (0) target = $region29
    $region28: #{tpu_custom_call.1} parent=1 // pred_region
      _
    $region29: #{tpu_custom_call.1} parent=1 // pred_fallthru
      _
    // Predicated region
    $region30: #{tpu_custom_call.1} parent=1 // pred_check
      _
    $region31: #{tpu_custom_call.1} parent=1 // pred_check_branch
      %84 = sbr.rel (0) target = $region33
    $region32: #{tpu_custom_call.1} parent=1 // pred_region
      %s86 = ssub.s32 2048, 2048
      %87 = vsyncadd [#allocation12], %s86
      %s88 = sshll.u32 [#allocation11], 4
      %s89 = int_to_ptr.vmem [resolvable:$true] %s88
      %94 = dma.hbm_to_vmem [thread:$0]  %s7, 2048, %s89, [#allocation12], 64, 64, 4
    $region33: #{tpu_custom_call.1} parent=1 // pred_fallthru
      _
    // Predicated region
    $region34: #{tpu_custom_call.1} parent=1 // pred_check
      _
    $region35: #{tpu_custom_call.1} parent=1 // pred_check_branch
      %96 = sbr.rel (0) target = $region37
    $region36: #{tpu_custom_call.1} parent=1 // pred_region
      _
    $region37: #{tpu_custom_call.1} parent=1 // pred_fallthru
      _
    // Predicated region
    $region38: #{tpu_custom_call.1} parent=1 // pred_check
      _
    $region39: #{tpu_custom_call.1} parent=1 // pred_check_branch
      %98 = sbr.rel (0) target = $region41
    $region40: #{tpu_custom_call.1} parent=1 // pred_region
      %s100 = ssub.s32 1024, 1024
      %101 = vsyncadd [#allocation12], %s100
      %s102 = sshll.u32 [#allocation13], 4
      %s103 = int_to_ptr.vmem [resolvable:$true] %s102
      %108 = dma.hbm_to_vmem [thread:$0]  %s9, 1024, %s103, [#allocation12], 64, 64, 4
    $region41: #{tpu_custom_call.1} parent=1 // pred_fallthru
      _
    // Predicated region
    $region42: #{tpu_custom_call.1} parent=1 // pred_check
      _
    $region43: #{tpu_custom_call.1} parent=1 // pred_check_branch
      %110 = sbr.rel (0) target = $region45
    $region44: #{tpu_custom_call.1} parent=1 // pred_region
      _
    $region45: #{tpu_custom_call.1} parent=1 // pred_fallthru
      _
    // Predicated region
    $region46: #{tpu_custom_call.1} parent=1 // pred_check
      _
    $region47: #{tpu_custom_call.1} parent=1 // pred_check_branch
      %112 = sbr.rel (0) target = $region49
    $region48: #{tpu_custom_call.1} parent=1 // pred_region
      %113 = dma.done [#allocation3], 896
    $region49: #{tpu_custom_call.1} parent=1 // pred_fallthru
      _
    // Predicated region
    $region50: #{tpu_custom_call.1} parent=1 // pred_check
      _
    $region51: #{tpu_custom_call.1} parent=1 // pred_check_branch
      %115 = sbr.rel (0) target = $region53
    $region52: #{tpu_custom_call.1} parent=1 // pred_region
      %116 = dma.done [#allocation6], 31360
    $region53: #{tpu_custom_call.1} parent=1 // pred_fallthru
      _
    // Predicated region
    $region54: #{tpu_custom_call.1} parent=1 // pred_check
      _
    $region55: #{tpu_custom_call.1} parent=1 // pred_check_branch
      %118 = sbr.rel (0) target = $region57
    $region56: #{tpu_custom_call.1} parent=1 // pred_region
      %119 = dma.done [#allocation6], 80
    $region57: #{tpu_custom_call.1} parent=1 // pred_fallthru
      _
    // Predicated region
    $region58: #{tpu_custom_call.1} parent=1 // pred_check
      _
    $region59: #{tpu_custom_call.1} parent=1 // pred_check_branch
      %121 = sbr.rel (0) target = $region61
    $region60: #{tpu_custom_call.1} parent=1 // pred_region
      %122 = dma.done [#allocation9], 15360
    $region61: #{tpu_custom_call.1} parent=1 // pred_fallthru
      _
    // Predicated region
    $region62: #{tpu_custom_call.1} parent=1 // pred_check
      _
    $region63: #{tpu_custom_call.1} parent=1 // pred_check_branch
      %124 = sbr.rel (0) target = $region65
    $region64: #{tpu_custom_call.1} parent=1 // pred_region
      %125 = dma.done [#allocation9], 6144
    $region65: #{tpu_custom_call.1} parent=1 // pred_fallthru
      _
    // Predicated region
    $region66: #{tpu_custom_call.1} parent=1 // pred_check
      _
    $region67: #{tpu_custom_call.1} parent=1 // pred_check_branch
      %127 = sbr.rel (0) target = $region69
    $region68: #{tpu_custom_call.1} parent=1 // pred_region
      %128 = dma.done [#allocation12], 2048
    $region69: #{tpu_custom_call.1} parent=1 // pred_fallthru
      _
    // Predicated region
    $region70: #{tpu_custom_call.1} parent=1 // pred_check
      _
    $region71: #{tpu_custom_call.1} parent=1 // pred_check_branch
      %130 = sbr.rel (0) target = $region73
    $region72: #{tpu_custom_call.1} parent=1 // pred_region
      %131 = dma.done [#allocation12], 1024
    $region73: #{tpu_custom_call.1} parent=1 // pred_fallthru
      _
    %v133 = vld [vmem:[#allocation2] sm:$0xff]
    %v134 = vld [vmem:[#allocation2 + $0x8] sm:$0xff]
    %v135 = vld [vmem:[#allocation2 + $0x10] sm:$0xff]
    %v136 = vld [vmem:[#allocation2 + $0x18] sm:$0xf]
    %v137 = vld [vmem:[#allocation2 + $0x1c] sm:$0xff]
    %v138 = vld [vmem:[#allocation2 + $0x24] sm:$0xff]
    %v139 = vld [vmem:[#allocation2 + $0x2c] sm:$0xff]
    %v140 = vld [vmem:[#allocation2 + $0x34] sm:$0xf]
    %v141 = vld [vmem:[#allocation5] sm:$0xff]
    %v142 = vld [vmem:[#allocation5 + $0x8] sm:$0xff]
    %v143 = vld [vmem:[#allocation5 + $0x10] sm:$0xf]
    %v144 = vld [vmem:[#allocation5 + $0x14] sm:$0xff]
    %v145 = vld [vmem:[#allocation5 + $0x1c] sm:$0xff]
    %v146 = vld [vmem:[#allocation5 + $0x24] sm:$0xf]
    %v147 = vld [vmem:[#allocation5 + $0x28] sm:$0xff]
    %v148 = vld [vmem:[#allocation5 + $0x30] sm:$0xff]
    %v149 = vld [vmem:[#allocation5 + $0x38] sm:$0xf]
    %v150 = vld [vmem:[#allocation5 + $0x3c] sm:$0xff]
    %v151 = vld [vmem:[#allocation5 + $0x44] sm:$0xff]
    %v152 = vld [vmem:[#allocation5 + $0x4c] sm:$0xf]
    %v153 = vld [vmem:[#allocation5 + $0x50] sm:$0xff]
    %v154 = vld [vmem:[#allocation5 + $0x58] sm:$0xff]
    %v155 = vld [vmem:[#allocation5 + $0x60] sm:$0xf]
    %v156 = vld [vmem:[#allocation5 + $0x64] sm:$0xff]
    %v157 = vld [vmem:[#allocation5 + $0x6c] sm:$0xff]
    %v158 = vld [vmem:[#allocation5 + $0x74] sm:$0xf]
    %v159 = vld [vmem:[#allocation5 + $0x78] sm:$0xff]
    %v160 = vld [vmem:[#allocation5 + $0x80] sm:$0xff]
    %v161 = vld [vmem:[#allocation5 + $0x88] sm:$0xf]
    %v162 = vld [vmem:[#allocation5 + $0x8c] sm:$0xff]
    %v163 = vld [vmem:[#allocation5 + $0x94] sm:$0xff]
    %v164 = vld [vmem:[#allocation5 + $0x9c] sm:$0xf]
    %v165 = vld [vmem:[#allocation5 + $0xa0] sm:$0xff]
    %v166 = vld [vmem:[#allocation5 + $0xa8] sm:$0xff]
    %v167 = vld [vmem:[#allocation5 + $0xb0] sm:$0xf]
    %v168 = vld [vmem:[#allocation5 + $0xb4] sm:$0xff]
    %v169 = vld [vmem:[#allocation5 + $0xbc] sm:$0xff]
    %v170 = vld [vmem:[#allocation5 + $0xc4] sm:$0xf]
    %v171 = vld [vmem:[#allocation5 + $0xc8] sm:$0xff]
    %v172 = vld [vmem:[#allocation5 + $0xd0] sm:$0xff]
    %v173 = vld [vmem:[#allocation5 + $0xd8] sm:$0xf]
    %v174 = vld [vmem:[#allocation5 + $0xdc] sm:$0xff]
    %v175 = vld [vmem:[#allocation5 + $0xe4] sm:$0xff]
    %v176 = vld [vmem:[#allocation5 + $0xec] sm:$0xf]
    %v177 = vld [vmem:[#allocation5 + $0xf0] sm:$0xff]
    %v178 = vld [vmem:[#allocation5 + $0xf8] sm:$0xff]
    %v179 = vld [vmem:[#allocation5 + $0x100] sm:$0xf]
    %v180 = vld [vmem:[#allocation5 + $0x104] sm:$0xff]
    %v181 = vld [vmem:[#allocation5 + $0x10c] sm:$0xff]
    %v182 = vld [vmem:[#allocation5 + $0x114] sm:$0xf]
    %v183 = vld [vmem:[#allocation5 + $0x118] sm:$0xff]
    %v184 = vld [vmem:[#allocation5 + $0x120] sm:$0xff]
    %v185 = vld [vmem:[#allocation5 + $0x128] sm:$0xf]
    %v186 = vld [vmem:[#allocation5 + $0x12c] sm:$0xff]
    %v187 = vld [vmem:[#allocation5 + $0x134] sm:$0xff]
    %v188 = vld [vmem:[#allocation5 + $0x13c] sm:$0xf]
    %v189 = vld [vmem:[#allocation5 + $0x140] sm:$0xff]
    %v190 = vld [vmem:[#allocation5 + $0x148] sm:$0xff]
    %v191 = vld [vmem:[#allocation5 + $0x150] sm:$0xf]
    %v192 = vld [vmem:[#allocation5 + $0x154] sm:$0xff]
    %v193 = vld [vmem:[#allocation5 + $0x15c] sm:$0xff]
    %v194 = vld [vmem:[#allocation5 + $0x164] sm:$0xf]
    %v195 = vld [vmem:[#allocation5 + $0x168] sm:$0xff]
    %v196 = vld [vmem:[#allocation5 + $0x170] sm:$0xff]
    %v197 = vld [vmem:[#allocation5 + $0x178] sm:$0xf]
    %v198 = vld [vmem:[#allocation5 + $0x17c] sm:$0xff]
    %v199 = vld [vmem:[#allocation5 + $0x184] sm:$0xff]
    %v200 = vld [vmem:[#allocation5 + $0x18c] sm:$0xf]
    %v201 = vld [vmem:[#allocation5 + $0x190] sm:$0xff]
    %v202 = vld [vmem:[#allocation5 + $0x198] sm:$0xff]
    %v203 = vld [vmem:[#allocation5 + $0x1a0] sm:$0xf]
    %v204 = vld [vmem:[#allocation5 + $0x1a4] sm:$0xff]
    %v205 = vld [vmem:[#allocation5 + $0x1ac] sm:$0xff]
    %v206 = vld [vmem:[#allocation5 + $0x1b4] sm:$0xf]
    %v207 = vld [vmem:[#allocation5 + $0x1b8] sm:$0xff]
    %v208 = vld [vmem:[#allocation5 + $0x1c0] sm:$0xff]
    %v209 = vld [vmem:[#allocation5 + $0x1c8] sm:$0xf]
    %v210 = vld [vmem:[#allocation5 + $0x1cc] sm:$0xff]
    %v211 = vld [vmem:[#allocation5 + $0x1d4] sm:$0xff]
    %v212 = vld [vmem:[#allocation5 + $0x1dc] sm:$0xf]
    %v213 = vld [vmem:[#allocation5 + $0x1e0] sm:$0xff]
    %v214 = vld [vmem:[#allocation5 + $0x1e8] sm:$0xff]
    %v215 = vld [vmem:[#allocation5 + $0x1f0] sm:$0xf]
    %v216 = vld [vmem:[#allocation5 + $0x1f4] sm:$0xff]
    %v217 = vld [vmem:[#allocation5 + $0x1fc] sm:$0xff]
    %v218 = vld [vmem:[#allocation5 + $0x204] sm:$0xf]
    %v219 = vld [vmem:[#allocation5 + $0x208] sm:$0xff]
    %v220 = vld [vmem:[#allocation5 + $0x210] sm:$0xff]
    %v221 = vld [vmem:[#allocation5 + $0x218] sm:$0xf]
    %v222 = vld [vmem:[#allocation5 + $0x21c] sm:$0xff]
    %v223 = vld [vmem:[#allocation5 + $0x224] sm:$0xff]
    %v224 = vld [vmem:[#allocation5 + $0x22c] sm:$0xf]
    %v225 = vld [vmem:[#allocation5 + $0x230] sm:$0xff]
    %v226 = vld [vmem:[#allocation5 + $0x238] sm:$0xff]
    %v227 = vld [vmem:[#allocation5 + $0x240] sm:$0xf]
    %v228 = vld [vmem:[#allocation5 + $0x244] sm:$0xff]
    %v229 = vld [vmem:[#allocation5 + $0x24c] sm:$0xff]
    %v230 = vld [vmem:[#allocation5 + $0x254] sm:$0xf]
    %v231 = vld [vmem:[#allocation5 + $0x258] sm:$0xff]
    %v232 = vld [vmem:[#allocation5 + $0x260] sm:$0xff]
    %v233 = vld [vmem:[#allocation5 + $0x268] sm:$0xf]
    %v234 = vld [vmem:[#allocation5 + $0x26c] sm:$0xff]
    %v235 = vld [vmem:[#allocation5 + $0x274] sm:$0xff]
    %v236 = vld [vmem:[#allocation5 + $0x27c] sm:$0xf]
    %v237 = vld [vmem:[#allocation5 + $0x280] sm:$0xff]
    %v238 = vld [vmem:[#allocation5 + $0x288] sm:$0xff]
    %v239 = vld [vmem:[#allocation5 + $0x290] sm:$0xf]
    %v240 = vld [vmem:[#allocation5 + $0x294] sm:$0xff]
    %v241 = vld [vmem:[#allocation5 + $0x29c] sm:$0xff]
    %v242 = vld [vmem:[#allocation5 + $0x2a4] sm:$0xf]
    %v243 = vld [vmem:[#allocation5 + $0x2a8] sm:$0xff]
    %v244 = vld [vmem:[#allocation5 + $0x2b0] sm:$0xff]
    %v245 = vld [vmem:[#allocation5 + $0x2b8] sm:$0xf]
    %v246 = vld [vmem:[#allocation5 + $0x2bc] sm:$0xff]
    %v247 = vld [vmem:[#allocation5 + $0x2c4] sm:$0xff]
    %v248 = vld [vmem:[#allocation5 + $0x2cc] sm:$0xf]
    %v249 = vld [vmem:[#allocation5 + $0x2d0] sm:$0xff]
    %v250 = vld [vmem:[#allocation5 + $0x2d8] sm:$0xff]
    %v251 = vld [vmem:[#allocation5 + $0x2e0] sm:$0xf]
    %v252 = vld [vmem:[#allocation5 + $0x2e4] sm:$0xff]
    %v253 = vld [vmem:[#allocation5 + $0x2ec] sm:$0xff]
    %v254 = vld [vmem:[#allocation5 + $0x2f4] sm:$0xf]
    %v255 = vld [vmem:[#allocation5 + $0x2f8] sm:$0xff]
    %v256 = vld [vmem:[#allocation5 + $0x300] sm:$0xff]
    %v257 = vld [vmem:[#allocation5 + $0x308] sm:$0xf]
    %v258 = vld [vmem:[#allocation5 + $0x30c] sm:$0xff]
    %v259 = vld [vmem:[#allocation5 + $0x314] sm:$0xff]
    %v260 = vld [vmem:[#allocation5 + $0x31c] sm:$0xf]
    %v261 = vld [vmem:[#allocation5 + $0x320] sm:$0xff]
    %v262 = vld [vmem:[#allocation5 + $0x328] sm:$0xff]
    %v263 = vld [vmem:[#allocation5 + $0x330] sm:$0xf]
    %v264 = vld [vmem:[#allocation5 + $0x334] sm:$0xff]
    %v265 = vld [vmem:[#allocation5 + $0x33c] sm:$0xff]
    %v266 = vld [vmem:[#allocation5 + $0x344] sm:$0xf]
    %v267 = vld [vmem:[#allocation5 + $0x348] sm:$0xff]
    %v268 = vld [vmem:[#allocation5 + $0x350] sm:$0xff]
    %v269 = vld [vmem:[#allocation5 + $0x358] sm:$0xf]
    %v270 = vld [vmem:[#allocation5 + $0x35c] sm:$0xff]
    %v271 = vld [vmem:[#allocation5 + $0x364] sm:$0xff]
    %v272 = vld [vmem:[#allocation5 + $0x36c] sm:$0xf]
    %v273 = vld [vmem:[#allocation5 + $0x370] sm:$0xff]
    %v274 = vld [vmem:[#allocation5 + $0x378] sm:$0xff]
    %v275 = vld [vmem:[#allocation5 + $0x380] sm:$0xf]
    %v276 = vld [vmem:[#allocation5 + $0x384] sm:$0xff]
    %v277 = vld [vmem:[#allocation5 + $0x38c] sm:$0xff]
    %v278 = vld [vmem:[#allocation5 + $0x394] sm:$0xf]
    %v279 = vld [vmem:[#allocation5 + $0x398] sm:$0xff]
    %v280 = vld [vmem:[#allocation5 + $0x3a0] sm:$0xff]
    %v281 = vld [vmem:[#allocation5 + $0x3a8] sm:$0xf]
    %v282 = vld [vmem:[#allocation5 + $0x3ac] sm:$0xff]
    %v283 = vld [vmem:[#allocation5 + $0x3b4] sm:$0xff]
    %v284 = vld [vmem:[#allocation5 + $0x3bc] sm:$0xf]
    %v285 = vld [vmem:[#allocation5 + $0x3c0] sm:$0xff]
    %v286 = vld [vmem:[#allocation5 + $0x3c8] sm:$0xff]
    %v287 = vld [vmem:[#allocation5 + $0x3d0] sm:$0xf]
    %v288 = vld [vmem:[#allocation5 + $0x3d4] sm:$0xff]
    %v289 = vld [vmem:[#allocation5 + $0x3dc] sm:$0xff]
    %v290 = vld [vmem:[#allocation5 + $0x3e4] sm:$0xf]
    %v291 = vld [vmem:[#allocation5 + $0x3e8] sm:$0xff]
    %v292 = vld [vmem:[#allocation5 + $0x3f0] sm:$0xff]
    %v293 = vld [vmem:[#allocation5 + $0x3f8] sm:$0xf]
    %v294 = vld [vmem:[#allocation5 + $0x3fc] sm:$0xff]
    %v295 = vld [vmem:[#allocation5 + $0x404] sm:$0xff]
    %v296 = vld [vmem:[#allocation5 + $0x40c] sm:$0xf]
    %v297 = vld [vmem:[#allocation5 + $0x410] sm:$0xff]
    %v298 = vld [vmem:[#allocation5 + $0x418] sm:$0xff]
    %v299 = vld [vmem:[#allocation5 + $0x420] sm:$0xf]
    %v300 = vld [vmem:[#allocation5 + $0x424] sm:$0xff]
    %v301 = vld [vmem:[#allocation5 + $0x42c] sm:$0xff]
    %v302 = vld [vmem:[#allocation5 + $0x434] sm:$0xf]
    %v303 = vld [vmem:[#allocation5 + $0x438] sm:$0xff]
    %v304 = vld [vmem:[#allocation5 + $0x440] sm:$0xff]
    %v305 = vld [vmem:[#allocation5 + $0x448] sm:$0xf]
    %v306 = vld [vmem:[#allocation5 + $0x44c] sm:$0xff]
    %v307 = vld [vmem:[#allocation5 + $0x454] sm:$0xff]
    %v308 = vld [vmem:[#allocation5 + $0x45c] sm:$0xf]
    %v309 = vld [vmem:[#allocation5 + $0x460] sm:$0xff]
    %v310 = vld [vmem:[#allocation5 + $0x468] sm:$0xff]
    %v311 = vld [vmem:[#allocation5 + $0x470] sm:$0xf]
    %v312 = vld [vmem:[#allocation5 + $0x474] sm:$0xff]
    %v313 = vld [vmem:[#allocation5 + $0x47c] sm:$0xff]
    %v314 = vld [vmem:[#allocation5 + $0x484] sm:$0xf]
    %v315 = vld [vmem:[#allocation5 + $0x488] sm:$0xff]
    %v316 = vld [vmem:[#allocation5 + $0x490] sm:$0xff]
    %v317 = vld [vmem:[#allocation5 + $0x498] sm:$0xf]
    %v318 = vld [vmem:[#allocation5 + $0x49c] sm:$0xff]
    %v319 = vld [vmem:[#allocation5 + $0x4a4] sm:$0xff]
    %v320 = vld [vmem:[#allocation5 + $0x4ac] sm:$0xf]
    %v321 = vld [vmem:[#allocation5 + $0x4b0] sm:$0xff]
    %v322 = vld [vmem:[#allocation5 + $0x4b8] sm:$0xff]
    %v323 = vld [vmem:[#allocation5 + $0x4c0] sm:$0xf]
    %v324 = vld [vmem:[#allocation5 + $0x4c4] sm:$0xff]
    %v325 = vld [vmem:[#allocation5 + $0x4cc] sm:$0xff]
    %v326 = vld [vmem:[#allocation5 + $0x4d4] sm:$0xf]
    %v327 = vld [vmem:[#allocation5 + $0x4d8] sm:$0xff]
    %v328 = vld [vmem:[#allocation5 + $0x4e0] sm:$0xff]
    %v329 = vld [vmem:[#allocation5 + $0x4e8] sm:$0xf]
    %v330 = vld [vmem:[#allocation5 + $0x4ec] sm:$0xff]
    %v331 = vld [vmem:[#allocation5 + $0x4f4] sm:$0xff]
    %v332 = vld [vmem:[#allocation5 + $0x4fc] sm:$0xf]
    %v333 = vld [vmem:[#allocation5 + $0x500] sm:$0xff]
    %v334 = vld [vmem:[#allocation5 + $0x508] sm:$0xff]
    %v335 = vld [vmem:[#allocation5 + $0x510] sm:$0xf]
    %v336 = vld [vmem:[#allocation5 + $0x514] sm:$0xff]
    %v337 = vld [vmem:[#allocation5 + $0x51c] sm:$0xff]
    %v338 = vld [vmem:[#allocation5 + $0x524] sm:$0xf]
    %v339 = vld [vmem:[#allocation5 + $0x528] sm:$0xff]
    %v340 = vld [vmem:[#allocation5 + $0x530] sm:$0xff]
    %v341 = vld [vmem:[#allocation5 + $0x538] sm:$0xf]
    %v342 = vld [vmem:[#allocation5 + $0x53c] sm:$0xff]
    %v343 = vld [vmem:[#allocation5 + $0x544] sm:$0xff]
    %v344 = vld [vmem:[#allocation5 + $0x54c] sm:$0xf]
    %v345 = vld [vmem:[#allocation5 + $0x550] sm:$0xff]
    %v346 = vld [vmem:[#allocation5 + $0x558] sm:$0xff]
    %v347 = vld [vmem:[#allocation5 + $0x560] sm:$0xf]
    %v348 = vld [vmem:[#allocation5 + $0x564] sm:$0xff]
    %v349 = vld [vmem:[#allocation5 + $0x56c] sm:$0xff]
    %v350 = vld [vmem:[#allocation5 + $0x574] sm:$0xf]
    %v351 = vld [vmem:[#allocation5 + $0x578] sm:$0xff]
    %v352 = vld [vmem:[#allocation5 + $0x580] sm:$0xff]
    %v353 = vld [vmem:[#allocation5 + $0x588] sm:$0xf]
    %v354 = vld [vmem:[#allocation5 + $0x58c] sm:$0xff]
    %v355 = vld [vmem:[#allocation5 + $0x594] sm:$0xff]
    %v356 = vld [vmem:[#allocation5 + $0x59c] sm:$0xf]
    %v357 = vld [vmem:[#allocation5 + $0x5a0] sm:$0xff]
    %v358 = vld [vmem:[#allocation5 + $0x5a8] sm:$0xff]
    %v359 = vld [vmem:[#allocation5 + $0x5b0] sm:$0xf]
    %v360 = vld [vmem:[#allocation5 + $0x5b4] sm:$0xff]
    %v361 = vld [vmem:[#allocation5 + $0x5bc] sm:$0xff]
    %v362 = vld [vmem:[#allocation5 + $0x5c4] sm:$0xf]
    %v363 = vld [vmem:[#allocation5 + $0x5c8] sm:$0xff]
    %v364 = vld [vmem:[#allocation5 + $0x5d0] sm:$0xff]
    %v365 = vld [vmem:[#allocation5 + $0x5d8] sm:$0xf]
    %v366 = vld [vmem:[#allocation5 + $0x5dc] sm:$0xff]
    %v367 = vld [vmem:[#allocation5 + $0x5e4] sm:$0xff]
    %v368 = vld [vmem:[#allocation5 + $0x5ec] sm:$0xf]
    %v369 = vld [vmem:[#allocation5 + $0x5f0] sm:$0xff]
    %v370 = vld [vmem:[#allocation5 + $0x5f8] sm:$0xff]
    %v371 = vld [vmem:[#allocation5 + $0x600] sm:$0xf]
    %v372 = vld [vmem:[#allocation5 + $0x604] sm:$0xff]
    %v373 = vld [vmem:[#allocation5 + $0x60c] sm:$0xff]
    %v374 = vld [vmem:[#allocation5 + $0x614] sm:$0xf]
    %v375 = vld [vmem:[#allocation5 + $0x618] sm:$0xff]
    %v376 = vld [vmem:[#allocation5 + $0x620] sm:$0xff]
    %v377 = vld [vmem:[#allocation5 + $0x628] sm:$0xf]
    %v378 = vld [vmem:[#allocation5 + $0x62c] sm:$0xff]
    %v379 = vld [vmem:[#allocation5 + $0x634] sm:$0xff]
    %v380 = vld [vmem:[#allocation5 + $0x63c] sm:$0xf]
    %v381 = vld [vmem:[#allocation5 + $0x640] sm:$0xff]
    %v382 = vld [vmem:[#allocation5 + $0x648] sm:$0xff]
    %v383 = vld [vmem:[#allocation5 + $0x650] sm:$0xf]
    %v384 = vld [vmem:[#allocation5 + $0x654] sm:$0xff]
    %v385 = vld [vmem:[#allocation5 + $0x65c] sm:$0xff]
    %v386 = vld [vmem:[#allocation5 + $0x664] sm:$0xf]
    %v387 = vld [vmem:[#allocation5 + $0x668] sm:$0xff]
    %v388 = vld [vmem:[#allocation5 + $0x670] sm:$0xff]
    %v389 = vld [vmem:[#allocation5 + $0x678] sm:$0xf]
    %v390 = vld [vmem:[#allocation5 + $0x67c] sm:$0xff]
    %v391 = vld [vmem:[#allocation5 + $0x684] sm:$0xff]
    %v392 = vld [vmem:[#allocation5 + $0x68c] sm:$0xf]
    %v393 = vld [vmem:[#allocation5 + $0x690] sm:$0xff]
    %v394 = vld [vmem:[#allocation5 + $0x698] sm:$0xff]
    %v395 = vld [vmem:[#allocation5 + $0x6a0] sm:$0xf]
    %v396 = vld [vmem:[#allocation5 + $0x6a4] sm:$0xff]
    %v397 = vld [vmem:[#allocation5 + $0x6ac] sm:$0xff]
    %v398 = vld [vmem:[#allocation5 + $0x6b4] sm:$0xf]
    %v399 = vld [vmem:[#allocation5 + $0x6b8] sm:$0xff]
    %v400 = vld [vmem:[#allocation5 + $0x6c0] sm:$0xff]
    %v401 = vld [vmem:[#allocation5 + $0x6c8] sm:$0xf]
    %v402 = vld [vmem:[#allocation5 + $0x6cc] sm:$0xff]
    %v403 = vld [vmem:[#allocation5 + $0x6d4] sm:$0xff]
    %v404 = vld [vmem:[#allocation5 + $0x6dc] sm:$0xf]
    %v405 = vld [vmem:[#allocation5 + $0x6e0] sm:$0xff]
    %v406 = vld [vmem:[#allocation5 + $0x6e8] sm:$0xff]
    %v407 = vld [vmem:[#allocation5 + $0x6f0] sm:$0xf]
    %v408 = vld [vmem:[#allocation5 + $0x6f4] sm:$0xff]
    %v409 = vld [vmem:[#allocation5 + $0x6fc] sm:$0xff]
    %v410 = vld [vmem:[#allocation5 + $0x704] sm:$0xf]
    %v411 = vld [vmem:[#allocation5 + $0x708] sm:$0xff]
    %v412 = vld [vmem:[#allocation5 + $0x710] sm:$0xff]
    %v413 = vld [vmem:[#allocation5 + $0x718] sm:$0xf]
    %v414 = vld [vmem:[#allocation5 + $0x71c] sm:$0xff]
    %v415 = vld [vmem:[#allocation5 + $0x724] sm:$0xff]
    %v416 = vld [vmem:[#allocation5 + $0x72c] sm:$0xf]
    %v417 = vld [vmem:[#allocation5 + $0x730] sm:$0xff]
    %v418 = vld [vmem:[#allocation5 + $0x738] sm:$0xff]
    %v419 = vld [vmem:[#allocation5 + $0x740] sm:$0xf]
    %v420 = vld [vmem:[#allocation5 + $0x744] sm:$0xff]
    %v421 = vld [vmem:[#allocation5 + $0x74c] sm:$0xff]
    %v422 = vld [vmem:[#allocation5 + $0x754] sm:$0xf]
    %v423 = vld [vmem:[#allocation5 + $0x758] sm:$0xff]
    %v424 = vld [vmem:[#allocation5 + $0x760] sm:$0xff]
    %v425 = vld [vmem:[#allocation5 + $0x768] sm:$0xf]
    %v426 = vld [vmem:[#allocation5 + $0x76c] sm:$0xff]
    %v427 = vld [vmem:[#allocation5 + $0x774] sm:$0xff]
    %v428 = vld [vmem:[#allocation5 + $0x77c] sm:$0xf]
    %v429 = vld [vmem:[#allocation5 + $0x780] sm:$0xff]
    %v430 = vld [vmem:[#allocation5 + $0x788] sm:$0xff]
    %v431 = vld [vmem:[#allocation5 + $0x790] sm:$0xf]
    %v432 = vld [vmem:[#allocation5 + $0x794] sm:$0xff]
    %v433 = vld [vmem:[#allocation5 + $0x79c] sm:$0xff]
    %v434 = vld [vmem:[#allocation5 + $0x7a4] sm:$0xf]
    %v435 = vld [vmem:[#allocation7] sm:$0x1f]
    %v437 = vlaneseq
    %v438 = vshrl.u32 %v437, 7
    %v439 = vsub.s32 0, %v438
    %v440 = vrot.slane %v435, %v439
    %v441 = vlaneseq
    %v442 = vshrl.u32 %v441, 7
    %v443 = vsub.s32 1, %v442
    %v444 = vrot.slane %v435, %v443
    %v445 = vlaneseq
    %v446 = vshrl.u32 %v445, 7
    %v447 = vsub.s32 2, %v446
    %v448 = vrot.slane %v435, %v447
    %v449 = vlaneseq
    %v450 = vshrl.u32 %v449, 7
    %v451 = vsub.s32 3, %v450
    %v452 = vrot.slane %v435, %v451
    %v453 = vlaneseq
    %v454 = vshrl.u32 %v453, 7
    %v455 = vsub.s32 4, %v454
    %v456 = vrot.slane %v435, %v455
    %v470 = vunpack.c.l.b16 %v133
    %v471 = vunpack.c.h.b16 %v133
    %v472 = vunpack.c.l.b16 %v134
    %v473 = vunpack.c.h.b16 %v134
    %v474 = vunpack.c.l.b16 %v135
    %v475 = vunpack.c.h.b16 %v135
    %v476 = vunpack.c.l.b16 %v136
    %v477 = vunpack.c.l.b16 %v137
    %v478 = vunpack.c.h.b16 %v137
    %v479 = vunpack.c.l.b16 %v138
    %v480 = vunpack.c.h.b16 %v138
    %v481 = vunpack.c.l.b16 %v139
    %v482 = vunpack.c.h.b16 %v139
    %v483 = vunpack.c.l.b16 %v140
    %v484 = vpack.c.b16 %v477, %v470
    %v485 = vpack.c.b16 %v478, %v471
    %v486 = vpack.c.b16 %v479, %v472
    %v487 = vpack.c.b16 %v480, %v473
    %v488 = vpack.c.b16 %v481, %v474
    %v489 = vpack.c.b16 %v482, %v475
    %v490 = vpack.c.b16 %v483, %v476
    %v791 = vunpack.c.l.b16 %v141
    %v792 = vunpack.c.h.b16 %v141
    %v793 = vunpack.c.l.b16 %v142
    %v794 = vunpack.c.h.b16 %v142
    %v795 = vunpack.c.l.b16 %v143
    %v796 = vunpack.c.l.b16 %v144
    %v797 = vunpack.c.h.b16 %v144
    %v798 = vunpack.c.l.b16 %v145
    %v799 = vunpack.c.h.b16 %v145
    %v800 = vunpack.c.l.b16 %v146
    %v801 = vunpack.c.l.b16 %v147
    %v802 = vunpack.c.h.b16 %v147
    %v803 = vunpack.c.l.b16 %v148
    %v804 = vunpack.c.h.b16 %v148
    %v805 = vunpack.c.l.b16 %v149
    %v806 = vunpack.c.l.b16 %v150
    %v807 = vunpack.c.h.b16 %v150
    %v808 = vunpack.c.l.b16 %v151
    %v809 = vunpack.c.h.b16 %v151
    %v810 = vunpack.c.l.b16 %v152
    %v811 = vunpack.c.l.b16 %v153
    %v812 = vunpack.c.h.b16 %v153
    %v813 = vunpack.c.l.b16 %v154
    %v814 = vunpack.c.h.b16 %v154
    %v815 = vunpack.c.l.b16 %v155
    %v816 = vunpack.c.l.b16 %v156
    %v817 = vunpack.c.h.b16 %v156
    %v818 = vunpack.c.l.b16 %v157
    %v819 = vunpack.c.h.b16 %v157
    %v820 = vunpack.c.l.b16 %v158
    %v821 = vunpack.c.l.b16 %v159
    %v822 = vunpack.c.h.b16 %v159
    %v823 = vunpack.c.l.b16 %v160
    %v824 = vunpack.c.h.b16 %v160
    %v825 = vunpack.c.l.b16 %v161
    %v826 = vunpack.c.l.b16 %v162
    %v827 = vunpack.c.h.b16 %v162
    %v828 = vunpack.c.l.b16 %v163
    %v829 = vunpack.c.h.b16 %v163
    %v830 = vunpack.c.l.b16 %v164
    %v831 = vunpack.c.l.b16 %v165
    %v832 = vunpack.c.h.b16 %v165
    %v833 = vunpack.c.l.b16 %v166
    %v834 = vunpack.c.h.b16 %v166
    %v835 = vunpack.c.l.b16 %v167
    %v836 = vunpack.c.l.b16 %v168
    %v837 = vunpack.c.h.b16 %v168
    %v838 = vunpack.c.l.b16 %v169
    %v839 = vunpack.c.h.b16 %v169
    %v840 = vunpack.c.l.b16 %v170
    %v841 = vunpack.c.l.b16 %v171
    %v842 = vunpack.c.h.b16 %v171
    %v843 = vunpack.c.l.b16 %v172
    %v844 = vunpack.c.h.b16 %v172
    %v845 = vunpack.c.l.b16 %v173
    %v846 = vunpack.c.l.b16 %v174
    %v847 = vunpack.c.h.b16 %v174
    %v848 = vunpack.c.l.b16 %v175
    %v849 = vunpack.c.h.b16 %v175
    %v850 = vunpack.c.l.b16 %v176
    %v851 = vunpack.c.l.b16 %v177
    %v852 = vunpack.c.h.b16 %v177
    %v853 = vunpack.c.l.b16 %v178
    %v854 = vunpack.c.h.b16 %v178
    %v855 = vunpack.c.l.b16 %v179
    %v856 = vunpack.c.l.b16 %v180
    %v857 = vunpack.c.h.b16 %v180
    %v858 = vunpack.c.l.b16 %v181
    %v859 = vunpack.c.h.b16 %v181
    %v860 = vunpack.c.l.b16 %v182
    %v861 = vunpack.c.l.b16 %v183
    %v862 = vunpack.c.h.b16 %v183
    %v863 = vunpack.c.l.b16 %v184
    %v864 = vunpack.c.h.b16 %v184
    %v865 = vunpack.c.l.b16 %v185
    %v866 = vunpack.c.l.b16 %v186
    %v867 = vunpack.c.h.b16 %v186
    %v868 = vunpack.c.l.b16 %v187
    %v869 = vunpack.c.h.b16 %v187
    %v870 = vunpack.c.l.b16 %v188
    %v871 = vunpack.c.l.b16 %v189
    %v872 = vunpack.c.h.b16 %v189
    %v873 = vunpack.c.l.b16 %v190
    %v874 = vunpack.c.h.b16 %v190
    %v875 = vunpack.c.l.b16 %v191
    %v876 = vunpack.c.l.b16 %v192
    %v877 = vunpack.c.h.b16 %v192
    %v878 = vunpack.c.l.b16 %v193
    %v879 = vunpack.c.h.b16 %v193
    %v880 = vunpack.c.l.b16 %v194
    %v881 = vunpack.c.l.b16 %v195
    %v882 = vunpack.c.h.b16 %v195
    %v883 = vunpack.c.l.b16 %v196
    %v884 = vunpack.c.h.b16 %v196
    %v885 = vunpack.c.l.b16 %v197
    %v886 = vunpack.c.l.b16 %v198
    %v887 = vunpack.c.h.b16 %v198
    %v888 = vunpack.c.l.b16 %v199
    %v889 = vunpack.c.h.b16 %v199
    %v890 = vunpack.c.l.b16 %v200
    %v891 = vunpack.c.l.b16 %v201
    %v892 = vunpack.c.h.b16 %v201
    %v893 = vunpack.c.l.b16 %v202
    %v894 = vunpack.c.h.b16 %v202
    %v895 = vunpack.c.l.b16 %v203
    %v896 = vunpack.c.l.b16 %v204
    %v897 = vunpack.c.h.b16 %v204
    %v898 = vunpack.c.l.b16 %v205
    %v899 = vunpack.c.h.b16 %v205
    %v900 = vunpack.c.l.b16 %v206
    %v901 = vunpack.c.l.b16 %v207
    %v902 = vunpack.c.h.b16 %v207
    %v903 = vunpack.c.l.b16 %v208
    %v904 = vunpack.c.h.b16 %v208
    %v905 = vunpack.c.l.b16 %v209
    %v906 = vunpack.c.l.b16 %v210
    %v907 = vunpack.c.h.b16 %v210
    %v908 = vunpack.c.l.b16 %v211
    %v909 = vunpack.c.h.b16 %v211
    %v910 = vunpack.c.l.b16 %v212
    %v911 = vunpack.c.l.b16 %v213
    %v912 = vunpack.c.h.b16 %v213
    %v913 = vunpack.c.l.b16 %v214
    %v914 = vunpack.c.h.b16 %v214
    %v915 = vunpack.c.l.b16 %v215
    %v916 = vunpack.c.l.b16 %v216
    %v917 = vunpack.c.h.b16 %v216
    %v918 = vunpack.c.l.b16 %v217
    %v919 = vunpack.c.h.b16 %v217
    %v920 = vunpack.c.l.b16 %v218
    %v921 = vunpack.c.l.b16 %v219
    %v922 = vunpack.c.h.b16 %v219
    %v923 = vunpack.c.l.b16 %v220
    %v924 = vunpack.c.h.b16 %v220
    %v925 = vunpack.c.l.b16 %v221
    %v926 = vunpack.c.l.b16 %v222
    %v927 = vunpack.c.h.b16 %v222
    %v928 = vunpack.c.l.b16 %v223
    %v929 = vunpack.c.h.b16 %v223
    %v930 = vunpack.c.l.b16 %v224
    %v931 = vunpack.c.l.b16 %v225
    %v932 = vunpack.c.h.b16 %v225
    %v933 = vunpack.c.l.b16 %v226
    %v934 = vunpack.c.h.b16 %v226
    %v935 = vunpack.c.l.b16 %v227
    %v936 = vunpack.c.l.b16 %v228
    %v937 = vunpack.c.h.b16 %v228
    %v938 = vunpack.c.l.b16 %v229
    %v939 = vunpack.c.h.b16 %v229
    %v940 = vunpack.c.l.b16 %v230
    %v941 = vunpack.c.l.b16 %v231
    %v942 = vunpack.c.h.b16 %v231
    %v943 = vunpack.c.l.b16 %v232
    %v944 = vunpack.c.h.b16 %v232
    %v945 = vunpack.c.l.b16 %v233
    %v946 = vunpack.c.l.b16 %v234
    %v947 = vunpack.c.h.b16 %v234
    %v948 = vunpack.c.l.b16 %v235
    %v949 = vunpack.c.h.b16 %v235
    %v950 = vunpack.c.l.b16 %v236
    %v951 = vunpack.c.l.b16 %v237
    %v952 = vunpack.c.h.b16 %v237
    %v953 = vunpack.c.l.b16 %v238
    %v954 = vunpack.c.h.b16 %v238
    %v955 = vunpack.c.l.b16 %v239
    %v956 = vunpack.c.l.b16 %v240
    %v957 = vunpack.c.h.b16 %v240
    %v958 = vunpack.c.l.b16 %v241
    %v959 = vunpack.c.h.b16 %v241
    %v960 = vunpack.c.l.b16 %v242
    %v961 = vunpack.c.l.b16 %v243
    %v962 = vunpack.c.h.b16 %v243
    %v963 = vunpack.c.l.b16 %v244
    %v964 = vunpack.c.h.b16 %v244
    %v965 = vunpack.c.l.b16 %v245
    %v966 = vunpack.c.l.b16 %v246
    %v967 = vunpack.c.h.b16 %v246
    %v968 = vunpack.c.l.b16 %v247
    %v969 = vunpack.c.h.b16 %v247
    %v970 = vunpack.c.l.b16 %v248
    %v971 = vunpack.c.l.b16 %v249
    %v972 = vunpack.c.h.b16 %v249
    %v973 = vunpack.c.l.b16 %v250
    %v974 = vunpack.c.h.b16 %v250
    %v975 = vunpack.c.l.b16 %v251
    %v976 = vunpack.c.l.b16 %v252
    %v977 = vunpack.c.h.b16 %v252
    %v978 = vunpack.c.l.b16 %v253
    %v979 = vunpack.c.h.b16 %v253
    %v980 = vunpack.c.l.b16 %v254
    %v981 = vunpack.c.l.b16 %v255
    %v982 = vunpack.c.h.b16 %v255
    %v983 = vunpack.c.l.b16 %v256
    %v984 = vunpack.c.h.b16 %v256
    %v985 = vunpack.c.l.b16 %v257
    %v986 = vunpack.c.l.b16 %v258
    %v987 = vunpack.c.h.b16 %v258
    %v988 = vunpack.c.l.b16 %v259
    %v989 = vunpack.c.h.b16 %v259
    %v990 = vunpack.c.l.b16 %v260
    %v991 = vunpack.c.l.b16 %v261
    %v992 = vunpack.c.h.b16 %v261
    %v993 = vunpack.c.l.b16 %v262
    %v994 = vunpack.c.h.b16 %v262
    %v995 = vunpack.c.l.b16 %v263
    %v996 = vunpack.c.l.b16 %v264
    %v997 = vunpack.c.h.b16 %v264
    %v998 = vunpack.c.l.b16 %v265
    %v999 = vunpack.c.h.b16 %v265
    %v1000 = vunpack.c.l.b16 %v266
    %v1001 = vunpack.c.l.b16 %v267
    %v1002 = vunpack.c.h.b16 %v267
    %v1003 = vunpack.c.l.b16 %v268
    %v1004 = vunpack.c.h.b16 %v268
    %v1005 = vunpack.c.l.b16 %v269
    %v1006 = vunpack.c.l.b16 %v270
    %v1007 = vunpack.c.h.b16 %v270
    %v1008 = vunpack.c.l.b16 %v271
    %v1009 = vunpack.c.h.b16 %v271
    %v1010 = vunpack.c.l.b16 %v272
    %v1011 = vunpack.c.l.b16 %v273
    %v1012 = vunpack.c.h.b16 %v273
    %v1013 = vunpack.c.l.b16 %v274
    %v1014 = vunpack.c.h.b16 %v274
    %v1015 = vunpack.c.l.b16 %v275
    %v1016 = vunpack.c.l.b16 %v276
    %v1017 = vunpack.c.h.b16 %v276
    %v1018 = vunpack.c.l.b16 %v277
    %v1019 = vunpack.c.h.b16 %v277
    %v1020 = vunpack.c.l.b16 %v278
    %v1021 = vunpack.c.l.b16 %v279
    %v1022 = vunpack.c.h.b16 %v279
    %v1023 = vunpack.c.l.b16 %v280
    %v1024 = vunpack.c.h.b16 %v280
    %v1025 = vunpack.c.l.b16 %v281
    %v1026 = vunpack.c.l.b16 %v282
    %v1027 = vunpack.c.h.b16 %v282
    %v1028 = vunpack.c.l.b16 %v283
    %v1029 = vunpack.c.h.b16 %v283
    %v1030 = vunpack.c.l.b16 %v284
    %v1031 = vunpack.c.l.b16 %v285
    %v1032 = vunpack.c.h.b16 %v285
    %v1033 = vunpack.c.l.b16 %v286
    %v1034 = vunpack.c.h.b16 %v286
    %v1035 = vunpack.c.l.b16 %v287
    %v1036 = vunpack.c.l.b16 %v288
    %v1037 = vunpack.c.h.b16 %v288
    %v1038 = vunpack.c.l.b16 %v289
    %v1039 = vunpack.c.h.b16 %v289
    %v1040 = vunpack.c.l.b16 %v290
    %v1041 = vunpack.c.l.b16 %v291
    %v1042 = vunpack.c.h.b16 %v291
    %v1043 = vunpack.c.l.b16 %v292
    %v1044 = vunpack.c.h.b16 %v292
    %v1045 = vunpack.c.l.b16 %v293
    %v1046 = vunpack.c.l.b16 %v294
    %v1047 = vunpack.c.h.b16 %v294
    %v1048 = vunpack.c.l.b16 %v295
    %v1049 = vunpack.c.h.b16 %v295
    %v1050 = vunpack.c.l.b16 %v296
    %v1051 = vunpack.c.l.b16 %v297
    %v1052 = vunpack.c.h.b16 %v297
    %v1053 = vunpack.c.l.b16 %v298
    %v1054 = vunpack.c.h.b16 %v298
    %v1055 = vunpack.c.l.b16 %v299
    %v1056 = vunpack.c.l.b16 %v300
    %v1057 = vunpack.c.h.b16 %v300
    %v1058 = vunpack.c.l.b16 %v301
    %v1059 = vunpack.c.h.b16 %v301
    %v1060 = vunpack.c.l.b16 %v302
    %v1061 = vunpack.c.l.b16 %v303
    %v1062 = vunpack.c.h.b16 %v303
    %v1063 = vunpack.c.l.b16 %v304
    %v1064 = vunpack.c.h.b16 %v304
    %v1065 = vunpack.c.l.b16 %v305
    %v1066 = vunpack.c.l.b16 %v306
    %v1067 = vunpack.c.h.b16 %v306
    %v1068 = vunpack.c.l.b16 %v307
    %v1069 = vunpack.c.h.b16 %v307
    %v1070 = vunpack.c.l.b16 %v308
    %v1071 = vunpack.c.l.b16 %v309
    %v1072 = vunpack.c.h.b16 %v309
    %v1073 = vunpack.c.l.b16 %v310
    %v1074 = vunpack.c.h.b16 %v310
    %v1075 = vunpack.c.l.b16 %v311
    %v1076 = vunpack.c.l.b16 %v312
    %v1077 = vunpack.c.h.b16 %v312
    %v1078 = vunpack.c.l.b16 %v313
    %v1079 = vunpack.c.h.b16 %v313
    %v1080 = vunpack.c.l.b16 %v314
    %v1081 = vunpack.c.l.b16 %v315
    %v1082 = vunpack.c.h.b16 %v315
    %v1083 = vunpack.c.l.b16 %v316
    %v1084 = vunpack.c.h.b16 %v316
    %v1085 = vunpack.c.l.b16 %v317
    %v1086 = vunpack.c.l.b16 %v318
    %v1087 = vunpack.c.h.b16 %v318
    %v1088 = vunpack.c.l.b16 %v319
    %v1089 = vunpack.c.h.b16 %v319
    %v1090 = vunpack.c.l.b16 %v320
    %v1091 = vunpack.c.l.b16 %v321
    %v1092 = vunpack.c.h.b16 %v321
    %v1093 = vunpack.c.l.b16 %v322
    %v1094 = vunpack.c.h.b16 %v322
    %v1095 = vunpack.c.l.b16 %v323
    %v1096 = vunpack.c.l.b16 %v324
    %v1097 = vunpack.c.h.b16 %v324
    %v1098 = vunpack.c.l.b16 %v325
    %v1099 = vunpack.c.h.b16 %v325
    %v1100 = vunpack.c.l.b16 %v326
    %v1101 = vunpack.c.l.b16 %v327
    %v1102 = vunpack.c.h.b16 %v327
    %v1103 = vunpack.c.l.b16 %v328
    %v1104 = vunpack.c.h.b16 %v328
    %v1105 = vunpack.c.l.b16 %v329
    %v1106 = vunpack.c.l.b16 %v330
    %v1107 = vunpack.c.h.b16 %v330
    %v1108 = vunpack.c.l.b16 %v331
    %v1109 = vunpack.c.h.b16 %v331
    %v1110 = vunpack.c.l.b16 %v332
    %v1111 = vunpack.c.l.b16 %v333
    %v1112 = vunpack.c.h.b16 %v333
    %v1113 = vunpack.c.l.b16 %v334
    %v1114 = vunpack.c.h.b16 %v334
    %v1115 = vunpack.c.l.b16 %v335
    %v1116 = vunpack.c.l.b16 %v336
    %v1117 = vunpack.c.h.b16 %v336
    %v1118 = vunpack.c.l.b16 %v337
    %v1119 = vunpack.c.h.b16 %v337
    %v1120 = vunpack.c.l.b16 %v338
    %v1121 = vunpack.c.l.b16 %v339
    %v1122 = vunpack.c.h.b16 %v339
    %v1123 = vunpack.c.l.b16 %v340
    %v1124 = vunpack.c.h.b16 %v340
    %v1125 = vunpack.c.l.b16 %v341
    %v1126 = vunpack.c.l.b16 %v342
    %v1127 = vunpack.c.h.b16 %v342
    %v1128 = vunpack.c.l.b16 %v343
    %v1129 = vunpack.c.h.b16 %v343
    %v1130 = vunpack.c.l.b16 %v344
    %v1131 = vunpack.c.l.b16 %v345
    %v1132 = vunpack.c.h.b16 %v345
    %v1133 = vunpack.c.l.b16 %v346
    %v1134 = vunpack.c.h.b16 %v346
    %v1135 = vunpack.c.l.b16 %v347
    %v1136 = vunpack.c.l.b16 %v348
    %v1137 = vunpack.c.h.b16 %v348
    %v1138 = vunpack.c.l.b16 %v349
    %v1139 = vunpack.c.h.b16 %v349
    %v1140 = vunpack.c.l.b16 %v350
    %v1141 = vunpack.c.l.b16 %v351
    %v1142 = vunpack.c.h.b16 %v351
    %v1143 = vunpack.c.l.b16 %v352
    %v1144 = vunpack.c.h.b16 %v352
    %v1145 = vunpack.c.l.b16 %v353
    %v1146 = vunpack.c.l.b16 %v354
    %v1147 = vunpack.c.h.b16 %v354
    %v1148 = vunpack.c.l.b16 %v355
    %v1149 = vunpack.c.h.b16 %v355
    %v1150 = vunpack.c.l.b16 %v356
    %v1151 = vunpack.c.l.b16 %v357
    %v1152 = vunpack.c.h.b16 %v357
    %v1153 = vunpack.c.l.b16 %v358
    %v1154 = vunpack.c.h.b16 %v358
    %v1155 = vunpack.c.l.b16 %v359
    %v1156 = vunpack.c.l.b16 %v360
    %v1157 = vunpack.c.h.b16 %v360
    %v1158 = vunpack.c.l.b16 %v361
    %v1159 = vunpack.c.h.b16 %v361
    %v1160 = vunpack.c.l.b16 %v362
    %v1161 = vunpack.c.l.b16 %v363
    %v1162 = vunpack.c.h.b16 %v363
    %v1163 = vunpack.c.l.b16 %v364
    %v1164 = vunpack.c.h.b16 %v364
    %v1165 = vunpack.c.l.b16 %v365
    %v1166 = vunpack.c.l.b16 %v366
    %v1167 = vunpack.c.h.b16 %v366
    %v1168 = vunpack.c.l.b16 %v367
    %v1169 = vunpack.c.h.b16 %v367
    %v1170 = vunpack.c.l.b16 %v368
    %v1171 = vunpack.c.l.b16 %v369
    %v1172 = vunpack.c.h.b16 %v369
    %v1173 = vunpack.c.l.b16 %v370
    %v1174 = vunpack.c.h.b16 %v370
    %v1175 = vunpack.c.l.b16 %v371
    %v1176 = vunpack.c.l.b16 %v372
    %v1177 = vunpack.c.h.b16 %v372
    %v1178 = vunpack.c.l.b16 %v373
    %v1179 = vunpack.c.h.b16 %v373
    %v1180 = vunpack.c.l.b16 %v374
    %v1181 = vunpack.c.l.b16 %v375
    %v1182 = vunpack.c.h.b16 %v375
    %v1183 = vunpack.c.l.b16 %v376
    %v1184 = vunpack.c.h.b16 %v376
    %v1185 = vunpack.c.l.b16 %v377
    %v1186 = vunpack.c.l.b16 %v378
    %v1187 = vunpack.c.h.b16 %v378
    %v1188 = vunpack.c.l.b16 %v379
    %v1189 = vunpack.c.h.b16 %v379
    %v1190 = vunpack.c.l.b16 %v380
    %v1191 = vunpack.c.l.b16 %v381
    %v1192 = vunpack.c.h.b16 %v381
    %v1193 = vunpack.c.l.b16 %v382
    %v1194 = vunpack.c.h.b16 %v382
    %v1195 = vunpack.c.l.b16 %v383
    %v1196 = vunpack.c.l.b16 %v384
    %v1197 = vunpack.c.h.b16 %v384
    %v1198 = vunpack.c.l.b16 %v385
    %v1199 = vunpack.c.h.b16 %v385
    %v1200 = vunpack.c.l.b16 %v386
    %v1201 = vunpack.c.l.b16 %v387
    %v1202 = vunpack.c.h.b16 %v387
    %v1203 = vunpack.c.l.b16 %v388
    %v1204 = vunpack.c.h.b16 %v388
    %v1205 = vunpack.c.l.b16 %v389
    %v1206 = vunpack.c.l.b16 %v390
    %v1207 = vunpack.c.h.b16 %v390
    %v1208 = vunpack.c.l.b16 %v391
    %v1209 = vunpack.c.h.b16 %v391
    %v1210 = vunpack.c.l.b16 %v392
    %v1211 = vunpack.c.l.b16 %v393
    %v1212 = vunpack.c.h.b16 %v393
    %v1213 = vunpack.c.l.b16 %v394
    %v1214 = vunpack.c.h.b16 %v394
    %v1215 = vunpack.c.l.b16 %v395
    %v1216 = vunpack.c.l.b16 %v396
    %v1217 = vunpack.c.h.b16 %v396
    %v1218 = vunpack.c.l.b16 %v397
    %v1219 = vunpack.c.h.b16 %v397
    %v1220 = vunpack.c.l.b16 %v398
    %v1221 = vunpack.c.l.b16 %v399
    %v1222 = vunpack.c.h.b16 %v399
    %v1223 = vunpack.c.l.b16 %v400
    %v1224 = vunpack.c.h.b16 %v400
    %v1225 = vunpack.c.l.b16 %v401
    %v1226 = vunpack.c.l.b16 %v402
    %v1227 = vunpack.c.h.b16 %v402
    %v1228 = vunpack.c.l.b16 %v403
    %v1229 = vunpack.c.h.b16 %v403
    %v1230 = vunpack.c.l.b16 %v404
    %v1231 = vunpack.c.l.b16 %v405
    %v1232 = vunpack.c.h.b16 %v405
    %v1233 = vunpack.c.l.b16 %v406
    %v1234 = vunpack.c.h.b16 %v406
    %v1235 = vunpack.c.l.b16 %v407
    %v1236 = vunpack.c.l.b16 %v408
    %v1237 = vunpack.c.h.b16 %v408
    %v1238 = vunpack.c.l.b16 %v409
    %v1239 = vunpack.c.h.b16 %v409
    %v1240 = vunpack.c.l.b16 %v410
    %v1241 = vunpack.c.l.b16 %v411
    %v1242 = vunpack.c.h.b16 %v411
    %v1243 = vunpack.c.l.b16 %v412
    %v1244 = vunpack.c.h.b16 %v412
    %v1245 = vunpack.c.l.b16 %v413
    %v1246 = vunpack.c.l.b16 %v414
    %v1247 = vunpack.c.h.b16 %v414
    %v1248 = vunpack.c.l.b16 %v415
    %v1249 = vunpack.c.h.b16 %v415
    %v1250 = vunpack.c.l.b16 %v416
    %v1251 = vunpack.c.l.b16 %v417
    %v1252 = vunpack.c.h.b16 %v417
    %v1253 = vunpack.c.l.b16 %v418
    %v1254 = vunpack.c.h.b16 %v418
    %v1255 = vunpack.c.l.b16 %v419
    %v1256 = vunpack.c.l.b16 %v420
    %v1257 = vunpack.c.h.b16 %v420
    %v1258 = vunpack.c.l.b16 %v421
    %v1259 = vunpack.c.h.b16 %v421
    %v1260 = vunpack.c.l.b16 %v422
    %v1261 = vunpack.c.l.b16 %v423
    %v1262 = vunpack.c.h.b16 %v423
    %v1263 = vunpack.c.l.b16 %v424
    %v1264 = vunpack.c.h.b16 %v424
    %v1265 = vunpack.c.l.b16 %v425
    %v1266 = vunpack.c.l.b16 %v426
    %v1267 = vunpack.c.h.b16 %v426
    %v1268 = vunpack.c.l.b16 %v427
    %v1269 = vunpack.c.h.b16 %v427
    %v1270 = vunpack.c.l.b16 %v428
    %v1271 = vunpack.c.l.b16 %v429
    %v1272 = vunpack.c.h.b16 %v429
    %v1273 = vunpack.c.l.b16 %v430
    %v1274 = vunpack.c.h.b16 %v430
    %v1275 = vunpack.c.l.b16 %v431
    %v1276 = vunpack.c.l.b16 %v432
    %v1277 = vunpack.c.h.b16 %v432
    %v1278 = vunpack.c.l.b16 %v433
    %v1279 = vunpack.c.h.b16 %v433
    %v1280 = vunpack.c.l.b16 %v434
    %v1281 = vpack.c.b16 %v796, %v791
    %v1282 = vpack.c.b16 %v797, %v792
    %v1283 = vpack.c.b16 %v798, %v793
    %v1284 = vpack.c.b16 %v799, %v794
    %v1285 = vpack.c.b16 %v800, %v795
    %v1286 = vpack.c.b16 %v806, %v801
    %v1287 = vpack.c.b16 %v807, %v802
    %v1288 = vpack.c.b16 %v808, %v803
    %v1289 = vpack.c.b16 %v809, %v804
    %v1290 = vpack.c.b16 %v810, %v805
    %v1291 = vpack.c.b16 %v816, %v811
    %v1292 = vpack.c.b16 %v817, %v812
    %v1293 = vpack.c.b16 %v818, %v813
    %v1294 = vpack.c.b16 %v819, %v814
    %v1295 = vpack.c.b16 %v820, %v815
    %v1296 = vpack.c.b16 %v826, %v821
    %v1297 = vpack.c.b16 %v827, %v822
    %v1298 = vpack.c.b16 %v828, %v823
    %v1299 = vpack.c.b16 %v829, %v824
    %v1300 = vpack.c.b16 %v830, %v825
    %v1301 = vpack.c.b16 %v836, %v831
    %v1302 = vpack.c.b16 %v837, %v832
    %v1303 = vpack.c.b16 %v838, %v833
    %v1304 = vpack.c.b16 %v839, %v834
    %v1305 = vpack.c.b16 %v840, %v835
    %v1306 = vpack.c.b16 %v846, %v841
    %v1307 = vpack.c.b16 %v847, %v842
    %v1308 = vpack.c.b16 %v848, %v843
    %v1309 = vpack.c.b16 %v849, %v844
    %v1310 = vpack.c.b16 %v850, %v845
    %v1311 = vpack.c.b16 %v856, %v851
    %v1312 = vpack.c.b16 %v857, %v852
    %v1313 = vpack.c.b16 %v858, %v853
    %v1314 = vpack.c.b16 %v859, %v854
    %v1315 = vpack.c.b16 %v860, %v855
    %v1316 = vpack.c.b16 %v866, %v861
    %v1317 = vpack.c.b16 %v867, %v862
    %v1318 = vpack.c.b16 %v868, %v863
    %v1319 = vpack.c.b16 %v869, %v864
    %v1320 = vpack.c.b16 %v870, %v865
    %v1321 = vpack.c.b16 %v876, %v871
    %v1322 = vpack.c.b16 %v877, %v872
    %v1323 = vpack.c.b16 %v878, %v873
    %v1324 = vpack.c.b16 %v879, %v874
    %v1325 = vpack.c.b16 %v880, %v875
    %v1326 = vpack.c.b16 %v886, %v881
    %v1327 = vpack.c.b16 %v887, %v882
    %v1328 = vpack.c.b16 %v888, %v883
    %v1329 = vpack.c.b16 %v889, %v884
    %v1330 = vpack.c.b16 %v890, %v885
    %v1331 = vpack.c.b16 %v896, %v891
    %v1332 = vpack.c.b16 %v897, %v892
    %v1333 = vpack.c.b16 %v898, %v893
    %v1334 = vpack.c.b16 %v899, %v894
    %v1335 = vpack.c.b16 %v900, %v895
    %v1336 = vpack.c.b16 %v906, %v901
    %v1337 = vpack.c.b16 %v907, %v902
    %v1338 = vpack.c.b16 %v908, %v903
    %v1339 = vpack.c.b16 %v909, %v904
    %v1340 = vpack.c.b16 %v910, %v905
    %v1341 = vpack.c.b16 %v916, %v911
    %v1342 = vpack.c.b16 %v917, %v912
    %v1343 = vpack.c.b16 %v918, %v913
    %v1344 = vpack.c.b16 %v919, %v914
    %v1345 = vpack.c.b16 %v920, %v915
    %v1346 = vpack.c.b16 %v926, %v921
    %v1347 = vpack.c.b16 %v927, %v922
    %v1348 = vpack.c.b16 %v928, %v923
    %v1349 = vpack.c.b16 %v929, %v924
    %v1350 = vpack.c.b16 %v930, %v925
    %v1351 = vpack.c.b16 %v936, %v931
    %v1352 = vpack.c.b16 %v937, %v932
    %v1353 = vpack.c.b16 %v938, %v933
    %v1354 = vpack.c.b16 %v939, %v934
    %v1355 = vpack.c.b16 %v940, %v935
    %v1356 = vpack.c.b16 %v946, %v941
    %v1357 = vpack.c.b16 %v947, %v942
    %v1358 = vpack.c.b16 %v948, %v943
    %v1359 = vpack.c.b16 %v949, %v944
    %v1360 = vpack.c.b16 %v950, %v945
    %v1361 = vpack.c.b16 %v956, %v951
    %v1362 = vpack.c.b16 %v957, %v952
    %v1363 = vpack.c.b16 %v958, %v953
    %v1364 = vpack.c.b16 %v959, %v954
    %v1365 = vpack.c.b16 %v960, %v955
    %v1366 = vpack.c.b16 %v966, %v961
    %v1367 = vpack.c.b16 %v967, %v962
    %v1368 = vpack.c.b16 %v968, %v963
    %v1369 = vpack.c.b16 %v969, %v964
    %v1370 = vpack.c.b16 %v970, %v965
    %v1371 = vpack.c.b16 %v976, %v971
    %v1372 = vpack.c.b16 %v977, %v972
    %v1373 = vpack.c.b16 %v978, %v973
    %v1374 = vpack.c.b16 %v979, %v974
    %v1375 = vpack.c.b16 %v980, %v975
    %v1376 = vpack.c.b16 %v986, %v981
    %v1377 = vpack.c.b16 %v987, %v982
    %v1378 = vpack.c.b16 %v988, %v983
    %v1379 = vpack.c.b16 %v989, %v984
    %v1380 = vpack.c.b16 %v990, %v985
    %v1381 = vpack.c.b16 %v996, %v991
    %v1382 = vpack.c.b16 %v997, %v992
    %v1383 = vpack.c.b16 %v998, %v993
    %v1384 = vpack.c.b16 %v999, %v994
    %v1385 = vpack.c.b16 %v1000, %v995
    %v1386 = vpack.c.b16 %v1006, %v1001
    %v1387 = vpack.c.b16 %v1007, %v1002
    %v1388 = vpack.c.b16 %v1008, %v1003
    %v1389 = vpack.c.b16 %v1009, %v1004
    %v1390 = vpack.c.b16 %v1010, %v1005
    %v1391 = vpack.c.b16 %v1016, %v1011
    %v1392 = vpack.c.b16 %v1017, %v1012
    %v1393 = vpack.c.b16 %v1018, %v1013
    %v1394 = vpack.c.b16 %v1019, %v1014
    %v1395 = vpack.c.b16 %v1020, %v1015
    %v1396 = vpack.c.b16 %v1026, %v1021
    %v1397 = vpack.c.b16 %v1027, %v1022
    %v1398 = vpack.c.b16 %v1028, %v1023
    %v1399 = vpack.c.b16 %v1029, %v1024
    %v1400 = vpack.c.b16 %v1030, %v1025
    %v1401 = vpack.c.b16 %v1036, %v1031
    %v1402 = vpack.c.b16 %v1037, %v1032
    %v1403 = vpack.c.b16 %v1038, %v1033
    %v1404 = vpack.c.b16 %v1039, %v1034
    %v1405 = vpack.c.b16 %v1040, %v1035
    %v1406 = vpack.c.b16 %v1046, %v1041
    %v1407 = vpack.c.b16 %v1047, %v1042
    %v1408 = vpack.c.b16 %v1048, %v1043
    %v1409 = vpack.c.b16 %v1049, %v1044
    %v1410 = vpack.c.b16 %v1050, %v1045
    %v1411 = vpack.c.b16 %v1056, %v1051
    %v1412 = vpack.c.b16 %v1057, %v1052
    %v1413 = vpack.c.b16 %v1058, %v1053
    %v1414 = vpack.c.b16 %v1059, %v1054
    %v1415 = vpack.c.b16 %v1060, %v1055
    %v1416 = vpack.c.b16 %v1066, %v1061
    %v1417 = vpack.c.b16 %v1067, %v1062
    %v1418 = vpack.c.b16 %v1068, %v1063
    %v1419 = vpack.c.b16 %v1069, %v1064
    %v1420 = vpack.c.b16 %v1070, %v1065
    %v1421 = vpack.c.b16 %v1076, %v1071
    %v1422 = vpack.c.b16 %v1077, %v1072
    %v1423 = vpack.c.b16 %v1078, %v1073
    %v1424 = vpack.c.b16 %v1079, %v1074
    %v1425 = vpack.c.b16 %v1080, %v1075
    %v1426 = vpack.c.b16 %v1086, %v1081
    %v1427 = vpack.c.b16 %v1087, %v1082
    %v1428 = vpack.c.b16 %v1088, %v1083
    %v1429 = vpack.c.b16 %v1089, %v1084
    %v1430 = vpack.c.b16 %v1090, %v1085
    %v1431 = vpack.c.b16 %v1096, %v1091
    %v1432 = vpack.c.b16 %v1097, %v1092
    %v1433 = vpack.c.b16 %v1098, %v1093
    %v1434 = vpack.c.b16 %v1099, %v1094
    %v1435 = vpack.c.b16 %v1100, %v1095
    %v1436 = vpack.c.b16 %v1106, %v1101
    %v1437 = vpack.c.b16 %v1107, %v1102
    %v1438 = vpack.c.b16 %v1108, %v1103
    %v1439 = vpack.c.b16 %v1109, %v1104
    %v1440 = vpack.c.b16 %v1110, %v1105
    %v1441 = vpack.c.b16 %v1116, %v1111
    %v1442 = vpack.c.b16 %v1117, %v1112
    %v1443 = vpack.c.b16 %v1118, %v1113
    %v1444 = vpack.c.b16 %v1119, %v1114
    %v1445 = vpack.c.b16 %v1120, %v1115
    %v1446 = vpack.c.b16 %v1126, %v1121
    %v1447 = vpack.c.b16 %v1127, %v1122
    %v1448 = vpack.c.b16 %v1128, %v1123
    %v1449 = vpack.c.b16 %v1129, %v1124
    %v1450 = vpack.c.b16 %v1130, %v1125
    %v1451 = vpack.c.b16 %v1136, %v1131
    %v1452 = vpack.c.b16 %v1137, %v1132
    %v1453 = vpack.c.b16 %v1138, %v1133
    %v1454 = vpack.c.b16 %v1139, %v1134
    %v1455 = vpack.c.b16 %v1140, %v1135
    %v1456 = vpack.c.b16 %v1146, %v1141
    %v1457 = vpack.c.b16 %v1147, %v1142
    %v1458 = vpack.c.b16 %v1148, %v1143
    %v1459 = vpack.c.b16 %v1149, %v1144
    %v1460 = vpack.c.b16 %v1150, %v1145
    %v1461 = vpack.c.b16 %v1156, %v1151
    %v1462 = vpack.c.b16 %v1157, %v1152
    %v1463 = vpack.c.b16 %v1158, %v1153
    %v1464 = vpack.c.b16 %v1159, %v1154
    %v1465 = vpack.c.b16 %v1160, %v1155
    %v1466 = vpack.c.b16 %v1166, %v1161
    %v1467 = vpack.c.b16 %v1167, %v1162
    %v1468 = vpack.c.b16 %v1168, %v1163
    %v1469 = vpack.c.b16 %v1169, %v1164
    %v1470 = vpack.c.b16 %v1170, %v1165
    %v1471 = vpack.c.b16 %v1176, %v1171
    %v1472 = vpack.c.b16 %v1177, %v1172
    %v1473 = vpack.c.b16 %v1178, %v1173
    %v1474 = vpack.c.b16 %v1179, %v1174
    %v1475 = vpack.c.b16 %v1180, %v1175
    %v1476 = vpack.c.b16 %v1186, %v1181
    %v1477 = vpack.c.b16 %v1187, %v1182
    %v1478 = vpack.c.b16 %v1188, %v1183
    %v1479 = vpack.c.b16 %v1189, %v1184
    %v1480 = vpack.c.b16 %v1190, %v1185
    %v1481 = vpack.c.b16 %v1196, %v1191
    %v1482 = vpack.c.b16 %v1197, %v1192
    %v1483 = vpack.c.b16 %v1198, %v1193
    %v1484 = vpack.c.b16 %v1199, %v1194
    %v1485 = vpack.c.b16 %v1200, %v1195
    %v1486 = vpack.c.b16 %v1206, %v1201
    %v1487 = vpack.c.b16 %v1207, %v1202
    %v1488 = vpack.c.b16 %v1208, %v1203
    %v1489 = vpack.c.b16 %v1209, %v1204
    %v1490 = vpack.c.b16 %v1210, %v1205
    %v1491 = vpack.c.b16 %v1216, %v1211
    %v1492 = vpack.c.b16 %v1217, %v1212
    %v1493 = vpack.c.b16 %v1218, %v1213
    %v1494 = vpack.c.b16 %v1219, %v1214
    %v1495 = vpack.c.b16 %v1220, %v1215
    %v1496 = vpack.c.b16 %v1226, %v1221
    %v1497 = vpack.c.b16 %v1227, %v1222
    %v1498 = vpack.c.b16 %v1228, %v1223
    %v1499 = vpack.c.b16 %v1229, %v1224
    %v1500 = vpack.c.b16 %v1230, %v1225
    %v1501 = vpack.c.b16 %v1236, %v1231
    %v1502 = vpack.c.b16 %v1237, %v1232
    %v1503 = vpack.c.b16 %v1238, %v1233
    %v1504 = vpack.c.b16 %v1239, %v1234
    %v1505 = vpack.c.b16 %v1240, %v1235
    %v1506 = vpack.c.b16 %v1246, %v1241
    %v1507 = vpack.c.b16 %v1247, %v1242
    %v1508 = vpack.c.b16 %v1248, %v1243
    %v1509 = vpack.c.b16 %v1249, %v1244
    %v1510 = vpack.c.b16 %v1250, %v1245
    %v1511 = vpack.c.b16 %v1256, %v1251
    %v1512 = vpack.c.b16 %v1257, %v1252
    %v1513 = vpack.c.b16 %v1258, %v1253
    %v1514 = vpack.c.b16 %v1259, %v1254
    %v1515 = vpack.c.b16 %v1260, %v1255
    %v1516 = vpack.c.b16 %v1266, %v1261
    %v1517 = vpack.c.b16 %v1267, %v1262
    %v1518 = vpack.c.b16 %v1268, %v1263
    %v1519 = vpack.c.b16 %v1269, %v1264
    %v1520 = vpack.c.b16 %v1270, %v1265
    %v1521 = vpack.c.b16 %v1276, %v1271
    %v1522 = vpack.c.b16 %v1277, %v1272
    %v1523 = vpack.c.b16 %v1278, %v1273
    %v1524 = vpack.c.b16 %v1279, %v1274
    %v1525 = vpack.c.b16 %v1280, %v1275
    %vm1771 = vcmask 130048
    %v1773 = vsel %vm1771, %v490, 0
    %1775 = vmatprep.subr.bf16.mxu0 %v1317
    %1776 = vmatpush1.bf16.msra.mxu0 %v1316
    %1777 = vmatprep.subr.bf16.mxu0 %v1312
    %1778 = vmatpush1.bf16.msra.mxu0 %v1311
    %1779 = vmatprep.subr.bf16.mxu0 %v1307
    %1780 = vmatpush1.bf16.msra.mxu0 %v1306
    %1781 = vmatprep.subr.bf16.mxu0 %v1302
    %1782 = vmatpush1.bf16.msra.mxu0 %v1301
    %1783 = vmatprep.subr.bf16.mxu0 %v1297
    %1784 = vmatpush1.bf16.msra.mxu0 %v1296
    %1785 = vmatprep.subr.bf16.mxu0 %v1292
    %1786 = vmatpush1.bf16.msra.mxu0 %v1291
    %1787 = vmatprep.subr.bf16.mxu0 %v1287
    %1788 = vmatpush1.bf16.msra.mxu0 %v1286
    %1789 = vmatprep.subr.bf16.mxu0 %v1282
    %1790 = vmatpush1.bf16.msra.mxu0 %v1281
    %1791 = vmatprep.subr.bf16.mxu0 %v1357
    %1792 = vmatpush2.bf16.msra.mxu0 %v1356
    %1793 = vmatprep.subr.bf16.mxu0 %v1352
    %1794 = vmatpush2.bf16.msra.mxu0 %v1351
    %1795 = vmatprep.subr.bf16.mxu0 %v1347
    %1796 = vmatpush2.bf16.msra.mxu0 %v1346
    %1797 = vmatprep.subr.bf16.mxu0 %v1342
    %1798 = vmatpush2.bf16.msra.mxu0 %v1341
    %1799 = vmatprep.subr.bf16.mxu0 %v1337
    %1800 = vmatpush2.bf16.msra.mxu0 %v1336
    %1801 = vmatprep.subr.bf16.mxu0 %v1332
    %1802 = vmatpush2.bf16.msra.mxu0 %v1331
    %1803 = vmatprep.subr.bf16.mxu0 %v1327
    %1804 = vmatpush2.bf16.msra.mxu0 %v1326
    %1805 = vmatprep.subr.bf16.mxu0 %v1322
    %1806 = vmatpush2.bf16.msra.mxu0 %v1321
    %1807 = vmatprep.mubr.bf16.mxu0 %v485
    %1808 = vmatmul.mubr.bf16.gmra.mxu0 %v484
    %v1809 = vpop.f32.mrf.mxu0
    %v1810 = vadd.f32 %v440, %v1809
    %v1811 = vpop.f32.mrf.mxu0
    %v1812 = vadd.f32 %v444, %v1811
    %v1813 = vpop.f32.mrf.mxu0
    %v1814 = vadd.f32 %v440, %v1813
    %v1815 = vpop.f32.mrf.mxu0
    %v1816 = vadd.f32 %v444, %v1815
    %1817 = vdwg.mxu0
    %1818 = vmatprep.subr.bf16.mxu0 %v1397
    %1819 = vmatpush1.bf16.msra.mxu0 %v1396
    %1820 = vmatprep.subr.bf16.mxu0 %v1392
    %1821 = vmatpush1.bf16.msra.mxu0 %v1391
    %1822 = vmatprep.subr.bf16.mxu0 %v1387
    %1823 = vmatpush1.bf16.msra.mxu0 %v1386
    %1824 = vmatprep.subr.bf16.mxu0 %v1382
    %1825 = vmatpush1.bf16.msra.mxu0 %v1381
    %1826 = vmatprep.subr.bf16.mxu0 %v1377
    %1827 = vmatpush1.bf16.msra.mxu0 %v1376
    %1828 = vmatprep.subr.bf16.mxu0 %v1372
    %1829 = vmatpush1.bf16.msra.mxu0 %v1371
    %1830 = vmatprep.subr.bf16.mxu0 %v1367
    %1831 = vmatpush1.bf16.msra.mxu0 %v1366
    %1832 = vmatprep.subr.bf16.mxu0 %v1362
    %1833 = vmatpush1.bf16.msra.mxu0 %v1361
    %1834 = vmatprep.subr.bf16.mxu0 %v1437
    %1835 = vmatpush2.bf16.msra.mxu0 %v1436
    %1836 = vmatprep.subr.bf16.mxu0 %v1432
    %1837 = vmatpush2.bf16.msra.mxu0 %v1431
    %1838 = vmatprep.subr.bf16.mxu0 %v1427
    %1839 = vmatpush2.bf16.msra.mxu0 %v1426
    %1840 = vmatprep.subr.bf16.mxu0 %v1422
    %1841 = vmatpush2.bf16.msra.mxu0 %v1421
    %1842 = vmatprep.subr.bf16.mxu0 %v1417
    %1843 = vmatpush2.bf16.msra.mxu0 %v1416
    %1844 = vmatprep.subr.bf16.mxu0 %v1412
    %1845 = vmatpush2.bf16.msra.mxu0 %v1411
    %1846 = vmatprep.subr.bf16.mxu0 %v1407
    %1847 = vmatpush2.bf16.msra.mxu0 %v1406
    %1848 = vmatprep.subr.bf16.mxu0 %v1402
    %1849 = vmatpush2.bf16.msra.mxu0 %v1401
    %1850 = vmatprep.mubr.bf16.mxu0 %v487
    %1851 = vmatmul.mubr.bf16.gmra.mxu0 %v486
    %v1852 = vpop.f32.mrf.mxu0
    %v1853 = vadd.f32 %v1810, %v1852
    %v1854 = vpop.f32.mrf.mxu0
    %v1855 = vadd.f32 %v1812, %v1854
    %v1856 = vpop.f32.mrf.mxu0
    %v1857 = vadd.f32 %v1814, %v1856
    %v1858 = vpop.f32.mrf.mxu0
    %v1859 = vadd.f32 %v1816, %v1858
    %1860 = vdwg.mxu0
    %1861 = vmatprep.subr.bf16.mxu0 %v1477
    %1862 = vmatpush1.bf16.msra.mxu0 %v1476
    %1863 = vmatprep.subr.bf16.mxu0 %v1472
    %1864 = vmatpush1.bf16.msra.mxu0 %v1471
    %1865 = vmatprep.subr.bf16.mxu0 %v1467
    %1866 = vmatpush1.bf16.msra.mxu0 %v1466
    %1867 = vmatprep.subr.bf16.mxu0 %v1462
    %1868 = vmatpush1.bf16.msra.mxu0 %v1461
    %1869 = vmatprep.subr.bf16.mxu0 %v1457
    %1870 = vmatpush1.bf16.msra.mxu0 %v1456
    %1871 = vmatprep.subr.bf16.mxu0 %v1452
    %1872 = vmatpush1.bf16.msra.mxu0 %v1451
    %1873 = vmatprep.subr.bf16.mxu0 %v1447
    %1874 = vmatpush1.bf16.msra.mxu0 %v1446
    %1875 = vmatprep.subr.bf16.mxu0 %v1442
    %1876 = vmatpush1.bf16.msra.mxu0 %v1441
    %1877 = vmatprep.subr.bf16.mxu0 %v1517
    %1878 = vmatpush2.bf16.msra.mxu0 %v1516
    %1879 = vmatprep.subr.bf16.mxu0 %v1512
    %1880 = vmatpush2.bf16.msra.mxu0 %v1511
    %1881 = vmatprep.subr.bf16.mxu0 %v1507
    %1882 = vmatpush2.bf16.msra.mxu0 %v1506
    %1883 = vmatprep.subr.bf16.mxu0 %v1502
    %1884 = vmatpush2.bf16.msra.mxu0 %v1501
    %1885 = vmatprep.subr.bf16.mxu0 %v1497
    %1886 = vmatpush2.bf16.msra.mxu0 %v1496
    %1887 = vmatprep.subr.bf16.mxu0 %v1492
    %1888 = vmatpush2.bf16.msra.mxu0 %v1491
    %1889 = vmatprep.subr.bf16.mxu0 %v1487
    %1890 = vmatpush2.bf16.msra.mxu0 %v1486
    %1891 = vmatprep.subr.bf16.mxu0 %v1482
    %1892 = vmatpush2.bf16.msra.mxu0 %v1481
    %1893 = vmatprep.mubr.bf16.mxu0 %v489
    %1894 = vmatmul.mubr.bf16.gmra.mxu0 %v488
    %v1895 = vpop.f32.mrf.mxu0
    %v1896 = vadd.f32 %v1853, %v1895
    %v1897 = vpop.f32.mrf.mxu0
    %v1898 = vadd.f32 %v1855, %v1897
    %v1899 = vpop.f32.mrf.mxu0
    %v1900 = vadd.f32 %v1857, %v1899
    %v1901 = vpop.f32.mrf.mxu0
    %v1902 = vadd.f32 %v1859, %v1901
    %1903 = vdwg.mxu0
    %1904 = vmatprep.subr.bf16.mxu0 0
    %1905 = vmatpush1.bf16.msra.mxu0 0
    %1906 = vmatprep.subr.bf16.mxu0 0
    %1907 = vmatpush1.bf16.msra.mxu0 0
    %1908 = vmatprep.subr.bf16.mxu0 0
    %1909 = vmatpush1.bf16.msra.mxu0 0
    %1910 = vmatprep.subr.bf16.mxu0 0
    %1911 = vmatpush1.bf16.msra.mxu0 0
    %1912 = vmatprep.subr.bf16.mxu0 0
    %1913 = vmatpush1.bf16.msra.mxu0 0
    %1914 = vmatprep.subr.bf16.mxu0 0
    %1915 = vmatpush1.bf16.msra.mxu0 0
    %1916 = vmatprep.subr.bf16.mxu0 0
    %1917 = vmatpush1.bf16.msra.mxu0 0
    %1918 = vmatprep.subr.bf16.mxu0 %v1522
    %1919 = vmatpush1.bf16.msra.mxu0 %v1521
    %1920 = vmatprep.subr.bf16.mxu0 0
    %1921 = vmatpush2.bf16.msra.mxu0 0
    %1922 = vmatprep.subr.bf16.mxu0 0
    %1923 = vmatpush2.bf16.msra.mxu0 0
    %1924 = vmatprep.subr.bf16.mxu0 0
    %1925 = vmatpush2.bf16.msra.mxu0 0
    %1926 = vmatprep.subr.bf16.mxu0 0
    %1927 = vmatpush2.bf16.msra.mxu0 0
    %1928 = vmatprep.subr.bf16.mxu0 0
    %1929 = vmatpush2.bf16.msra.mxu0 0
    %1930 = vmatprep.subr.bf16.mxu0 0
    %1931 = vmatpush2.bf16.msra.mxu0 0
    %1932 = vmatprep.subr.bf16.mxu0 0
    %1933 = vmatpush2.bf16.msra.mxu0 0
    %1934 = vmatprep.subr.bf16.mxu0 0
    %1935 = vmatpush2.bf16.msra.mxu0 0
    %1936 = vmatprep.mubr.bf16.mxu0 0
    %1937 = vmatmul.mubr.bf16.gmra.mxu0 %v1773
    %v1938 = vpop.f32.mrf.mxu0
    %v1939 = vadd.f32 %v1896, %v1938
    %v1940 = vpop.f32.mrf.mxu0
    %v1941 = vadd.f32 %v1898, %v1940
    %v1942 = vpop.f32.mrf.mxu0
    %v1943 = vadd.f32 %v1900, %v1942
    %v1944 = vpop.f32.mrf.mxu0
    %v1945 = vadd.f32 %v1902, %v1944
    %1946 = vdwg.mxu0
    %1947 = vmatprep.subr.bf16.mxu0 %v1319
    %1948 = vmatpush1.bf16.msra.mxu0 %v1318
    %1949 = vmatprep.subr.bf16.mxu0 %v1314
    %1950 = vmatpush1.bf16.msra.mxu0 %v1313
    %1951 = vmatprep.subr.bf16.mxu0 %v1309
    %1952 = vmatpush1.bf16.msra.mxu0 %v1308
    %1953 = vmatprep.subr.bf16.mxu0 %v1304
    %1954 = vmatpush1.bf16.msra.mxu0 %v1303
    %1955 = vmatprep.subr.bf16.mxu0 %v1299
    %1956 = vmatpush1.bf16.msra.mxu0 %v1298
    %1957 = vmatprep.subr.bf16.mxu0 %v1294
    %1958 = vmatpush1.bf16.msra.mxu0 %v1293
    %1959 = vmatprep.subr.bf16.mxu0 %v1289
    %1960 = vmatpush1.bf16.msra.mxu0 %v1288
    %1961 = vmatprep.subr.bf16.mxu0 %v1284
    %1962 = vmatpush1.bf16.msra.mxu0 %v1283
    %1963 = vmatprep.subr.bf16.mxu0 %v1359
    %1964 = vmatpush2.bf16.msra.mxu0 %v1358
    %1965 = vmatprep.subr.bf16.mxu0 %v1354
    %1966 = vmatpush2.bf16.msra.mxu0 %v1353
    %1967 = vmatprep.subr.bf16.mxu0 %v1349
    %1968 = vmatpush2.bf16.msra.mxu0 %v1348
    %1969 = vmatprep.subr.bf16.mxu0 %v1344
    %1970 = vmatpush2.bf16.msra.mxu0 %v1343
    %1971 = vmatprep.subr.bf16.mxu0 %v1339
    %1972 = vmatpush2.bf16.msra.mxu0 %v1338
    %1973 = vmatprep.subr.bf16.mxu0 %v1334
    %1974 = vmatpush2.bf16.msra.mxu0 %v1333
    %1975 = vmatprep.subr.bf16.mxu0 %v1329
    %1976 = vmatpush2.bf16.msra.mxu0 %v1328
    %1977 = vmatprep.subr.bf16.mxu0 %v1324
    %1978 = vmatpush2.bf16.msra.mxu0 %v1323
    %1979 = vmatprep.mubr.bf16.mxu0 %v485
    %1980 = vmatmul.mubr.bf16.gmra.mxu0 %v484
    %v1981 = vpop.f32.mrf.mxu0
    %v1982 = vadd.f32 %v448, %v1981
    %v1983 = vpop.f32.mrf.mxu0
    %v1984 = vadd.f32 %v452, %v1983
    %v1985 = vpop.f32.mrf.mxu0
    %v1986 = vadd.f32 %v448, %v1985
    %v1987 = vpop.f32.mrf.mxu0
    %v1988 = vadd.f32 %v452, %v1987
    %1989 = vdwg.mxu0
    %1990 = vmatprep.subr.bf16.mxu0 %v1399
    %1991 = vmatpush1.bf16.msra.mxu0 %v1398
    %1992 = vmatprep.subr.bf16.mxu0 %v1394
    %1993 = vmatpush1.bf16.msra.mxu0 %v1393
    %1994 = vmatprep.subr.bf16.mxu0 %v1389
    %1995 = vmatpush1.bf16.msra.mxu0 %v1388
    %1996 = vmatprep.subr.bf16.mxu0 %v1384
    %1997 = vmatpush1.bf16.msra.mxu0 %v1383
    %1998 = vmatprep.subr.bf16.mxu0 %v1379
    %1999 = vmatpush1.bf16.msra.mxu0 %v1378
    %2000 = vmatprep.subr.bf16.mxu0 %v1374
    %2001 = vmatpush1.bf16.msra.mxu0 %v1373
    %2002 = vmatprep.subr.bf16.mxu0 %v1369
    %2003 = vmatpush1.bf16.msra.mxu0 %v1368
    %2004 = vmatprep.subr.bf16.mxu0 %v1364
    %2005 = vmatpush1.bf16.msra.mxu0 %v1363
    %2006 = vmatprep.subr.bf16.mxu0 %v1439
    %2007 = vmatpush2.bf16.msra.mxu0 %v1438
    %2008 = vmatprep.subr.bf16.mxu0 %v1434
    %2009 = vmatpush2.bf16.msra.mxu0 %v1433
    %2010 = vmatprep.subr.bf16.mxu0 %v1429
    %2011 = vmatpush2.bf16.msra.mxu0 %v1428
    %2012 = vmatprep.subr.bf16.mxu0 %v1424
    %2013 = vmatpush2.bf16.msra.mxu0 %v1423
    %2014 = vmatprep.subr.bf16.mxu0 %v1419
    %2015 = vmatpush2.bf16.msra.mxu0 %v1418
    %2016 = vmatprep.subr.bf16.mxu0 %v1414
    %2017 = vmatpush2.bf16.msra.mxu0 %v1413
    %2018 = vmatprep.subr.bf16.mxu0 %v1409
    %2019 = vmatpush2.bf16.msra.mxu0 %v1408
    %2020 = vmatprep.subr.bf16.mxu0 %v1404
    %2021 = vmatpush2.bf16.msra.mxu0 %v1403
    %2022 = vmatprep.mubr.bf16.mxu0 %v487
    %2023 = vmatmul.mubr.bf16.gmra.mxu0 %v486
    %v2024 = vpop.f32.mrf.mxu0
    %v2025 = vadd.f32 %v1982, %v2024
    %v2026 = vpop.f32.mrf.mxu0
    %v2027 = vadd.f32 %v1984, %v2026
    %v2028 = vpop.f32.mrf.mxu0
    %v2029 = vadd.f32 %v1986, %v2028
    %v2030 = vpop.f32.mrf.mxu0
    %v2031 = vadd.f32 %v1988, %v2030
    %2032 = vdwg.mxu0
    %2033 = vmatprep.subr.bf16.mxu0 %v1479
    %2034 = vmatpush1.bf16.msra.mxu0 %v1478
    %2035 = vmatprep.subr.bf16.mxu0 %v1474
    %2036 = vmatpush1.bf16.msra.mxu0 %v1473
    %2037 = vmatprep.subr.bf16.mxu0 %v1469
    %2038 = vmatpush1.bf16.msra.mxu0 %v1468
    %2039 = vmatprep.subr.bf16.mxu0 %v1464
    %2040 = vmatpush1.bf16.msra.mxu0 %v1463
    %2041 = vmatprep.subr.bf16.mxu0 %v1459
    %2042 = vmatpush1.bf16.msra.mxu0 %v1458
    %2043 = vmatprep.subr.bf16.mxu0 %v1454
    %2044 = vmatpush1.bf16.msra.mxu0 %v1453
    %2045 = vmatprep.subr.bf16.mxu0 %v1449
    %2046 = vmatpush1.bf16.msra.mxu0 %v1448
    %2047 = vmatprep.subr.bf16.mxu0 %v1444
    %2048 = vmatpush1.bf16.msra.mxu0 %v1443
    %2049 = vmatprep.subr.bf16.mxu0 %v1519
    %2050 = vmatpush2.bf16.msra.mxu0 %v1518
    %2051 = vmatprep.subr.bf16.mxu0 %v1514
    %2052 = vmatpush2.bf16.msra.mxu0 %v1513
    %2053 = vmatprep.subr.bf16.mxu0 %v1509
    %2054 = vmatpush2.bf16.msra.mxu0 %v1508
    %2055 = vmatprep.subr.bf16.mxu0 %v1504
    %2056 = vmatpush2.bf16.msra.mxu0 %v1503
    %2057 = vmatprep.subr.bf16.mxu0 %v1499
    %2058 = vmatpush2.bf16.msra.mxu0 %v1498
    %2059 = vmatprep.subr.bf16.mxu0 %v1494
    %2060 = vmatpush2.bf16.msra.mxu0 %v1493
    %2061 = vmatprep.subr.bf16.mxu0 %v1489
    %2062 = vmatpush2.bf16.msra.mxu0 %v1488
    %2063 = vmatprep.subr.bf16.mxu0 %v1484
    %2064 = vmatpush2.bf16.msra.mxu0 %v1483
    %2065 = vmatprep.mubr.bf16.mxu0 %v489
    %2066 = vmatmul.mubr.bf16.gmra.mxu0 %v488
    %v2067 = vpop.f32.mrf.mxu0
    %v2068 = vadd.f32 %v2025, %v2067
    %v2069 = vpop.f32.mrf.mxu0
    %v2070 = vadd.f32 %v2027, %v2069
    %v2071 = vpop.f32.mrf.mxu0
    %v2072 = vadd.f32 %v2029, %v2071
    %v2073 = vpop.f32.mrf.mxu0
    %v2074 = vadd.f32 %v2031, %v2073
    %2075 = vdwg.mxu0
    %2076 = vmatprep.subr.bf16.mxu0 0
    %2077 = vmatpush1.bf16.msra.mxu0 0
    %2078 = vmatprep.subr.bf16.mxu0 0
    %2079 = vmatpush1.bf16.msra.mxu0 0
    %2080 = vmatprep.subr.bf16.mxu0 0
    %2081 = vmatpush1.bf16.msra.mxu0 0
    %2082 = vmatprep.subr.bf16.mxu0 0
    %2083 = vmatpush1.bf16.msra.mxu0 0
    %2084 = vmatprep.subr.bf16.mxu0 0
    %2085 = vmatpush1.bf16.msra.mxu0 0
    %2086 = vmatprep.subr.bf16.mxu0 0
    %2087 = vmatpush1.bf16.msra.mxu0 0
    %2088 = vmatprep.subr.bf16.mxu0 0
    %2089 = vmatpush1.bf16.msra.mxu0 0
    %2090 = vmatprep.subr.bf16.mxu0 %v1524
    %2091 = vmatpush1.bf16.msra.mxu0 %v1523
    %2092 = vmatprep.subr.bf16.mxu0 0
    %2093 = vmatpush2.bf16.msra.mxu0 0
    %2094 = vmatprep.subr.bf16.mxu0 0
    %2095 = vmatpush2.bf16.msra.mxu0 0
    %2096 = vmatprep.subr.bf16.mxu0 0
    %2097 = vmatpush2.bf16.msra.mxu0 0
    %2098 = vmatprep.subr.bf16.mxu0 0
    %2099 = vmatpush2.bf16.msra.mxu0 0
    %2100 = vmatprep.subr.bf16.mxu0 0
    %2101 = vmatpush2.bf16.msra.mxu0 0
    %2102 = vmatprep.subr.bf16.mxu0 0
    %2103 = vmatpush2.bf16.msra.mxu0 0
    %2104 = vmatprep.subr.bf16.mxu0 0
    %2105 = vmatpush2.bf16.msra.mxu0 0
    %2106 = vmatprep.subr.bf16.mxu0 0
    %2107 = vmatpush2.bf16.msra.mxu0 0
    %2108 = vmatprep.mubr.bf16.mxu0 0
    %2109 = vmatmul.mubr.bf16.gmra.mxu0 %v1773
    %v2110 = vpop.f32.mrf.mxu0
    %v2111 = vadd.f32 %v2068, %v2110
    %v2112 = vpop.f32.mrf.mxu0
    %v2113 = vadd.f32 %v2070, %v2112
    %v2114 = vpop.f32.mrf.mxu0
    %v2115 = vadd.f32 %v2072, %v2114
    %v2116 = vpop.f32.mrf.mxu0
    %v2117 = vadd.f32 %v2074, %v2116
    %2118 = vdwg.mxu0
    %2119 = vmatprep.subr.bf16.mxu0 0
    %2120 = vmatpush1.bf16.msra.mxu0 %v1320
    %2121 = vmatprep.subr.bf16.mxu0 0
    %2122 = vmatpush1.bf16.msra.mxu0 %v1315
    %2123 = vmatprep.subr.bf16.mxu0 0
    %2124 = vmatpush1.bf16.msra.mxu0 %v1310
    %2125 = vmatprep.subr.bf16.mxu0 0
    %2126 = vmatpush1.bf16.msra.mxu0 %v1305
    %2127 = vmatprep.subr.bf16.mxu0 0
    %2128 = vmatpush1.bf16.msra.mxu0 %v1300
    %2129 = vmatprep.subr.bf16.mxu0 0
    %2130 = vmatpush1.bf16.msra.mxu0 %v1295
    %2131 = vmatprep.subr.bf16.mxu0 0
    %2132 = vmatpush1.bf16.msra.mxu0 %v1290
    %2133 = vmatprep.subr.bf16.mxu0 0
    %2134 = vmatpush1.bf16.msra.mxu0 %v1285
    %2135 = vmatprep.subr.bf16.mxu0 0
    %2136 = vmatpush2.bf16.msra.mxu0 %v1360
    %2137 = vmatprep.subr.bf16.mxu0 0
    %2138 = vmatpush2.bf16.msra.mxu0 %v1355
    %2139 = vmatprep.subr.bf16.mxu0 0
    %2140 = vmatpush2.bf16.msra.mxu0 %v1350
    %2141 = vmatprep.subr.bf16.mxu0 0
    %2142 = vmatpush2.bf16.msra.mxu0 %v1345
    %2143 = vmatprep.subr.bf16.mxu0 0
    %2144 = vmatpush2.bf16.msra.mxu0 %v1340
    %2145 = vmatprep.subr.bf16.mxu0 0
    %2146 = vmatpush2.bf16.msra.mxu0 %v1335
    %2147 = vmatprep.subr.bf16.mxu0 0
    %2148 = vmatpush2.bf16.msra.mxu0 %v1330
    %2149 = vmatprep.subr.bf16.mxu0 0
    %2150 = vmatpush2.bf16.msra.mxu0 %v1325
    %2151 = vmatprep.mubr.bf16.mxu0 %v485
    %2152 = vmatmul.mubr.bf16.gmra.mxu0 %v484
    %v2153 = vpop.f32.mrf.mxu0
    %v2154 = vadd.f32 %v456, %v2153
    %v2155 = vpop.f32.mrf.mxu0
    %v2156 = vpop.f32.mrf.mxu0
    %v2157 = vadd.f32 %v456, %v2156
    %v2158 = vpop.f32.mrf.mxu0
    %2159 = vdwg.mxu0
    %2160 = vmatprep.subr.bf16.mxu0 0
    %2161 = vmatpush1.bf16.msra.mxu0 %v1400
    %2162 = vmatprep.subr.bf16.mxu0 0
    %2163 = vmatpush1.bf16.msra.mxu0 %v1395
    %2164 = vmatprep.subr.bf16.mxu0 0
    %2165 = vmatpush1.bf16.msra.mxu0 %v1390
    %2166 = vmatprep.subr.bf16.mxu0 0
    %2167 = vmatpush1.bf16.msra.mxu0 %v1385
    %2168 = vmatprep.subr.bf16.mxu0 0
    %2169 = vmatpush1.bf16.msra.mxu0 %v1380
    %2170 = vmatprep.subr.bf16.mxu0 0
    %2171 = vmatpush1.bf16.msra.mxu0 %v1375
    %2172 = vmatprep.subr.bf16.mxu0 0
    %2173 = vmatpush1.bf16.msra.mxu0 %v1370
    %2174 = vmatprep.subr.bf16.mxu0 0
    %2175 = vmatpush1.bf16.msra.mxu0 %v1365
    %2176 = vmatprep.subr.bf16.mxu0 0
    %2177 = vmatpush2.bf16.msra.mxu0 %v1440
    %2178 = vmatprep.subr.bf16.mxu0 0
    %2179 = vmatpush2.bf16.msra.mxu0 %v1435
    %2180 = vmatprep.subr.bf16.mxu0 0
    %2181 = vmatpush2.bf16.msra.mxu0 %v1430
    %2182 = vmatprep.subr.bf16.mxu0 0
    %2183 = vmatpush2.bf16.msra.mxu0 %v1425
    %2184 = vmatprep.subr.bf16.mxu0 0
    %2185 = vmatpush2.bf16.msra.mxu0 %v1420
    %2186 = vmatprep.subr.bf16.mxu0 0
    %2187 = vmatpush2.bf16.msra.mxu0 %v1415
    %2188 = vmatprep.subr.bf16.mxu0 0
    %2189 = vmatpush2.bf16.msra.mxu0 %v1410
    %2190 = vmatprep.subr.bf16.mxu0 0
    %2191 = vmatpush2.bf16.msra.mxu0 %v1405
    %2192 = vmatprep.mubr.bf16.mxu0 %v487
    %2193 = vmatmul.mubr.bf16.gmra.mxu0 %v486
    %v2194 = vpop.f32.mrf.mxu0
    %v2195 = vadd.f32 %v2154, %v2194
    %v2196 = vpop.f32.mrf.mxu0
    %v2197 = vpop.f32.mrf.mxu0
    %v2198 = vadd.f32 %v2157, %v2197
    %v2199 = vpop.f32.mrf.mxu0
    %2200 = vdwg.mxu0
    %2201 = vmatprep.subr.bf16.mxu0 0
    %2202 = vmatpush1.bf16.msra.mxu0 %v1480
    %2203 = vmatprep.subr.bf16.mxu0 0
    %2204 = vmatpush1.bf16.msra.mxu0 %v1475
    %2205 = vmatprep.subr.bf16.mxu0 0
    %2206 = vmatpush1.bf16.msra.mxu0 %v1470
    %2207 = vmatprep.subr.bf16.mxu0 0
    %2208 = vmatpush1.bf16.msra.mxu0 %v1465
    %2209 = vmatprep.subr.bf16.mxu0 0
    %2210 = vmatpush1.bf16.msra.mxu0 %v1460
    %2211 = vmatprep.subr.bf16.mxu0 0
    %2212 = vmatpush1.bf16.msra.mxu0 %v1455
    %2213 = vmatprep.subr.bf16.mxu0 0
    %2214 = vmatpush1.bf16.msra.mxu0 %v1450
    %2215 = vmatprep.subr.bf16.mxu0 0
    %2216 = vmatpush1.bf16.msra.mxu0 %v1445
    %2217 = vmatprep.subr.bf16.mxu0 0
    %2218 = vmatpush2.bf16.msra.mxu0 %v1520
    %2219 = vmatprep.subr.bf16.mxu0 0
    %2220 = vmatpush2.bf16.msra.mxu0 %v1515
    %2221 = vmatprep.subr.bf16.mxu0 0
    %2222 = vmatpush2.bf16.msra.mxu0 %v1510
    %2223 = vmatprep.subr.bf16.mxu0 0
    %2224 = vmatpush2.bf16.msra.mxu0 %v1505
    %2225 = vmatprep.subr.bf16.mxu0 0
    %2226 = vmatpush2.bf16.msra.mxu0 %v1500
    %2227 = vmatprep.subr.bf16.mxu0 0
    %2228 = vmatpush2.bf16.msra.mxu0 %v1495
    %2229 = vmatprep.subr.bf16.mxu0 0
    %2230 = vmatpush2.bf16.msra.mxu0 %v1490
    %2231 = vmatprep.subr.bf16.mxu0 0
    %2232 = vmatpush2.bf16.msra.mxu0 %v1485
    %2233 = vmatprep.mubr.bf16.mxu0 %v489
    %2234 = vmatmul.mubr.bf16.gmra.mxu0 %v488
    %v2235 = vpop.f32.mrf.mxu0
    %v2236 = vadd.f32 %v2195, %v2235
    %v2237 = vpop.f32.mrf.mxu0
    %v2238 = vpop.f32.mrf.mxu0
    %v2239 = vadd.f32 %v2198, %v2238
    %v2240 = vpop.f32.mrf.mxu0
    %2241 = vdwg.mxu0
    %2242 = vmatprep.subr.bf16.mxu0 0
    %2243 = vmatpush1.bf16.msra.mxu0 0
    %2244 = vmatprep.subr.bf16.mxu0 0
    %2245 = vmatpush1.bf16.msra.mxu0 0
    %2246 = vmatprep.subr.bf16.mxu0 0
    %2247 = vmatpush1.bf16.msra.mxu0 0
    %2248 = vmatprep.subr.bf16.mxu0 0
    %2249 = vmatpush1.bf16.msra.mxu0 0
    %2250 = vmatprep.subr.bf16.mxu0 0
    %2251 = vmatpush1.bf16.msra.mxu0 0
    %2252 = vmatprep.subr.bf16.mxu0 0
    %2253 = vmatpush1.bf16.msra.mxu0 0
    %2254 = vmatprep.subr.bf16.mxu0 0
    %2255 = vmatpush1.bf16.msra.mxu0 0
    %2256 = vmatprep.subr.bf16.mxu0 0
    %2257 = vmatpush1.bf16.msra.mxu0 %v1525
    %2258 = vmatprep.subr.bf16.mxu0 0
    %2259 = vmatpush2.bf16.msra.mxu0 0
    %2260 = vmatprep.subr.bf16.mxu0 0
    %2261 = vmatpush2.bf16.msra.mxu0 0
    %2262 = vmatprep.subr.bf16.mxu0 0
    %2263 = vmatpush2.bf16.msra.mxu0 0
    %2264 = vmatprep.subr.bf16.mxu0 0
    %2265 = vmatpush2.bf16.msra.mxu0 0
    %2266 = vmatprep.subr.bf16.mxu0 0
    %2267 = vmatpush2.bf16.msra.mxu0 0
    %2268 = vmatprep.subr.bf16.mxu0 0
    %2269 = vmatpush2.bf16.msra.mxu0 0
    %2270 = vmatprep.subr.bf16.mxu0 0
    %2271 = vmatpush2.bf16.msra.mxu0 0
    %2272 = vmatprep.subr.bf16.mxu0 0
    %2273 = vmatpush2.bf16.msra.mxu0 0
    %2274 = vmatprep.mubr.bf16.mxu0 0
    %2275 = vmatmul.mubr.bf16.gmra.mxu0 %v1773
    %v2276 = vpop.f32.mrf.mxu0
    %v2277 = vadd.f32 %v2236, %v2276
    %v2278 = vpop.f32.mrf.mxu0
    %v2279 = vpop.f32.mrf.mxu0
    %v2280 = vadd.f32 %v2239, %v2279
    %v2281 = vpop.f32.mrf.mxu0
    %2282 = vdwg.mxu0
    %v2283 = vmax.f32 %v1939, 0.0
    %v2284 = vmax.f32 %v1941, 0.0
    %v2285 = vmax.f32 %v2111, 0.0
    %v2286 = vmax.f32 %v2113, 0.0
    %v2287 = vmax.f32 %v2277, 0.0
    %v2288 = vmax.f32 %v1943, 0.0
    %v2289 = vmax.f32 %v1945, 0.0
    %v2290 = vmax.f32 %v2115, 0.0
    %v2291 = vmax.f32 %v2117, 0.0
    %v2292 = vmax.f32 %v2280, 0.0
    %v2293 = vpack.c.bf16 %v2288, %v2283
    %v2294 = vpack.c.bf16 %v2289, %v2284
    %v2295 = vpack.c.bf16 %v2290, %v2285
    %v2296 = vpack.c.bf16 %v2291, %v2286
    %v2297 = vpack.c.bf16 %v2292, %v2287
    %v2298 = vld [vmem:[#allocation8] sm:$0xff]
    %v2299 = vld [vmem:[#allocation8 + $0x8] sm:$0xf]
    %v2300 = vld [vmem:[#allocation8 + $0xc] sm:$0xff]
    %v2301 = vld [vmem:[#allocation8 + $0x14] sm:$0xf]
    %v2302 = vld [vmem:[#allocation8 + $0x18] sm:$0xff]
    %v2303 = vld [vmem:[#allocation8 + $0x20] sm:$0xf]
    %v2304 = vld [vmem:[#allocation8 + $0x24] sm:$0xff]
    %v2305 = vld [vmem:[#allocation8 + $0x2c] sm:$0xf]
    %v2306 = vld [vmem:[#allocation8 + $0x30] sm:$0xff]
    %v2307 = vld [vmem:[#allocation8 + $0x38] sm:$0xf]
    %v2308 = vld [vmem:[#allocation8 + $0x3c] sm:$0xff]
    %v2309 = vld [vmem:[#allocation8 + $0x44] sm:$0xf]
    %v2310 = vld [vmem:[#allocation8 + $0x48] sm:$0xff]
    %v2311 = vld [vmem:[#allocation8 + $0x50] sm:$0xf]
    %v2312 = vld [vmem:[#allocation8 + $0x54] sm:$0xff]
    %v2313 = vld [vmem:[#allocation8 + $0x5c] sm:$0xf]
    %v2314 = vld [vmem:[#allocation8 + $0x60] sm:$0xff]
    %v2315 = vld [vmem:[#allocation8 + $0x68] sm:$0xf]
    %v2316 = vld [vmem:[#allocation8 + $0x6c] sm:$0xff]
    %v2317 = vld [vmem:[#allocation8 + $0x74] sm:$0xf]
    %v2318 = vld [vmem:[#allocation8 + $0x78] sm:$0xff]
    %v2319 = vld [vmem:[#allocation8 + $0x80] sm:$0xf]
    %v2320 = vld [vmem:[#allocation8 + $0x84] sm:$0xff]
    %v2321 = vld [vmem:[#allocation8 + $0x8c] sm:$0xf]
    %v2322 = vld [vmem:[#allocation8 + $0x90] sm:$0xff]
    %v2323 = vld [vmem:[#allocation8 + $0x98] sm:$0xf]
    %v2324 = vld [vmem:[#allocation8 + $0x9c] sm:$0xff]
    %v2325 = vld [vmem:[#allocation8 + $0xa4] sm:$0xf]
    %v2326 = vld [vmem:[#allocation8 + $0xa8] sm:$0xff]
    %v2327 = vld [vmem:[#allocation8 + $0xb0] sm:$0xf]
    %v2328 = vld [vmem:[#allocation8 + $0xb4] sm:$0xff]
    %v2329 = vld [vmem:[#allocation8 + $0xbc] sm:$0xf]
    %v2330 = vld [vmem:[#allocation8 + $0xc0] sm:$0xff]
    %v2331 = vld [vmem:[#allocation8 + $0xc8] sm:$0xf]
    %v2332 = vld [vmem:[#allocation8 + $0xcc] sm:$0xff]
    %v2333 = vld [vmem:[#allocation8 + $0xd4] sm:$0xf]
    %v2334 = vld [vmem:[#allocation8 + $0xd8] sm:$0xff]
    %v2335 = vld [vmem:[#allocation8 + $0xe0] sm:$0xf]
    %v2336 = vld [vmem:[#allocation8 + $0xe4] sm:$0xff]
    %v2337 = vld [vmem:[#allocation8 + $0xec] sm:$0xf]
    %v2338 = vld [vmem:[#allocation8 + $0xf0] sm:$0xff]
    %v2339 = vld [vmem:[#allocation8 + $0xf8] sm:$0xf]
    %v2340 = vld [vmem:[#allocation8 + $0xfc] sm:$0xff]
    %v2341 = vld [vmem:[#allocation8 + $0x104] sm:$0xf]
    %v2342 = vld [vmem:[#allocation8 + $0x108] sm:$0xff]
    %v2343 = vld [vmem:[#allocation8 + $0x110] sm:$0xf]
    %v2344 = vld [vmem:[#allocation8 + $0x114] sm:$0xff]
    %v2345 = vld [vmem:[#allocation8 + $0x11c] sm:$0xf]
    %v2346 = vld [vmem:[#allocation8 + $0x120] sm:$0xff]
    %v2347 = vld [vmem:[#allocation8 + $0x128] sm:$0xf]
    %v2348 = vld [vmem:[#allocation8 + $0x12c] sm:$0xff]
    %v2349 = vld [vmem:[#allocation8 + $0x134] sm:$0xf]
    %v2350 = vld [vmem:[#allocation8 + $0x138] sm:$0xff]
    %v2351 = vld [vmem:[#allocation8 + $0x140] sm:$0xf]
    %v2352 = vld [vmem:[#allocation8 + $0x144] sm:$0xff]
    %v2353 = vld [vmem:[#allocation8 + $0x14c] sm:$0xf]
    %v2354 = vld [vmem:[#allocation8 + $0x150] sm:$0xff]
    %v2355 = vld [vmem:[#allocation8 + $0x158] sm:$0xf]
    %v2356 = vld [vmem:[#allocation8 + $0x15c] sm:$0xff]
    %v2357 = vld [vmem:[#allocation8 + $0x164] sm:$0xf]
    %v2358 = vld [vmem:[#allocation8 + $0x168] sm:$0xff]
    %v2359 = vld [vmem:[#allocation8 + $0x170] sm:$0xf]
    %v2360 = vld [vmem:[#allocation8 + $0x174] sm:$0xff]
    %v2361 = vld [vmem:[#allocation8 + $0x17c] sm:$0xf]
    %v2362 = vld [vmem:[#allocation8 + $0x180] sm:$0xff]
    %v2363 = vld [vmem:[#allocation8 + $0x188] sm:$0xf]
    %v2364 = vld [vmem:[#allocation8 + $0x18c] sm:$0xff]
    %v2365 = vld [vmem:[#allocation8 + $0x194] sm:$0xf]
    %v2366 = vld [vmem:[#allocation8 + $0x198] sm:$0xff]
    %v2367 = vld [vmem:[#allocation8 + $0x1a0] sm:$0xf]
    %v2368 = vld [vmem:[#allocation8 + $0x1a4] sm:$0xff]
    %v2369 = vld [vmem:[#allocation8 + $0x1ac] sm:$0xf]
    %v2370 = vld [vmem:[#allocation8 + $0x1b0] sm:$0xff]
    %v2371 = vld [vmem:[#allocation8 + $0x1b8] sm:$0xf]
    %v2372 = vld [vmem:[#allocation8 + $0x1bc] sm:$0xff]
    %v2373 = vld [vmem:[#allocation8 + $0x1c4] sm:$0xf]
    %v2374 = vld [vmem:[#allocation8 + $0x1c8] sm:$0xff]
    %v2375 = vld [vmem:[#allocation8 + $0x1d0] sm:$0xf]
    %v2376 = vld [vmem:[#allocation8 + $0x1d4] sm:$0xff]
    %v2377 = vld [vmem:[#allocation8 + $0x1dc] sm:$0xf]
    %v2378 = vld [vmem:[#allocation8 + $0x1e0] sm:$0xff]
    %v2379 = vld [vmem:[#allocation8 + $0x1e8] sm:$0xf]
    %v2380 = vld [vmem:[#allocation8 + $0x1ec] sm:$0xff]
    %v2381 = vld [vmem:[#allocation8 + $0x1f4] sm:$0xf]
    %v2382 = vld [vmem:[#allocation8 + $0x1f8] sm:$0xff]
    %v2383 = vld [vmem:[#allocation8 + $0x200] sm:$0xf]
    %v2384 = vld [vmem:[#allocation8 + $0x204] sm:$0xff]
    %v2385 = vld [vmem:[#allocation8 + $0x20c] sm:$0xf]
    %v2386 = vld [vmem:[#allocation8 + $0x210] sm:$0xff]
    %v2387 = vld [vmem:[#allocation8 + $0x218] sm:$0xf]
    %v2388 = vld [vmem:[#allocation8 + $0x21c] sm:$0xff]
    %v2389 = vld [vmem:[#allocation8 + $0x224] sm:$0xf]
    %v2390 = vld [vmem:[#allocation8 + $0x228] sm:$0xff]
    %v2391 = vld [vmem:[#allocation8 + $0x230] sm:$0xf]
    %v2392 = vld [vmem:[#allocation8 + $0x234] sm:$0xff]
    %v2393 = vld [vmem:[#allocation8 + $0x23c] sm:$0xf]
    %v2394 = vld [vmem:[#allocation8 + $0x240] sm:$0xff]
    %v2395 = vld [vmem:[#allocation8 + $0x248] sm:$0xf]
    %v2396 = vld [vmem:[#allocation8 + $0x24c] sm:$0xff]
    %v2397 = vld [vmem:[#allocation8 + $0x254] sm:$0xf]
    %v2398 = vld [vmem:[#allocation8 + $0x258] sm:$0xff]
    %v2399 = vld [vmem:[#allocation8 + $0x260] sm:$0xf]
    %v2400 = vld [vmem:[#allocation8 + $0x264] sm:$0xff]
    %v2401 = vld [vmem:[#allocation8 + $0x26c] sm:$0xf]
    %v2402 = vld [vmem:[#allocation8 + $0x270] sm:$0xff]
    %v2403 = vld [vmem:[#allocation8 + $0x278] sm:$0xf]
    %v2404 = vld [vmem:[#allocation8 + $0x27c] sm:$0xff]
    %v2405 = vld [vmem:[#allocation8 + $0x284] sm:$0xf]
    %v2406 = vld [vmem:[#allocation8 + $0x288] sm:$0xff]
    %v2407 = vld [vmem:[#allocation8 + $0x290] sm:$0xf]
    %v2408 = vld [vmem:[#allocation8 + $0x294] sm:$0xff]
    %v2409 = vld [vmem:[#allocation8 + $0x29c] sm:$0xf]
    %v2410 = vld [vmem:[#allocation8 + $0x2a0] sm:$0xff]
    %v2411 = vld [vmem:[#allocation8 + $0x2a8] sm:$0xf]
    %v2412 = vld [vmem:[#allocation8 + $0x2ac] sm:$0xff]
    %v2413 = vld [vmem:[#allocation8 + $0x2b4] sm:$0xf]
    %v2414 = vld [vmem:[#allocation8 + $0x2b8] sm:$0xff]
    %v2415 = vld [vmem:[#allocation8 + $0x2c0] sm:$0xf]
    %v2416 = vld [vmem:[#allocation8 + $0x2c4] sm:$0xff]
    %v2417 = vld [vmem:[#allocation8 + $0x2cc] sm:$0xf]
    %v2418 = vld [vmem:[#allocation8 + $0x2d0] sm:$0xff]
    %v2419 = vld [vmem:[#allocation8 + $0x2d8] sm:$0xf]
    %v2420 = vld [vmem:[#allocation8 + $0x2dc] sm:$0xff]
    %v2421 = vld [vmem:[#allocation8 + $0x2e4] sm:$0xf]
    %v2422 = vld [vmem:[#allocation8 + $0x2e8] sm:$0xff]
    %v2423 = vld [vmem:[#allocation8 + $0x2f0] sm:$0xf]
    %v2424 = vld [vmem:[#allocation8 + $0x2f4] sm:$0xff]
    %v2425 = vld [vmem:[#allocation8 + $0x2fc] sm:$0xf]
    %v2426 = vld [vmem:[#allocation8 + $0x300] sm:$0xff]
    %v2427 = vld [vmem:[#allocation8 + $0x308] sm:$0xf]
    %v2428 = vld [vmem:[#allocation8 + $0x30c] sm:$0xff]
    %v2429 = vld [vmem:[#allocation8 + $0x314] sm:$0xf]
    %v2430 = vld [vmem:[#allocation8 + $0x318] sm:$0xff]
    %v2431 = vld [vmem:[#allocation8 + $0x320] sm:$0xf]
    %v2432 = vld [vmem:[#allocation8 + $0x324] sm:$0xff]
    %v2433 = vld [vmem:[#allocation8 + $0x32c] sm:$0xf]
    %v2434 = vld [vmem:[#allocation8 + $0x330] sm:$0xff]
    %v2435 = vld [vmem:[#allocation8 + $0x338] sm:$0xf]
    %v2436 = vld [vmem:[#allocation8 + $0x33c] sm:$0xff]
    %v2437 = vld [vmem:[#allocation8 + $0x344] sm:$0xf]
    %v2438 = vld [vmem:[#allocation8 + $0x348] sm:$0xff]
    %v2439 = vld [vmem:[#allocation8 + $0x350] sm:$0xf]
    %v2440 = vld [vmem:[#allocation8 + $0x354] sm:$0xff]
    %v2441 = vld [vmem:[#allocation8 + $0x35c] sm:$0xf]
    %v2442 = vld [vmem:[#allocation8 + $0x360] sm:$0xff]
    %v2443 = vld [vmem:[#allocation8 + $0x368] sm:$0xf]
    %v2444 = vld [vmem:[#allocation8 + $0x36c] sm:$0xff]
    %v2445 = vld [vmem:[#allocation8 + $0x374] sm:$0xf]
    %v2446 = vld [vmem:[#allocation8 + $0x378] sm:$0xff]
    %v2447 = vld [vmem:[#allocation8 + $0x380] sm:$0xf]
    %v2448 = vld [vmem:[#allocation8 + $0x384] sm:$0xff]
    %v2449 = vld [vmem:[#allocation8 + $0x38c] sm:$0xf]
    %v2450 = vld [vmem:[#allocation8 + $0x390] sm:$0xff]
    %v2451 = vld [vmem:[#allocation8 + $0x398] sm:$0xf]
    %v2452 = vld [vmem:[#allocation8 + $0x39c] sm:$0xff]
    %v2453 = vld [vmem:[#allocation8 + $0x3a4] sm:$0xf]
    %v2454 = vld [vmem:[#allocation8 + $0x3a8] sm:$0xff]
    %v2455 = vld [vmem:[#allocation8 + $0x3b0] sm:$0xf]
    %v2456 = vld [vmem:[#allocation8 + $0x3b4] sm:$0xff]
    %v2457 = vld [vmem:[#allocation8 + $0x3bc] sm:$0xf]
    %v2458 = vld [vmem:[%s4] sm:$0x7]
    %v2460 = vlaneseq
    %v2461 = vshrl.u32 %v2460, 7
    %v2462 = vsub.s32 0, %v2461
    %v2463 = vrot.slane %v2458, %v2462
    %v2464 = vlaneseq
    %v2465 = vshrl.u32 %v2464, 7
    %v2466 = vsub.s32 1, %v2465
    %v2467 = vrot.slane %v2458, %v2466
    %v2468 = vlaneseq
    %v2469 = vshrl.u32 %v2468, 7
    %v2470 = vsub.s32 2, %v2469
    %v2471 = vrot.slane %v2458, %v2470
    %v2635 = vunpack.c.l.b16 %v2298
    %v2636 = vunpack.c.h.b16 %v2298
    %v2637 = vunpack.c.l.b16 %v2299
    %v2638 = vunpack.c.l.b16 %v2300
    %v2639 = vunpack.c.h.b16 %v2300
    %v2640 = vunpack.c.l.b16 %v2301
    %v2641 = vunpack.c.l.b16 %v2302
    %v2642 = vunpack.c.h.b16 %v2302
    %v2643 = vunpack.c.l.b16 %v2303
    %v2644 = vunpack.c.l.b16 %v2304
    %v2645 = vunpack.c.h.b16 %v2304
    %v2646 = vunpack.c.l.b16 %v2305
    %v2647 = vunpack.c.l.b16 %v2306
    %v2648 = vunpack.c.h.b16 %v2306
    %v2649 = vunpack.c.l.b16 %v2307
    %v2650 = vunpack.c.l.b16 %v2308
    %v2651 = vunpack.c.h.b16 %v2308
    %v2652 = vunpack.c.l.b16 %v2309
    %v2653 = vunpack.c.l.b16 %v2310
    %v2654 = vunpack.c.h.b16 %v2310
    %v2655 = vunpack.c.l.b16 %v2311
    %v2656 = vunpack.c.l.b16 %v2312
    %v2657 = vunpack.c.h.b16 %v2312
    %v2658 = vunpack.c.l.b16 %v2313
    %v2659 = vunpack.c.l.b16 %v2314
    %v2660 = vunpack.c.h.b16 %v2314
    %v2661 = vunpack.c.l.b16 %v2315
    %v2662 = vunpack.c.l.b16 %v2316
    %v2663 = vunpack.c.h.b16 %v2316
    %v2664 = vunpack.c.l.b16 %v2317
    %v2665 = vunpack.c.l.b16 %v2318
    %v2666 = vunpack.c.h.b16 %v2318
    %v2667 = vunpack.c.l.b16 %v2319
    %v2668 = vunpack.c.l.b16 %v2320
    %v2669 = vunpack.c.h.b16 %v2320
    %v2670 = vunpack.c.l.b16 %v2321
    %v2671 = vunpack.c.l.b16 %v2322
    %v2672 = vunpack.c.h.b16 %v2322
    %v2673 = vunpack.c.l.b16 %v2323
    %v2674 = vunpack.c.l.b16 %v2324
    %v2675 = vunpack.c.h.b16 %v2324
    %v2676 = vunpack.c.l.b16 %v2325
    %v2677 = vunpack.c.l.b16 %v2326
    %v2678 = vunpack.c.h.b16 %v2326
    %v2679 = vunpack.c.l.b16 %v2327
    %v2680 = vunpack.c.l.b16 %v2328
    %v2681 = vunpack.c.h.b16 %v2328
    %v2682 = vunpack.c.l.b16 %v2329
    %v2683 = vunpack.c.l.b16 %v2330
    %v2684 = vunpack.c.h.b16 %v2330
    %v2685 = vunpack.c.l.b16 %v2331
    %v2686 = vunpack.c.l.b16 %v2332
    %v2687 = vunpack.c.h.b16 %v2332
    %v2688 = vunpack.c.l.b16 %v2333
    %v2689 = vunpack.c.l.b16 %v2334
    %v2690 = vunpack.c.h.b16 %v2334
    %v2691 = vunpack.c.l.b16 %v2335
    %v2692 = vunpack.c.l.b16 %v2336
    %v2693 = vunpack.c.h.b16 %v2336
    %v2694 = vunpack.c.l.b16 %v2337
    %v2695 = vunpack.c.l.b16 %v2338
    %v2696 = vunpack.c.h.b16 %v2338
    %v2697 = vunpack.c.l.b16 %v2339
    %v2698 = vunpack.c.l.b16 %v2340
    %v2699 = vunpack.c.h.b16 %v2340
    %v2700 = vunpack.c.l.b16 %v2341
    %v2701 = vunpack.c.l.b16 %v2342
    %v2702 = vunpack.c.h.b16 %v2342
    %v2703 = vunpack.c.l.b16 %v2343
    %v2704 = vunpack.c.l.b16 %v2344
    %v2705 = vunpack.c.h.b16 %v2344
    %v2706 = vunpack.c.l.b16 %v2345
    %v2707 = vunpack.c.l.b16 %v2346
    %v2708 = vunpack.c.h.b16 %v2346
    %v2709 = vunpack.c.l.b16 %v2347
    %v2710 = vunpack.c.l.b16 %v2348
    %v2711 = vunpack.c.h.b16 %v2348
    %v2712 = vunpack.c.l.b16 %v2349
    %v2713 = vunpack.c.l.b16 %v2350
    %v2714 = vunpack.c.h.b16 %v2350
    %v2715 = vunpack.c.l.b16 %v2351
    %v2716 = vunpack.c.l.b16 %v2352
    %v2717 = vunpack.c.h.b16 %v2352
    %v2718 = vunpack.c.l.b16 %v2353
    %v2719 = vunpack.c.l.b16 %v2354
    %v2720 = vunpack.c.h.b16 %v2354
    %v2721 = vunpack.c.l.b16 %v2355
    %v2722 = vunpack.c.l.b16 %v2356
    %v2723 = vunpack.c.h.b16 %v2356
    %v2724 = vunpack.c.l.b16 %v2357
    %v2725 = vunpack.c.l.b16 %v2358
    %v2726 = vunpack.c.h.b16 %v2358
    %v2727 = vunpack.c.l.b16 %v2359
    %v2728 = vunpack.c.l.b16 %v2360
    %v2729 = vunpack.c.h.b16 %v2360
    %v2730 = vunpack.c.l.b16 %v2361
    %v2731 = vunpack.c.l.b16 %v2362
    %v2732 = vunpack.c.h.b16 %v2362
    %v2733 = vunpack.c.l.b16 %v2363
    %v2734 = vunpack.c.l.b16 %v2364
    %v2735 = vunpack.c.h.b16 %v2364
    %v2736 = vunpack.c.l.b16 %v2365
    %v2737 = vunpack.c.l.b16 %v2366
    %v2738 = vunpack.c.h.b16 %v2366
    %v2739 = vunpack.c.l.b16 %v2367
    %v2740 = vunpack.c.l.b16 %v2368
    %v2741 = vunpack.c.h.b16 %v2368
    %v2742 = vunpack.c.l.b16 %v2369
    %v2743 = vunpack.c.l.b16 %v2370
    %v2744 = vunpack.c.h.b16 %v2370
    %v2745 = vunpack.c.l.b16 %v2371
    %v2746 = vunpack.c.l.b16 %v2372
    %v2747 = vunpack.c.h.b16 %v2372
    %v2748 = vunpack.c.l.b16 %v2373
    %v2749 = vunpack.c.l.b16 %v2374
    %v2750 = vunpack.c.h.b16 %v2374
    %v2751 = vunpack.c.l.b16 %v2375
    %v2752 = vunpack.c.l.b16 %v2376
    %v2753 = vunpack.c.h.b16 %v2376
    %v2754 = vunpack.c.l.b16 %v2377
    %v2755 = vunpack.c.l.b16 %v2378
    %v2756 = vunpack.c.h.b16 %v2378
    %v2757 = vunpack.c.l.b16 %v2379
    %v2758 = vunpack.c.l.b16 %v2380
    %v2759 = vunpack.c.h.b16 %v2380
    %v2760 = vunpack.c.l.b16 %v2381
    %v2761 = vunpack.c.l.b16 %v2382
    %v2762 = vunpack.c.h.b16 %v2382
    %v2763 = vunpack.c.l.b16 %v2383
    %v2764 = vunpack.c.l.b16 %v2384
    %v2765 = vunpack.c.h.b16 %v2384
    %v2766 = vunpack.c.l.b16 %v2385
    %v2767 = vunpack.c.l.b16 %v2386
    %v2768 = vunpack.c.h.b16 %v2386
    %v2769 = vunpack.c.l.b16 %v2387
    %v2770 = vunpack.c.l.b16 %v2388
    %v2771 = vunpack.c.h.b16 %v2388
    %v2772 = vunpack.c.l.b16 %v2389
    %v2773 = vunpack.c.l.b16 %v2390
    %v2774 = vunpack.c.h.b16 %v2390
    %v2775 = vunpack.c.l.b16 %v2391
    %v2776 = vunpack.c.l.b16 %v2392
    %v2777 = vunpack.c.h.b16 %v2392
    %v2778 = vunpack.c.l.b16 %v2393
    %v2779 = vunpack.c.l.b16 %v2394
    %v2780 = vunpack.c.h.b16 %v2394
    %v2781 = vunpack.c.l.b16 %v2395
    %v2782 = vunpack.c.l.b16 %v2396
    %v2783 = vunpack.c.h.b16 %v2396
    %v2784 = vunpack.c.l.b16 %v2397
    %v2785 = vunpack.c.l.b16 %v2398
    %v2786 = vunpack.c.h.b16 %v2398
    %v2787 = vunpack.c.l.b16 %v2399
    %v2788 = vunpack.c.l.b16 %v2400
    %v2789 = vunpack.c.h.b16 %v2400
    %v2790 = vunpack.c.l.b16 %v2401
    %v2791 = vunpack.c.l.b16 %v2402
    %v2792 = vunpack.c.h.b16 %v2402
    %v2793 = vunpack.c.l.b16 %v2403
    %v2794 = vunpack.c.l.b16 %v2404
    %v2795 = vunpack.c.h.b16 %v2404
    %v2796 = vunpack.c.l.b16 %v2405
    %v2797 = vunpack.c.l.b16 %v2406
    %v2798 = vunpack.c.h.b16 %v2406
    %v2799 = vunpack.c.l.b16 %v2407
    %v2800 = vunpack.c.l.b16 %v2408
    %v2801 = vunpack.c.h.b16 %v2408
    %v2802 = vunpack.c.l.b16 %v2409
    %v2803 = vunpack.c.l.b16 %v2410
    %v2804 = vunpack.c.h.b16 %v2410
    %v2805 = vunpack.c.l.b16 %v2411
    %v2806 = vunpack.c.l.b16 %v2412
    %v2807 = vunpack.c.h.b16 %v2412
    %v2808 = vunpack.c.l.b16 %v2413
    %v2809 = vunpack.c.l.b16 %v2414
    %v2810 = vunpack.c.h.b16 %v2414
    %v2811 = vunpack.c.l.b16 %v2415
    %v2812 = vunpack.c.l.b16 %v2416
    %v2813 = vunpack.c.h.b16 %v2416
    %v2814 = vunpack.c.l.b16 %v2417
    %v2815 = vunpack.c.l.b16 %v2418
    %v2816 = vunpack.c.h.b16 %v2418
    %v2817 = vunpack.c.l.b16 %v2419
    %v2818 = vunpack.c.l.b16 %v2420
    %v2819 = vunpack.c.h.b16 %v2420
    %v2820 = vunpack.c.l.b16 %v2421
    %v2821 = vunpack.c.l.b16 %v2422
    %v2822 = vunpack.c.h.b16 %v2422
    %v2823 = vunpack.c.l.b16 %v2423
    %v2824 = vunpack.c.l.b16 %v2424
    %v2825 = vunpack.c.h.b16 %v2424
    %v2826 = vunpack.c.l.b16 %v2425
    %v2827 = vunpack.c.l.b16 %v2426
    %v2828 = vunpack.c.h.b16 %v2426
    %v2829 = vunpack.c.l.b16 %v2427
    %v2830 = vunpack.c.l.b16 %v2428
    %v2831 = vunpack.c.h.b16 %v2428
    %v2832 = vunpack.c.l.b16 %v2429
    %v2833 = vunpack.c.l.b16 %v2430
    %v2834 = vunpack.c.h.b16 %v2430
    %v2835 = vunpack.c.l.b16 %v2431
    %v2836 = vunpack.c.l.b16 %v2432
    %v2837 = vunpack.c.h.b16 %v2432
    %v2838 = vunpack.c.l.b16 %v2433
    %v2839 = vunpack.c.l.b16 %v2434
    %v2840 = vunpack.c.h.b16 %v2434
    %v2841 = vunpack.c.l.b16 %v2435
    %v2842 = vunpack.c.l.b16 %v2436
    %v2843 = vunpack.c.h.b16 %v2436
    %v2844 = vunpack.c.l.b16 %v2437
    %v2845 = vunpack.c.l.b16 %v2438
    %v2846 = vunpack.c.h.b16 %v2438
    %v2847 = vunpack.c.l.b16 %v2439
    %v2848 = vunpack.c.l.b16 %v2440
    %v2849 = vunpack.c.h.b16 %v2440
    %v2850 = vunpack.c.l.b16 %v2441
    %v2851 = vunpack.c.l.b16 %v2442
    %v2852 = vunpack.c.h.b16 %v2442
    %v2853 = vunpack.c.l.b16 %v2443
    %v2854 = vunpack.c.l.b16 %v2444
    %v2855 = vunpack.c.h.b16 %v2444
    %v2856 = vunpack.c.l.b16 %v2445
    %v2857 = vunpack.c.l.b16 %v2446
    %v2858 = vunpack.c.h.b16 %v2446
    %v2859 = vunpack.c.l.b16 %v2447
    %v2860 = vunpack.c.l.b16 %v2448
    %v2861 = vunpack.c.h.b16 %v2448
    %v2862 = vunpack.c.l.b16 %v2449
    %v2863 = vunpack.c.l.b16 %v2450
    %v2864 = vunpack.c.h.b16 %v2450
    %v2865 = vunpack.c.l.b16 %v2451
    %v2866 = vunpack.c.l.b16 %v2452
    %v2867 = vunpack.c.h.b16 %v2452
    %v2868 = vunpack.c.l.b16 %v2453
    %v2869 = vunpack.c.l.b16 %v2454
    %v2870 = vunpack.c.h.b16 %v2454
    %v2871 = vunpack.c.l.b16 %v2455
    %v2872 = vunpack.c.l.b16 %v2456
    %v2873 = vunpack.c.h.b16 %v2456
    %v2874 = vunpack.c.l.b16 %v2457
    %v2875 = vpack.c.b16 %v2638, %v2635
    %v2876 = vpack.c.b16 %v2639, %v2636
    %v2877 = vpack.c.b16 %v2640, %v2637
    %v2878 = vpack.c.b16 %v2644, %v2641
    %v2879 = vpack.c.b16 %v2645, %v2642
    %v2880 = vpack.c.b16 %v2646, %v2643
    %v2881 = vpack.c.b16 %v2650, %v2647
    %v2882 = vpack.c.b16 %v2651, %v2648
    %v2883 = vpack.c.b16 %v2652, %v2649
    %v2884 = vpack.c.b16 %v2656, %v2653
    %v2885 = vpack.c.b16 %v2657, %v2654
    %v2886 = vpack.c.b16 %v2658, %v2655
    %v2887 = vpack.c.b16 %v2662, %v2659
    %v2888 = vpack.c.b16 %v2663, %v2660
    %v2889 = vpack.c.b16 %v2664, %v2661
    %v2890 = vpack.c.b16 %v2668, %v2665
    %v2891 = vpack.c.b16 %v2669, %v2666
    %v2892 = vpack.c.b16 %v2670, %v2667
    %v2893 = vpack.c.b16 %v2674, %v2671
    %v2894 = vpack.c.b16 %v2675, %v2672
    %v2895 = vpack.c.b16 %v2676, %v2673
    %v2896 = vpack.c.b16 %v2680, %v2677
    %v2897 = vpack.c.b16 %v2681, %v2678
    %v2898 = vpack.c.b16 %v2682, %v2679
    %v2899 = vpack.c.b16 %v2686, %v2683
    %v2900 = vpack.c.b16 %v2687, %v2684
    %v2901 = vpack.c.b16 %v2688, %v2685
    %v2902 = vpack.c.b16 %v2692, %v2689
    %v2903 = vpack.c.b16 %v2693, %v2690
    %v2904 = vpack.c.b16 %v2694, %v2691
    %v2905 = vpack.c.b16 %v2698, %v2695
    %v2906 = vpack.c.b16 %v2699, %v2696
    %v2907 = vpack.c.b16 %v2700, %v2697
    %v2908 = vpack.c.b16 %v2704, %v2701
    %v2909 = vpack.c.b16 %v2705, %v2702
    %v2910 = vpack.c.b16 %v2706, %v2703
    %v2911 = vpack.c.b16 %v2710, %v2707
    %v2912 = vpack.c.b16 %v2711, %v2708
    %v2913 = vpack.c.b16 %v2712, %v2709
    %v2914 = vpack.c.b16 %v2716, %v2713
    %v2915 = vpack.c.b16 %v2717, %v2714
    %v2916 = vpack.c.b16 %v2718, %v2715
    %v2917 = vpack.c.b16 %v2722, %v2719
    %v2918 = vpack.c.b16 %v2723, %v2720
    %v2919 = vpack.c.b16 %v2724, %v2721
    %v2920 = vpack.c.b16 %v2728, %v2725
    %v2921 = vpack.c.b16 %v2729, %v2726
    %v2922 = vpack.c.b16 %v2730, %v2727
    %v2923 = vpack.c.b16 %v2734, %v2731
    %v2924 = vpack.c.b16 %v2735, %v2732
    %v2925 = vpack.c.b16 %v2736, %v2733
    %v2926 = vpack.c.b16 %v2740, %v2737
    %v2927 = vpack.c.b16 %v2741, %v2738
    %v2928 = vpack.c.b16 %v2742, %v2739
    %v2929 = vpack.c.b16 %v2746, %v2743
    %v2930 = vpack.c.b16 %v2747, %v2744
    %v2931 = vpack.c.b16 %v2748, %v2745
    %v2932 = vpack.c.b16 %v2752, %v2749
    %v2933 = vpack.c.b16 %v2753, %v2750
    %v2934 = vpack.c.b16 %v2754, %v2751
    %v2935 = vpack.c.b16 %v2758, %v2755
    %v2936 = vpack.c.b16 %v2759, %v2756
    %v2937 = vpack.c.b16 %v2760, %v2757
    %v2938 = vpack.c.b16 %v2764, %v2761
    %v2939 = vpack.c.b16 %v2765, %v2762
    %v2940 = vpack.c.b16 %v2766, %v2763
    %v2941 = vpack.c.b16 %v2770, %v2767
    %v2942 = vpack.c.b16 %v2771, %v2768
    %v2943 = vpack.c.b16 %v2772, %v2769
    %v2944 = vpack.c.b16 %v2776, %v2773
    %v2945 = vpack.c.b16 %v2777, %v2774
    %v2946 = vpack.c.b16 %v2778, %v2775
    %v2947 = vpack.c.b16 %v2782, %v2779
    %v2948 = vpack.c.b16 %v2783, %v2780
    %v2949 = vpack.c.b16 %v2784, %v2781
    %v2950 = vpack.c.b16 %v2788, %v2785
    %v2951 = vpack.c.b16 %v2789, %v2786
    %v2952 = vpack.c.b16 %v2790, %v2787
    %v2953 = vpack.c.b16 %v2794, %v2791
    %v2954 = vpack.c.b16 %v2795, %v2792
    %v2955 = vpack.c.b16 %v2796, %v2793
    %v2956 = vpack.c.b16 %v2800, %v2797
    %v2957 = vpack.c.b16 %v2801, %v2798
    %v2958 = vpack.c.b16 %v2802, %v2799
    %v2959 = vpack.c.b16 %v2806, %v2803
    %v2960 = vpack.c.b16 %v2807, %v2804
    %v2961 = vpack.c.b16 %v2808, %v2805
    %v2962 = vpack.c.b16 %v2812, %v2809
    %v2963 = vpack.c.b16 %v2813, %v2810
    %v2964 = vpack.c.b16 %v2814, %v2811
    %v2965 = vpack.c.b16 %v2818, %v2815
    %v2966 = vpack.c.b16 %v2819, %v2816
    %v2967 = vpack.c.b16 %v2820, %v2817
    %v2968 = vpack.c.b16 %v2824, %v2821
    %v2969 = vpack.c.b16 %v2825, %v2822
    %v2970 = vpack.c.b16 %v2826, %v2823
    %v2971 = vpack.c.b16 %v2830, %v2827
    %v2972 = vpack.c.b16 %v2831, %v2828
    %v2973 = vpack.c.b16 %v2832, %v2829
    %v2974 = vpack.c.b16 %v2836, %v2833
    %v2975 = vpack.c.b16 %v2837, %v2834
    %v2976 = vpack.c.b16 %v2838, %v2835
    %v2977 = vpack.c.b16 %v2842, %v2839
    %v2978 = vpack.c.b16 %v2843, %v2840
    %v2979 = vpack.c.b16 %v2844, %v2841
    %v2980 = vpack.c.b16 %v2848, %v2845
    %v2981 = vpack.c.b16 %v2849, %v2846
    %v2982 = vpack.c.b16 %v2850, %v2847
    %v2983 = vpack.c.b16 %v2854, %v2851
    %v2984 = vpack.c.b16 %v2855, %v2852
    %v2985 = vpack.c.b16 %v2856, %v2853
    %v2986 = vpack.c.b16 %v2860, %v2857
    %v2987 = vpack.c.b16 %v2861, %v2858
    %v2988 = vpack.c.b16 %v2862, %v2859
    %v2989 = vpack.c.b16 %v2866, %v2863
    %v2990 = vpack.c.b16 %v2867, %v2864
    %v2991 = vpack.c.b16 %v2868, %v2865
    %v2992 = vpack.c.b16 %v2872, %v2869
    %v2993 = vpack.c.b16 %v2873, %v2870
    %v2994 = vpack.c.b16 %v2874, %v2871
    %3115 = vmatprep.subr.bf16.mxu0 %v2897
    %3116 = vmatpush1.bf16.msra.mxu0 %v2896
    %3117 = vmatprep.subr.bf16.mxu0 %v2894
    %3118 = vmatpush1.bf16.msra.mxu0 %v2893
    %3119 = vmatprep.subr.bf16.mxu0 %v2891
    %3120 = vmatpush1.bf16.msra.mxu0 %v2890
    %3121 = vmatprep.subr.bf16.mxu0 %v2888
    %3122 = vmatpush1.bf16.msra.mxu0 %v2887
    %3123 = vmatprep.subr.bf16.mxu0 %v2885
    %3124 = vmatpush1.bf16.msra.mxu0 %v2884
    %3125 = vmatprep.subr.bf16.mxu0 %v2882
    %3126 = vmatpush1.bf16.msra.mxu0 %v2881
    %3127 = vmatprep.subr.bf16.mxu0 %v2879
    %3128 = vmatpush1.bf16.msra.mxu0 %v2878
    %3129 = vmatprep.subr.bf16.mxu0 %v2876
    %3130 = vmatpush1.bf16.msra.mxu0 %v2875
    %3131 = vmatprep.subr.bf16.mxu0 %v2921
    %3132 = vmatpush2.bf16.msra.mxu0 %v2920
    %3133 = vmatprep.subr.bf16.mxu0 %v2918
    %3134 = vmatpush2.bf16.msra.mxu0 %v2917
    %3135 = vmatprep.subr.bf16.mxu0 %v2915
    %3136 = vmatpush2.bf16.msra.mxu0 %v2914
    %3137 = vmatprep.subr.bf16.mxu0 %v2912
    %3138 = vmatpush2.bf16.msra.mxu0 %v2911
    %3139 = vmatprep.subr.bf16.mxu0 %v2909
    %3140 = vmatpush2.bf16.msra.mxu0 %v2908
    %3141 = vmatprep.subr.bf16.mxu0 %v2906
    %3142 = vmatpush2.bf16.msra.mxu0 %v2905
    %3143 = vmatprep.subr.bf16.mxu0 %v2903
    %3144 = vmatpush2.bf16.msra.mxu0 %v2902
    %3145 = vmatprep.subr.bf16.mxu0 %v2900
    %3146 = vmatpush2.bf16.msra.mxu0 %v2899
    %3147 = vmatprep.mubr.bf16.mxu0 %v2294
    %3148 = vmatmul.mubr.bf16.gmra.mxu0 %v2293
    %v3149 = vpop.f32.mrf.mxu0
    %v3150 = vadd.f32 %v2463, %v3149
    %v3151 = vpop.f32.mrf.mxu0
    %v3152 = vadd.f32 %v2467, %v3151
    %v3153 = vpop.f32.mrf.mxu0
    %v3154 = vadd.f32 %v2463, %v3153
    %v3155 = vpop.f32.mrf.mxu0
    %v3156 = vadd.f32 %v2467, %v3155
    %3157 = vdwg.mxu0
    %3158 = vmatprep.subr.bf16.mxu0 %v2945
    %3159 = vmatpush1.bf16.msra.mxu0 %v2944
    %3160 = vmatprep.subr.bf16.mxu0 %v2942
    %3161 = vmatpush1.bf16.msra.mxu0 %v2941
    %3162 = vmatprep.subr.bf16.mxu0 %v2939
    %3163 = vmatpush1.bf16.msra.mxu0 %v2938
    %3164 = vmatprep.subr.bf16.mxu0 %v2936
    %3165 = vmatpush1.bf16.msra.mxu0 %v2935
    %3166 = vmatprep.subr.bf16.mxu0 %v2933
    %3167 = vmatpush1.bf16.msra.mxu0 %v2932
    %3168 = vmatprep.subr.bf16.mxu0 %v2930
    %3169 = vmatpush1.bf16.msra.mxu0 %v2929
    %3170 = vmatprep.subr.bf16.mxu0 %v2927
    %3171 = vmatpush1.bf16.msra.mxu0 %v2926
    %3172 = vmatprep.subr.bf16.mxu0 %v2924
    %3173 = vmatpush1.bf16.msra.mxu0 %v2923
    %3174 = vmatprep.subr.bf16.mxu0 %v2969
    %3175 = vmatpush2.bf16.msra.mxu0 %v2968
    %3176 = vmatprep.subr.bf16.mxu0 %v2966
    %3177 = vmatpush2.bf16.msra.mxu0 %v2965
    %3178 = vmatprep.subr.bf16.mxu0 %v2963
    %3179 = vmatpush2.bf16.msra.mxu0 %v2962
    %3180 = vmatprep.subr.bf16.mxu0 %v2960
    %3181 = vmatpush2.bf16.msra.mxu0 %v2959
    %3182 = vmatprep.subr.bf16.mxu0 %v2957
    %3183 = vmatpush2.bf16.msra.mxu0 %v2956
    %3184 = vmatprep.subr.bf16.mxu0 %v2954
    %3185 = vmatpush2.bf16.msra.mxu0 %v2953
    %3186 = vmatprep.subr.bf16.mxu0 %v2951
    %3187 = vmatpush2.bf16.msra.mxu0 %v2950
    %3188 = vmatprep.subr.bf16.mxu0 %v2948
    %3189 = vmatpush2.bf16.msra.mxu0 %v2947
    %3190 = vmatprep.mubr.bf16.mxu0 %v2296
    %3191 = vmatmul.mubr.bf16.gmra.mxu0 %v2295
    %v3192 = vpop.f32.mrf.mxu0
    %v3193 = vadd.f32 %v3150, %v3192
    %v3194 = vpop.f32.mrf.mxu0
    %v3195 = vadd.f32 %v3152, %v3194
    %v3196 = vpop.f32.mrf.mxu0
    %v3197 = vadd.f32 %v3154, %v3196
    %v3198 = vpop.f32.mrf.mxu0
    %v3199 = vadd.f32 %v3156, %v3198
    %3200 = vdwg.mxu0
    %3201 = vmatprep.subr.bf16.mxu0 %v2993
    %3202 = vmatpush1.bf16.msra.mxu0 %v2992
    %3203 = vmatprep.subr.bf16.mxu0 %v2990
    %3204 = vmatpush1.bf16.msra.mxu0 %v2989
    %3205 = vmatprep.subr.bf16.mxu0 %v2987
    %3206 = vmatpush1.bf16.msra.mxu0 %v2986
    %3207 = vmatprep.subr.bf16.mxu0 %v2984
    %3208 = vmatpush1.bf16.msra.mxu0 %v2983
    %3209 = vmatprep.subr.bf16.mxu0 %v2981
    %3210 = vmatpush1.bf16.msra.mxu0 %v2980
    %3211 = vmatprep.subr.bf16.mxu0 %v2978
    %3212 = vmatpush1.bf16.msra.mxu0 %v2977
    %3213 = vmatprep.subr.bf16.mxu0 %v2975
    %3214 = vmatpush1.bf16.msra.mxu0 %v2974
    %3215 = vmatprep.subr.bf16.mxu0 %v2972
    %3216 = vmatpush1.bf16.msra.mxu0 %v2971
    %3217 = vmatprep.subr.bf16.mxu0 0
    %3218 = vmatpush2.bf16.msra.mxu0 0
    %3219 = vmatprep.subr.bf16.mxu0 0
    %3220 = vmatpush2.bf16.msra.mxu0 0
    %3221 = vmatprep.subr.bf16.mxu0 0
    %3222 = vmatpush2.bf16.msra.mxu0 0
    %3223 = vmatprep.subr.bf16.mxu0 0
    %3224 = vmatpush2.bf16.msra.mxu0 0
    %3225 = vmatprep.subr.bf16.mxu0 0
    %3226 = vmatpush2.bf16.msra.mxu0 0
    %3227 = vmatprep.subr.bf16.mxu0 0
    %3228 = vmatpush2.bf16.msra.mxu0 0
    %3229 = vmatprep.subr.bf16.mxu0 0
    %3230 = vmatpush2.bf16.msra.mxu0 0
    %3231 = vmatprep.subr.bf16.mxu0 0
    %3232 = vmatpush2.bf16.msra.mxu0 0
    %3233 = vmatprep.mubr.bf16.mxu0 0
    %3234 = vmatmul.mubr.bf16.gmra.mxu0 %v2297
    %v3235 = vpop.f32.mrf.mxu0
    %v3236 = vadd.f32 %v3193, %v3235
    %v3237 = vpop.f32.mrf.mxu0
    %v3238 = vadd.f32 %v3195, %v3237
    %v3239 = vpop.f32.mrf.mxu0
    %v3240 = vadd.f32 %v3197, %v3239
    %v3241 = vpop.f32.mrf.mxu0
    %v3242 = vadd.f32 %v3199, %v3241
    %3243 = vdwg.mxu0
    %3244 = vmatprep.subr.bf16.mxu0 0
    %3245 = vmatpush1.bf16.msra.mxu0 %v2898
    %3246 = vmatprep.subr.bf16.mxu0 0
    %3247 = vmatpush1.bf16.msra.mxu0 %v2895
    %3248 = vmatprep.subr.bf16.mxu0 0
    %3249 = vmatpush1.bf16.msra.mxu0 %v2892
    %3250 = vmatprep.subr.bf16.mxu0 0
    %3251 = vmatpush1.bf16.msra.mxu0 %v2889
    %3252 = vmatprep.subr.bf16.mxu0 0
    %3253 = vmatpush1.bf16.msra.mxu0 %v2886
    %3254 = vmatprep.subr.bf16.mxu0 0
    %3255 = vmatpush1.bf16.msra.mxu0 %v2883
    %3256 = vmatprep.subr.bf16.mxu0 0
    %3257 = vmatpush1.bf16.msra.mxu0 %v2880
    %3258 = vmatprep.subr.bf16.mxu0 0
    %3259 = vmatpush1.bf16.msra.mxu0 %v2877
    %3260 = vmatprep.subr.bf16.mxu0 0
    %3261 = vmatpush2.bf16.msra.mxu0 %v2922
    %3262 = vmatprep.subr.bf16.mxu0 0
    %3263 = vmatpush2.bf16.msra.mxu0 %v2919
    %3264 = vmatprep.subr.bf16.mxu0 0
    %3265 = vmatpush2.bf16.msra.mxu0 %v2916
    %3266 = vmatprep.subr.bf16.mxu0 0
    %3267 = vmatpush2.bf16.msra.mxu0 %v2913
    %3268 = vmatprep.subr.bf16.mxu0 0
    %3269 = vmatpush2.bf16.msra.mxu0 %v2910
    %3270 = vmatprep.subr.bf16.mxu0 0
    %3271 = vmatpush2.bf16.msra.mxu0 %v2907
    %3272 = vmatprep.subr.bf16.mxu0 0
    %3273 = vmatpush2.bf16.msra.mxu0 %v2904
    %3274 = vmatprep.subr.bf16.mxu0 0
    %3275 = vmatpush2.bf16.msra.mxu0 %v2901
    %3276 = vmatprep.mubr.bf16.mxu0 %v2294
    %3277 = vmatmul.mubr.bf16.gmra.mxu0 %v2293
    %v3278 = vpop.f32.mrf.mxu0
    %v3279 = vadd.f32 %v2471, %v3278
    %v3280 = vpop.f32.mrf.mxu0
    %v3281 = vpop.f32.mrf.mxu0
    %v3282 = vadd.f32 %v2471, %v3281
    %v3283 = vpop.f32.mrf.mxu0
    %3284 = vdwg.mxu0
    %3285 = vmatprep.subr.bf16.mxu0 0
    %3286 = vmatpush1.bf16.msra.mxu0 %v2946
    %3287 = vmatprep.subr.bf16.mxu0 0
    %3288 = vmatpush1.bf16.msra.mxu0 %v2943
    %3289 = vmatprep.subr.bf16.mxu0 0
    %3290 = vmatpush1.bf16.msra.mxu0 %v2940
    %3291 = vmatprep.subr.bf16.mxu0 0
    %3292 = vmatpush1.bf16.msra.mxu0 %v2937
    %3293 = vmatprep.subr.bf16.mxu0 0
    %3294 = vmatpush1.bf16.msra.mxu0 %v2934
    %3295 = vmatprep.subr.bf16.mxu0 0
    %3296 = vmatpush1.bf16.msra.mxu0 %v2931
    %3297 = vmatprep.subr.bf16.mxu0 0
    %3298 = vmatpush1.bf16.msra.mxu0 %v2928
    %3299 = vmatprep.subr.bf16.mxu0 0
    %3300 = vmatpush1.bf16.msra.mxu0 %v2925
    %3301 = vmatprep.subr.bf16.mxu0 0
    %3302 = vmatpush2.bf16.msra.mxu0 %v2970
    %3303 = vmatprep.subr.bf16.mxu0 0
    %3304 = vmatpush2.bf16.msra.mxu0 %v2967
    %3305 = vmatprep.subr.bf16.mxu0 0
    %3306 = vmatpush2.bf16.msra.mxu0 %v2964
    %3307 = vmatprep.subr.bf16.mxu0 0
    %3308 = vmatpush2.bf16.msra.mxu0 %v2961
    %3309 = vmatprep.subr.bf16.mxu0 0
    %3310 = vmatpush2.bf16.msra.mxu0 %v2958
    %3311 = vmatprep.subr.bf16.mxu0 0
    %3312 = vmatpush2.bf16.msra.mxu0 %v2955
    %3313 = vmatprep.subr.bf16.mxu0 0
    %3314 = vmatpush2.bf16.msra.mxu0 %v2952
    %3315 = vmatprep.subr.bf16.mxu0 0
    %3316 = vmatpush2.bf16.msra.mxu0 %v2949
    %3317 = vmatprep.mubr.bf16.mxu0 %v2296
    %3318 = vmatmul.mubr.bf16.gmra.mxu0 %v2295
    %v3319 = vpop.f32.mrf.mxu0
    %v3320 = vadd.f32 %v3279, %v3319
    %v3321 = vpop.f32.mrf.mxu0
    %v3322 = vpop.f32.mrf.mxu0
    %v3323 = vadd.f32 %v3282, %v3322
    %v3324 = vpop.f32.mrf.mxu0
    %3325 = vdwg.mxu0
    %3326 = vmatprep.subr.bf16.mxu0 0
    %3327 = vmatpush1.bf16.msra.mxu0 %v2994
    %3328 = vmatprep.subr.bf16.mxu0 0
    %3329 = vmatpush1.bf16.msra.mxu0 %v2991
    %3330 = vmatprep.subr.bf16.mxu0 0
    %3331 = vmatpush1.bf16.msra.mxu0 %v2988
    %3332 = vmatprep.subr.bf16.mxu0 0
    %3333 = vmatpush1.bf16.msra.mxu0 %v2985
    %3334 = vmatprep.subr.bf16.mxu0 0
    %3335 = vmatpush1.bf16.msra.mxu0 %v2982
    %3336 = vmatprep.subr.bf16.mxu0 0
    %3337 = vmatpush1.bf16.msra.mxu0 %v2979
    %3338 = vmatprep.subr.bf16.mxu0 0
    %3339 = vmatpush1.bf16.msra.mxu0 %v2976
    %3340 = vmatprep.subr.bf16.mxu0 0
    %3341 = vmatpush1.bf16.msra.mxu0 %v2973
    %3342 = vmatprep.subr.bf16.mxu0 0
    %3343 = vmatpush2.bf16.msra.mxu0 0
    %3344 = vmatprep.subr.bf16.mxu0 0
    %3345 = vmatpush2.bf16.msra.mxu0 0
    %3346 = vmatprep.subr.bf16.mxu0 0
    %3347 = vmatpush2.bf16.msra.mxu0 0
    %3348 = vmatprep.subr.bf16.mxu0 0
    %3349 = vmatpush2.bf16.msra.mxu0 0
    %3350 = vmatprep.subr.bf16.mxu0 0
    %3351 = vmatpush2.bf16.msra.mxu0 0
    %3352 = vmatprep.subr.bf16.mxu0 0
    %3353 = vmatpush2.bf16.msra.mxu0 0
    %3354 = vmatprep.subr.bf16.mxu0 0
    %3355 = vmatpush2.bf16.msra.mxu0 0
    %3356 = vmatprep.subr.bf16.mxu0 0
    %3357 = vmatpush2.bf16.msra.mxu0 0
    %3358 = vmatprep.mubr.bf16.mxu0 0
    %3359 = vmatmul.mubr.bf16.gmra.mxu0 %v2297
    %v3360 = vpop.f32.mrf.mxu0
    %v3361 = vadd.f32 %v3320, %v3360
    %v3362 = vpop.f32.mrf.mxu0
    %v3363 = vpop.f32.mrf.mxu0
    %v3364 = vadd.f32 %v3323, %v3363
    %v3365 = vpop.f32.mrf.mxu0
    %3366 = vdwg.mxu0
    %v3367 = vmax.f32 %v3236, 0.0
    %v3368 = vmax.f32 %v3238, 0.0
    %v3369 = vmax.f32 %v3361, 0.0
    %v3370 = vmax.f32 %v3240, 0.0
    %v3371 = vmax.f32 %v3242, 0.0
    %v3372 = vmax.f32 %v3364, 0.0
    %v3373 = vpack.c.bf16 %v3370, %v3367
    %v3374 = vpack.c.bf16 %v3371, %v3368
    %v3375 = vpack.c.bf16 %v3372, %v3369
    %v3376 = vld [vmem:[#allocation10] sm:$0xff]
    %v3377 = vld [vmem:[#allocation10 + $0x8] sm:$0xff]
    %v3378 = vld [vmem:[#allocation10 + $0x10] sm:$0xff]
    %v3379 = vld [vmem:[#allocation10 + $0x18] sm:$0xff]
    %v3380 = vld [vmem:[#allocation10 + $0x20] sm:$0xff]
    %v3381 = vld [vmem:[#allocation10 + $0x28] sm:$0xff]
    %v3382 = vld [vmem:[#allocation10 + $0x30] sm:$0xff]
    %v3383 = vld [vmem:[#allocation10 + $0x38] sm:$0xff]
    %v3384 = vld [vmem:[#allocation10 + $0x40] sm:$0xff]
    %v3385 = vld [vmem:[#allocation10 + $0x48] sm:$0xff]
    %v3386 = vld [vmem:[#allocation10 + $0x50] sm:$0xff]
    %v3387 = vld [vmem:[#allocation10 + $0x58] sm:$0xff]
    %v3388 = vld [vmem:[#allocation10 + $0x60] sm:$0xff]
    %v3389 = vld [vmem:[#allocation10 + $0x68] sm:$0xff]
    %v3390 = vld [vmem:[#allocation10 + $0x70] sm:$0xff]
    %v3391 = vld [vmem:[#allocation10 + $0x78] sm:$0xff]
    %v3392 = vld [vmem:[#allocation10 + $0x80] sm:$0xff]
    %v3393 = vld [vmem:[#allocation10 + $0x88] sm:$0xff]
    %v3394 = vld [vmem:[#allocation10 + $0x90] sm:$0xff]
    %v3395 = vld [vmem:[#allocation10 + $0x98] sm:$0xff]
    %v3396 = vld [vmem:[#allocation10 + $0xa0] sm:$0xff]
    %v3397 = vld [vmem:[#allocation10 + $0xa8] sm:$0xff]
    %v3398 = vld [vmem:[#allocation10 + $0xb0] sm:$0xff]
    %v3399 = vld [vmem:[#allocation10 + $0xb8] sm:$0xff]
    %v3400 = vld [vmem:[#allocation10 + $0xc0] sm:$0xff]
    %v3401 = vld [vmem:[#allocation10 + $0xc8] sm:$0xff]
    %v3402 = vld [vmem:[#allocation10 + $0xd0] sm:$0xff]
    %v3403 = vld [vmem:[#allocation10 + $0xd8] sm:$0xff]
    %v3404 = vld [vmem:[#allocation10 + $0xe0] sm:$0xff]
    %v3405 = vld [vmem:[#allocation10 + $0xe8] sm:$0xff]
    %v3406 = vld [vmem:[#allocation10 + $0xf0] sm:$0xff]
    %v3407 = vld [vmem:[#allocation10 + $0xf8] sm:$0xff]
    %v3408 = vld [vmem:[#allocation10 + $0x100] sm:$0xff]
    %v3409 = vld [vmem:[#allocation10 + $0x108] sm:$0xff]
    %v3410 = vld [vmem:[#allocation10 + $0x110] sm:$0xff]
    %v3411 = vld [vmem:[#allocation10 + $0x118] sm:$0xff]
    %v3412 = vld [vmem:[#allocation10 + $0x120] sm:$0xff]
    %v3413 = vld [vmem:[#allocation10 + $0x128] sm:$0xff]
    %v3414 = vld [vmem:[#allocation10 + $0x130] sm:$0xff]
    %v3415 = vld [vmem:[#allocation10 + $0x138] sm:$0xff]
    %v3416 = vld [vmem:[#allocation10 + $0x140] sm:$0xff]
    %v3417 = vld [vmem:[#allocation10 + $0x148] sm:$0xff]
    %v3418 = vld [vmem:[#allocation10 + $0x150] sm:$0xff]
    %v3419 = vld [vmem:[#allocation10 + $0x158] sm:$0xff]
    %v3420 = vld [vmem:[#allocation10 + $0x160] sm:$0xff]
    %v3421 = vld [vmem:[#allocation10 + $0x168] sm:$0xff]
    %v3422 = vld [vmem:[#allocation10 + $0x170] sm:$0xff]
    %v3423 = vld [vmem:[#allocation10 + $0x178] sm:$0xff]
    %v3424 = vld [vmem:[%s6] sm:$0x3]
    %v3426 = vlaneseq
    %v3427 = vshrl.u32 %v3426, 7
    %v3428 = vsub.s32 0, %v3427
    %v3429 = vrot.slane %v3424, %v3428
    %v3430 = vlaneseq
    %v3431 = vshrl.u32 %v3430, 7
    %v3432 = vsub.s32 1, %v3431
    %v3433 = vrot.slane %v3424, %v3432
    %v3484 = vunpack.c.l.b16 %v3376
    %v3485 = vunpack.c.h.b16 %v3376
    %v3486 = vunpack.c.l.b16 %v3377
    %v3487 = vunpack.c.h.b16 %v3377
    %v3488 = vunpack.c.l.b16 %v3378
    %v3489 = vunpack.c.h.b16 %v3378
    %v3490 = vunpack.c.l.b16 %v3379
    %v3491 = vunpack.c.h.b16 %v3379
    %v3492 = vunpack.c.l.b16 %v3380
    %v3493 = vunpack.c.h.b16 %v3380
    %v3494 = vunpack.c.l.b16 %v3381
    %v3495 = vunpack.c.h.b16 %v3381
    %v3496 = vunpack.c.l.b16 %v3382
    %v3497 = vunpack.c.h.b16 %v3382
    %v3498 = vunpack.c.l.b16 %v3383
    %v3499 = vunpack.c.h.b16 %v3383
    %v3500 = vunpack.c.l.b16 %v3384
    %v3501 = vunpack.c.h.b16 %v3384
    %v3502 = vunpack.c.l.b16 %v3385
    %v3503 = vunpack.c.h.b16 %v3385
    %v3504 = vunpack.c.l.b16 %v3386
    %v3505 = vunpack.c.h.b16 %v3386
    %v3506 = vunpack.c.l.b16 %v3387
    %v3507 = vunpack.c.h.b16 %v3387
    %v3508 = vunpack.c.l.b16 %v3388
    %v3509 = vunpack.c.h.b16 %v3388
    %v3510 = vunpack.c.l.b16 %v3389
    %v3511 = vunpack.c.h.b16 %v3389
    %v3512 = vunpack.c.l.b16 %v3390
    %v3513 = vunpack.c.h.b16 %v3390
    %v3514 = vunpack.c.l.b16 %v3391
    %v3515 = vunpack.c.h.b16 %v3391
    %v3516 = vunpack.c.l.b16 %v3392
    %v3517 = vunpack.c.h.b16 %v3392
    %v3518 = vunpack.c.l.b16 %v3393
    %v3519 = vunpack.c.h.b16 %v3393
    %v3520 = vunpack.c.l.b16 %v3394
    %v3521 = vunpack.c.h.b16 %v3394
    %v3522 = vunpack.c.l.b16 %v3395
    %v3523 = vunpack.c.h.b16 %v3395
    %v3524 = vunpack.c.l.b16 %v3396
    %v3525 = vunpack.c.h.b16 %v3396
    %v3526 = vunpack.c.l.b16 %v3397
    %v3527 = vunpack.c.h.b16 %v3397
    %v3528 = vunpack.c.l.b16 %v3398
    %v3529 = vunpack.c.h.b16 %v3398
    %v3530 = vunpack.c.l.b16 %v3399
    %v3531 = vunpack.c.h.b16 %v3399
    %v3532 = vunpack.c.l.b16 %v3400
    %v3533 = vunpack.c.h.b16 %v3400
    %v3534 = vunpack.c.l.b16 %v3401
    %v3535 = vunpack.c.h.b16 %v3401
    %v3536 = vunpack.c.l.b16 %v3402
    %v3537 = vunpack.c.h.b16 %v3402
    %v3538 = vunpack.c.l.b16 %v3403
    %v3539 = vunpack.c.h.b16 %v3403
    %v3540 = vunpack.c.l.b16 %v3404
    %v3541 = vunpack.c.h.b16 %v3404
    %v3542 = vunpack.c.l.b16 %v3405
    %v3543 = vunpack.c.h.b16 %v3405
    %v3544 = vunpack.c.l.b16 %v3406
    %v3545 = vunpack.c.h.b16 %v3406
    %v3546 = vunpack.c.l.b16 %v3407
    %v3547 = vunpack.c.h.b16 %v3407
    %v3548 = vunpack.c.l.b16 %v3408
    %v3549 = vunpack.c.h.b16 %v3408
    %v3550 = vunpack.c.l.b16 %v3409
    %v3551 = vunpack.c.h.b16 %v3409
    %v3552 = vunpack.c.l.b16 %v3410
    %v3553 = vunpack.c.h.b16 %v3410
    %v3554 = vunpack.c.l.b16 %v3411
    %v3555 = vunpack.c.h.b16 %v3411
    %v3556 = vunpack.c.l.b16 %v3412
    %v3557 = vunpack.c.h.b16 %v3412
    %v3558 = vunpack.c.l.b16 %v3413
    %v3559 = vunpack.c.h.b16 %v3413
    %v3560 = vunpack.c.l.b16 %v3414
    %v3561 = vunpack.c.h.b16 %v3414
    %v3562 = vunpack.c.l.b16 %v3415
    %v3563 = vunpack.c.h.b16 %v3415
    %v3564 = vunpack.c.l.b16 %v3416
    %v3565 = vunpack.c.h.b16 %v3416
    %v3566 = vunpack.c.l.b16 %v3417
    %v3567 = vunpack.c.h.b16 %v3417
    %v3568 = vunpack.c.l.b16 %v3418
    %v3569 = vunpack.c.h.b16 %v3418
    %v3570 = vunpack.c.l.b16 %v3419
    %v3571 = vunpack.c.h.b16 %v3419
    %v3572 = vunpack.c.l.b16 %v3420
    %v3573 = vunpack.c.h.b16 %v3420
    %v3574 = vunpack.c.l.b16 %v3421
    %v3575 = vunpack.c.h.b16 %v3421
    %v3576 = vunpack.c.l.b16 %v3422
    %v3577 = vunpack.c.h.b16 %v3422
    %v3578 = vunpack.c.l.b16 %v3423
    %v3579 = vunpack.c.h.b16 %v3423
    %v3580 = vpack.c.b16 %v3486, %v3484
    %v3581 = vpack.c.b16 %v3487, %v3485
    %v3582 = vpack.c.b16 %v3490, %v3488
    %v3583 = vpack.c.b16 %v3491, %v3489
    %v3584 = vpack.c.b16 %v3494, %v3492
    %v3585 = vpack.c.b16 %v3495, %v3493
    %v3586 = vpack.c.b16 %v3498, %v3496
    %v3587 = vpack.c.b16 %v3499, %v3497
    %v3588 = vpack.c.b16 %v3502, %v3500
    %v3589 = vpack.c.b16 %v3503, %v3501
    %v3590 = vpack.c.b16 %v3506, %v3504
    %v3591 = vpack.c.b16 %v3507, %v3505
    %v3592 = vpack.c.b16 %v3510, %v3508
    %v3593 = vpack.c.b16 %v3511, %v3509
    %v3594 = vpack.c.b16 %v3514, %v3512
    %v3595 = vpack.c.b16 %v3515, %v3513
    %v3596 = vpack.c.b16 %v3518, %v3516
    %v3597 = vpack.c.b16 %v3519, %v3517
    %v3598 = vpack.c.b16 %v3522, %v3520
    %v3599 = vpack.c.b16 %v3523, %v3521
    %v3600 = vpack.c.b16 %v3526, %v3524
    %v3601 = vpack.c.b16 %v3527, %v3525
    %v3602 = vpack.c.b16 %v3530, %v3528
    %v3603 = vpack.c.b16 %v3531, %v3529
    %v3604 = vpack.c.b16 %v3534, %v3532
    %v3605 = vpack.c.b16 %v3535, %v3533
    %v3606 = vpack.c.b16 %v3538, %v3536
    %v3607 = vpack.c.b16 %v3539, %v3537
    %v3608 = vpack.c.b16 %v3542, %v3540
    %v3609 = vpack.c.b16 %v3543, %v3541
    %v3610 = vpack.c.b16 %v3546, %v3544
    %v3611 = vpack.c.b16 %v3547, %v3545
    %v3612 = vpack.c.b16 %v3550, %v3548
    %v3613 = vpack.c.b16 %v3551, %v3549
    %v3614 = vpack.c.b16 %v3554, %v3552
    %v3615 = vpack.c.b16 %v3555, %v3553
    %v3616 = vpack.c.b16 %v3558, %v3556
    %v3617 = vpack.c.b16 %v3559, %v3557
    %v3618 = vpack.c.b16 %v3562, %v3560
    %v3619 = vpack.c.b16 %v3563, %v3561
    %v3620 = vpack.c.b16 %v3566, %v3564
    %v3621 = vpack.c.b16 %v3567, %v3565
    %v3622 = vpack.c.b16 %v3570, %v3568
    %v3623 = vpack.c.b16 %v3571, %v3569
    %v3624 = vpack.c.b16 %v3574, %v3572
    %v3625 = vpack.c.b16 %v3575, %v3573
    %v3626 = vpack.c.b16 %v3578, %v3576
    %v3627 = vpack.c.b16 %v3579, %v3577
    %3676 = vmatprep.subr.bf16.mxu0 %v3595
    %3677 = vmatpush1.bf16.msra.mxu0 %v3594
    %3678 = vmatprep.subr.bf16.mxu0 %v3593
    %3679 = vmatpush1.bf16.msra.mxu0 %v3592
    %3680 = vmatprep.subr.bf16.mxu0 %v3591
    %3681 = vmatpush1.bf16.msra.mxu0 %v3590
    %3682 = vmatprep.subr.bf16.mxu0 %v3589
    %3683 = vmatpush1.bf16.msra.mxu0 %v3588
    %3684 = vmatprep.subr.bf16.mxu0 %v3587
    %3685 = vmatpush1.bf16.msra.mxu0 %v3586
    %3686 = vmatprep.subr.bf16.mxu0 %v3585
    %3687 = vmatpush1.bf16.msra.mxu0 %v3584
    %3688 = vmatprep.subr.bf16.mxu0 %v3583
    %3689 = vmatpush1.bf16.msra.mxu0 %v3582
    %3690 = vmatprep.subr.bf16.mxu0 %v3581
    %3691 = vmatpush1.bf16.msra.mxu0 %v3580
    %3692 = vmatprep.subr.bf16.mxu0 %v3611
    %3693 = vmatpush2.bf16.msra.mxu0 %v3610
    %3694 = vmatprep.subr.bf16.mxu0 %v3609
    %3695 = vmatpush2.bf16.msra.mxu0 %v3608
    %3696 = vmatprep.subr.bf16.mxu0 %v3607
    %3697 = vmatpush2.bf16.msra.mxu0 %v3606
    %3698 = vmatprep.subr.bf16.mxu0 %v3605
    %3699 = vmatpush2.bf16.msra.mxu0 %v3604
    %3700 = vmatprep.subr.bf16.mxu0 %v3603
    %3701 = vmatpush2.bf16.msra.mxu0 %v3602
    %3702 = vmatprep.subr.bf16.mxu0 %v3601
    %3703 = vmatpush2.bf16.msra.mxu0 %v3600
    %3704 = vmatprep.subr.bf16.mxu0 %v3599
    %3705 = vmatpush2.bf16.msra.mxu0 %v3598
    %3706 = vmatprep.subr.bf16.mxu0 %v3597
    %3707 = vmatpush2.bf16.msra.mxu0 %v3596
    %3708 = vmatprep.mubr.bf16.mxu0 %v3374
    %3709 = vmatmul.mubr.bf16.gmra.mxu0 %v3373
    %v3710 = vpop.f32.mrf.mxu0
    %v3711 = vadd.f32 %v3429, %v3710
    %v3712 = vpop.f32.mrf.mxu0
    %v3713 = vadd.f32 %v3433, %v3712
    %v3714 = vpop.f32.mrf.mxu0
    %v3715 = vadd.f32 %v3429, %v3714
    %v3716 = vpop.f32.mrf.mxu0
    %v3717 = vadd.f32 %v3433, %v3716
    %3718 = vdwg.mxu0
    %3719 = vmatprep.subr.bf16.mxu0 %v3627
    %3720 = vmatpush1.bf16.msra.mxu0 %v3626
    %3721 = vmatprep.subr.bf16.mxu0 %v3625
    %3722 = vmatpush1.bf16.msra.mxu0 %v3624
    %3723 = vmatprep.subr.bf16.mxu0 %v3623
    %3724 = vmatpush1.bf16.msra.mxu0 %v3622
    %3725 = vmatprep.subr.bf16.mxu0 %v3621
    %3726 = vmatpush1.bf16.msra.mxu0 %v3620
    %3727 = vmatprep.subr.bf16.mxu0 %v3619
    %3728 = vmatpush1.bf16.msra.mxu0 %v3618
    %3729 = vmatprep.subr.bf16.mxu0 %v3617
    %3730 = vmatpush1.bf16.msra.mxu0 %v3616
    %3731 = vmatprep.subr.bf16.mxu0 %v3615
    %3732 = vmatpush1.bf16.msra.mxu0 %v3614
    %3733 = vmatprep.subr.bf16.mxu0 %v3613
    %3734 = vmatpush1.bf16.msra.mxu0 %v3612
    %3735 = vmatprep.subr.bf16.mxu0 0
    %3736 = vmatpush2.bf16.msra.mxu0 0
    %3737 = vmatprep.subr.bf16.mxu0 0
    %3738 = vmatpush2.bf16.msra.mxu0 0
    %3739 = vmatprep.subr.bf16.mxu0 0
    %3740 = vmatpush2.bf16.msra.mxu0 0
    %3741 = vmatprep.subr.bf16.mxu0 0
    %3742 = vmatpush2.bf16.msra.mxu0 0
    %3743 = vmatprep.subr.bf16.mxu0 0
    %3744 = vmatpush2.bf16.msra.mxu0 0
    %3745 = vmatprep.subr.bf16.mxu0 0
    %3746 = vmatpush2.bf16.msra.mxu0 0
    %3747 = vmatprep.subr.bf16.mxu0 0
    %3748 = vmatpush2.bf16.msra.mxu0 0
    %3749 = vmatprep.subr.bf16.mxu0 0
    %3750 = vmatpush2.bf16.msra.mxu0 0
    %3751 = vmatprep.mubr.bf16.mxu0 0
    %3752 = vmatmul.mubr.bf16.gmra.mxu0 %v3375
    %v3753 = vpop.f32.mrf.mxu0
    %v3754 = vadd.f32 %v3711, %v3753
    %v3755 = vpop.f32.mrf.mxu0
    %v3756 = vadd.f32 %v3713, %v3755
    %v3757 = vpop.f32.mrf.mxu0
    %v3758 = vadd.f32 %v3715, %v3757
    %v3759 = vpop.f32.mrf.mxu0
    %v3760 = vadd.f32 %v3717, %v3759
    %3761 = vdwg.mxu0
    %v3762 = vmax.f32 %v3754, 0.0
    %v3763 = vmax.f32 %v3756, 0.0
    %v3764 = vmax.f32 %v3758, 0.0
    %v3765 = vmax.f32 %v3760, 0.0
    %v3766 = vpack.c.bf16 %v3764, %v3762
    %v3767 = vpack.c.bf16 %v3765, %v3763
    %v3768 = vld [vmem:[#allocation11] sm:$0xf]
    %v3769 = vld [vmem:[#allocation11 + $0x4] sm:$0xf]
    %v3770 = vld [vmem:[#allocation11 + $0x8] sm:$0xf]
    %v3771 = vld [vmem:[#allocation11 + $0xc] sm:$0xf]
    %v3772 = vld [vmem:[#allocation11 + $0x10] sm:$0xf]
    %v3773 = vld [vmem:[#allocation11 + $0x14] sm:$0xf]
    %v3774 = vld [vmem:[#allocation11 + $0x18] sm:$0xf]
    %v3775 = vld [vmem:[#allocation11 + $0x1c] sm:$0xf]
    %v3776 = vld [vmem:[#allocation11 + $0x20] sm:$0xf]
    %v3777 = vld [vmem:[#allocation11 + $0x24] sm:$0xf]
    %v3778 = vld [vmem:[#allocation11 + $0x28] sm:$0xf]
    %v3779 = vld [vmem:[#allocation11 + $0x2c] sm:$0xf]
    %v3780 = vld [vmem:[#allocation11 + $0x30] sm:$0xf]
    %v3781 = vld [vmem:[#allocation11 + $0x34] sm:$0xf]
    %v3782 = vld [vmem:[#allocation11 + $0x38] sm:$0xf]
    %v3783 = vld [vmem:[#allocation11 + $0x3c] sm:$0xf]
    %v3784 = vld [vmem:[#allocation11 + $0x40] sm:$0xf]
    %v3785 = vld [vmem:[#allocation11 + $0x44] sm:$0xf]
    %v3786 = vld [vmem:[#allocation11 + $0x48] sm:$0xf]
    %v3787 = vld [vmem:[#allocation11 + $0x4c] sm:$0xf]
    %v3788 = vld [vmem:[#allocation11 + $0x50] sm:$0xf]
    %v3789 = vld [vmem:[#allocation11 + $0x54] sm:$0xf]
    %v3790 = vld [vmem:[#allocation11 + $0x58] sm:$0xf]
    %v3791 = vld [vmem:[#allocation11 + $0x5c] sm:$0xf]
    %v3792 = vld [vmem:[#allocation11 + $0x60] sm:$0xf]
    %v3793 = vld [vmem:[#allocation11 + $0x64] sm:$0xf]
    %v3794 = vld [vmem:[#allocation11 + $0x68] sm:$0xf]
    %v3795 = vld [vmem:[#allocation11 + $0x6c] sm:$0xf]
    %v3796 = vld [vmem:[#allocation11 + $0x70] sm:$0xf]
    %v3797 = vld [vmem:[#allocation11 + $0x74] sm:$0xf]
    %v3798 = vld [vmem:[#allocation11 + $0x78] sm:$0xf]
    %v3799 = vld [vmem:[#allocation11 + $0x7c] sm:$0xf]
    %v3800 = vld [vmem:[%s8] sm:$0x1]
    %v3802 = vlaneseq
    %v3803 = vshrl.u32 %v3802, 7
    %v3804 = vsub.s32 0, %v3803
    %v3805 = vrot.slane %v3800, %v3804
    %v3839 = vunpack.c.l.b16 %v3768
    %v3840 = vunpack.c.l.b16 %v3769
    %v3841 = vunpack.c.l.b16 %v3770
    %v3842 = vunpack.c.l.b16 %v3771
    %v3843 = vunpack.c.l.b16 %v3772
    %v3844 = vunpack.c.l.b16 %v3773
    %v3845 = vunpack.c.l.b16 %v3774
    %v3846 = vunpack.c.l.b16 %v3775
    %v3847 = vunpack.c.l.b16 %v3776
    %v3848 = vunpack.c.l.b16 %v3777
    %v3849 = vunpack.c.l.b16 %v3778
    %v3850 = vunpack.c.l.b16 %v3779
    %v3851 = vunpack.c.l.b16 %v3780
    %v3852 = vunpack.c.l.b16 %v3781
    %v3853 = vunpack.c.l.b16 %v3782
    %v3854 = vunpack.c.l.b16 %v3783
    %v3855 = vunpack.c.l.b16 %v3784
    %v3856 = vunpack.c.l.b16 %v3785
    %v3857 = vunpack.c.l.b16 %v3786
    %v3858 = vunpack.c.l.b16 %v3787
    %v3859 = vunpack.c.l.b16 %v3788
    %v3860 = vunpack.c.l.b16 %v3789
    %v3861 = vunpack.c.l.b16 %v3790
    %v3862 = vunpack.c.l.b16 %v3791
    %v3863 = vunpack.c.l.b16 %v3792
    %v3864 = vunpack.c.l.b16 %v3793
    %v3865 = vunpack.c.l.b16 %v3794
    %v3866 = vunpack.c.l.b16 %v3795
    %v3867 = vunpack.c.l.b16 %v3796
    %v3868 = vunpack.c.l.b16 %v3797
    %v3869 = vunpack.c.l.b16 %v3798
    %v3870 = vunpack.c.l.b16 %v3799
    %v3871 = vpack.c.b16 %v3840, %v3839
    %v3872 = vpack.c.b16 %v3842, %v3841
    %v3873 = vpack.c.b16 %v3844, %v3843
    %v3874 = vpack.c.b16 %v3846, %v3845
    %v3875 = vpack.c.b16 %v3848, %v3847
    %v3876 = vpack.c.b16 %v3850, %v3849
    %v3877 = vpack.c.b16 %v3852, %v3851
    %v3878 = vpack.c.b16 %v3854, %v3853
    %v3879 = vpack.c.b16 %v3856, %v3855
    %v3880 = vpack.c.b16 %v3858, %v3857
    %v3881 = vpack.c.b16 %v3860, %v3859
    %v3882 = vpack.c.b16 %v3862, %v3861
    %v3883 = vpack.c.b16 %v3864, %v3863
    %v3884 = vpack.c.b16 %v3866, %v3865
    %v3885 = vpack.c.b16 %v3868, %v3867
    %v3886 = vpack.c.b16 %v3870, %v3869
    %3903 = vmatprep.subr.bf16.mxu0 0
    %3904 = vmatpush1.bf16.msra.mxu0 %v3878
    %3905 = vmatprep.subr.bf16.mxu0 0
    %3906 = vmatpush1.bf16.msra.mxu0 %v3877
    %3907 = vmatprep.subr.bf16.mxu0 0
    %3908 = vmatpush1.bf16.msra.mxu0 %v3876
    %3909 = vmatprep.subr.bf16.mxu0 0
    %3910 = vmatpush1.bf16.msra.mxu0 %v3875
    %3911 = vmatprep.subr.bf16.mxu0 0
    %3912 = vmatpush1.bf16.msra.mxu0 %v3874
    %3913 = vmatprep.subr.bf16.mxu0 0
    %3914 = vmatpush1.bf16.msra.mxu0 %v3873
    %3915 = vmatprep.subr.bf16.mxu0 0
    %3916 = vmatpush1.bf16.msra.mxu0 %v3872
    %3917 = vmatprep.subr.bf16.mxu0 0
    %3918 = vmatpush1.bf16.msra.mxu0 %v3871
    %3919 = vmatprep.subr.bf16.mxu0 0
    %3920 = vmatpush2.bf16.msra.mxu0 %v3886
    %3921 = vmatprep.subr.bf16.mxu0 0
    %3922 = vmatpush2.bf16.msra.mxu0 %v3885
    %3923 = vmatprep.subr.bf16.mxu0 0
    %3924 = vmatpush2.bf16.msra.mxu0 %v3884
    %3925 = vmatprep.subr.bf16.mxu0 0
    %3926 = vmatpush2.bf16.msra.mxu0 %v3883
    %3927 = vmatprep.subr.bf16.mxu0 0
    %3928 = vmatpush2.bf16.msra.mxu0 %v3882
    %3929 = vmatprep.subr.bf16.mxu0 0
    %3930 = vmatpush2.bf16.msra.mxu0 %v3881
    %3931 = vmatprep.subr.bf16.mxu0 0
    %3932 = vmatpush2.bf16.msra.mxu0 %v3880
    %3933 = vmatprep.subr.bf16.mxu0 0
    %3934 = vmatpush2.bf16.msra.mxu0 %v3879
    %3935 = vmatprep.mubr.bf16.mxu0 %v3767
    %3936 = vmatmul.mubr.bf16.gmra.mxu0 %v3766
    %v3937 = vpop.f32.mrf.mxu0
    %v3938 = vadd.f32 %v3805, %v3937
    %v3939 = vpop.f32.mrf.mxu0
    %v3940 = vpop.f32.mrf.mxu0
    %v3941 = vadd.f32 %v3805, %v3940
    %v3942 = vpop.f32.mrf.mxu0
    %3943 = vdwg.mxu0
    %v3944 = vmax.f32 %v3938, 0.0
    %v3945 = vmax.f32 %v3941, 0.0
    %v3946 = vpack.c.bf16 %v3945, %v3944
    %v3947 = vld [vmem:[#allocation13] sm:$0xf]
    %v3948 = vld [vmem:[#allocation13 + $0x4] sm:$0xf]
    %v3949 = vld [vmem:[#allocation13 + $0x8] sm:$0xf]
    %v3950 = vld [vmem:[#allocation13 + $0xc] sm:$0xf]
    %v3951 = vld [vmem:[#allocation13 + $0x10] sm:$0xf]
    %v3952 = vld [vmem:[#allocation13 + $0x14] sm:$0xf]
    %v3953 = vld [vmem:[#allocation13 + $0x18] sm:$0xf]
    %v3954 = vld [vmem:[#allocation13 + $0x1c] sm:$0xf]
    %v3955 = vld [vmem:[#allocation13 + $0x20] sm:$0xf]
    %v3956 = vld [vmem:[#allocation13 + $0x24] sm:$0xf]
    %v3957 = vld [vmem:[#allocation13 + $0x28] sm:$0xf]
    %v3958 = vld [vmem:[#allocation13 + $0x2c] sm:$0xf]
    %v3959 = vld [vmem:[#allocation13 + $0x30] sm:$0xf]
    %v3960 = vld [vmem:[#allocation13 + $0x34] sm:$0xf]
    %v3961 = vld [vmem:[#allocation13 + $0x38] sm:$0xf]
    %v3962 = vld [vmem:[#allocation13 + $0x3c] sm:$0xf]
    %v3963 = vld [vmem:[%s10] sm:$0x1]
    %v3965 = vlaneseq
    %v3966 = vshrl.u32 %v3965, 7
    %v3967 = vsub.s32 0, %v3966
    %v3968 = vrot.slane %v3963, %v3967
    %v3986 = vunpack.c.l.b16 %v3947
    %v3987 = vunpack.c.l.b16 %v3948
    %v3988 = vunpack.c.l.b16 %v3949
    %v3989 = vunpack.c.l.b16 %v3950
    %v3990 = vunpack.c.l.b16 %v3951
    %v3991 = vunpack.c.l.b16 %v3952
    %v3992 = vunpack.c.l.b16 %v3953
    %v3993 = vunpack.c.l.b16 %v3954
    %v3994 = vunpack.c.l.b16 %v3955
    %v3995 = vunpack.c.l.b16 %v3956
    %v3996 = vunpack.c.l.b16 %v3957
    %v3997 = vunpack.c.l.b16 %v3958
    %v3998 = vunpack.c.l.b16 %v3959
    %v3999 = vunpack.c.l.b16 %v3960
    %v4000 = vunpack.c.l.b16 %v3961
    %v4001 = vunpack.c.l.b16 %v3962
    %v4002 = vpack.c.b16 %v3987, %v3986
    %v4003 = vpack.c.b16 %v3989, %v3988
    %v4004 = vpack.c.b16 %v3991, %v3990
    %v4005 = vpack.c.b16 %v3993, %v3992
    %v4006 = vpack.c.b16 %v3995, %v3994
    %v4007 = vpack.c.b16 %v3997, %v3996
    %v4008 = vpack.c.b16 %v3999, %v3998
    %v4009 = vpack.c.b16 %v4001, %v4000
    %4018 = vmatprep.subr.bf16.mxu0 0
    %4019 = vmatpush1.bf16.msra.mxu0 %v4009
    %4020 = vmatprep.subr.bf16.mxu0 0
    %4021 = vmatpush1.bf16.msra.mxu0 %v4008
    %4022 = vmatprep.subr.bf16.mxu0 0
    %4023 = vmatpush1.bf16.msra.mxu0 %v4007
    %4024 = vmatprep.subr.bf16.mxu0 0
    %4025 = vmatpush1.bf16.msra.mxu0 %v4006
    %4026 = vmatprep.subr.bf16.mxu0 0
    %4027 = vmatpush1.bf16.msra.mxu0 %v4005
    %4028 = vmatprep.subr.bf16.mxu0 0
    %4029 = vmatpush1.bf16.msra.mxu0 %v4004
    %4030 = vmatprep.subr.bf16.mxu0 0
    %4031 = vmatpush1.bf16.msra.mxu0 %v4003
    %4032 = vmatprep.subr.bf16.mxu0 0
    %4033 = vmatpush1.bf16.msra.mxu0 %v4002
    %4034 = vmatprep.subr.bf16.mxu0 0
    %4035 = vmatpush2.bf16.msra.mxu0 0
    %4036 = vmatprep.subr.bf16.mxu0 0
    %4037 = vmatpush2.bf16.msra.mxu0 0
    %4038 = vmatprep.subr.bf16.mxu0 0
    %4039 = vmatpush2.bf16.msra.mxu0 0
    %4040 = vmatprep.subr.bf16.mxu0 0
    %4041 = vmatpush2.bf16.msra.mxu0 0
    %4042 = vmatprep.subr.bf16.mxu0 0
    %4043 = vmatpush2.bf16.msra.mxu0 0
    %4044 = vmatprep.subr.bf16.mxu0 0
    %4045 = vmatpush2.bf16.msra.mxu0 0
    %4046 = vmatprep.subr.bf16.mxu0 0
    %4047 = vmatpush2.bf16.msra.mxu0 0
    %4048 = vmatprep.subr.bf16.mxu0 0
    %4049 = vmatpush2.bf16.msra.mxu0 0
    %4050 = vmatprep.mubr.bf16.mxu0 0
    %4051 = vmatmul.mubr.bf16.gmra.mxu0 %v3946
    %v4052 = vpop.f32.mrf.mxu0
    %v4053 = vadd.f32 %v3968, %v4052
    %v4054 = vpop.f32.mrf.mxu0
    %v4055 = vpop.f32.mrf.mxu0
    %v4056 = vadd.f32 %v3968, %v4055
    %v4057 = vpop.f32.mrf.mxu0
    %4058 = vdwg.mxu0
    %4059 = vst [vmem:[#allocation14] sm:$0xff] %v4053
    %4060 = vst [vmem:[#allocation14 + $0x8] sm:$0xff] %v4056
    // Predicated region
    $region74: #{tpu_custom_call.1} parent=1 // pred_check
      _
    $region75: #{tpu_custom_call.1} parent=1 // pred_check_branch
      %4062 = sbr.rel (0) target = $region77
    $region76: #{tpu_custom_call.1} parent=1 // pred_region
      %s4064 = ssub.s32 256, 256
      %4065 = vsyncadd [#allocation4], %s4064
      %s4066 = sshll.u32 [#allocation14], 4
      %s4067 = int_to_ptr.vmem [resolvable:$true] %s4066
      %4072 = dma.vmem_to_hbm [thread:$0]  %s4067, 256, %s11, [#allocation4], 128, 128, 8
    $region77: #{tpu_custom_call.1} parent=1 // pred_fallthru
      _
    // Predicated region
    $region78: #{tpu_custom_call.1} parent=1 // pred_check
      _
    $region79: #{tpu_custom_call.1} parent=1 // pred_check_branch
      %4074 = sbr.rel (0) target = $region81
    $region80: #{tpu_custom_call.1} parent=1 // pred_region
      %4075 = dma.done [#allocation4], 256
    $region81: #{tpu_custom_call.1} parent=1 // pred_fallthru
      _
    %4076 = vsyncpa [#allocation3], 1
    %4077 = vsyncpa [#allocation6], 1
    %4078 = vsyncpa [#allocation9], 1
    %4079 = vsyncpa [#allocation12], 1
    %4080 = vsyncpa [#allocation4], 1

// kernel: tpu_custom_call.1
$region0: #{tpu_custom_call.1}
  #allocation0 [shape = 'u32[]', space=smem, size = 0x4, offset = 0x4, fixed_abs, tag = 'smem constant byte address 0x4 - core index']
  #allocation1 [shape = 'u32[144,128]{1,0:T(1,128)}', space=vmem, size = 0x12000, scoped, tag = 'internal scratch']
  %s0 = inlined_call_operand.hbm [shape: bf16[16,784], index: 0, kind: input, shape index: {}]
  %s1 = inlined_call_operand.hbm [shape: bf16[784,640], index: 1, kind: input, shape index: {}]
  %s2 = inlined_call_operand.hbm [shape: f32[1,640], index: 2, kind: input, shape index: {}]
  %s3 = inlined_call_operand.hbm [shape: bf16[640,384], index: 3, kind: input, shape index: {}]
  %s4 = inlined_call_operand.vmem [shape: f32[1,384], index: 4, kind: input, shape index: {}]
  %s5 = inlined_call_operand.hbm [shape: bf16[384,256], index: 5, kind: input, shape index: {}]
  %s6 = inlined_call_operand.vmem [shape: f32[1,256], index: 6, kind: input, shape index: {}]
  %s7 = inlined_call_operand.hbm [shape: bf16[256,128], index: 7, kind: input, shape index: {}]
  %s8 = inlined_call_operand.vmem [shape: f32[1,128], index: 8, kind: input, shape index: {}]
  %s9 = inlined_call_operand.hbm [shape: bf16[128,128], index: 9, kind: input, shape index: {}]
  %s10 = inlined_call_operand.vmem [shape: f32[1,128], index: 10, kind: input, shape index: {}]
  %s11 = inlined_call_operand.hbm [shape: f32[16,128], index: 11, kind: output, shape index: {}]
  %s12 = sld [smem:[#allocation0]]
  $region82: #{tpu_custom_call.1} parent=0
    _
  %s14 = ssub.s32 1, %s12
  %s15 = scalar_select 0, %s14, %s12
  $region1: #{tpu_custom_call.1} parent=0
    #allocation2 [shape = 'u8[28672]{0}', space=vmem, size = 0x7000, scoped, tag = 'input window, operand 0, single buffered']
    #allocation3 [shape = 's32[1]{0}', space=sflag, size = 0x4, scoped, tag = 'scoped memory for tpu_custom_call.1']
    #allocation4 [shape = 's32[1]{0}', space=sflag, size = 0x4, scoped, tag = 'scoped memory for tpu_custom_call.1']
    #allocation5 [shape = 'u8[1003520]{0}', space=vmem, size = 0xf5000, scoped, tag = 'input window, operand 1, single buffered']
    #allocation6 [shape = 's32[1]{0}', space=sflag, size = 0x4, scoped, tag = 'scoped memory for tpu_custom_call.1']
    #allocation7 [shape = 'u8[2560]{0}', space=vmem, size = 0xc00, scoped, tag = 'input window, operand 2, single buffered']
    #allocation8 [shape = 'u8[491520]{0}', space=vmem, size = 0x78000, scoped, tag = 'input window, operand 3, single buffered']
    #allocation9 [shape = 's32[1]{0}', space=sflag, size = 0x4, scoped, tag = 'scoped memory for tpu_custom_call.1']
    #allocation10 [shape = 'u8[196608]{0}', space=vmem, size = 0x30000, scoped, tag = 'input window, operand 5, single buffered']
    #allocation11 [shape = 'u8[65536]{0}', space=vmem, size = 0x10000, scoped, tag = 'input window, operand 7, single buffered']
    #allocation12 [shape = 's32[1]{0}', space=sflag, size = 0x4, scoped, tag = 'scoped memory for tpu_custom_call.1']
    #allocation13 [shape = 'u8[32768]{0}', space=vmem, size = 0x8000, scoped, tag = 'input window, operand 9, single buffered']
    #allocation14 [shape = 'u8[8192]{0}', space=vmem, size = 0x2000, scoped, tag = 'output window, operand 0, single buffered']
    %16 = vsyncpa [#allocation3], 0
    %17 = vsyncpa [#allocation6], 0
    %18 = vsyncpa [#allocation9], 0
    %19 = vsyncpa [#allocation12], 0
    %20 = vsyncpa [#allocation4], 0
    // Predicated region
    $region2: #{tpu_custom_call.1} parent=1 // pred_check
      _
    $region3: #{tpu_custom_call.1} parent=1 // pred_check_branch
      %22 = sbr.rel (0) target = $region5
    $region4: #{tpu_custom_call.1} parent=1 // pred_region
      %s24 = ssub.s32 896, 896
      %25 = vsyncadd [#allocation3], %s24
      %s26 = sshll.u32 [#allocation2], 4
      %s27 = int_to_ptr.vmem [resolvable:$true] %s26
      %32 = dma.hbm_to_vmem [thread:$0]  %s0, 896, %s27, [#allocation3], 448, 448, 28
    $region5: #{tpu_custom_call.1} parent=1 // pred_fallthru
      _
    // Predicated region
    $region6: #{tpu_custom_call.1} parent=1 // pred_check
      _
    $region7: #{tpu_custom_call.1} parent=1 // pred_check_branch
      %34 = sbr.rel (0) target = $region9
    $region8: #{tpu_custom_call.1} parent=1 // pred_region
      %s36 = ssub.s32 31360, 31360
      %37 = vsyncadd [#allocation6], %s36
      %s38 = sshll.u32 [#allocation5], 4
      %s39 = int_to_ptr.vmem [resolvable:$true] %s38
      %44 = dma.hbm_to_vmem [thread:$0]  %s1, 31360, %s39, [#allocation6], 320, 320, 20
    $region9: #{tpu_custom_call.1} parent=1 // pred_fallthru
      _
    // Predicated region
    $region10: #{tpu_custom_call.1} parent=1 // pred_check
      _
    $region11: #{tpu_custom_call.1} parent=1 // pred_check_branch
      %46 = sbr.rel (0) target = $region13
    $region12: #{tpu_custom_call.1} parent=1 // pred_region
      %s48 = ssub.s32 80, 80
      %49 = vsyncadd [#allocation6], %s48
      %s51 = sshll.u32 [#allocation7], 4
      %s52 = int_to_ptr.vmem [resolvable:$true] %s51
      %54 = dma.hbm_to_vmem [thread:$0]  %s2, 80, %s52, [#allocation6]
    $region13: #{tpu_custom_call.1} parent=1 // pred_fallthru
      _
    // Predicated region
    $region14: #{tpu_custom_call.1} parent=1 // pred_check
      _
    $region15: #{tpu_custom_call.1} parent=1 // pred_check_branch
      %56 = sbr.rel (0) target = $region17
    $region16: #{tpu_custom_call.1} parent=1 // pred_region
      %s58 = ssub.s32 15360, 15360
      %59 = vsyncadd [#allocation9], %s58
      %s60 = sshll.u32 [#allocation8], 4
      %s61 = int_to_ptr.vmem [resolvable:$true] %s60
      %66 = dma.hbm_to_vmem [thread:$0]  %s3, 15360, %s61, [#allocation9], 192, 192, 12
    $region17: #{tpu_custom_call.1} parent=1 // pred_fallthru
      _
    // Predicated region
    $region18: #{tpu_custom_call.1} parent=1 // pred_check
      _
    $region19: #{tpu_custom_call.1} parent=1 // pred_check_branch
      %68 = sbr.rel (0) target = $region21
    $region20: #{tpu_custom_call.1} parent=1 // pred_region
      _
    $region21: #{tpu_custom_call.1} parent=1 // pred_fallthru
      _
    // Predicated region
    $region22: #{tpu_custom_call.1} parent=1 // pred_check
      _
    $region23: #{tpu_custom_call.1} parent=1 // pred_check_branch
      %70 = sbr.rel (0) target = $region25
    $region24: #{tpu_custom_call.1} parent=1 // pred_region
      %s72 = ssub.s32 6144, 6144
      %73 = vsyncadd [#allocation9], %s72
      %s74 = sshll.u32 [#allocation10], 4
      %s75 = int_to_ptr.vmem [resolvable:$true] %s74
      %80 = dma.hbm_to_vmem [thread:$0]  %s5, 6144, %s75, [#allocation9], 128, 128, 8
    $region25: #{tpu_custom_call.1} parent=1 // pred_fallthru
      _
    // Predicated region
    $region26: #{tpu_custom_call.1} parent=1 // pred_check
      _
    $region27: #{tpu_custom_call.1} parent=1 // pred_check_branch
      %82 = sbr.rel (0) target = $region29
    $region28: #{tpu_custom_call.1} parent=1 // pred_region
      _
    $region29: #{tpu_custom_call.1} parent=1 // pred_fallthru
      _
    // Predicated region
    $region30: #{tpu_custom_call.1} parent=1 // pred_check
      _
    $region31: #{tpu_custom_call.1} parent=1 // pred_check_branch
      %84 = sbr.rel (0) target = $region33
    $region32: #{tpu_custom_call.1} parent=1 // pred_region
      %s86 = ssub.s32 2048, 2048
      %87 = vsyncadd [#allocation12], %s86
      %s88 = sshll.u32 [#allocation11], 4
      %s89 = int_to_ptr.vmem [resolvable:$true] %s88
      %94 = dma.hbm_to_vmem [thread:$0]  %s7, 2048, %s89, [#allocation12], 64, 64, 4
    $region33: #{tpu_custom_call.1} parent=1 // pred_fallthru
      _
    // Predicated region
    $region34: #{tpu_custom_call.1} parent=1 // pred_check
      _
    $region35: #{tpu_custom_call.1} parent=1 // pred_check_branch
      %96 = sbr.rel (0) target = $region37
    $region36: #{tpu_custom_call.1} parent=1 // pred_region
      _
    $region37: #{tpu_custom_call.1} parent=1 // pred_fallthru
      _
    // Predicated region
    $region38: #{tpu_custom_call.1} parent=1 // pred_check
      _
    $region39: #{tpu_custom_call.1} parent=1 // pred_check_branch
      %98 = sbr.rel (0) target = $region41
    $region40: #{tpu_custom_call.1} parent=1 // pred_region
      %s100 = ssub.s32 1024, 1024
      %101 = vsyncadd [#allocation12], %s100
      %s102 = sshll.u32 [#allocation13], 4
      %s103 = int_to_ptr.vmem [resolvable:$true] %s102
      %108 = dma.hbm_to_vmem [thread:$0]  %s9, 1024, %s103, [#allocation12], 64, 64, 4
    $region41: #{tpu_custom_call.1} parent=1 // pred_fallthru
      _
    // Predicated region
    $region42: #{tpu_custom_call.1} parent=1 // pred_check
      _
    $region43: #{tpu_custom_call.1} parent=1 // pred_check_branch
      %110 = sbr.rel (0) target = $region45
    $region44: #{tpu_custom_call.1} parent=1 // pred_region
      _
    $region45: #{tpu_custom_call.1} parent=1 // pred_fallthru
      _
    // Predicated region
    $region46: #{tpu_custom_call.1} parent=1 // pred_check
      _
    $region47: #{tpu_custom_call.1} parent=1 // pred_check_branch
      %112 = sbr.rel (0) target = $region49
    $region48: #{tpu_custom_call.1} parent=1 // pred_region
      %113 = dma.done [#allocation3], 896
    $region49: #{tpu_custom_call.1} parent=1 // pred_fallthru
      _
    // Predicated region
    $region50: #{tpu_custom_call.1} parent=1 // pred_check
      _
    $region51: #{tpu_custom_call.1} parent=1 // pred_check_branch
      %115 = sbr.rel (0) target = $region53
    $region52: #{tpu_custom_call.1} parent=1 // pred_region
      %116 = dma.done [#allocation6], 31360
    $region53: #{tpu_custom_call.1} parent=1 // pred_fallthru
      _
    // Predicated region
    $region54: #{tpu_custom_call.1} parent=1 // pred_check
      _
    $region55: #{tpu_custom_call.1} parent=1 // pred_check_branch
      %118 = sbr.rel (0) target = $region57
    $region56: #{tpu_custom_call.1} parent=1 // pred_region
      %119 = dma.done [#allocation6], 80
    $region57: #{tpu_custom_call.1} parent=1 // pred_fallthru
      _
    // Predicated region
    $region58: #{tpu_custom_call.1} parent=1 // pred_check
      _
    $region59: #{tpu_custom_call.1} parent=1 // pred_check_branch
      %121 = sbr.rel (0) target = $region61
    $region60: #{tpu_custom_call.1} parent=1 // pred_region
      %122 = dma.done [#allocation9], 15360
    $region61: #{tpu_custom_call.1} parent=1 // pred_fallthru
      _
    // Predicated region
    $region62: #{tpu_custom_call.1} parent=1 // pred_check
      _
    $region63: #{tpu_custom_call.1} parent=1 // pred_check_branch
      %124 = sbr.rel (0) target = $region65
    $region64: #{tpu_custom_call.1} parent=1 // pred_region
      %125 = dma.done [#allocation9], 6144
    $region65: #{tpu_custom_call.1} parent=1 // pred_fallthru
      _
    // Predicated region
    $region66: #{tpu_custom_call.1} parent=1 // pred_check
      _
    $region67: #{tpu_custom_call.1} parent=1 // pred_check_branch
      %127 = sbr.rel (0) target = $region69
    $region68: #{tpu_custom_call.1} parent=1 // pred_region
      %128 = dma.done [#allocation12], 2048
    $region69: #{tpu_custom_call.1} parent=1 // pred_fallthru
      _
    // Predicated region
    $region70: #{tpu_custom_call.1} parent=1 // pred_check
      _
    $region71: #{tpu_custom_call.1} parent=1 // pred_check_branch
      %130 = sbr.rel (0) target = $region73
    $region72: #{tpu_custom_call.1} parent=1 // pred_region
      %131 = dma.done [#allocation12], 1024
    $region73: #{tpu_custom_call.1} parent=1 // pred_fallthru
      _
    %v133 = vld [vmem:[#allocation2] sm:$0xff]
    %v134 = vld [vmem:[#allocation2 + $0x8] sm:$0xff]
    %v135 = vld [vmem:[#allocation2 + $0x10] sm:$0xff]
    %v136 = vld [vmem:[#allocation2 + $0x18] sm:$0xf]
    %v137 = vld [vmem:[#allocation2 + $0x1c] sm:$0xff]
    %v138 = vld [vmem:[#allocation2 + $0x24] sm:$0xff]
    %v139 = vld [vmem:[#allocation2 + $0x2c] sm:$0xff]
    %v140 = vld [vmem:[#allocation2 + $0x34] sm:$0xf]
    %v141 = vld [vmem:[#allocation5] sm:$0xff]
    %v142 = vld [vmem:[#allocation5 + $0x8] sm:$0xff]
    %v143 = vld [vmem:[#allocation5 + $0x10] sm:$0xf]
    %v144 = vld [vmem:[#allocation5 + $0x14] sm:$0xff]
    %v145 = vld [vmem:[#allocation5 + $0x1c] sm:$0xff]
    %v146 = vld [vmem:[#allocation5 + $0x24] sm:$0xf]
    %v147 = vld [vmem:[#allocation5 + $0x28] sm:$0xff]
    %v148 = vld [vmem:[#allocation5 + $0x30] sm:$0xff]
    %v149 = vld [vmem:[#allocation5 + $0x38] sm:$0xf]
    %v150 = vld [vmem:[#allocation5 + $0x3c] sm:$0xff]
    %v151 = vld [vmem:[#allocation5 + $0x44] sm:$0xff]
    %v152 = vld [vmem:[#allocation5 + $0x4c] sm:$0xf]
    %v153 = vld [vmem:[#allocation5 + $0x50] sm:$0xff]
    %v154 = vld [vmem:[#allocation5 + $0x58] sm:$0xff]
    %v155 = vld [vmem:[#allocation5 + $0x60] sm:$0xf]
    %v156 = vld [vmem:[#allocation5 + $0x64] sm:$0xff]
    %v157 = vld [vmem:[#allocation5 + $0x6c] sm:$0xff]
    %v158 = vld [vmem:[#allocation5 + $0x74] sm:$0xf]
    %v159 = vld [vmem:[#allocation5 + $0x78] sm:$0xff]
    %v160 = vld [vmem:[#allocation5 + $0x80] sm:$0xff]
    %v161 = vld [vmem:[#allocation5 + $0x88] sm:$0xf]
    %v162 = vld [vmem:[#allocation5 + $0x8c] sm:$0xff]
    %v163 = vld [vmem:[#allocation5 + $0x94] sm:$0xff]
    %v164 = vld [vmem:[#allocation5 + $0x9c] sm:$0xf]
    %v165 = vld [vmem:[#allocation5 + $0xa0] sm:$0xff]
    %v166 = vld [vmem:[#allocation5 + $0xa8] sm:$0xff]
    %v167 = vld [vmem:[#allocation5 + $0xb0] sm:$0xf]
    %v168 = vld [vmem:[#allocation5 + $0xb4] sm:$0xff]
    %v169 = vld [vmem:[#allocation5 + $0xbc] sm:$0xff]
    %v170 = vld [vmem:[#allocation5 + $0xc4] sm:$0xf]
    %v171 = vld [vmem:[#allocation5 + $0xc8] sm:$0xff]
    %v172 = vld [vmem:[#allocation5 + $0xd0] sm:$0xff]
    %v173 = vld [vmem:[#allocation5 + $0xd8] sm:$0xf]
    %v174 = vld [vmem:[#allocation5 + $0xdc] sm:$0xff]
    %v175 = vld [vmem:[#allocation5 + $0xe4] sm:$0xff]
    %v176 = vld [vmem:[#allocation5 + $0xec] sm:$0xf]
    %v177 = vld [vmem:[#allocation5 + $0xf0] sm:$0xff]
    %v178 = vld [vmem:[#allocation5 + $0xf8] sm:$0xff]
    %v179 = vld [vmem:[#allocation5 + $0x100] sm:$0xf]
    %v180 = vld [vmem:[#allocation5 + $0x104] sm:$0xff]
    %v181 = vld [vmem:[#allocation5 + $0x10c] sm:$0xff]
    %v182 = vld [vmem:[#allocation5 + $0x114] sm:$0xf]
    %v183 = vld [vmem:[#allocation5 + $0x118] sm:$0xff]
    %v184 = vld [vmem:[#allocation5 + $0x120] sm:$0xff]
    %v185 = vld [vmem:[#allocation5 + $0x128] sm:$0xf]
    %v186 = vld [vmem:[#allocation5 + $0x12c] sm:$0xff]
    %v187 = vld [vmem:[#allocation5 + $0x134] sm:$0xff]
    %v188 = vld [vmem:[#allocation5 + $0x13c] sm:$0xf]
    %v189 = vld [vmem:[#allocation5 + $0x140] sm:$0xff]
    %v190 = vld [vmem:[#allocation5 + $0x148] sm:$0xff]
    %v191 = vld [vmem:[#allocation5 + $0x150] sm:$0xf]
    %v192 = vld [vmem:[#allocation5 + $0x154] sm:$0xff]
    %v193 = vld [vmem:[#allocation5 + $0x15c] sm:$0xff]
    %v194 = vld [vmem:[#allocation5 + $0x164] sm:$0xf]
    %v195 = vld [vmem:[#allocation5 + $0x168] sm:$0xff]
    %v196 = vld [vmem:[#allocation5 + $0x170] sm:$0xff]
    %v197 = vld [vmem:[#allocation5 + $0x178] sm:$0xf]
    %v198 = vld [vmem:[#allocation5 + $0x17c] sm:$0xff]
    %v199 = vld [vmem:[#allocation5 + $0x184] sm:$0xff]
    %v200 = vld [vmem:[#allocation5 + $0x18c] sm:$0xf]
    %v201 = vld [vmem:[#allocation5 + $0x190] sm:$0xff]
    %v202 = vld [vmem:[#allocation5 + $0x198] sm:$0xff]
    %v203 = vld [vmem:[#allocation5 + $0x1a0] sm:$0xf]
    %v204 = vld [vmem:[#allocation5 + $0x1a4] sm:$0xff]
    %v205 = vld [vmem:[#allocation5 + $0x1ac] sm:$0xff]
    %v206 = vld [vmem:[#allocation5 + $0x1b4] sm:$0xf]
    %v207 = vld [vmem:[#allocation5 + $0x1b8] sm:$0xff]
    %v208 = vld [vmem:[#allocation5 + $0x1c0] sm:$0xff]
    %v209 = vld [vmem:[#allocation5 + $0x1c8] sm:$0xf]
    %v210 = vld [vmem:[#allocation5 + $0x1cc] sm:$0xff]
    %v211 = vld [vmem:[#allocation5 + $0x1d4] sm:$0xff]
    %v212 = vld [vmem:[#allocation5 + $0x1dc] sm:$0xf]
    %v213 = vld [vmem:[#allocation5 + $0x1e0] sm:$0xff]
    %v214 = vld [vmem:[#allocation5 + $0x1e8] sm:$0xff]
    %v215 = vld [vmem:[#allocation5 + $0x1f0] sm:$0xf]
    %v216 = vld [vmem:[#allocation5 + $0x1f4] sm:$0xff]
    %v217 = vld [vmem:[#allocation5 + $0x1fc] sm:$0xff]
    %v218 = vld [vmem:[#allocation5 + $0x204] sm:$0xf]
    %v219 = vld [vmem:[#allocation5 + $0x208] sm:$0xff]
    %v220 = vld [vmem:[#allocation5 + $0x210] sm:$0xff]
    %v221 = vld [vmem:[#allocation5 + $0x218] sm:$0xf]
    %v222 = vld [vmem:[#allocation5 + $0x21c] sm:$0xff]
    %v223 = vld [vmem:[#allocation5 + $0x224] sm:$0xff]
    %v224 = vld [vmem:[#allocation5 + $0x22c] sm:$0xf]
    %v225 = vld [vmem:[#allocation5 + $0x230] sm:$0xff]
    %v226 = vld [vmem:[#allocation5 + $0x238] sm:$0xff]
    %v227 = vld [vmem:[#allocation5 + $0x240] sm:$0xf]
    %v228 = vld [vmem:[#allocation5 + $0x244] sm:$0xff]
    %v229 = vld [vmem:[#allocation5 + $0x24c] sm:$0xff]
    %v230 = vld [vmem:[#allocation5 + $0x254] sm:$0xf]
    %v231 = vld [vmem:[#allocation5 + $0x258] sm:$0xff]
    %v232 = vld [vmem:[#allocation5 + $0x260] sm:$0xff]
    %v233 = vld [vmem:[#allocation5 + $0x268] sm:$0xf]
    %v234 = vld [vmem:[#allocation5 + $0x26c] sm:$0xff]
    %v235 = vld [vmem:[#allocation5 + $0x274] sm:$0xff]
    %v236 = vld [vmem:[#allocation5 + $0x27c] sm:$0xf]
    %v237 = vld [vmem:[#allocation5 + $0x280] sm:$0xff]
    %v238 = vld [vmem:[#allocation5 + $0x288] sm:$0xff]
    %v239 = vld [vmem:[#allocation5 + $0x290] sm:$0xf]
    %v240 = vld [vmem:[#allocation5 + $0x294] sm:$0xff]
    %v241 = vld [vmem:[#allocation5 + $0x29c] sm:$0xff]
    %v242 = vld [vmem:[#allocation5 + $0x2a4] sm:$0xf]
    %v243 = vld [vmem:[#allocation5 + $0x2a8] sm:$0xff]
    %v244 = vld [vmem:[#allocation5 + $0x2b0] sm:$0xff]
    %v245 = vld [vmem:[#allocation5 + $0x2b8] sm:$0xf]
    %v246 = vld [vmem:[#allocation5 + $0x2bc] sm:$0xff]
    %v247 = vld [vmem:[#allocation5 + $0x2c4] sm:$0xff]
    %v248 = vld [vmem:[#allocation5 + $0x2cc] sm:$0xf]
    %v249 = vld [vmem:[#allocation5 + $0x2d0] sm:$0xff]
    %v250 = vld [vmem:[#allocation5 + $0x2d8] sm:$0xff]
    %v251 = vld [vmem:[#allocation5 + $0x2e0] sm:$0xf]
    %v252 = vld [vmem:[#allocation5 + $0x2e4] sm:$0xff]
    %v253 = vld [vmem:[#allocation5 + $0x2ec] sm:$0xff]
    %v254 = vld [vmem:[#allocation5 + $0x2f4] sm:$0xf]
    %v255 = vld [vmem:[#allocation5 + $0x2f8] sm:$0xff]
    %v256 = vld [vmem:[#allocation5 + $0x300] sm:$0xff]
    %v257 = vld [vmem:[#allocation5 + $0x308] sm:$0xf]
    %v258 = vld [vmem:[#allocation5 + $0x30c] sm:$0xff]
    %v259 = vld [vmem:[#allocation5 + $0x314] sm:$0xff]
    %v260 = vld [vmem:[#allocation5 + $0x31c] sm:$0xf]
    %v261 = vld [vmem:[#allocation5 + $0x320] sm:$0xff]
    %v262 = vld [vmem:[#allocation5 + $0x328] sm:$0xff]
    %v263 = vld [vmem:[#allocation5 + $0x330] sm:$0xf]
    %v264 = vld [vmem:[#allocation5 + $0x334] sm:$0xff]
    %v265 = vld [vmem:[#allocation5 + $0x33c] sm:$0xff]
    %v266 = vld [vmem:[#allocation5 + $0x344] sm:$0xf]
    %v267 = vld [vmem:[#allocation5 + $0x348] sm:$0xff]
    %v268 = vld [vmem:[#allocation5 + $0x350] sm:$0xff]
    %v269 = vld [vmem:[#allocation5 + $0x358] sm:$0xf]
    %v270 = vld [vmem:[#allocation5 + $0x35c] sm:$0xff]
    %v271 = vld [vmem:[#allocation5 + $0x364] sm:$0xff]
    %v272 = vld [vmem:[#allocation5 + $0x36c] sm:$0xf]
    %v273 = vld [vmem:[#allocation5 + $0x370] sm:$0xff]
    %v274 = vld [vmem:[#allocation5 + $0x378] sm:$0xff]
    %v275 = vld [vmem:[#allocation5 + $0x380] sm:$0xf]
    %v276 = vld [vmem:[#allocation5 + $0x384] sm:$0xff]
    %v277 = vld [vmem:[#allocation5 + $0x38c] sm:$0xff]
    %v278 = vld [vmem:[#allocation5 + $0x394] sm:$0xf]
    %v279 = vld [vmem:[#allocation5 + $0x398] sm:$0xff]
    %v280 = vld [vmem:[#allocation5 + $0x3a0] sm:$0xff]
    %v281 = vld [vmem:[#allocation5 + $0x3a8] sm:$0xf]
    %v282 = vld [vmem:[#allocation5 + $0x3ac] sm:$0xff]
    %v283 = vld [vmem:[#allocation5 + $0x3b4] sm:$0xff]
    %v284 = vld [vmem:[#allocation5 + $0x3bc] sm:$0xf]
    %v285 = vld [vmem:[#allocation5 + $0x3c0] sm:$0xff]
    %v286 = vld [vmem:[#allocation5 + $0x3c8] sm:$0xff]
    %v287 = vld [vmem:[#allocation5 + $0x3d0] sm:$0xf]
    %v288 = vld [vmem:[#allocation5 + $0x3d4] sm:$0xff]
    %v289 = vld [vmem:[#allocation5 + $0x3dc] sm:$0xff]
    %v290 = vld [vmem:[#allocation5 + $0x3e4] sm:$0xf]
    %v291 = vld [vmem:[#allocation5 + $0x3e8] sm:$0xff]
    %v292 = vld [vmem:[#allocation5 + $0x3f0] sm:$0xff]
    %v293 = vld [vmem:[#allocation5 + $0x3f8] sm:$0xf]
    %v294 = vld [vmem:[#allocation5 + $0x3fc] sm:$0xff]
    %v295 = vld [vmem:[#allocation5 + $0x404] sm:$0xff]
    %v296 = vld [vmem:[#allocation5 + $0x40c] sm:$0xf]
    %v297 = vld [vmem:[#allocation5 + $0x410] sm:$0xff]
    %v298 = vld [vmem:[#allocation5 + $0x418] sm:$0xff]
    %v299 = vld [vmem:[#allocation5 + $0x420] sm:$0xf]
    %v300 = vld [vmem:[#allocation5 + $0x424] sm:$0xff]
    %v301 = vld [vmem:[#allocation5 + $0x42c] sm:$0xff]
    %v302 = vld [vmem:[#allocation5 + $0x434] sm:$0xf]
    %v303 = vld [vmem:[#allocation5 + $0x438] sm:$0xff]
    %v304 = vld [vmem:[#allocation5 + $0x440] sm:$0xff]
    %v305 = vld [vmem:[#allocation5 + $0x448] sm:$0xf]
    %v306 = vld [vmem:[#allocation5 + $0x44c] sm:$0xff]
    %v307 = vld [vmem:[#allocation5 + $0x454] sm:$0xff]
    %v308 = vld [vmem:[#allocation5 + $0x45c] sm:$0xf]
    %v309 = vld [vmem:[#allocation5 + $0x460] sm:$0xff]
    %v310 = vld [vmem:[#allocation5 + $0x468] sm:$0xff]
    %v311 = vld [vmem:[#allocation5 + $0x470] sm:$0xf]
    %v312 = vld [vmem:[#allocation5 + $0x474] sm:$0xff]
    %v313 = vld [vmem:[#allocation5 + $0x47c] sm:$0xff]
    %v314 = vld [vmem:[#allocation5 + $0x484] sm:$0xf]
    %v315 = vld [vmem:[#allocation5 + $0x488] sm:$0xff]
    %v316 = vld [vmem:[#allocation5 + $0x490] sm:$0xff]
    %v317 = vld [vmem:[#allocation5 + $0x498] sm:$0xf]
    %v318 = vld [vmem:[#allocation5 + $0x49c] sm:$0xff]
    %v319 = vld [vmem:[#allocation5 + $0x4a4] sm:$0xff]
    %v320 = vld [vmem:[#allocation5 + $0x4ac] sm:$0xf]
    %v321 = vld [vmem:[#allocation5 + $0x4b0] sm:$0xff]
    %v322 = vld [vmem:[#allocation5 + $0x4b8] sm:$0xff]
    %v323 = vld [vmem:[#allocation5 + $0x4c0] sm:$0xf]
    %v324 = vld [vmem:[#allocation5 + $0x4c4] sm:$0xff]
    %v325 = vld [vmem:[#allocation5 + $0x4cc] sm:$0xff]
    %v326 = vld [vmem:[#allocation5 + $0x4d4] sm:$0xf]
    %v327 = vld [vmem:[#allocation5 + $0x4d8] sm:$0xff]
    %v328 = vld [vmem:[#allocation5 + $0x4e0] sm:$0xff]
    %v329 = vld [vmem:[#allocation5 + $0x4e8] sm:$0xf]
    %v330 = vld [vmem:[#allocation5 + $0x4ec] sm:$0xff]
    %v331 = vld [vmem:[#allocation5 + $0x4f4] sm:$0xff]
    %v332 = vld [vmem:[#allocation5 + $0x4fc] sm:$0xf]
    %v333 = vld [vmem:[#allocation5 + $0x500] sm:$0xff]
    %v334 = vld [vmem:[#allocation5 + $0x508] sm:$0xff]
    %v335 = vld [vmem:[#allocation5 + $0x510] sm:$0xf]
    %v336 = vld [vmem:[#allocation5 + $0x514] sm:$0xff]
    %v337 = vld [vmem:[#allocation5 + $0x51c] sm:$0xff]
    %v338 = vld [vmem:[#allocation5 + $0x524] sm:$0xf]
    %v339 = vld [vmem:[#allocation5 + $0x528] sm:$0xff]
    %v340 = vld [vmem:[#allocation5 + $0x530] sm:$0xff]
    %v341 = vld [vmem:[#allocation5 + $0x538] sm:$0xf]
    %v342 = vld [vmem:[#allocation5 + $0x53c] sm:$0xff]
    %v343 = vld [vmem:[#allocation5 + $0x544] sm:$0xff]
    %v344 = vld [vmem:[#allocation5 + $0x54c] sm:$0xf]
    %v345 = vld [vmem:[#allocation5 + $0x550] sm:$0xff]
    %v346 = vld [vmem:[#allocation5 + $0x558] sm:$0xff]
    %v347 = vld [vmem:[#allocation5 + $0x560] sm:$0xf]
    %v348 = vld [vmem:[#allocation5 + $0x564] sm:$0xff]
    %v349 = vld [vmem:[#allocation5 + $0x56c] sm:$0xff]
    %v350 = vld [vmem:[#allocation5 + $0x574] sm:$0xf]
    %v351 = vld [vmem:[#allocation5 + $0x578] sm:$0xff]
    %v352 = vld [vmem:[#allocation5 + $0x580] sm:$0xff]
    %v353 = vld [vmem:[#allocation5 + $0x588] sm:$0xf]
    %v354 = vld [vmem:[#allocation5 + $0x58c] sm:$0xff]
    %v355 = vld [vmem:[#allocation5 + $0x594] sm:$0xff]
    %v356 = vld [vmem:[#allocation5 + $0x59c] sm:$0xf]
    %v357 = vld [vmem:[#allocation5 + $0x5a0] sm:$0xff]
    %v358 = vld [vmem:[#allocation5 + $0x5a8] sm:$0xff]
    %v359 = vld [vmem:[#allocation5 + $0x5b0] sm:$0xf]
    %v360 = vld [vmem:[#allocation5 + $0x5b4] sm:$0xff]
    %v361 = vld [vmem:[#allocation5 + $0x5bc] sm:$0xff]
    %v362 = vld [vmem:[#allocation5 + $0x5c4] sm:$0xf]
    %v363 = vld [vmem:[#allocation5 + $0x5c8] sm:$0xff]
    %v364 = vld [vmem:[#allocation5 + $0x5d0] sm:$0xff]
    %v365 = vld [vmem:[#allocation5 + $0x5d8] sm:$0xf]
    %v366 = vld [vmem:[#allocation5 + $0x5dc] sm:$0xff]
    %v367 = vld [vmem:[#allocation5 + $0x5e4] sm:$0xff]
    %v368 = vld [vmem:[#allocation5 + $0x5ec] sm:$0xf]
    %v369 = vld [vmem:[#allocation5 + $0x5f0] sm:$0xff]
    %v370 = vld [vmem:[#allocation5 + $0x5f8] sm:$0xff]
    %v371 = vld [vmem:[#allocation5 + $0x600] sm:$0xf]
    %v372 = vld [vmem:[#allocation5 + $0x604] sm:$0xff]
    %v373 = vld [vmem:[#allocation5 + $0x60c] sm:$0xff]
    %v374 = vld [vmem:[#allocation5 + $0x614] sm:$0xf]
    %v375 = vld [vmem:[#allocation5 + $0x618] sm:$0xff]
    %v376 = vld [vmem:[#allocation5 + $0x620] sm:$0xff]
    %v377 = vld [vmem:[#allocation5 + $0x628] sm:$0xf]
    %v378 = vld [vmem:[#allocation5 + $0x62c] sm:$0xff]
    %v379 = vld [vmem:[#allocation5 + $0x634] sm:$0xff]
    %v380 = vld [vmem:[#allocation5 + $0x63c] sm:$0xf]
    %v381 = vld [vmem:[#allocation5 + $0x640] sm:$0xff]
    %v382 = vld [vmem:[#allocation5 + $0x648] sm:$0xff]
    %v383 = vld [vmem:[#allocation5 + $0x650] sm:$0xf]
    %v384 = vld [vmem:[#allocation5 + $0x654] sm:$0xff]
    %v385 = vld [vmem:[#allocation5 + $0x65c] sm:$0xff]
    %v386 = vld [vmem:[#allocation5 + $0x664] sm:$0xf]
    %v387 = vld [vmem:[#allocation5 + $0x668] sm:$0xff]
    %v388 = vld [vmem:[#allocation5 + $0x670] sm:$0xff]
    %v389 = vld [vmem:[#allocation5 + $0x678] sm:$0xf]
    %v390 = vld [vmem:[#allocation5 + $0x67c] sm:$0xff]
    %v391 = vld [vmem:[#allocation5 + $0x684] sm:$0xff]
    %v392 = vld [vmem:[#allocation5 + $0x68c] sm:$0xf]
    %v393 = vld [vmem:[#allocation5 + $0x690] sm:$0xff]
    %v394 = vld [vmem:[#allocation5 + $0x698] sm:$0xff]
    %v395 = vld [vmem:[#allocation5 + $0x6a0] sm:$0xf]
    %v396 = vld [vmem:[#allocation5 + $0x6a4] sm:$0xff]
    %v397 = vld [vmem:[#allocation5 + $0x6ac] sm:$0xff]
    %v398 = vld [vmem:[#allocation5 + $0x6b4] sm:$0xf]
    %v399 = vld [vmem:[#allocation5 + $0x6b8] sm:$0xff]
    %v400 = vld [vmem:[#allocation5 + $0x6c0] sm:$0xff]
    %v401 = vld [vmem:[#allocation5 + $0x6c8] sm:$0xf]
    %v402 = vld [vmem:[#allocation5 + $0x6cc] sm:$0xff]
    %v403 = vld [vmem:[#allocation5 + $0x6d4] sm:$0xff]
    %v404 = vld [vmem:[#allocation5 + $0x6dc] sm:$0xf]
    %v405 = vld [vmem:[#allocation5 + $0x6e0] sm:$0xff]
    %v406 = vld [vmem:[#allocation5 + $0x6e8] sm:$0xff]
    %v407 = vld [vmem:[#allocation5 + $0x6f0] sm:$0xf]
    %v408 = vld [vmem:[#allocation5 + $0x6f4] sm:$0xff]
    %v409 = vld [vmem:[#allocation5 + $0x6fc] sm:$0xff]
    %v410 = vld [vmem:[#allocation5 + $0x704] sm:$0xf]
    %v411 = vld [vmem:[#allocation5 + $0x708] sm:$0xff]
    %v412 = vld [vmem:[#allocation5 + $0x710] sm:$0xff]
    %v413 = vld [vmem:[#allocation5 + $0x718] sm:$0xf]
    %v414 = vld [vmem:[#allocation5 + $0x71c] sm:$0xff]
    %v415 = vld [vmem:[#allocation5 + $0x724] sm:$0xff]
    %v416 = vld [vmem:[#allocation5 + $0x72c] sm:$0xf]
    %v417 = vld [vmem:[#allocation5 + $0x730] sm:$0xff]
    %v418 = vld [vmem:[#allocation5 + $0x738] sm:$0xff]
    %v419 = vld [vmem:[#allocation5 + $0x740] sm:$0xf]
    %v420 = vld [vmem:[#allocation5 + $0x744] sm:$0xff]
    %v421 = vld [vmem:[#allocation5 + $0x74c] sm:$0xff]
    %v422 = vld [vmem:[#allocation5 + $0x754] sm:$0xf]
    %v423 = vld [vmem:[#allocation5 + $0x758] sm:$0xff]
    %v424 = vld [vmem:[#allocation5 + $0x760] sm:$0xff]
    %v425 = vld [vmem:[#allocation5 + $0x768] sm:$0xf]
    %v426 = vld [vmem:[#allocation5 + $0x76c] sm:$0xff]
    %v427 = vld [vmem:[#allocation5 + $0x774] sm:$0xff]
    %v428 = vld [vmem:[#allocation5 + $0x77c] sm:$0xf]
    %v429 = vld [vmem:[#allocation5 + $0x780] sm:$0xff]
    %v430 = vld [vmem:[#allocation5 + $0x788] sm:$0xff]
    %v431 = vld [vmem:[#allocation5 + $0x790] sm:$0xf]
    %v432 = vld [vmem:[#allocation5 + $0x794] sm:$0xff]
    %v433 = vld [vmem:[#allocation5 + $0x79c] sm:$0xff]
    %v434 = vld [vmem:[#allocation5 + $0x7a4] sm:$0xf]
    %v435 = vld [vmem:[#allocation7] sm:$0x1f]
    %v437 = vlaneseq
    %v438 = vshrl.u32 %v437, 7
    %v439 = vsub.s32 0, %v438
    %v440 = vrot.slane %v435, %v439
    %v441 = vlaneseq
    %v442 = vshrl.u32 %v441, 7
    %v443 = vsub.s32 1, %v442
    %v444 = vrot.slane %v435, %v443
    %v445 = vlaneseq
    %v446 = vshrl.u32 %v445, 7
    %v447 = vsub.s32 2, %v446
    %v448 = vrot.slane %v435, %v447
    %v449 = vlaneseq
    %v450 = vshrl.u32 %v449, 7
    %v451 = vsub.s32 3, %v450
    %v452 = vrot.slane %v435, %v451
    %v453 = vlaneseq
    %v454 = vshrl.u32 %v453, 7
    %v455 = vsub.s32 4, %v454
    %v456 = vrot.slane %v435, %v455
    %v470 = vunpack.c.l.b16 %v133
    %v471 = vunpack.c.h.b16 %v133
    %v472 = vunpack.c.l.b16 %v134
    %v473 = vunpack.c.h.b16 %v134
    %v474 = vunpack.c.l.b16 %v135
    %v475 = vunpack.c.h.b16 %v135
    %v476 = vunpack.c.l.b16 %v136
    %v477 = vunpack.c.l.b16 %v137
    %v478 = vunpack.c.h.b16 %v137
    %v479 = vunpack.c.l.b16 %v138
    %v480 = vunpack.c.h.b16 %v138
    %v481 = vunpack.c.l.b16 %v139
    %v482 = vunpack.c.h.b16 %v139
    %v483 = vunpack.c.l.b16 %v140
    %v484 = vpack.c.b16 %v477, %v470
    %v485 = vpack.c.b16 %v478, %v471
    %v486 = vpack.c.b16 %v479, %v472
    %v487 = vpack.c.b16 %v480, %v473
    %v488 = vpack.c.b16 %v481, %v474
    %v489 = vpack.c.b16 %v482, %v475
    %v490 = vpack.c.b16 %v483, %v476
    %v791 = vunpack.c.l.b16 %v141
    %v792 = vunpack.c.h.b16 %v141
    %v793 = vunpack.c.l.b16 %v142
    %v794 = vunpack.c.h.b16 %v142
    %v795 = vunpack.c.l.b16 %v143
    %v796 = vunpack.c.l.b16 %v144
    %v797 = vunpack.c.h.b16 %v144
    %v798 = vunpack.c.l.b16 %v145
    %v799 = vunpack.c.h.b16 %v145
    %v800 = vunpack.c.l.b16 %v146
    %v801 = vunpack.c.l.b16 %v147
    %v802 = vunpack.c.h.b16 %v147
    %v803 = vunpack.c.l.b16 %v148
    %v804 = vunpack.c.h.b16 %v148
    %v805 = vunpack.c.l.b16 %v149
    %v806 = vunpack.c.l.b16 %v150
    %v807 = vunpack.c.h.b16 %v150
    %v808 = vunpack.c.l.b16 %v151
    %v809 = vunpack.c.h.b16 %v151
    %v810 = vunpack.c.l.b16 %v152
    %v811 = vunpack.c.l.b16 %v153
    %v812 = vunpack.c.h.b16 %v153
    %v813 = vunpack.c.l.b16 %v154
    %v814 = vunpack.c.h.b16 %v154
    %v815 = vunpack.c.l.b16 %v155
    %v816 = vunpack.c.l.b16 %v156
    %v817 = vunpack.c.h.b16 %v156
    %v818 = vunpack.c.l.b16 %v157
    %v819 = vunpack.c.h.b16 %v157
    %v820 = vunpack.c.l.b16 %v158
    %v821 = vunpack.c.l.b16 %v159
    %v822 = vunpack.c.h.b16 %v159
    %v823 = vunpack.c.l.b16 %v160
    %v824 = vunpack.c.h.b16 %v160
    %v825 = vunpack.c.l.b16 %v161
    %v826 = vunpack.c.l.b16 %v162
    %v827 = vunpack.c.h.b16 %v162
    %v828 = vunpack.c.l.b16 %v163
    %v829 = vunpack.c.h.b16 %v163
    %v830 = vunpack.c.l.b16 %v164
    %v831 = vunpack.c.l.b16 %v165
    %v832 = vunpack.c.h.b16 %v165
    %v833 = vunpack.c.l.b16 %v166
    %v834 = vunpack.c.h.b16 %v166
    %v835 = vunpack.c.l.b16 %v167
    %v836 = vunpack.c.l.b16 %v168
    %v837 = vunpack.c.h.b16 %v168
    %v838 = vunpack.c.l.b16 %v169
    %v839 = vunpack.c.h.b16 %v169
    %v840 = vunpack.c.l.b16 %v170
    %v841 = vunpack.c.l.b16 %v171
    %v842 = vunpack.c.h.b16 %v171
    %v843 = vunpack.c.l.b16 %v172
    %v844 = vunpack.c.h.b16 %v172
    %v845 = vunpack.c.l.b16 %v173
    %v846 = vunpack.c.l.b16 %v174
    %v847 = vunpack.c.h.b16 %v174
    %v848 = vunpack.c.l.b16 %v175
    %v849 = vunpack.c.h.b16 %v175
    %v850 = vunpack.c.l.b16 %v176
    %v851 = vunpack.c.l.b16 %v177
    %v852 = vunpack.c.h.b16 %v177
    %v853 = vunpack.c.l.b16 %v178
    %v854 = vunpack.c.h.b16 %v178
    %v855 = vunpack.c.l.b16 %v179
    %v856 = vunpack.c.l.b16 %v180
    %v857 = vunpack.c.h.b16 %v180
    %v858 = vunpack.c.l.b16 %v181
    %v859 = vunpack.c.h.b16 %v181
    %v860 = vunpack.c.l.b16 %v182
    %v861 = vunpack.c.l.b16 %v183
    %v862 = vunpack.c.h.b16 %v183
    %v863 = vunpack.c.l.b16 %v184
    %v864 = vunpack.c.h.b16 %v184
    %v865 = vunpack.c.l.b16 %v185
    %v866 = vunpack.c.l.b16 %v186
    %v867 = vunpack.c.h.b16 %v186
    %v868 = vunpack.c.l.b16 %v187
    %v869 = vunpack.c.h.b16 %v187
    %v870 = vunpack.c.l.b16 %v188
    %v871 = vunpack.c.l.b16 %v189
    %v872 = vunpack.c.h.b16 %v189
    %v873 = vunpack.c.l.b16 %v190
    %v874 = vunpack.c.h.b16 %v190
    %v875 = vunpack.c.l.b16 %v191
    %v876 = vunpack.c.l.b16 %v192
    %v877 = vunpack.c.h.b16 %v192
    %v878 = vunpack.c.l.b16 %v193
    %v879 = vunpack.c.h.b16 %v193
    %v880 = vunpack.c.l.b16 %v194
    %v881 = vunpack.c.l.b16 %v195
    %v882 = vunpack.c.h.b16 %v195
    %v883 = vunpack.c.l.b16 %v196
    %v884 = vunpack.c.h.b16 %v196
    %v885 = vunpack.c.l.b16 %v197
    %v886 = vunpack.c.l.b16 %v198
    %v887 = vunpack.c.h.b16 %v198
    %v888 = vunpack.c.l.b16 %v199
    %v889 = vunpack.c.h.b16 %v199
    %v890 = vunpack.c.l.b16 %v200
    %v891 = vunpack.c.l.b16 %v201
    %v892 = vunpack.c.h.b16 %v201
    %v893 = vunpack.c.l.b16 %v202
    %v894 = vunpack.c.h.b16 %v202
    %v895 = vunpack.c.l.b16 %v203
    %v896 = vunpack.c.l.b16 %v204
    %v897 = vunpack.c.h.b16 %v204
    %v898 = vunpack.c.l.b16 %v205
    %v899 = vunpack.c.h.b16 %v205
    %v900 = vunpack.c.l.b16 %v206
    %v901 = vunpack.c.l.b16 %v207
    %v902 = vunpack.c.h.b16 %v207
    %v903 = vunpack.c.l.b16 %v208
    %v904 = vunpack.c.h.b16 %v208
    %v905 = vunpack.c.l.b16 %v209
    %v906 = vunpack.c.l.b16 %v210
    %v907 = vunpack.c.h.b16 %v210
    %v908 = vunpack.c.l.b16 %v211
    %v909 = vunpack.c.h.b16 %v211
    %v910 = vunpack.c.l.b16 %v212
    %v911 = vunpack.c.l.b16 %v213
    %v912 = vunpack.c.h.b16 %v213
    %v913 = vunpack.c.l.b16 %v214
    %v914 = vunpack.c.h.b16 %v214
    %v915 = vunpack.c.l.b16 %v215
    %v916 = vunpack.c.l.b16 %v216
    %v917 = vunpack.c.h.b16 %v216
    %v918 = vunpack.c.l.b16 %v217
    %v919 = vunpack.c.h.b16 %v217
    %v920 = vunpack.c.l.b16 %v218
    %v921 = vunpack.c.l.b16 %v219
    %v922 = vunpack.c.h.b16 %v219
    %v923 = vunpack.c.l.b16 %v220
    %v924 = vunpack.c.h.b16 %v220
    %v925 = vunpack.c.l.b16 %v221
    %v926 = vunpack.c.l.b16 %v222
    %v927 = vunpack.c.h.b16 %v222
    %v928 = vunpack.c.l.b16 %v223
    %v929 = vunpack.c.h.b16 %v223
    %v930 = vunpack.c.l.b16 %v224
    %v931 = vunpack.c.l.b16 %v225
    %v932 = vunpack.c.h.b16 %v225
    %v933 = vunpack.c.l.b16 %v226
    %v934 = vunpack.c.h.b16 %v226
    %v935 = vunpack.c.l.b16 %v227
    %v936 = vunpack.c.l.b16 %v228
    %v937 = vunpack.c.h.b16 %v228
    %v938 = vunpack.c.l.b16 %v229
    %v939 = vunpack.c.h.b16 %v229
    %v940 = vunpack.c.l.b16 %v230
    %v941 = vunpack.c.l.b16 %v231
    %v942 = vunpack.c.h.b16 %v231
    %v943 = vunpack.c.l.b16 %v232
    %v944 = vunpack.c.h.b16 %v232
    %v945 = vunpack.c.l.b16 %v233
    %v946 = vunpack.c.l.b16 %v234
    %v947 = vunpack.c.h.b16 %v234
    %v948 = vunpack.c.l.b16 %v235
    %v949 = vunpack.c.h.b16 %v235
    %v950 = vunpack.c.l.b16 %v236
    %v951 = vunpack.c.l.b16 %v237
    %v952 = vunpack.c.h.b16 %v237
    %v953 = vunpack.c.l.b16 %v238
    %v954 = vunpack.c.h.b16 %v238
    %v955 = vunpack.c.l.b16 %v239
    %v956 = vunpack.c.l.b16 %v240
    %v957 = vunpack.c.h.b16 %v240
    %v958 = vunpack.c.l.b16 %v241
    %v959 = vunpack.c.h.b16 %v241
    %v960 = vunpack.c.l.b16 %v242
    %v961 = vunpack.c.l.b16 %v243
    %v962 = vunpack.c.h.b16 %v243
    %v963 = vunpack.c.l.b16 %v244
    %v964 = vunpack.c.h.b16 %v244
    %v965 = vunpack.c.l.b16 %v245
    %v966 = vunpack.c.l.b16 %v246
    %v967 = vunpack.c.h.b16 %v246
    %v968 = vunpack.c.l.b16 %v247
    %v969 = vunpack.c.h.b16 %v247
    %v970 = vunpack.c.l.b16 %v248
    %v971 = vunpack.c.l.b16 %v249
    %v972 = vunpack.c.h.b16 %v249
    %v973 = vunpack.c.l.b16 %v250
    %v974 = vunpack.c.h.b16 %v250
    %v975 = vunpack.c.l.b16 %v251
    %v976 = vunpack.c.l.b16 %v252
    %v977 = vunpack.c.h.b16 %v252
    %v978 = vunpack.c.l.b16 %v253
    %v979 = vunpack.c.h.b16 %v253
    %v980 = vunpack.c.l.b16 %v254
    %v981 = vunpack.c.l.b16 %v255
    %v982 = vunpack.c.h.b16 %v255
    %v983 = vunpack.c.l.b16 %v256
    %v984 = vunpack.c.h.b16 %v256
    %v985 = vunpack.c.l.b16 %v257
    %v986 = vunpack.c.l.b16 %v258
    %v987 = vunpack.c.h.b16 %v258
    %v988 = vunpack.c.l.b16 %v259
    %v989 = vunpack.c.h.b16 %v259
    %v990 = vunpack.c.l.b16 %v260
    %v991 = vunpack.c.l.b16 %v261
    %v992 = vunpack.c.h.b16 %v261
    %v993 = vunpack.c.l.b16 %v262
    %v994 = vunpack.c.h.b16 %v262
    %v995 = vunpack.c.l.b16 %v263
    %v996 = vunpack.c.l.b16 %v264
    %v997 = vunpack.c.h.b16 %v264
    %v998 = vunpack.c.l.b16 %v265
    %v999 = vunpack.c.h.b16 %v265
    %v1000 = vunpack.c.l.b16 %v266
    %v1001 = vunpack.c.l.b16 %v267
    %v1002 = vunpack.c.h.b16 %v267
    %v1003 = vunpack.c.l.b16 %v268
    %v1004 = vunpack.c.h.b16 %v268
    %v1005 = vunpack.c.l.b16 %v269
    %v1006 = vunpack.c.l.b16 %v270
    %v1007 = vunpack.c.h.b16 %v270
    %v1008 = vunpack.c.l.b16 %v271
    %v1009 = vunpack.c.h.b16 %v271
    %v1010 = vunpack.c.l.b16 %v272
    %v1011 = vunpack.c.l.b16 %v273
    %v1012 = vunpack.c.h.b16 %v273
    %v1013 = vunpack.c.l.b16 %v274
    %v1014 = vunpack.c.h.b16 %v274
    %v1015 = vunpack.c.l.b16 %v275
    %v1016 = vunpack.c.l.b16 %v276
    %v1017 = vunpack.c.h.b16 %v276
    %v1018 = vunpack.c.l.b16 %v277
    %v1019 = vunpack.c.h.b16 %v277
    %v1020 = vunpack.c.l.b16 %v278
    %v1021 = vunpack.c.l.b16 %v279
    %v1022 = vunpack.c.h.b16 %v279
    %v1023 = vunpack.c.l.b16 %v280
    %v1024 = vunpack.c.h.b16 %v280
    %v1025 = vunpack.c.l.b16 %v281
    %v1026 = vunpack.c.l.b16 %v282
    %v1027 = vunpack.c.h.b16 %v282
    %v1028 = vunpack.c.l.b16 %v283
    %v1029 = vunpack.c.h.b16 %v283
    %v1030 = vunpack.c.l.b16 %v284
    %v1031 = vunpack.c.l.b16 %v285
    %v1032 = vunpack.c.h.b16 %v285
    %v1033 = vunpack.c.l.b16 %v286
    %v1034 = vunpack.c.h.b16 %v286
    %v1035 = vunpack.c.l.b16 %v287
    %v1036 = vunpack.c.l.b16 %v288
    %v1037 = vunpack.c.h.b16 %v288
    %v1038 = vunpack.c.l.b16 %v289
    %v1039 = vunpack.c.h.b16 %v289
    %v1040 = vunpack.c.l.b16 %v290
    %v1041 = vunpack.c.l.b16 %v291
    %v1042 = vunpack.c.h.b16 %v291
    %v1043 = vunpack.c.l.b16 %v292
    %v1044 = vunpack.c.h.b16 %v292
    %v1045 = vunpack.c.l.b16 %v293
    %v1046 = vunpack.c.l.b16 %v294
    %v1047 = vunpack.c.h.b16 %v294
    %v1048 = vunpack.c.l.b16 %v295
    %v1049 = vunpack.c.h.b16 %v295
    %v1050 = vunpack.c.l.b16 %v296
    %v1051 = vunpack.c.l.b16 %v297
    %v1052 = vunpack.c.h.b16 %v297
    %v1053 = vunpack.c.l.b16 %v298
    %v1054 = vunpack.c.h.b16 %v298
    %v1055 = vunpack.c.l.b16 %v299
    %v1056 = vunpack.c.l.b16 %v300
    %v1057 = vunpack.c.h.b16 %v300
    %v1058 = vunpack.c.l.b16 %v301
    %v1059 = vunpack.c.h.b16 %v301
    %v1060 = vunpack.c.l.b16 %v302
    %v1061 = vunpack.c.l.b16 %v303
    %v1062 = vunpack.c.h.b16 %v303
    %v1063 = vunpack.c.l.b16 %v304
    %v1064 = vunpack.c.h.b16 %v304
    %v1065 = vunpack.c.l.b16 %v305
    %v1066 = vunpack.c.l.b16 %v306
    %v1067 = vunpack.c.h.b16 %v306
    %v1068 = vunpack.c.l.b16 %v307
    %v1069 = vunpack.c.h.b16 %v307
    %v1070 = vunpack.c.l.b16 %v308
    %v1071 = vunpack.c.l.b16 %v309
    %v1072 = vunpack.c.h.b16 %v309
    %v1073 = vunpack.c.l.b16 %v310
    %v1074 = vunpack.c.h.b16 %v310
    %v1075 = vunpack.c.l.b16 %v311
    %v1076 = vunpack.c.l.b16 %v312
    %v1077 = vunpack.c.h.b16 %v312
    %v1078 = vunpack.c.l.b16 %v313
    %v1079 = vunpack.c.h.b16 %v313
    %v1080 = vunpack.c.l.b16 %v314
    %v1081 = vunpack.c.l.b16 %v315
    %v1082 = vunpack.c.h.b16 %v315
    %v1083 = vunpack.c.l.b16 %v316
    %v1084 = vunpack.c.h.b16 %v316
    %v1085 = vunpack.c.l.b16 %v317
    %v1086 = vunpack.c.l.b16 %v318
    %v1087 = vunpack.c.h.b16 %v318
    %v1088 = vunpack.c.l.b16 %v319
    %v1089 = vunpack.c.h.b16 %v319
    %v1090 = vunpack.c.l.b16 %v320
    %v1091 = vunpack.c.l.b16 %v321
    %v1092 = vunpack.c.h.b16 %v321
    %v1093 = vunpack.c.l.b16 %v322
    %v1094 = vunpack.c.h.b16 %v322
    %v1095 = vunpack.c.l.b16 %v323
    %v1096 = vunpack.c.l.b16 %v324
    %v1097 = vunpack.c.h.b16 %v324
    %v1098 = vunpack.c.l.b16 %v325
    %v1099 = vunpack.c.h.b16 %v325
    %v1100 = vunpack.c.l.b16 %v326
    %v1101 = vunpack.c.l.b16 %v327
    %v1102 = vunpack.c.h.b16 %v327
    %v1103 = vunpack.c.l.b16 %v328
    %v1104 = vunpack.c.h.b16 %v328
    %v1105 = vunpack.c.l.b16 %v329
    %v1106 = vunpack.c.l.b16 %v330
    %v1107 = vunpack.c.h.b16 %v330
    %v1108 = vunpack.c.l.b16 %v331
    %v1109 = vunpack.c.h.b16 %v331
    %v1110 = vunpack.c.l.b16 %v332
    %v1111 = vunpack.c.l.b16 %v333
    %v1112 = vunpack.c.h.b16 %v333
    %v1113 = vunpack.c.l.b16 %v334
    %v1114 = vunpack.c.h.b16 %v334
    %v1115 = vunpack.c.l.b16 %v335
    %v1116 = vunpack.c.l.b16 %v336
    %v1117 = vunpack.c.h.b16 %v336
    %v1118 = vunpack.c.l.b16 %v337
    %v1119 = vunpack.c.h.b16 %v337
    %v1120 = vunpack.c.l.b16 %v338
    %v1121 = vunpack.c.l.b16 %v339
    %v1122 = vunpack.c.h.b16 %v339
    %v1123 = vunpack.c.l.b16 %v340
    %v1124 = vunpack.c.h.b16 %v340
    %v1125 = vunpack.c.l.b16 %v341
    %v1126 = vunpack.c.l.b16 %v342
    %v1127 = vunpack.c.h.b16 %v342
    %v1128 = vunpack.c.l.b16 %v343
    %v1129 = vunpack.c.h.b16 %v343
    %v1130 = vunpack.c.l.b16 %v344
    %v1131 = vunpack.c.l.b16 %v345
    %v1132 = vunpack.c.h.b16 %v345
    %v1133 = vunpack.c.l.b16 %v346
    %v1134 = vunpack.c.h.b16 %v346
    %v1135 = vunpack.c.l.b16 %v347
    %v1136 = vunpack.c.l.b16 %v348
    %v1137 = vunpack.c.h.b16 %v348
    %v1138 = vunpack.c.l.b16 %v349
    %v1139 = vunpack.c.h.b16 %v349
    %v1140 = vunpack.c.l.b16 %v350
    %v1141 = vunpack.c.l.b16 %v351
    %v1142 = vunpack.c.h.b16 %v351
    %v1143 = vunpack.c.l.b16 %v352
    %v1144 = vunpack.c.h.b16 %v352
    %v1145 = vunpack.c.l.b16 %v353
    %v1146 = vunpack.c.l.b16 %v354
    %v1147 = vunpack.c.h.b16 %v354
    %v1148 = vunpack.c.l.b16 %v355
    %v1149 = vunpack.c.h.b16 %v355
    %v1150 = vunpack.c.l.b16 %v356
    %v1151 = vunpack.c.l.b16 %v357
    %v1152 = vunpack.c.h.b16 %v357
    %v1153 = vunpack.c.l.b16 %v358
    %v1154 = vunpack.c.h.b16 %v358
    %v1155 = vunpack.c.l.b16 %v359
    %v1156 = vunpack.c.l.b16 %v360
    %v1157 = vunpack.c.h.b16 %v360
    %v1158 = vunpack.c.l.b16 %v361
    %v1159 = vunpack.c.h.b16 %v361
    %v1160 = vunpack.c.l.b16 %v362
    %v1161 = vunpack.c.l.b16 %v363
    %v1162 = vunpack.c.h.b16 %v363
    %v1163 = vunpack.c.l.b16 %v364
    %v1164 = vunpack.c.h.b16 %v364
    %v1165 = vunpack.c.l.b16 %v365
    %v1166 = vunpack.c.l.b16 %v366
    %v1167 = vunpack.c.h.b16 %v366
    %v1168 = vunpack.c.l.b16 %v367
    %v1169 = vunpack.c.h.b16 %v367
    %v1170 = vunpack.c.l.b16 %v368
    %v1171 = vunpack.c.l.b16 %v369
    %v1172 = vunpack.c.h.b16 %v369
    %v1173 = vunpack.c.l.b16 %v370
    %v1174 = vunpack.c.h.b16 %v370
    %v1175 = vunpack.c.l.b16 %v371
    %v1176 = vunpack.c.l.b16 %v372
    %v1177 = vunpack.c.h.b16 %v372
    %v1178 = vunpack.c.l.b16 %v373
    %v1179 = vunpack.c.h.b16 %v373
    %v1180 = vunpack.c.l.b16 %v374
    %v1181 = vunpack.c.l.b16 %v375
    %v1182 = vunpack.c.h.b16 %v375
    %v1183 = vunpack.c.l.b16 %v376
    %v1184 = vunpack.c.h.b16 %v376
    %v1185 = vunpack.c.l.b16 %v377
    %v1186 = vunpack.c.l.b16 %v378
    %v1187 = vunpack.c.h.b16 %v378
    %v1188 = vunpack.c.l.b16 %v379
    %v1189 = vunpack.c.h.b16 %v379
    %v1190 = vunpack.c.l.b16 %v380
    %v1191 = vunpack.c.l.b16 %v381
    %v1192 = vunpack.c.h.b16 %v381
    %v1193 = vunpack.c.l.b16 %v382
    %v1194 = vunpack.c.h.b16 %v382
    %v1195 = vunpack.c.l.b16 %v383
    %v1196 = vunpack.c.l.b16 %v384
    %v1197 = vunpack.c.h.b16 %v384
    %v1198 = vunpack.c.l.b16 %v385
    %v1199 = vunpack.c.h.b16 %v385
    %v1200 = vunpack.c.l.b16 %v386
    %v1201 = vunpack.c.l.b16 %v387
    %v1202 = vunpack.c.h.b16 %v387
    %v1203 = vunpack.c.l.b16 %v388
    %v1204 = vunpack.c.h.b16 %v388
    %v1205 = vunpack.c.l.b16 %v389
    %v1206 = vunpack.c.l.b16 %v390
    %v1207 = vunpack.c.h.b16 %v390
    %v1208 = vunpack.c.l.b16 %v391
    %v1209 = vunpack.c.h.b16 %v391
    %v1210 = vunpack.c.l.b16 %v392
    %v1211 = vunpack.c.l.b16 %v393
    %v1212 = vunpack.c.h.b16 %v393
    %v1213 = vunpack.c.l.b16 %v394
    %v1214 = vunpack.c.h.b16 %v394
    %v1215 = vunpack.c.l.b16 %v395
    %v1216 = vunpack.c.l.b16 %v396
    %v1217 = vunpack.c.h.b16 %v396
    %v1218 = vunpack.c.l.b16 %v397
    %v1219 = vunpack.c.h.b16 %v397
    %v1220 = vunpack.c.l.b16 %v398
    %v1221 = vunpack.c.l.b16 %v399
    %v1222 = vunpack.c.h.b16 %v399
    %v1223 = vunpack.c.l.b16 %v400
    %v1224 = vunpack.c.h.b16 %v400
    %v1225 = vunpack.c.l.b16 %v401
    %v1226 = vunpack.c.l.b16 %v402
    %v1227 = vunpack.c.h.b16 %v402
    %v1228 = vunpack.c.l.b16 %v403
    %v1229 = vunpack.c.h.b16 %v403
    %v1230 = vunpack.c.l.b16 %v404
    %v1231 = vunpack.c.l.b16 %v405
    %v1232 = vunpack.c.h.b16 %v405
    %v1233 = vunpack.c.l.b16 %v406
    %v1234 = vunpack.c.h.b16 %v406
    %v1235 = vunpack.c.l.b16 %v407
    %v1236 = vunpack.c.l.b16 %v408
    %v1237 = vunpack.c.h.b16 %v408
    %v1238 = vunpack.c.l.b16 %v409
    %v1239 = vunpack.c.h.b16 %v409
    %v1240 = vunpack.c.l.b16 %v410
    %v1241 = vunpack.c.l.b16 %v411
    %v1242 = vunpack.c.h.b16 %v411
    %v1243 = vunpack.c.l.b16 %v412
    %v1244 = vunpack.c.h.b16 %v412
    %v1245 = vunpack.c.l.b16 %v413
    %v1246 = vunpack.c.l.b16 %v414
    %v1247 = vunpack.c.h.b16 %v414
    %v1248 = vunpack.c.l.b16 %v415
    %v1249 = vunpack.c.h.b16 %v415
    %v1250 = vunpack.c.l.b16 %v416
    %v1251 = vunpack.c.l.b16 %v417
    %v1252 = vunpack.c.h.b16 %v417
    %v1253 = vunpack.c.l.b16 %v418
    %v1254 = vunpack.c.h.b16 %v418
    %v1255 = vunpack.c.l.b16 %v419
    %v1256 = vunpack.c.l.b16 %v420
    %v1257 = vunpack.c.h.b16 %v420
    %v1258 = vunpack.c.l.b16 %v421
    %v1259 = vunpack.c.h.b16 %v421
    %v1260 = vunpack.c.l.b16 %v422
    %v1261 = vunpack.c.l.b16 %v423
    %v1262 = vunpack.c.h.b16 %v423
    %v1263 = vunpack.c.l.b16 %v424
    %v1264 = vunpack.c.h.b16 %v424
    %v1265 = vunpack.c.l.b16 %v425
    %v1266 = vunpack.c.l.b16 %v426
    %v1267 = vunpack.c.h.b16 %v426
    %v1268 = vunpack.c.l.b16 %v427
    %v1269 = vunpack.c.h.b16 %v427
    %v1270 = vunpack.c.l.b16 %v428
    %v1271 = vunpack.c.l.b16 %v429
    %v1272 = vunpack.c.h.b16 %v429
    %v1273 = vunpack.c.l.b16 %v430
    %v1274 = vunpack.c.h.b16 %v430
    %v1275 = vunpack.c.l.b16 %v431
    %v1276 = vunpack.c.l.b16 %v432
    %v1277 = vunpack.c.h.b16 %v432
    %v1278 = vunpack.c.l.b16 %v433
    %v1279 = vunpack.c.h.b16 %v433
    %v1280 = vunpack.c.l.b16 %v434
    %v1281 = vpack.c.b16 %v796, %v791
    %v1282 = vpack.c.b16 %v797, %v792
    %v1283 = vpack.c.b16 %v798, %v793
    %v1284 = vpack.c.b16 %v799, %v794
    %v1285 = vpack.c.b16 %v800, %v795
    %v1286 = vpack.c.b16 %v806, %v801
    %v1287 = vpack.c.b16 %v807, %v802
    %v1288 = vpack.c.b16 %v808, %v803
    %v1289 = vpack.c.b16 %v809, %v804
    %v1290 = vpack.c.b16 %v810, %v805
    %v1291 = vpack.c.b16 %v816, %v811
    %v1292 = vpack.c.b16 %v817, %v812
    %v1293 = vpack.c.b16 %v818, %v813
    %v1294 = vpack.c.b16 %v819, %v814
    %v1295 = vpack.c.b16 %v820, %v815
    %v1296 = vpack.c.b16 %v826, %v821
    %v1297 = vpack.c.b16 %v827, %v822
    %v1298 = vpack.c.b16 %v828, %v823
    %v1299 = vpack.c.b16 %v829, %v824
    %v1300 = vpack.c.b16 %v830, %v825
    %v1301 = vpack.c.b16 %v836, %v831
    %v1302 = vpack.c.b16 %v837, %v832
    %v1303 = vpack.c.b16 %v838, %v833
    %v1304 = vpack.c.b16 %v839, %v834
    %v1305 = vpack.c.b16 %v840, %v835
    %v1306 = vpack.c.b16 %v846, %v841
    %v1307 = vpack.c.b16 %v847, %v842
    %v1308 = vpack.c.b16 %v848, %v843
    %v1309 = vpack.c.b16 %v849, %v844
    %v1310 = vpack.c.b16 %v850, %v845
    %v1311 = vpack.c.b16 %v856, %v851
    %v1312 = vpack.c.b16 %v857, %v852
    %v1313 = vpack.c.b16 %v858, %v853
    %v1314 = vpack.c.b16 %v859, %v854
    %v1315 = vpack.c.b16 %v860, %v855
    %v1316 = vpack.c.b16 %v866, %v861
    %v1317 = vpack.c.b16 %v867, %v862
    %v1318 = vpack.c.b16 %v868, %v863
    %v1319 = vpack.c.b16 %v869, %v864
    %v1320 = vpack.c.b16 %v870, %v865
    %v1321 = vpack.c.b16 %v876, %v871
    %v1322 = vpack.c.b16 %v877, %v872
    %v1323 = vpack.c.b16 %v878, %v873
    %v1324 = vpack.c.b16 %v879, %v874
    %v1325 = vpack.c.b16 %v880, %v875
    %v1326 = vpack.c.b16 %v886, %v881
    %v1327 = vpack.c.b16 %v887, %v882
    %v1328 = vpack.c.b16 %v888, %v883
    %v1329 = vpack.c.b16 %v889, %v884
    %v1330 = vpack.c.b16 %v890, %v885
    %v1331 = vpack.c.b16 %v896, %v891
    %v1332 = vpack.c.b16 %v897, %v892
    %v1333 = vpack.c.b16 %v898, %v893
    %v1334 = vpack.c.b16 %v899, %v894
    %v1335 = vpack.c.b16 %v900, %v895
    %v1336 = vpack.c.b16 %v906, %v901
    %v1337 = vpack.c.b16 %v907, %v902
    %v1338 = vpack.c.b16 %v908, %v903
    %v1339 = vpack.c.b16 %v909, %v904
    %v1340 = vpack.c.b16 %v910, %v905
    %v1341 = vpack.c.b16 %v916, %v911
    %v1342 = vpack.c.b16 %v917, %v912
    %v1343 = vpack.c.b16 %v918, %v913
    %v1344 = vpack.c.b16 %v919, %v914
    %v1345 = vpack.c.b16 %v920, %v915
    %v1346 = vpack.c.b16 %v926, %v921
    %v1347 = vpack.c.b16 %v927, %v922
    %v1348 = vpack.c.b16 %v928, %v923
    %v1349 = vpack.c.b16 %v929, %v924
    %v1350 = vpack.c.b16 %v930, %v925
    %v1351 = vpack.c.b16 %v936, %v931
    %v1352 = vpack.c.b16 %v937, %v932
    %v1353 = vpack.c.b16 %v938, %v933
    %v1354 = vpack.c.b16 %v939, %v934
    %v1355 = vpack.c.b16 %v940, %v935
    %v1356 = vpack.c.b16 %v946, %v941
    %v1357 = vpack.c.b16 %v947, %v942
    %v1358 = vpack.c.b16 %v948, %v943
    %v1359 = vpack.c.b16 %v949, %v944
    %v1360 = vpack.c.b16 %v950, %v945
    %v1361 = vpack.c.b16 %v956, %v951
    %v1362 = vpack.c.b16 %v957, %v952
    %v1363 = vpack.c.b16 %v958, %v953
    %v1364 = vpack.c.b16 %v959, %v954
    %v1365 = vpack.c.b16 %v960, %v955
    %v1366 = vpack.c.b16 %v966, %v961
    %v1367 = vpack.c.b16 %v967, %v962
    %v1368 = vpack.c.b16 %v968, %v963
    %v1369 = vpack.c.b16 %v969, %v964
    %v1370 = vpack.c.b16 %v970, %v965
    %v1371 = vpack.c.b16 %v976, %v971
    %v1372 = vpack.c.b16 %v977, %v972
    %v1373 = vpack.c.b16 %v978, %v973
    %v1374 = vpack.c.b16 %v979, %v974
    %v1375 = vpack.c.b16 %v980, %v975
    %v1376 = vpack.c.b16 %v986, %v981
    %v1377 = vpack.c.b16 %v987, %v982
    %v1378 = vpack.c.b16 %v988, %v983
    %v1379 = vpack.c.b16 %v989, %v984
    %v1380 = vpack.c.b16 %v990, %v985
    %v1381 = vpack.c.b16 %v996, %v991
    %v1382 = vpack.c.b16 %v997, %v992
    %v1383 = vpack.c.b16 %v998, %v993
    %v1384 = vpack.c.b16 %v999, %v994
    %v1385 = vpack.c.b16 %v1000, %v995
    %v1386 = vpack.c.b16 %v1006, %v1001
    %v1387 = vpack.c.b16 %v1007, %v1002
    %v1388 = vpack.c.b16 %v1008, %v1003
    %v1389 = vpack.c.b16 %v1009, %v1004
    %v1390 = vpack.c.b16 %v1010, %v1005
    %v1391 = vpack.c.b16 %v1016, %v1011
    %v1392 = vpack.c.b16 %v1017, %v1012
    %v1393 = vpack.c.b16 %v1018, %v1013
    %v1394 = vpack.c.b16 %v1019, %v1014
    %v1395 = vpack.c.b16 %v1020, %v1015
    %v1396 = vpack.c.b16 %v1026, %v1021
    %v1397 = vpack.c.b16 %v1027, %v1022
    %v1398 = vpack.c.b16 %v1028, %v1023
    %v1399 = vpack.c.b16 %v1029, %v1024
    %v1400 = vpack.c.b16 %v1030, %v1025
    %v1401 = vpack.c.b16 %v1036, %v1031
    %v1402 = vpack.c.b16 %v1037, %v1032
    %v1403 = vpack.c.b16 %v1038, %v1033
    %v1404 = vpack.c.b16 %v1039, %v1034
    %v1405 = vpack.c.b16 %v1040, %v1035
    %v1406 = vpack.c.b16 %v1046, %v1041
    %v1407 = vpack.c.b16 %v1047, %v1042
    %v1408 = vpack.c.b16 %v1048, %v1043
    %v1409 = vpack.c.b16 %v1049, %v1044
    %v1410 = vpack.c.b16 %v1050, %v1045
    %v1411 = vpack.c.b16 %v1056, %v1051
    %v1412 = vpack.c.b16 %v1057, %v1052
    %v1413 = vpack.c.b16 %v1058, %v1053
    %v1414 = vpack.c.b16 %v1059, %v1054
    %v1415 = vpack.c.b16 %v1060, %v1055
    %v1416 = vpack.c.b16 %v1066, %v1061
    %v1417 = vpack.c.b16 %v1067, %v1062
    %v1418 = vpack.c.b16 %v1068, %v1063
    %v1419 = vpack.c.b16 %v1069, %v1064
    %v1420 = vpack.c.b16 %v1070, %v1065
    %v1421 = vpack.c.b16 %v1076, %v1071
    %v1422 = vpack.c.b16 %v1077, %v1072
    %v1423 = vpack.c.b16 %v1078, %v1073
    %v1424 = vpack.c.b16 %v1079, %v1074
    %v1425 = vpack.c.b16 %v1080, %v1075
    %v1426 = vpack.c.b16 %v1086, %v1081
    %v1427 = vpack.c.b16 %v1087, %v1082
    %v1428 = vpack.c.b16 %v1088, %v1083
    %v1429 = vpack.c.b16 %v1089, %v1084
    %v1430 = vpack.c.b16 %v1090, %v1085
    %v1431 = vpack.c.b16 %v1096, %v1091
    %v1432 = vpack.c.b16 %v1097, %v1092
    %v1433 = vpack.c.b16 %v1098, %v1093
    %v1434 = vpack.c.b16 %v1099, %v1094
    %v1435 = vpack.c.b16 %v1100, %v1095
    %v1436 = vpack.c.b16 %v1106, %v1101
    %v1437 = vpack.c.b16 %v1107, %v1102
    %v1438 = vpack.c.b16 %v1108, %v1103
    %v1439 = vpack.c.b16 %v1109, %v1104
    %v1440 = vpack.c.b16 %v1110, %v1105
    %v1441 = vpack.c.b16 %v1116, %v1111
    %v1442 = vpack.c.b16 %v1117, %v1112
    %v1443 = vpack.c.b16 %v1118, %v1113
    %v1444 = vpack.c.b16 %v1119, %v1114
    %v1445 = vpack.c.b16 %v1120, %v1115
    %v1446 = vpack.c.b16 %v1126, %v1121
    %v1447 = vpack.c.b16 %v1127, %v1122
    %v1448 = vpack.c.b16 %v1128, %v1123
    %v1449 = vpack.c.b16 %v1129, %v1124
    %v1450 = vpack.c.b16 %v1130, %v1125
    %v1451 = vpack.c.b16 %v1136, %v1131
    %v1452 = vpack.c.b16 %v1137, %v1132
    %v1453 = vpack.c.b16 %v1138, %v1133
    %v1454 = vpack.c.b16 %v1139, %v1134
    %v1455 = vpack.c.b16 %v1140, %v1135
    %v1456 = vpack.c.b16 %v1146, %v1141
    %v1457 = vpack.c.b16 %v1147, %v1142
    %v1458 = vpack.c.b16 %v1148, %v1143
    %v1459 = vpack.c.b16 %v1149, %v1144
    %v1460 = vpack.c.b16 %v1150, %v1145
    %v1461 = vpack.c.b16 %v1156, %v1151
    %v1462 = vpack.c.b16 %v1157, %v1152
    %v1463 = vpack.c.b16 %v1158, %v1153
    %v1464 = vpack.c.b16 %v1159, %v1154
    %v1465 = vpack.c.b16 %v1160, %v1155
    %v1466 = vpack.c.b16 %v1166, %v1161
    %v1467 = vpack.c.b16 %v1167, %v1162
    %v1468 = vpack.c.b16 %v1168, %v1163
    %v1469 = vpack.c.b16 %v1169, %v1164
    %v1470 = vpack.c.b16 %v1170, %v1165
    %v1471 = vpack.c.b16 %v1176, %v1171
    %v1472 = vpack.c.b16 %v1177, %v1172
    %v1473 = vpack.c.b16 %v1178, %v1173
    %v1474 = vpack.c.b16 %v1179, %v1174
    %v1475 = vpack.c.b16 %v1180, %v1175
    %v1476 = vpack.c.b16 %v1186, %v1181
    %v1477 = vpack.c.b16 %v1187, %v1182
    %v1478 = vpack.c.b16 %v1188, %v1183
    %v1479 = vpack.c.b16 %v1189, %v1184
    %v1480 = vpack.c.b16 %v1190, %v1185
    %v1481 = vpack.c.b16 %v1196, %v1191
    %v1482 = vpack.c.b16 %v1197, %v1192
    %v1483 = vpack.c.b16 %v1198, %v1193
    %v1484 = vpack.c.b16 %v1199, %v1194
    %v1485 = vpack.c.b16 %v1200, %v1195
    %v1486 = vpack.c.b16 %v1206, %v1201
    %v1487 = vpack.c.b16 %v1207, %v1202
    %v1488 = vpack.c.b16 %v1208, %v1203
    %v1489 = vpack.c.b16 %v1209, %v1204
    %v1490 = vpack.c.b16 %v1210, %v1205
    %v1491 = vpack.c.b16 %v1216, %v1211
    %v1492 = vpack.c.b16 %v1217, %v1212
    %v1493 = vpack.c.b16 %v1218, %v1213
    %v1494 = vpack.c.b16 %v1219, %v1214
    %v1495 = vpack.c.b16 %v1220, %v1215
    %v1496 = vpack.c.b16 %v1226, %v1221
    %v1497 = vpack.c.b16 %v1227, %v1222
    %v1498 = vpack.c.b16 %v1228, %v1223
    %v1499 = vpack.c.b16 %v1229, %v1224
    %v1500 = vpack.c.b16 %v1230, %v1225
    %v1501 = vpack.c.b16 %v1236, %v1231
    %v1502 = vpack.c.b16 %v1237, %v1232
    %v1503 = vpack.c.b16 %v1238, %v1233
    %v1504 = vpack.c.b16 %v1239, %v1234
    %v1505 = vpack.c.b16 %v1240, %v1235
    %v1506 = vpack.c.b16 %v1246, %v1241
    %v1507 = vpack.c.b16 %v1247, %v1242
    %v1508 = vpack.c.b16 %v1248, %v1243
    %v1509 = vpack.c.b16 %v1249, %v1244
    %v1510 = vpack.c.b16 %v1250, %v1245
    %v1511 = vpack.c.b16 %v1256, %v1251
    %v1512 = vpack.c.b16 %v1257, %v1252
    %v1513 = vpack.c.b16 %v1258, %v1253
    %v1514 = vpack.c.b16 %v1259, %v1254
    %v1515 = vpack.c.b16 %v1260, %v1255
    %v1516 = vpack.c.b16 %v1266, %v1261
    %v1517 = vpack.c.b16 %v1267, %v1262
    %v1518 = vpack.c.b16 %v1268, %v1263
    %v1519 = vpack.c.b16 %v1269, %v1264
    %v1520 = vpack.c.b16 %v1270, %v1265
    %v1521 = vpack.c.b16 %v1276, %v1271
    %v1522 = vpack.c.b16 %v1277, %v1272
    %v1523 = vpack.c.b16 %v1278, %v1273
    %v1524 = vpack.c.b16 %v1279, %v1274
    %v1525 = vpack.c.b16 %v1280, %v1275
    %vm1771 = vcmask 130048
    %v1773 = vsel %vm1771, %v490, 0
    %1775 = vmatprep.subr.bf16.mxu0 %v1317
    %1776 = vmatpush1.bf16.msra.mxu0 %v1316
    %1777 = vmatprep.subr.bf16.mxu0 %v1312
    %1778 = vmatpush1.bf16.msra.mxu0 %v1311
    %1779 = vmatprep.subr.bf16.mxu0 %v1307
    %1780 = vmatpush1.bf16.msra.mxu0 %v1306
    %1781 = vmatprep.subr.bf16.mxu0 %v1302
    %1782 = vmatpush1.bf16.msra.mxu0 %v1301
    %1783 = vmatprep.subr.bf16.mxu0 %v1297
    %1784 = vmatpush1.bf16.msra.mxu0 %v1296
    %1785 = vmatprep.subr.bf16.mxu0 %v1292
    %1786 = vmatpush1.bf16.msra.mxu0 %v1291
    %1787 = vmatprep.subr.bf16.mxu0 %v1287
    %1788 = vmatpush1.bf16.msra.mxu0 %v1286
    %1789 = vmatprep.subr.bf16.mxu0 %v1282
    %1790 = vmatpush1.bf16.msra.mxu0 %v1281
    %1791 = vmatprep.subr.bf16.mxu0 %v1357
    %1792 = vmatpush2.bf16.msra.mxu0 %v1356
    %1793 = vmatprep.subr.bf16.mxu0 %v1352
    %1794 = vmatpush2.bf16.msra.mxu0 %v1351
    %1795 = vmatprep.subr.bf16.mxu0 %v1347
    %1796 = vmatpush2.bf16.msra.mxu0 %v1346
    %1797 = vmatprep.subr.bf16.mxu0 %v1342
    %1798 = vmatpush2.bf16.msra.mxu0 %v1341
    %1799 = vmatprep.subr.bf16.mxu0 %v1337
    %1800 = vmatpush2.bf16.msra.mxu0 %v1336
    %1801 = vmatprep.subr.bf16.mxu0 %v1332
    %1802 = vmatpush2.bf16.msra.mxu0 %v1331
    %1803 = vmatprep.subr.bf16.mxu0 %v1327
    %1804 = vmatpush2.bf16.msra.mxu0 %v1326
    %1805 = vmatprep.subr.bf16.mxu0 %v1322
    %1806 = vmatpush2.bf16.msra.mxu0 %v1321
    %1807 = vmatprep.mubr.bf16.mxu0 %v485
    %1808 = vmatmul.mubr.bf16.gmra.mxu0 %v484
    %v1809 = vpop.f32.mrf.mxu0
    %v1810 = vadd.f32 %v440, %v1809
    %v1811 = vpop.f32.mrf.mxu0
    %v1812 = vadd.f32 %v444, %v1811
    %v1813 = vpop.f32.mrf.mxu0
    %v1814 = vadd.f32 %v440, %v1813
    %v1815 = vpop.f32.mrf.mxu0
    %v1816 = vadd.f32 %v444, %v1815
    %1817 = vdwg.mxu0
    %1818 = vmatprep.subr.bf16.mxu0 %v1397
    %1819 = vmatpush1.bf16.msra.mxu0 %v1396
    %1820 = vmatprep.subr.bf16.mxu0 %v1392
    %1821 = vmatpush1.bf16.msra.mxu0 %v1391
    %1822 = vmatprep.subr.bf16.mxu0 %v1387
    %1823 = vmatpush1.bf16.msra.mxu0 %v1386
    %1824 = vmatprep.subr.bf16.mxu0 %v1382
    %1825 = vmatpush1.bf16.msra.mxu0 %v1381
    %1826 = vmatprep.subr.bf16.mxu0 %v1377
    %1827 = vmatpush1.bf16.msra.mxu0 %v1376
    %1828 = vmatprep.subr.bf16.mxu0 %v1372
    %1829 = vmatpush1.bf16.msra.mxu0 %v1371
    %1830 = vmatprep.subr.bf16.mxu0 %v1367
    %1831 = vmatpush1.bf16.msra.mxu0 %v1366
    %1832 = vmatprep.subr.bf16.mxu0 %v1362
    %1833 = vmatpush1.bf16.msra.mxu0 %v1361
    %1834 = vmatprep.subr.bf16.mxu0 %v1437
    %1835 = vmatpush2.bf16.msra.mxu0 %v1436
    %1836 = vmatprep.subr.bf16.mxu0 %v1432
    %1837 = vmatpush2.bf16.msra.mxu0 %v1431
    %1838 = vmatprep.subr.bf16.mxu0 %v1427
    %1839 = vmatpush2.bf16.msra.mxu0 %v1426
    %1840 = vmatprep.subr.bf16.mxu0 %v1422
    %1841 = vmatpush2.bf16.msra.mxu0 %v1421
    %1842 = vmatprep.subr.bf16.mxu0 %v1417
    %1843 = vmatpush2.bf16.msra.mxu0 %v1416
    %1844 = vmatprep.subr.bf16.mxu0 %v1412
    %1845 = vmatpush2.bf16.msra.mxu0 %v1411
    %1846 = vmatprep.subr.bf16.mxu0 %v1407
    %1847 = vmatpush2.bf16.msra.mxu0 %v1406
    %1848 = vmatprep.subr.bf16.mxu0 %v1402
    %1849 = vmatpush2.bf16.msra.mxu0 %v1401
    %1850 = vmatprep.mubr.bf16.mxu0 %v487
    %1851 = vmatmul.mubr.bf16.gmra.mxu0 %v486
    %v1852 = vpop.f32.mrf.mxu0
    %v1853 = vadd.f32 %v1810, %v1852
    %v1854 = vpop.f32.mrf.mxu0
    %v1855 = vadd.f32 %v1812, %v1854
    %v1856 = vpop.f32.mrf.mxu0
    %v1857 = vadd.f32 %v1814, %v1856
    %v1858 = vpop.f32.mrf.mxu0
    %v1859 = vadd.f32 %v1816, %v1858
    %1860 = vdwg.mxu0
    %1861 = vmatprep.subr.bf16.mxu0 %v1477
    %1862 = vmatpush1.bf16.msra.mxu0 %v1476
    %1863 = vmatprep.subr.bf16.mxu0 %v1472
    %1864 = vmatpush1.bf16.msra.mxu0 %v1471
    %1865 = vmatprep.subr.bf16.mxu0 %v1467
    %1866 = vmatpush1.bf16.msra.mxu0 %v1466
    %1867 = vmatprep.subr.bf16.mxu0 %v1462
    %1868 = vmatpush1.bf16.msra.mxu0 %v1461
    %1869 = vmatprep.subr.bf16.mxu0 %v1457
    %1870 = vmatpush1.bf16.msra.mxu0 %v1456
    %1871 = vmatprep.subr.bf16.mxu0 %v1452
    %1872 = vmatpush1.bf16.msra.mxu0 %v1451
    %1873 = vmatprep.subr.bf16.mxu0 %v1447
    %1874 = vmatpush1.bf16.msra.mxu0 %v1446
    %1875 = vmatprep.subr.bf16.mxu0 %v1442
    %1876 = vmatpush1.bf16.msra.mxu0 %v1441
    %1877 = vmatprep.subr.bf16.mxu0 %v1517
    %1878 = vmatpush2.bf16.msra.mxu0 %v1516
    %1879 = vmatprep.subr.bf16.mxu0 %v1512
    %1880 = vmatpush2.bf16.msra.mxu0 %v1511
    %1881 = vmatprep.subr.bf16.mxu0 %v1507
    %1882 = vmatpush2.bf16.msra.mxu0 %v1506
    %1883 = vmatprep.subr.bf16.mxu0 %v1502
    %1884 = vmatpush2.bf16.msra.mxu0 %v1501
    %1885 = vmatprep.subr.bf16.mxu0 %v1497
    %1886 = vmatpush2.bf16.msra.mxu0 %v1496
    %1887 = vmatprep.subr.bf16.mxu0 %v1492
    %1888 = vmatpush2.bf16.msra.mxu0 %v1491
    %1889 = vmatprep.subr.bf16.mxu0 %v1487
    %1890 = vmatpush2.bf16.msra.mxu0 %v1486
    %1891 = vmatprep.subr.bf16.mxu0 %v1482
    %1892 = vmatpush2.bf16.msra.mxu0 %v1481
    %1893 = vmatprep.mubr.bf16.mxu0 %v489
    %1894 = vmatmul.mubr.bf16.gmra.mxu0 %v488
    %v1895 = vpop.f32.mrf.mxu0
    %v1896 = vadd.f32 %v1853, %v1895
    %v1897 = vpop.f32.mrf.mxu0
    %v1898 = vadd.f32 %v1855, %v1897
    %v1899 = vpop.f32.mrf.mxu0
    %v1900 = vadd.f32 %v1857, %v1899
    %v1901 = vpop.f32.mrf.mxu0
    %v1902 = vadd.f32 %v1859, %v1901
    %1903 = vdwg.mxu0
    %1904 = vmatprep.subr.bf16.mxu0 0
    %1905 = vmatpush1.bf16.msra.mxu0 0
    %1906 = vmatprep.subr.bf16.mxu0 0
    %1907 = vmatpush1.bf16.msra.mxu0 0
    %1908 = vmatprep.subr.bf16.mxu0 0
    %1909 = vmatpush1.bf16.msra.mxu0 0
    %1910 = vmatprep.subr.bf16.mxu0 0
    %1911 = vmatpush1.bf16.msra.mxu0 0
    %1912 = vmatprep.subr.bf16.mxu0 0
    %1913 = vmatpush1.bf16.msra.mxu0 0
    %1914 = vmatprep.subr.bf16.mxu0 0
    %1915 = vmatpush1.bf16.msra.mxu0 0
    %1916 = vmatprep.subr.bf16.mxu0 0
    %1917 = vmatpush1.bf16.msra.mxu0 0
    %1918 = vmatprep.subr.bf16.mxu0 %v1522
    %1919 = vmatpush1.bf16.msra.mxu0 %v1521
    %1920 = vmatprep.subr.bf16.mxu0 0
    %1921 = vmatpush2.bf16.msra.mxu0 0
    %1922 = vmatprep.subr.bf16.mxu0 0
    %1923 = vmatpush2.bf16.msra.mxu0 0
    %1924 = vmatprep.subr.bf16.mxu0 0
    %1925 = vmatpush2.bf16.msra.mxu0 0
    %1926 = vmatprep.subr.bf16.mxu0 0
    %1927 = vmatpush2.bf16.msra.mxu0 0
    %1928 = vmatprep.subr.bf16.mxu0 0
    %1929 = vmatpush2.bf16.msra.mxu0 0
    %1930 = vmatprep.subr.bf16.mxu0 0
    %1931 = vmatpush2.bf16.msra.mxu0 0
    %1932 = vmatprep.subr.bf16.mxu0 0
    %1933 = vmatpush2.bf16.msra.mxu0 0
    %1934 = vmatprep.subr.bf16.mxu0 0
    %1935 = vmatpush2.bf16.msra.mxu0 0
    %1936 = vmatprep.mubr.bf16.mxu0 0
    %1937 = vmatmul.mubr.bf16.gmra.mxu0 %v1773
    %v1938 = vpop.f32.mrf.mxu0
    %v1939 = vadd.f32 %v1896, %v1938
    %v1940 = vpop.f32.mrf.mxu0
    %v1941 = vadd.f32 %v1898, %v1940
    %v1942 = vpop.f32.mrf.mxu0
    %v1943 = vadd.f32 %v1900, %v1942
    %v1944 = vpop.f32.mrf.mxu0
    %v1945 = vadd.f32 %v1902, %v1944
    %1946 = vdwg.mxu0
    %1947 = vmatprep.subr.bf16.mxu0 %v1319
    %1948 = vmatpush1.bf16.msra.mxu0 %v1318
    %1949 = vmatprep.subr.bf16.mxu0 %v1314
    %1950 = vmatpush1.bf16.msra.mxu0 %v1313
    %1951 = vmatprep.subr.bf16.mxu0 %v1309
    %1952 = vmatpush1.bf16.msra.mxu0 %v1308
    %1953 = vmatprep.subr.bf16.mxu0 %v1304
    %1954 = vmatpush1.bf16.msra.mxu0 %v1303
    %1955 = vmatprep.subr.bf16.mxu0 %v1299
    %1956 = vmatpush1.bf16.msra.mxu0 %v1298
    %1957 = vmatprep.subr.bf16.mxu0 %v1294
    %1958 = vmatpush1.bf16.msra.mxu0 %v1293
    %1959 = vmatprep.subr.bf16.mxu0 %v1289
    %1960 = vmatpush1.bf16.msra.mxu0 %v1288
    %1961 = vmatprep.subr.bf16.mxu0 %v1284
    %1962 = vmatpush1.bf16.msra.mxu0 %v1283
    %1963 = vmatprep.subr.bf16.mxu0 %v1359
    %1964 = vmatpush2.bf16.msra.mxu0 %v1358
    %1965 = vmatprep.subr.bf16.mxu0 %v1354
    %1966 = vmatpush2.bf16.msra.mxu0 %v1353
    %1967 = vmatprep.subr.bf16.mxu0 %v1349
    %1968 = vmatpush2.bf16.msra.mxu0 %v1348
    %1969 = vmatprep.subr.bf16.mxu0 %v1344
    %1970 = vmatpush2.bf16.msra.mxu0 %v1343
    %1971 = vmatprep.subr.bf16.mxu0 %v1339
    %1972 = vmatpush2.bf16.msra.mxu0 %v1338
    %1973 = vmatprep.subr.bf16.mxu0 %v1334
    %1974 = vmatpush2.bf16.msra.mxu0 %v1333
    %1975 = vmatprep.subr.bf16.mxu0 %v1329
    %1976 = vmatpush2.bf16.msra.mxu0 %v1328
    %1977 = vmatprep.subr.bf16.mxu0 %v1324
    %1978 = vmatpush2.bf16.msra.mxu0 %v1323
    %1979 = vmatprep.mubr.bf16.mxu0 %v485
    %1980 = vmatmul.mubr.bf16.gmra.mxu0 %v484
    %v1981 = vpop.f32.mrf.mxu0
    %v1982 = vadd.f32 %v448, %v1981
    %v1983 = vpop.f32.mrf.mxu0
    %v1984 = vadd.f32 %v452, %v1983
    %v1985 = vpop.f32.mrf.mxu0
    %v1986 = vadd.f32 %v448, %v1985
    %v1987 = vpop.f32.mrf.mxu0
    %v1988 = vadd.f32 %v452, %v1987
    %1989 = vdwg.mxu0
    %1990 = vmatprep.subr.bf16.mxu0 %v1399
    %1991 = vmatpush1.bf16.msra.mxu0 %v1398
    %1992 = vmatprep.subr.bf16.mxu0 %v1394
    %1993 = vmatpush1.bf16.msra.mxu0 %v1393
    %1994 = vmatprep.subr.bf16.mxu0 %v1389
    %1995 = vmatpush1.bf16.msra.mxu0 %v1388
    %1996 = vmatprep.subr.bf16.mxu0 %v1384
    %1997 = vmatpush1.bf16.msra.mxu0 %v1383
    %1998 = vmatprep.subr.bf16.mxu0 %v1379
    %1999 = vmatpush1.bf16.msra.mxu0 %v1378
    %2000 = vmatprep.subr.bf16.mxu0 %v1374
    %2001 = vmatpush1.bf16.msra.mxu0 %v1373
    %2002 = vmatprep.subr.bf16.mxu0 %v1369
    %2003 = vmatpush1.bf16.msra.mxu0 %v1368
    %2004 = vmatprep.subr.bf16.mxu0 %v1364
    %2005 = vmatpush1.bf16.msra.mxu0 %v1363
    %2006 = vmatprep.subr.bf16.mxu0 %v1439
    %2007 = vmatpush2.bf16.msra.mxu0 %v1438
    %2008 = vmatprep.subr.bf16.mxu0 %v1434
    %2009 = vmatpush2.bf16.msra.mxu0 %v1433
    %2010 = vmatprep.subr.bf16.mxu0 %v1429
    %2011 = vmatpush2.bf16.msra.mxu0 %v1428
    %2012 = vmatprep.subr.bf16.mxu0 %v1424
    %2013 = vmatpush2.bf16.msra.mxu0 %v1423
    %2014 = vmatprep.subr.bf16.mxu0 %v1419
    %2015 = vmatpush2.bf16.msra.mxu0 %v1418
    %2016 = vmatprep.subr.bf16.mxu0 %v1414
    %2017 = vmatpush2.bf16.msra.mxu0 %v1413
    %2018 = vmatprep.subr.bf16.mxu0 %v1409
    %2019 = vmatpush2.bf16.msra.mxu0 %v1408
    %2020 = vmatprep.subr.bf16.mxu0 %v1404
    %2021 = vmatpush2.bf16.msra.mxu0 %v1403
    %2022 = vmatprep.mubr.bf16.mxu0 %v487
    %2023 = vmatmul.mubr.bf16.gmra.mxu0 %v486
    %v2024 = vpop.f32.mrf.mxu0
    %v2025 = vadd.f32 %v1982, %v2024
    %v2026 = vpop.f32.mrf.mxu0
    %v2027 = vadd.f32 %v1984, %v2026
    %v2028 = vpop.f32.mrf.mxu0
    %v2029 = vadd.f32 %v1986, %v2028
    %v2030 = vpop.f32.mrf.mxu0
    %v2031 = vadd.f32 %v1988, %v2030
    %2032 = vdwg.mxu0
    %2033 = vmatprep.subr.bf16.mxu0 %v1479
    %2034 = vmatpush1.bf16.msra.mxu0 %v1478
    %2035 = vmatprep.subr.bf16.mxu0 %v1474
    %2036 = vmatpush1.bf16.msra.mxu0 %v1473
    %2037 = vmatprep.subr.bf16.mxu0 %v1469
    %2038 = vmatpush1.bf16.msra.mxu0 %v1468
    %2039 = vmatprep.subr.bf16.mxu0 %v1464
    %2040 = vmatpush1.bf16.msra.mxu0 %v1463
    %2041 = vmatprep.subr.bf16.mxu0 %v1459
    %2042 = vmatpush1.bf16.msra.mxu0 %v1458
    %2043 = vmatprep.subr.bf16.mxu0 %v1454
    %2044 = vmatpush1.bf16.msra.mxu0 %v1453
    %2045 = vmatprep.subr.bf16.mxu0 %v1449
    %2046 = vmatpush1.bf16.msra.mxu0 %v1448
    %2047 = vmatprep.subr.bf16.mxu0 %v1444
    %2048 = vmatpush1.bf16.msra.mxu0 %v1443
    %2049 = vmatprep.subr.bf16.mxu0 %v1519
    %2050 = vmatpush2.bf16.msra.mxu0 %v1518
    %2051 = vmatprep.subr.bf16.mxu0 %v1514
    %2052 = vmatpush2.bf16.msra.mxu0 %v1513
    %2053 = vmatprep.subr.bf16.mxu0 %v1509
    %2054 = vmatpush2.bf16.msra.mxu0 %v1508
    %2055 = vmatprep.subr.bf16.mxu0 %v1504
    %2056 = vmatpush2.bf16.msra.mxu0 %v1503
    %2057 = vmatprep.subr.bf16.mxu0 %v1499
    %2058 = vmatpush2.bf16.msra.mxu0 %v1498
    %2059 = vmatprep.subr.bf16.mxu0 %v1494
    %2060 = vmatpush2.bf16.msra.mxu0 %v1493
    %2061 = vmatprep.subr.bf16.mxu0 %v1489
    %2062 = vmatpush2.bf16.msra.mxu0 %v1488
    %2063 = vmatprep.subr.bf16.mxu0 %v1484
    %2064 = vmatpush2.bf16.msra.mxu0 %v1483
    %2065 = vmatprep.mubr.bf16.mxu0 %v489
    %2066 = vmatmul.mubr.bf16.gmra.mxu0 %v488
    %v2067 = vpop.f32.mrf.mxu0
    %v2068 = vadd.f32 %v2025, %v2067
    %v2069 = vpop.f32.mrf.mxu0
    %v2070 = vadd.f32 %v2027, %v2069
    %v2071 = vpop.f32.mrf.mxu0
    %v2072 = vadd.f32 %v2029, %v2071
    %v2073 = vpop.f32.mrf.mxu0
    %v2074 = vadd.f32 %v2031, %v2073
    %2075 = vdwg.mxu0
    %2076 = vmatprep.subr.bf16.mxu0 0
    %2077 = vmatpush1.bf16.msra.mxu0 0
    %2078 = vmatprep.subr.bf16.mxu0 0
    %2079 = vmatpush1.bf16.msra.mxu0 0
    %2080 = vmatprep.subr.bf16.mxu0 0
    %2081 = vmatpush1.bf16.msra.mxu0 0
    %2082 = vmatprep.subr.bf16.mxu0 0
    %2083 = vmatpush1.bf16.msra.mxu0 0
    %2084 = vmatprep.subr.bf16.mxu0 0
    %2085 = vmatpush1.bf16.msra.mxu0 0
    %2086 = vmatprep.subr.bf16.mxu0 0
    %2087 = vmatpush1.bf16.msra.mxu0 0
    %2088 = vmatprep.subr.bf16.mxu0 0
    %2089 = vmatpush1.bf16.msra.mxu0 0
    %2090 = vmatprep.subr.bf16.mxu0 %v1524
    %2091 = vmatpush1.bf16.msra.mxu0 %v1523
    %2092 = vmatprep.subr.bf16.mxu0 0
    %2093 = vmatpush2.bf16.msra.mxu0 0
    %2094 = vmatprep.subr.bf16.mxu0 0
    %2095 = vmatpush2.bf16.msra.mxu0 0
    %2096 = vmatprep.subr.bf16.mxu0 0
    %2097 = vmatpush2.bf16.msra.mxu0 0
    %2098 = vmatprep.subr.bf16.mxu0 0
    %2099 = vmatpush2.bf16.msra.mxu0 0
    %2100 = vmatprep.subr.bf16.mxu0 0
    %2101 = vmatpush2.bf16.msra.mxu0 0
    %2102 = vmatprep.subr.bf16.mxu0 0
    %2103 = vmatpush2.bf16.msra.mxu0 0
    %2104 = vmatprep.subr.bf16.mxu0 0
    %2105 = vmatpush2.bf16.msra.mxu0 0
    %2106 = vmatprep.subr.bf16.mxu0 0
    %2107 = vmatpush2.bf16.msra.mxu0 0
    %2108 = vmatprep.mubr.bf16.mxu0 0
    %2109 = vmatmul.mubr.bf16.gmra.mxu0 %v1773
    %v2110 = vpop.f32.mrf.mxu0
    %v2111 = vadd.f32 %v2068, %v2110
    %v2112 = vpop.f32.mrf.mxu0
    %v2113 = vadd.f32 %v2070, %v2112
    %v2114 = vpop.f32.mrf.mxu0
    %v2115 = vadd.f32 %v2072, %v2114
    %v2116 = vpop.f32.mrf.mxu0
    %v2117 = vadd.f32 %v2074, %v2116
    %2118 = vdwg.mxu0
    %2119 = vmatprep.subr.bf16.mxu0 0
    %2120 = vmatpush1.bf16.msra.mxu0 %v1320
    %2121 = vmatprep.subr.bf16.mxu0 0
    %2122 = vmatpush1.bf16.msra.mxu0 %v1315
    %2123 = vmatprep.subr.bf16.mxu0 0
    %2124 = vmatpush1.bf16.msra.mxu0 %v1310
    %2125 = vmatprep.subr.bf16.mxu0 0
    %2126 = vmatpush1.bf16.msra.mxu0 %v1305
    %2127 = vmatprep.subr.bf16.mxu0 0
    %2128 = vmatpush1.bf16.msra.mxu0 %v1300
    %2129 = vmatprep.subr.bf16.mxu0 0
    %2130 = vmatpush1.bf16.msra.mxu0 %v1295
    %2131 = vmatprep.subr.bf16.mxu0 0
    %2132 = vmatpush1.bf16.msra.mxu0 %v1290
    %2133 = vmatprep.subr.bf16.mxu0 0
    %2134 = vmatpush1.bf16.msra.mxu0 %v1285
    %2135 = vmatprep.subr.bf16.mxu0 0
    %2136 = vmatpush2.bf16.msra.mxu0 %v1360
    %2137 = vmatprep.subr.bf16.mxu0 0
    %2138 = vmatpush2.bf16.msra.mxu0 %v1355
    %2139 = vmatprep.subr.bf16.mxu0 0
    %2140 = vmatpush2.bf16.msra.mxu0 %v1350
    %2141 = vmatprep.subr.bf16.mxu0 0
    %2142 = vmatpush2.bf16.msra.mxu0 %v1345
    %2143 = vmatprep.subr.bf16.mxu0 0
    %2144 = vmatpush2.bf16.msra.mxu0 %v1340
    %2145 = vmatprep.subr.bf16.mxu0 0
    %2146 = vmatpush2.bf16.msra.mxu0 %v1335
    %2147 = vmatprep.subr.bf16.mxu0 0
    %2148 = vmatpush2.bf16.msra.mxu0 %v1330
    %2149 = vmatprep.subr.bf16.mxu0 0
    %2150 = vmatpush2.bf16.msra.mxu0 %v1325
    %2151 = vmatprep.mubr.bf16.mxu0 %v485
    %2152 = vmatmul.mubr.bf16.gmra.mxu0 %v484
    %v2153 = vpop.f32.mrf.mxu0
    %v2154 = vadd.f32 %v456, %v2153
    %v2155 = vpop.f32.mrf.mxu0
    %v2156 = vpop.f32.mrf.mxu0
    %v2157 = vadd.f32 %v456, %v2156
    %v2158 = vpop.f32.mrf.mxu0
    %2159 = vdwg.mxu0
    %2160 = vmatprep.subr.bf16.mxu0 0
    %2161 = vmatpush1.bf16.msra.mxu0 %v1400
    %2162 = vmatprep.subr.bf16.mxu0 0
    %2163 = vmatpush1.bf16.msra.mxu0 %v1395
    %2164 = vmatprep.subr.bf16.mxu0 0
    %2165 = vmatpush1.bf16.msra.mxu0 %v1390
    %2166 = vmatprep.subr.bf16.mxu0 0
    %2167 = vmatpush1.bf16.msra.mxu0 %v1385
    %2168 = vmatprep.subr.bf16.mxu0 0
    %2169 = vmatpush1.bf16.msra.mxu0 %v1380
    %2170 = vmatprep.subr.bf16.mxu0 0
    %2171 = vmatpush1.bf16.msra.mxu0 %v1375
    %2172 = vmatprep.subr.bf16.mxu0 0
    %2173 = vmatpush1.bf16.msra.mxu0 %v1370
    %2174 = vmatprep.subr.bf16.mxu0 0
    %2175 = vmatpush1.bf16.msra.mxu0 %v1365
    %2176 = vmatprep.subr.bf16.mxu0 0
    %2177 = vmatpush2.bf16.msra.mxu0 %v1440
    %2178 = vmatprep.subr.bf16.mxu0 0
    %2179 = vmatpush2.bf16.msra.mxu0 %v1435
    %2180 = vmatprep.subr.bf16.mxu0 0
    %2181 = vmatpush2.bf16.msra.mxu0 %v1430
    %2182 = vmatprep.subr.bf16.mxu0 0
    %2183 = vmatpush2.bf16.msra.mxu0 %v1425
    %2184 = vmatprep.subr.bf16.mxu0 0
    %2185 = vmatpush2.bf16.msra.mxu0 %v1420
    %2186 = vmatprep.subr.bf16.mxu0 0
    %2187 = vmatpush2.bf16.msra.mxu0 %v1415
    %2188 = vmatprep.subr.bf16.mxu0 0
    %2189 = vmatpush2.bf16.msra.mxu0 %v1410
    %2190 = vmatprep.subr.bf16.mxu0 0
    %2191 = vmatpush2.bf16.msra.mxu0 %v1405
    %2192 = vmatprep.mubr.bf16.mxu0 %v487
    %2193 = vmatmul.mubr.bf16.gmra.mxu0 %v486
    %v2194 = vpop.f32.mrf.mxu0
    %v2195 = vadd.f32 %v2154, %v2194
    %v2196 = vpop.f32.mrf.mxu0
    %v2197 = vpop.f32.mrf.mxu0
    %v2198 = vadd.f32 %v2157, %v2197
    %v2199 = vpop.f32.mrf.mxu0
    %2200 = vdwg.mxu0
    %2201 = vmatprep.subr.bf16.mxu0 0
    %2202 = vmatpush1.bf16.msra.mxu0 %v1480
    %2203 = vmatprep.subr.bf16.mxu0 0
    %2204 = vmatpush1.bf16.msra.mxu0 %v1475
    %2205 = vmatprep.subr.bf16.mxu0 0
    %2206 = vmatpush1.bf16.msra.mxu0 %v1470
    %2207 = vmatprep.subr.bf16.mxu0 0
    %2208 = vmatpush1.bf16.msra.mxu0 %v1465
    %2209 = vmatprep.subr.bf16.mxu0 0
    %2210 = vmatpush1.bf16.msra.mxu0 %v1460
    %2211 = vmatprep.subr.bf16.mxu0 0
    %2212 = vmatpush1.bf16.msra.mxu0 %v1455
    %2213 = vmatprep.subr.bf16.mxu0 0
    %2214 = vmatpush1.bf16.msra.mxu0 %v1450
    %2215 = vmatprep.subr.bf16.mxu0 0
    %2216 = vmatpush1.bf16.msra.mxu0 %v1445
    %2217 = vmatprep.subr.bf16.mxu0 0
    %2218 = vmatpush2.bf16.msra.mxu0 %v1520
    %2219 = vmatprep.subr.bf16.mxu0 0
    %2220 = vmatpush2.bf16.msra.mxu0 %v1515
    %2221 = vmatprep.subr.bf16.mxu0 0
    %2222 = vmatpush2.bf16.msra.mxu0 %v1510
    %2223 = vmatprep.subr.bf16.mxu0 0
    %2224 = vmatpush2.bf16.msra.mxu0 %v1505
    %2225 = vmatprep.subr.bf16.mxu0 0
    %2226 = vmatpush2.bf16.msra.mxu0 %v1500
    %2227 = vmatprep.subr.bf16.mxu0 0
    %2228 = vmatpush2.bf16.msra.mxu0 %v1495
    %2229 = vmatprep.subr.bf16.mxu0 0
    %2230 = vmatpush2.bf16.msra.mxu0 %v1490
    %2231 = vmatprep.subr.bf16.mxu0 0
    %2232 = vmatpush2.bf16.msra.mxu0 %v1485
    %2233 = vmatprep.mubr.bf16.mxu0 %v489
    %2234 = vmatmul.mubr.bf16.gmra.mxu0 %v488
    %v2235 = vpop.f32.mrf.mxu0
    %v2236 = vadd.f32 %v2195, %v2235
    %v2237 = vpop.f32.mrf.mxu0
    %v2238 = vpop.f32.mrf.mxu0
    %v2239 = vadd.f32 %v2198, %v2238
    %v2240 = vpop.f32.mrf.mxu0
    %2241 = vdwg.mxu0
    %2242 = vmatprep.subr.bf16.mxu0 0
    %2243 = vmatpush1.bf16.msra.mxu0 0
    %2244 = vmatprep.subr.bf16.mxu0 0
    %2245 = vmatpush1.bf16.msra.mxu0 0
    %2246 = vmatprep.subr.bf16.mxu0 0
    %2247 = vmatpush1.bf16.msra.mxu0 0
    %2248 = vmatprep.subr.bf16.mxu0 0
    %2249 = vmatpush1.bf16.msra.mxu0 0
    %2250 = vmatprep.subr.bf16.mxu0 0
    %2251 = vmatpush1.bf16.msra.mxu0 0
    %2252 = vmatprep.subr.bf16.mxu0 0
    %2253 = vmatpush1.bf16.msra.mxu0 0
    %2254 = vmatprep.subr.bf16.mxu0 0
    %2255 = vmatpush1.bf16.msra.mxu0 0
    %2256 = vmatprep.subr.bf16.mxu0 0
    %2257 = vmatpush1.bf16.msra.mxu0 %v1525
    %2258 = vmatprep.subr.bf16.mxu0 0
    %2259 = vmatpush2.bf16.msra.mxu0 0
    %2260 = vmatprep.subr.bf16.mxu0 0
    %2261 = vmatpush2.bf16.msra.mxu0 0
    %2262 = vmatprep.subr.bf16.mxu0 0
    %2263 = vmatpush2.bf16.msra.mxu0 0
    %2264 = vmatprep.subr.bf16.mxu0 0
    %2265 = vmatpush2.bf16.msra.mxu0 0
    %2266 = vmatprep.subr.bf16.mxu0 0
    %2267 = vmatpush2.bf16.msra.mxu0 0
    %2268 = vmatprep.subr.bf16.mxu0 0
    %2269 = vmatpush2.bf16.msra.mxu0 0
    %2270 = vmatprep.subr.bf16.mxu0 0
    %2271 = vmatpush2.bf16.msra.mxu0 0
    %2272 = vmatprep.subr.bf16.mxu0 0
    %2273 = vmatpush2.bf16.msra.mxu0 0
    %2274 = vmatprep.mubr.bf16.mxu0 0
    %2275 = vmatmul.mubr.bf16.gmra.mxu0 %v1773
    %v2276 = vpop.f32.mrf.mxu0
    %v2277 = vadd.f32 %v2236, %v2276
    %v2278 = vpop.f32.mrf.mxu0
    %v2279 = vpop.f32.mrf.mxu0
    %v2280 = vadd.f32 %v2239, %v2279
    %v2281 = vpop.f32.mrf.mxu0
    %2282 = vdwg.mxu0
    %v2283 = vmax.f32 %v1939, 0.0
    %v2284 = vmax.f32 %v1941, 0.0
    %v2285 = vmax.f32 %v2111, 0.0
    %v2286 = vmax.f32 %v2113, 0.0
    %v2287 = vmax.f32 %v2277, 0.0
    %v2288 = vmax.f32 %v1943, 0.0
    %v2289 = vmax.f32 %v1945, 0.0
    %v2290 = vmax.f32 %v2115, 0.0
    %v2291 = vmax.f32 %v2117, 0.0
    %v2292 = vmax.f32 %v2280, 0.0
    %v2293 = vpack.c.bf16 %v2288, %v2283
    %v2294 = vpack.c.bf16 %v2289, %v2284
    %v2295 = vpack.c.bf16 %v2290, %v2285
    %v2296 = vpack.c.bf16 %v2291, %v2286
    %v2297 = vpack.c.bf16 %v2292, %v2287
    %v2298 = vld [vmem:[#allocation8] sm:$0xff]
    %v2299 = vld [vmem:[#allocation8 + $0x8] sm:$0xf]
    %v2300 = vld [vmem:[#allocation8 + $0xc] sm:$0xff]
    %v2301 = vld [vmem:[#allocation8 + $0x14] sm:$0xf]
    %v2302 = vld [vmem:[#allocation8 + $0x18] sm:$0xff]
    %v2303 = vld [vmem:[#allocation8 + $0x20] sm:$0xf]
    %v2304 = vld [vmem:[#allocation8 + $0x24] sm:$0xff]
    %v2305 = vld [vmem:[#allocation8 + $0x2c] sm:$0xf]
    %v2306 = vld [vmem:[#allocation8 + $0x30] sm:$0xff]
    %v2307 = vld [vmem:[#allocation8 + $0x38] sm:$0xf]
    %v2308 = vld [vmem:[#allocation8 + $0x3c] sm:$0xff]
    %v2309 = vld [vmem:[#allocation8 + $0x44] sm:$0xf]
    %v2310 = vld [vmem:[#allocation8 + $0x48] sm:$0xff]
    %v2311 = vld [vmem:[#allocation8 + $0x50] sm:$0xf]
    %v2312 = vld [vmem:[#allocation8 + $0x54] sm:$0xff]
    %v2313 = vld [vmem:[#allocation8 + $0x5c] sm:$0xf]
    %v2314 = vld [vmem:[#allocation8 + $0x60] sm:$0xff]
    %v2315 = vld [vmem:[#allocation8 + $0x68] sm:$0xf]
    %v2316 = vld [vmem:[#allocation8 + $0x6c] sm:$0xff]
    %v2317 = vld [vmem:[#allocation8 + $0x74] sm:$0xf]
    %v2318 = vld [vmem:[#allocation8 + $0x78] sm:$0xff]
    %v2319 = vld [vmem:[#allocation8 + $0x80] sm:$0xf]
    %v2320 = vld [vmem:[#allocation8 + $0x84] sm:$0xff]
    %v2321 = vld [vmem:[#allocation8 + $0x8c] sm:$0xf]
    %v2322 = vld [vmem:[#allocation8 + $0x90] sm:$0xff]
    %v2323 = vld [vmem:[#allocation8 + $0x98] sm:$0xf]
    %v2324 = vld [vmem:[#allocation8 + $0x9c] sm:$0xff]
    %v2325 = vld [vmem:[#allocation8 + $0xa4] sm:$0xf]
    %v2326 = vld [vmem:[#allocation8 + $0xa8] sm:$0xff]
    %v2327 = vld [vmem:[#allocation8 + $0xb0] sm:$0xf]
    %v2328 = vld [vmem:[#allocation8 + $0xb4] sm:$0xff]
    %v2329 = vld [vmem:[#allocation8 + $0xbc] sm:$0xf]
    %v2330 = vld [vmem:[#allocation8 + $0xc0] sm:$0xff]
    %v2331 = vld [vmem:[#allocation8 + $0xc8] sm:$0xf]
    %v2332 = vld [vmem:[#allocation8 + $0xcc] sm:$0xff]
    %v2333 = vld [vmem:[#allocation8 + $0xd4] sm:$0xf]
    %v2334 = vld [vmem:[#allocation8 + $0xd8] sm:$0xff]
    %v2335 = vld [vmem:[#allocation8 + $0xe0] sm:$0xf]
    %v2336 = vld [vmem:[#allocation8 + $0xe4] sm:$0xff]
    %v2337 = vld [vmem:[#allocation8 + $0xec] sm:$0xf]
    %v2338 = vld [vmem:[#allocation8 + $0xf0] sm:$0xff]
    %v2339 = vld [vmem:[#allocation8 + $0xf8] sm:$0xf]
    %v2340 = vld [vmem:[#allocation8 + $0xfc] sm:$0xff]
    %v2341 = vld [vmem:[#allocation8 + $0x104] sm:$0xf]
    %v2342 = vld [vmem:[#allocation8 + $0x108] sm:$0xff]
    %v2343 = vld [vmem:[#allocation8 + $0x110] sm:$0xf]
    %v2344 = vld [vmem:[#allocation8 + $0x114] sm:$0xff]
    %v2345 = vld [vmem:[#allocation8 + $0x11c] sm:$0xf]
    %v2346 = vld [vmem:[#allocation8 + $0x120] sm:$0xff]
    %v2347 = vld [vmem:[#allocation8 + $0x128] sm:$0xf]
    %v2348 = vld [vmem:[#allocation8 + $0x12c] sm:$0xff]
    %v2349 = vld [vmem:[#allocation8 + $0x134] sm:$0xf]
    %v2350 = vld [vmem:[#allocation8 + $0x138] sm:$0xff]
    %v2351 = vld [vmem:[#allocation8 + $0x140] sm:$0xf]
    %v2352 = vld [vmem:[#allocation8 + $0x144] sm:$0xff]
    %v2353 = vld [vmem:[#allocation8 + $0x14c] sm:$0xf]
    %v2354 = vld [vmem:[#allocation8 + $0x150] sm:$0xff]
    %v2355 = vld [vmem:[#allocation8 + $0x158] sm:$0xf]
    %v2356 = vld [vmem:[#allocation8 + $0x15c] sm:$0xff]
    %v2357 = vld [vmem:[#allocation8 + $0x164] sm:$0xf]
    %v2358 = vld [vmem:[#allocation8 + $0x168] sm:$0xff]
    %v2359 = vld [vmem:[#allocation8 + $0x170] sm:$0xf]
    %v2360 = vld [vmem:[#allocation8 + $0x174] sm:$0xff]
    %v2361 = vld [vmem:[#allocation8 + $0x17c] sm:$0xf]
    %v2362 = vld [vmem:[#allocation8 + $0x180] sm:$0xff]
    %v2363 = vld [vmem:[#allocation8 + $0x188] sm:$0xf]
    %v2364 = vld [vmem:[#allocation8 + $0x18c] sm:$0xff]
    %v2365 = vld [vmem:[#allocation8 + $0x194] sm:$0xf]
    %v2366 = vld [vmem:[#allocation8 + $0x198] sm:$0xff]
    %v2367 = vld [vmem:[#allocation8 + $0x1a0] sm:$0xf]
    %v2368 = vld [vmem:[#allocation8 + $0x1a4] sm:$0xff]
    %v2369 = vld [vmem:[#allocation8 + $0x1ac] sm:$0xf]
    %v2370 = vld [vmem:[#allocation8 + $0x1b0] sm:$0xff]
    %v2371 = vld [vmem:[#allocation8 + $0x1b8] sm:$0xf]
    %v2372 = vld [vmem:[#allocation8 + $0x1bc] sm:$0xff]
    %v2373 = vld [vmem:[#allocation8 + $0x1c4] sm:$0xf]
    %v2374 = vld [vmem:[#allocation8 + $0x1c8] sm:$0xff]
    %v2375 = vld [vmem:[#allocation8 + $0x1d0] sm:$0xf]
    %v2376 = vld [vmem:[#allocation8 + $0x1d4] sm:$0xff]
    %v2377 = vld [vmem:[#allocation8 + $0x1dc] sm:$0xf]
    %v2378 = vld [vmem:[#allocation8 + $0x1e0] sm:$0xff]
    %v2379 = vld [vmem:[#allocation8 + $0x1e8] sm:$0xf]
    %v2380 = vld [vmem:[#allocation8 + $0x1ec] sm:$0xff]
    %v2381 = vld [vmem:[#allocation8 + $0x1f4] sm:$0xf]
    %v2382 = vld [vmem:[#allocation8 + $0x1f8] sm:$0xff]
    %v2383 = vld [vmem:[#allocation8 + $0x200] sm:$0xf]
    %v2384 = vld [vmem:[#allocation8 + $0x204] sm:$0xff]
    %v2385 = vld [vmem:[#allocation8 + $0x20c] sm:$0xf]
    %v2386 = vld [vmem:[#allocation8 + $0x210] sm:$0xff]
    %v2387 = vld [vmem:[#allocation8 + $0x218] sm:$0xf]
    %v2388 = vld [vmem:[#allocation8 + $0x21c] sm:$0xff]
    %v2389 = vld [vmem:[#allocation8 + $0x224] sm:$0xf]
    %v2390 = vld [vmem:[#allocation8 + $0x228] sm:$0xff]
    %v2391 = vld [vmem:[#allocation8 + $0x230] sm:$0xf]
    %v2392 = vld [vmem:[#allocation8 + $0x234] sm:$0xff]
    %v2393 = vld [vmem:[#allocation8 + $0x23c] sm:$0xf]
    %v2394 = vld [vmem:[#allocation8 + $0x240] sm:$0xff]
    %v2395 = vld [vmem:[#allocation8 + $0x248] sm:$0xf]
    %v2396 = vld [vmem:[#allocation8 + $0x24c] sm:$0xff]
    %v2397 = vld [vmem:[#allocation8 + $0x254] sm:$0xf]
    %v2398 = vld [vmem:[#allocation8 + $0x258] sm:$0xff]
    %v2399 = vld [vmem:[#allocation8 + $0x260] sm:$0xf]
    %v2400 = vld [vmem:[#allocation8 + $0x264] sm:$0xff]
    %v2401 = vld [vmem:[#allocation8 + $0x26c] sm:$0xf]
    %v2402 = vld [vmem:[#allocation8 + $0x270] sm:$0xff]
    %v2403 = vld [vmem:[#allocation8 + $0x278] sm:$0xf]
    %v2404 = vld [vmem:[#allocation8 + $0x27c] sm:$0xff]
    %v2405 = vld [vmem:[#allocation8 + $0x284] sm:$0xf]
    %v2406 = vld [vmem:[#allocation8 + $0x288] sm:$0xff]
    %v2407 = vld [vmem:[#allocation8 + $0x290] sm:$0xf]
    %v2408 = vld [vmem:[#allocation8 + $0x294] sm:$0xff]
    %v2409 = vld [vmem:[#allocation8 + $0x29c] sm:$0xf]
    %v2410 = vld [vmem:[#allocation8 + $0x2a0] sm:$0xff]
    %v2411 = vld [vmem:[#allocation8 + $0x2a8] sm:$0xf]
    %v2412 = vld [vmem:[#allocation8 + $0x2ac] sm:$0xff]
    %v2413 = vld [vmem:[#allocation8 + $0x2b4] sm:$0xf]
    %v2414 = vld [vmem:[#allocation8 + $0x2b8] sm:$0xff]
    %v2415 = vld [vmem:[#allocation8 + $0x2c0] sm:$0xf]
    %v2416 = vld [vmem:[#allocation8 + $0x2c4] sm:$0xff]
    %v2417 = vld [vmem:[#allocation8 + $0x2cc] sm:$0xf]
    %v2418 = vld [vmem:[#allocation8 + $0x2d0] sm:$0xff]
    %v2419 = vld [vmem:[#allocation8 + $0x2d8] sm:$0xf]
    %v2420 = vld [vmem:[#allocation8 + $0x2dc] sm:$0xff]
    %v2421 = vld [vmem:[#allocation8 + $0x2e4] sm:$0xf]
    %v2422 = vld [vmem:[#allocation8 + $0x2e8] sm:$0xff]
    %v2423 = vld [vmem:[#allocation8 + $0x2f0] sm:$0xf]
    %v2424 = vld [vmem:[#allocation8 + $0x2f4] sm:$0xff]
    %v2425 = vld [vmem:[#allocation8 + $0x2fc] sm:$0xf]
    %v2426 = vld [vmem:[#allocation8 + $0x300] sm:$0xff]
    %v2427 = vld [vmem:[#allocation8 + $0x308] sm:$0xf]
    %v2428 = vld [vmem:[#allocation8 + $0x30c] sm:$0xff]
    %v2429 = vld [vmem:[#allocation8 + $0x314] sm:$0xf]
    %v2430 = vld [vmem:[#allocation8 + $0x318] sm:$0xff]
    %v2431 = vld [vmem:[#allocation8 + $0x320] sm:$0xf]
    %v2432 = vld [vmem:[#allocation8 + $0x324] sm:$0xff]
    %v2433 = vld [vmem:[#allocation8 + $0x32c] sm:$0xf]
    %v2434 = vld [vmem:[#allocation8 + $0x330] sm:$0xff]
    %v2435 = vld [vmem:[#allocation8 + $0x338] sm:$0xf]
    %v2436 = vld [vmem:[#allocation8 + $0x33c] sm:$0xff]
    %v2437 = vld [vmem:[#allocation8 + $0x344] sm:$0xf]
    %v2438 = vld [vmem:[#allocation8 + $0x348] sm:$0xff]
    %v2439 = vld [vmem:[#allocation8 + $0x350] sm:$0xf]
    %v2440 = vld [vmem:[#allocation8 + $0x354] sm:$0xff]
    %v2441 = vld [vmem:[#allocation8 + $0x35c] sm:$0xf]
    %v2442 = vld [vmem:[#allocation8 + $0x360] sm:$0xff]
    %v2443 = vld [vmem:[#allocation8 + $0x368] sm:$0xf]
    %v2444 = vld [vmem:[#allocation8 + $0x36c] sm:$0xff]
    %v2445 = vld [vmem:[#allocation8 + $0x374] sm:$0xf]
    %v2446 = vld [vmem:[#allocation8 + $0x378] sm:$0xff]
    %v2447 = vld [vmem:[#allocation8 + $0x380] sm:$0xf]
    %v2448 = vld [vmem:[#allocation8 + $0x384] sm:$0xff]
    %v2449 = vld [vmem:[#allocation8 + $0x38c] sm:$0xf]
    %v2450 = vld [vmem:[#allocation8 + $0x390] sm:$0xff]
    %v2451 = vld [vmem:[#allocation8 + $0x398] sm:$0xf]
    %v2452 = vld [vmem:[#allocation8 + $0x39c] sm:$0xff]
    %v2453 = vld [vmem:[#allocation8 + $0x3a4] sm:$0xf]
    %v2454 = vld [vmem:[#allocation8 + $0x3a8] sm:$0xff]
    %v2455 = vld [vmem:[#allocation8 + $0x3b0] sm:$0xf]
    %v2456 = vld [vmem:[#allocation8 + $0x3b4] sm:$0xff]
    %v2457 = vld [vmem:[#allocation8 + $0x3bc] sm:$0xf]
    %v2458 = vld [vmem:[%s4] sm:$0x7]
    %v2460 = vlaneseq
    %v2461 = vshrl.u32 %v2460, 7
    %v2462 = vsub.s32 0, %v2461
    %v2463 = vrot.slane %v2458, %v2462
    %v2464 = vlaneseq
    %v2465 = vshrl.u32 %v2464, 7
    %v2466 = vsub.s32 1, %v2465
    %v2467 = vrot.slane %v2458, %v2466
    %v2468 = vlaneseq
    %v2469 = vshrl.u32 %v2468, 7
    %v2470 = vsub.s32 2, %v2469
    %v2471 = vrot.slane %v2458, %v2470
    %v2635 = vunpack.c.l.b16 %v2298
    %v2636 = vunpack.c.h.b16 %v2298
    %v2637 = vunpack.c.l.b16 %v2299
    %v2638 = vunpack.c.l.b16 %v2300
    %v2639 = vunpack.c.h.b16 %v2300
    %v2640 = vunpack.c.l.b16 %v2301
    %v2641 = vunpack.c.l.b16 %v2302
    %v2642 = vunpack.c.h.b16 %v2302
    %v2643 = vunpack.c.l.b16 %v2303
    %v2644 = vunpack.c.l.b16 %v2304
    %v2645 = vunpack.c.h.b16 %v2304
    %v2646 = vunpack.c.l.b16 %v2305
    %v2647 = vunpack.c.l.b16 %v2306
    %v2648 = vunpack.c.h.b16 %v2306
    %v2649 = vunpack.c.l.b16 %v2307
    %v2650 = vunpack.c.l.b16 %v2308
    %v2651 = vunpack.c.h.b16 %v2308
    %v2652 = vunpack.c.l.b16 %v2309
    %v2653 = vunpack.c.l.b16 %v2310
    %v2654 = vunpack.c.h.b16 %v2310
    %v2655 = vunpack.c.l.b16 %v2311
    %v2656 = vunpack.c.l.b16 %v2312
    %v2657 = vunpack.c.h.b16 %v2312
    %v2658 = vunpack.c.l.b16 %v2313
    %v2659 = vunpack.c.l.b16 %v2314
    %v2660 = vunpack.c.h.b16 %v2314
    %v2661 = vunpack.c.l.b16 %v2315
    %v2662 = vunpack.c.l.b16 %v2316
    %v2663 = vunpack.c.h.b16 %v2316
    %v2664 = vunpack.c.l.b16 %v2317
    %v2665 = vunpack.c.l.b16 %v2318
    %v2666 = vunpack.c.h.b16 %v2318
    %v2667 = vunpack.c.l.b16 %v2319
    %v2668 = vunpack.c.l.b16 %v2320
    %v2669 = vunpack.c.h.b16 %v2320
    %v2670 = vunpack.c.l.b16 %v2321
    %v2671 = vunpack.c.l.b16 %v2322
    %v2672 = vunpack.c.h.b16 %v2322
    %v2673 = vunpack.c.l.b16 %v2323
    %v2674 = vunpack.c.l.b16 %v2324
    %v2675 = vunpack.c.h.b16 %v2324
    %v2676 = vunpack.c.l.b16 %v2325
    %v2677 = vunpack.c.l.b16 %v2326
    %v2678 = vunpack.c.h.b16 %v2326
    %v2679 = vunpack.c.l.b16 %v2327
    %v2680 = vunpack.c.l.b16 %v2328
    %v2681 = vunpack.c.h.b16 %v2328
    %v2682 = vunpack.c.l.b16 %v2329
    %v2683 = vunpack.c.l.b16 %v2330
    %v2684 = vunpack.c.h.b16 %v2330
    %v2685 = vunpack.c.l.b16 %v2331
    %v2686 = vunpack.c.l.b16 %v2332
    %v2687 = vunpack.c.h.b16 %v2332
    %v2688 = vunpack.c.l.b16 %v2333
    %v2689 = vunpack.c.l.b16 %v2334
    %v2690 = vunpack.c.h.b16 %v2334
    %v2691 = vunpack.c.l.b16 %v2335
    %v2692 = vunpack.c.l.b16 %v2336
    %v2693 = vunpack.c.h.b16 %v2336
    %v2694 = vunpack.c.l.b16 %v2337
    %v2695 = vunpack.c.l.b16 %v2338
    %v2696 = vunpack.c.h.b16 %v2338
    %v2697 = vunpack.c.l.b16 %v2339
    %v2698 = vunpack.c.l.b16 %v2340
    %v2699 = vunpack.c.h.b16 %v2340
    %v2700 = vunpack.c.l.b16 %v2341
    %v2701 = vunpack.c.l.b16 %v2342
    %v2702 = vunpack.c.h.b16 %v2342
    %v2703 = vunpack.c.l.b16 %v2343
    %v2704 = vunpack.c.l.b16 %v2344
    %v2705 = vunpack.c.h.b16 %v2344
    %v2706 = vunpack.c.l.b16 %v2345
    %v2707 = vunpack.c.l.b16 %v2346
    %v2708 = vunpack.c.h.b16 %v2346
    %v2709 = vunpack.c.l.b16 %v2347
    %v2710 = vunpack.c.l.b16 %v2348
    %v2711 = vunpack.c.h.b16 %v2348
    %v2712 = vunpack.c.l.b16 %v2349
    %v2713 = vunpack.c.l.b16 %v2350
    %v2714 = vunpack.c.h.b16 %v2350
    %v2715 = vunpack.c.l.b16 %v2351
    %v2716 = vunpack.c.l.b16 %v2352
    %v2717 = vunpack.c.h.b16 %v2352
    %v2718 = vunpack.c.l.b16 %v2353
    %v2719 = vunpack.c.l.b16 %v2354
    %v2720 = vunpack.c.h.b16 %v2354
    %v2721 = vunpack.c.l.b16 %v2355
    %v2722 = vunpack.c.l.b16 %v2356
    %v2723 = vunpack.c.h.b16 %v2356
    %v2724 = vunpack.c.l.b16 %v2357
    %v2725 = vunpack.c.l.b16 %v2358
    %v2726 = vunpack.c.h.b16 %v2358
    %v2727 = vunpack.c.l.b16 %v2359
    %v2728 = vunpack.c.l.b16 %v2360
    %v2729 = vunpack.c.h.b16 %v2360
    %v2730 = vunpack.c.l.b16 %v2361
    %v2731 = vunpack.c.l.b16 %v2362
    %v2732 = vunpack.c.h.b16 %v2362
    %v2733 = vunpack.c.l.b16 %v2363
    %v2734 = vunpack.c.l.b16 %v2364
    %v2735 = vunpack.c.h.b16 %v2364
    %v2736 = vunpack.c.l.b16 %v2365
    %v2737 = vunpack.c.l.b16 %v2366
    %v2738 = vunpack.c.h.b16 %v2366
    %v2739 = vunpack.c.l.b16 %v2367
    %v2740 = vunpack.c.l.b16 %v2368
    %v2741 = vunpack.c.h.b16 %v2368
    %v2742 = vunpack.c.l.b16 %v2369
    %v2743 = vunpack.c.l.b16 %v2370
    %v2744 = vunpack.c.h.b16 %v2370
    %v2745 = vunpack.c.l.b16 %v2371
    %v2746 = vunpack.c.l.b16 %v2372
    %v2747 = vunpack.c.h.b16 %v2372
    %v2748 = vunpack.c.l.b16 %v2373
    %v2749 = vunpack.c.l.b16 %v2374
    %v2750 = vunpack.c.h.b16 %v2374
    %v2751 = vunpack.c.l.b16 %v2375
    %v2752 = vunpack.c.l.b16 %v2376
    %v2753 = vunpack.c.h.b16 %v2376
    %v2754 = vunpack.c.l.b16 %v2377
    %v2755 = vunpack.c.l.b16 %v2378
    %v2756 = vunpack.c.h.b16 %v2378
    %v2757 = vunpack.c.l.b16 %v2379
    %v2758 = vunpack.c.l.b16 %v2380
    %v2759 = vunpack.c.h.b16 %v2380
    %v2760 = vunpack.c.l.b16 %v2381
    %v2761 = vunpack.c.l.b16 %v2382
    %v2762 = vunpack.c.h.b16 %v2382
    %v2763 = vunpack.c.l.b16 %v2383
    %v2764 = vunpack.c.l.b16 %v2384
    %v2765 = vunpack.c.h.b16 %v2384
    %v2766 = vunpack.c.l.b16 %v2385
    %v2767 = vunpack.c.l.b16 %v2386
    %v2768 = vunpack.c.h.b16 %v2386
    %v2769 = vunpack.c.l.b16 %v2387
    %v2770 = vunpack.c.l.b16 %v2388
    %v2771 = vunpack.c.h.b16 %v2388
    %v2772 = vunpack.c.l.b16 %v2389
    %v2773 = vunpack.c.l.b16 %v2390
    %v2774 = vunpack.c.h.b16 %v2390
    %v2775 = vunpack.c.l.b16 %v2391
    %v2776 = vunpack.c.l.b16 %v2392
    %v2777 = vunpack.c.h.b16 %v2392
    %v2778 = vunpack.c.l.b16 %v2393
    %v2779 = vunpack.c.l.b16 %v2394
    %v2780 = vunpack.c.h.b16 %v2394
    %v2781 = vunpack.c.l.b16 %v2395
    %v2782 = vunpack.c.l.b16 %v2396
    %v2783 = vunpack.c.h.b16 %v2396
    %v2784 = vunpack.c.l.b16 %v2397
    %v2785 = vunpack.c.l.b16 %v2398
    %v2786 = vunpack.c.h.b16 %v2398
    %v2787 = vunpack.c.l.b16 %v2399
    %v2788 = vunpack.c.l.b16 %v2400
    %v2789 = vunpack.c.h.b16 %v2400
    %v2790 = vunpack.c.l.b16 %v2401
    %v2791 = vunpack.c.l.b16 %v2402
    %v2792 = vunpack.c.h.b16 %v2402
    %v2793 = vunpack.c.l.b16 %v2403
    %v2794 = vunpack.c.l.b16 %v2404
    %v2795 = vunpack.c.h.b16 %v2404
    %v2796 = vunpack.c.l.b16 %v2405
    %v2797 = vunpack.c.l.b16 %v2406
    %v2798 = vunpack.c.h.b16 %v2406
    %v2799 = vunpack.c.l.b16 %v2407
    %v2800 = vunpack.c.l.b16 %v2408
    %v2801 = vunpack.c.h.b16 %v2408
    %v2802 = vunpack.c.l.b16 %v2409
    %v2803 = vunpack.c.l.b16 %v2410
    %v2804 = vunpack.c.h.b16 %v2410
    %v2805 = vunpack.c.l.b16 %v2411
    %v2806 = vunpack.c.l.b16 %v2412
    %v2807 = vunpack.c.h.b16 %v2412
    %v2808 = vunpack.c.l.b16 %v2413
    %v2809 = vunpack.c.l.b16 %v2414
    %v2810 = vunpack.c.h.b16 %v2414
    %v2811 = vunpack.c.l.b16 %v2415
    %v2812 = vunpack.c.l.b16 %v2416
    %v2813 = vunpack.c.h.b16 %v2416
    %v2814 = vunpack.c.l.b16 %v2417
    %v2815 = vunpack.c.l.b16 %v2418
    %v2816 = vunpack.c.h.b16 %v2418
    %v2817 = vunpack.c.l.b16 %v2419
    %v2818 = vunpack.c.l.b16 %v2420
    %v2819 = vunpack.c.h.b16 %v2420
    %v2820 = vunpack.c.l.b16 %v2421
    %v2821 = vunpack.c.l.b16 %v2422
    %v2822 = vunpack.c.h.b16 %v2422
    %v2823 = vunpack.c.l.b16 %v2423
    %v2824 = vunpack.c.l.b16 %v2424
    %v2825 = vunpack.c.h.b16 %v2424
    %v2826 = vunpack.c.l.b16 %v2425
    %v2827 = vunpack.c.l.b16 %v2426
    %v2828 = vunpack.c.h.b16 %v2426
    %v2829 = vunpack.c.l.b16 %v2427
    %v2830 = vunpack.c.l.b16 %v2428
    %v2831 = vunpack.c.h.b16 %v2428
    %v2832 = vunpack.c.l.b16 %v2429
    %v2833 = vunpack.c.l.b16 %v2430
    %v2834 = vunpack.c.h.b16 %v2430
    %v2835 = vunpack.c.l.b16 %v2431
    %v2836 = vunpack.c.l.b16 %v2432
    %v2837 = vunpack.c.h.b16 %v2432
    %v2838 = vunpack.c.l.b16 %v2433
    %v2839 = vunpack.c.l.b16 %v2434
    %v2840 = vunpack.c.h.b16 %v2434
    %v2841 = vunpack.c.l.b16 %v2435
    %v2842 = vunpack.c.l.b16 %v2436
    %v2843 = vunpack.c.h.b16 %v2436
    %v2844 = vunpack.c.l.b16 %v2437
    %v2845 = vunpack.c.l.b16 %v2438
    %v2846 = vunpack.c.h.b16 %v2438
    %v2847 = vunpack.c.l.b16 %v2439
    %v2848 = vunpack.c.l.b16 %v2440
    %v2849 = vunpack.c.h.b16 %v2440
    %v2850 = vunpack.c.l.b16 %v2441
    %v2851 = vunpack.c.l.b16 %v2442
    %v2852 = vunpack.c.h.b16 %v2442
    %v2853 = vunpack.c.l.b16 %v2443
    %v2854 = vunpack.c.l.b16 %v2444
    %v2855 = vunpack.c.h.b16 %v2444
    %v2856 = vunpack.c.l.b16 %v2445
    %v2857 = vunpack.c.l.b16 %v2446
    %v2858 = vunpack.c.h.b16 %v2446
    %v2859 = vunpack.c.l.b16 %v2447
    %v2860 = vunpack.c.l.b16 %v2448
    %v2861 = vunpack.c.h.b16 %v2448
    %v2862 = vunpack.c.l.b16 %v2449
    %v2863 = vunpack.c.l.b16 %v2450
    %v2864 = vunpack.c.h.b16 %v2450
    %v2865 = vunpack.c.l.b16 %v2451
    %v2866 = vunpack.c.l.b16 %v2452
    %v2867 = vunpack.c.h.b16 %v2452
    %v2868 = vunpack.c.l.b16 %v2453
    %v2869 = vunpack.c.l.b16 %v2454
    %v2870 = vunpack.c.h.b16 %v2454
    %v2871 = vunpack.c.l.b16 %v2455
    %v2872 = vunpack.c.l.b16 %v2456
    %v2873 = vunpack.c.h.b16 %v2456
    %v2874 = vunpack.c.l.b16 %v2457
    %v2875 = vpack.c.b16 %v2638, %v2635
    %v2876 = vpack.c.b16 %v2639, %v2636
    %v2877 = vpack.c.b16 %v2640, %v2637
    %v2878 = vpack.c.b16 %v2644, %v2641
    %v2879 = vpack.c.b16 %v2645, %v2642
    %v2880 = vpack.c.b16 %v2646, %v2643
    %v2881 = vpack.c.b16 %v2650, %v2647
    %v2882 = vpack.c.b16 %v2651, %v2648
    %v2883 = vpack.c.b16 %v2652, %v2649
    %v2884 = vpack.c.b16 %v2656, %v2653
    %v2885 = vpack.c.b16 %v2657, %v2654
    %v2886 = vpack.c.b16 %v2658, %v2655
    %v2887 = vpack.c.b16 %v2662, %v2659
    %v2888 = vpack.c.b16 %v2663, %v2660
    %v2889 = vpack.c.b16 %v2664, %v2661
    %v2890 = vpack.c.b16 %v2668, %v2665
    %v2891 = vpack.c.b16 %v2669, %v2666
    %v2892 = vpack.c.b16 %v2670, %v2667
    %v2893 = vpack.c.b16 %v2674, %v2671
    %v2894 = vpack.c.b16 %v2675, %v2672
    %v2895 = vpack.c.b16 %v2676, %v2673
    %v2896 = vpack.c.b16 %v2680, %v2677
    %v2897 = vpack.c.b16 %v2681, %v2678
    %v2898 = vpack.c.b16 %v2682, %v2679
    %v2899 = vpack.c.b16 %v2686, %v2683
    %v2900 = vpack.c.b16 %v2687, %v2684
    %v2901 = vpack.c.b16 %v2688, %v2685
    %v2902 = vpack.c.b16 %v2692, %v2689
    %v2903 = vpack.c.b16 %v2693, %v2690
    %v2904 = vpack.c.b16 %v2694, %v2691
    %v2905 = vpack.c.b16 %v2698, %v2695
    %v2906 = vpack.c.b16 %v2699, %v2696
    %v2907 = vpack.c.b16 %v2700, %v2697
    %v2908 = vpack.c.b16 %v2704, %v2701
    %v2909 = vpack.c.b16 %v2705, %v2702
    %v2910 = vpack.c.b16 %v2706, %v2703
    %v2911 = vpack.c.b16 %v2710, %v2707
    %v2912 = vpack.c.b16 %v2711, %v2708
    %v2913 = vpack.c.b16 %v2712, %v2709
    %v2914 = vpack.c.b16 %v2716, %v2713
    %v2915 = vpack.c.b16 %v2717, %v2714
    %v2916 = vpack.c.b16 %v2718, %v2715
    %v2917 = vpack.c.b16 %v2722, %v2719
    %v2918 = vpack.c.b16 %v2723, %v2720
    %v2919 = vpack.c.b16 %v2724, %v2721
    %v2920 = vpack.c.b16 %v2728, %v2725
    %v2921 = vpack.c.b16 %v2729, %v2726
    %v2922 = vpack.c.b16 %v2730, %v2727
    %v2923 = vpack.c.b16 %v2734, %v2731
    %v2924 = vpack.c.b16 %v2735, %v2732
    %v2925 = vpack.c.b16 %v2736, %v2733
    %v2926 = vpack.c.b16 %v2740, %v2737
    %v2927 = vpack.c.b16 %v2741, %v2738
    %v2928 = vpack.c.b16 %v2742, %v2739
    %v2929 = vpack.c.b16 %v2746, %v2743
    %v2930 = vpack.c.b16 %v2747, %v2744
    %v2931 = vpack.c.b16 %v2748, %v2745
    %v2932 = vpack.c.b16 %v2752, %v2749
    %v2933 = vpack.c.b16 %v2753, %v2750
    %v2934 = vpack.c.b16 %v2754, %v2751
    %v2935 = vpack.c.b16 %v2758, %v2755
    %v2936 = vpack.c.b16 %v2759, %v2756
    %v2937 = vpack.c.b16 %v2760, %v2757
    %v2938 = vpack.c.b16 %v2764, %v2761
    %v2939 = vpack.c.b16 %v2765, %v2762
    %v2940 = vpack.c.b16 %v2766, %v2763
    %v2941 = vpack.c.b16 %v2770, %v2767
    %v2942 = vpack.c.b16 %v2771, %v2768
    %v2943 = vpack.c.b16 %v2772, %v2769
    %v2944 = vpack.c.b16 %v2776, %v2773
    %v2945 = vpack.c.b16 %v2777, %v2774
    %v2946 = vpack.c.b16 %v2778, %v2775
    %v2947 = vpack.c.b16 %v2782, %v2779
    %v2948 = vpack.c.b16 %v2783, %v2780
    %v2949 = vpack.c.b16 %v2784, %v2781
    %v2950 = vpack.c.b16 %v2788, %v2785
    %v2951 = vpack.c.b16 %v2789, %v2786
    %v2952 = vpack.c.b16 %v2790, %v2787
    %v2953 = vpack.c.b16 %v2794, %v2791
    %v2954 = vpack.c.b16 %v2795, %v2792
    %v2955 = vpack.c.b16 %v2796, %v2793
    %v2956 = vpack.c.b16 %v2800, %v2797
    %v2957 = vpack.c.b16 %v2801, %v2798
    %v2958 = vpack.c.b16 %v2802, %v2799
    %v2959 = vpack.c.b16 %v2806, %v2803
    %v2960 = vpack.c.b16 %v2807, %v2804
    %v2961 = vpack.c.b16 %v2808, %v2805
    %v2962 = vpack.c.b16 %v2812, %v2809
    %v2963 = vpack.c.b16 %v2813, %v2810
    %v2964 = vpack.c.b16 %v2814, %v2811
    %v2965 = vpack.c.b16 %v2818, %v2815
    %v2966 = vpack.c.b16 %v2819, %v2816
    %v2967 = vpack.c.b16 %v2820, %v2817
    %v2968 = vpack.c.b16 %v2824, %v2821
    %v2969 = vpack.c.b16 %v2825, %v2822
    %v2970 = vpack.c.b16 %v2826, %v2823
    %v2971 = vpack.c.b16 %v2830, %v2827
    %v2972 = vpack.c.b16 %v2831, %v2828
    %v2973 = vpack.c.b16 %v2832, %v2829
    %v2974 = vpack.c.b16 %v2836, %v2833
    %v2975 = vpack.c.b16 %v2837, %v2834
    %v2976 = vpack.c.b16 %v2838, %v2835
    %v2977 = vpack.c.b16 %v2842, %v2839
    %v2978 = vpack.c.b16 %v2843, %v2840
    %v2979 = vpack.c.b16 %v2844, %v2841
    %v2980 = vpack.c.b16 %v2848, %v2845
    %v2981 = vpack.c.b16 %v2849, %v2846
    %v2982 = vpack.c.b16 %v2850, %v2847
    %v2983 = vpack.c.b16 %v2854, %v2851
    %v2984 = vpack.c.b16 %v2855, %v2852
    %v2985 = vpack.c.b16 %v2856, %v2853
    %v2986 = vpack.c.b16 %v2860, %v2857
    %v2987 = vpack.c.b16 %v2861, %v2858
    %v2988 = vpack.c.b16 %v2862, %v2859
    %v2989 = vpack.c.b16 %v2866, %v2863
    %v2990 = vpack.c.b16 %v2867, %v2864
    %v2991 = vpack.c.b16 %v2868, %v2865
    %v2992 = vpack.c.b16 %v2872, %v2869
    %v2993 = vpack.c.b16 %v2873, %v2870
    %v2994 = vpack.c.b16 %v2874, %v2871
    %3115 = vmatprep.subr.bf16.mxu0 %v2897
    %3116 = vmatpush1.bf16.msra.mxu0 %v2896
    %3117 = vmatprep.subr.bf16.mxu0 %v2894
    %3118 = vmatpush1.bf16.msra.mxu0 %v2893
    %3119 = vmatprep.subr.bf16.mxu0 %v2891
    %3120 = vmatpush1.bf16.msra.mxu0 %v2890
    %3121 = vmatprep.subr.bf16.mxu0 %v2888
    %3122 = vmatpush1.bf16.msra.mxu0 %v2887
    %3123 = vmatprep.subr.bf16.mxu0 %v2885
    %3124 = vmatpush1.bf16.msra.mxu0 %v2884
    %3125 = vmatprep.subr.bf16.mxu0 %v2882
    %3126 = vmatpush1.bf16.msra.mxu0 %v2881
    %3127 = vmatprep.subr.bf16.mxu0 %v2879
    %3128 = vmatpush1.bf16.msra.mxu0 %v2878
    %3129 = vmatprep.subr.bf16.mxu0 %v2876
    %3130 = vmatpush1.bf16.msra.mxu0 %v2875
    %3131 = vmatprep.subr.bf16.mxu0 %v2921
    %3132 = vmatpush2.bf16.msra.mxu0 %v2920
    %3133 = vmatprep.subr.bf16.mxu0 %v2918
    %3134 = vmatpush2.bf16.msra.mxu0 %v2917
    %3135 = vmatprep.subr.bf16.mxu0 %v2915
    %3136 = vmatpush2.bf16.msra.mxu0 %v2914
    %3137 = vmatprep.subr.bf16.mxu0 %v2912
    %3138 = vmatpush2.bf16.msra.mxu0 %v2911
    %3139 = vmatprep.subr.bf16.mxu0 %v2909
    %3140 = vmatpush2.bf16.msra.mxu0 %v2908
    %3141 = vmatprep.subr.bf16.mxu0 %v2906
    %3142 = vmatpush2.bf16.msra.mxu0 %v2905
    %3143 = vmatprep.subr.bf16.mxu0 %v2903
    %3144 = vmatpush2.bf16.msra.mxu0 %v2902
    %3145 = vmatprep.subr.bf16.mxu0 %v2900
    %3146 = vmatpush2.bf16.msra.mxu0 %v2899
    %3147 = vmatprep.mubr.bf16.mxu0 %v2294
    %3148 = vmatmul.mubr.bf16.gmra.mxu0 %v2293
    %v3149 = vpop.f32.mrf.mxu0
    %v3150 = vadd.f32 %v2463, %v3149
    %v3151 = vpop.f32.mrf.mxu0
    %v3152 = vadd.f32 %v2467, %v3151
    %v3153 = vpop.f32.mrf.mxu0
    %v3154 = vadd.f32 %v2463, %v3153
    %v3155 = vpop.f32.mrf.mxu0
    %v3156 = vadd.f32 %v2467, %v3155
    %3157 = vdwg.mxu0
    %3158 = vmatprep.subr.bf16.mxu0 %v2945
    %3159 = vmatpush1.bf16.msra.mxu0 %v2944
    %3160 = vmatprep.subr.bf16.mxu0 %v2942
    %3161 = vmatpush1.bf16.msra.mxu0 %v2941
    %3162 = vmatprep.subr.bf16.mxu0 %v2939
    %3163 = vmatpush1.bf16.msra.mxu0 %v2938
    %3164 = vmatprep.subr.bf16.mxu0 %v2936
    %3165 = vmatpush1.bf16.msra.mxu0 %v2935
    %3166 = vmatprep.subr.bf16.mxu0 %v2933
    %3167 = vmatpush1.bf16.msra.mxu0 %v2932
    %3168 = vmatprep.subr.bf16.mxu0 %v2930
    %3169 = vmatpush1.bf16.msra.mxu0 %v2929
    %3170 = vmatprep.subr.bf16.mxu0 %v2927
    %3171 = vmatpush1.bf16.msra.mxu0 %v2926
    %3172 = vmatprep.subr.bf16.mxu0 %v2924
    %3173 = vmatpush1.bf16.msra.mxu0 %v2923
    %3174 = vmatprep.subr.bf16.mxu0 %v2969
    %3175 = vmatpush2.bf16.msra.mxu0 %v2968
    %3176 = vmatprep.subr.bf16.mxu0 %v2966
    %3177 = vmatpush2.bf16.msra.mxu0 %v2965
    %3178 = vmatprep.subr.bf16.mxu0 %v2963
    %3179 = vmatpush2.bf16.msra.mxu0 %v2962
    %3180 = vmatprep.subr.bf16.mxu0 %v2960
    %3181 = vmatpush2.bf16.msra.mxu0 %v2959
    %3182 = vmatprep.subr.bf16.mxu0 %v2957
    %3183 = vmatpush2.bf16.msra.mxu0 %v2956
    %3184 = vmatprep.subr.bf16.mxu0 %v2954
    %3185 = vmatpush2.bf16.msra.mxu0 %v2953
    %3186 = vmatprep.subr.bf16.mxu0 %v2951
    %3187 = vmatpush2.bf16.msra.mxu0 %v2950
    %3188 = vmatprep.subr.bf16.mxu0 %v2948
    %3189 = vmatpush2.bf16.msra.mxu0 %v2947
    %3190 = vmatprep.mubr.bf16.mxu0 %v2296
    %3191 = vmatmul.mubr.bf16.gmra.mxu0 %v2295
    %v3192 = vpop.f32.mrf.mxu0
    %v3193 = vadd.f32 %v3150, %v3192
    %v3194 = vpop.f32.mrf.mxu0
    %v3195 = vadd.f32 %v3152, %v3194
    %v3196 = vpop.f32.mrf.mxu0
    %v3197 = vadd.f32 %v3154, %v3196
    %v3198 = vpop.f32.mrf.mxu0
    %v3199 = vadd.f32 %v3156, %v3198
    %3200 = vdwg.mxu0
    %3201 = vmatprep.subr.bf16.mxu0 %v2993
    %3202 = vmatpush1.bf16.msra.mxu0 %v2992
    %3203 = vmatprep.subr.bf16.mxu0 %v2990
    %3204 = vmatpush1.bf16.msra.mxu0 %v2989
    %3205 = vmatprep.subr.bf16.mxu0 %v2987
    %3206 = vmatpush1.bf16.msra.mxu0 %v2986
    %3207 = vmatprep.subr.bf16.mxu0 %v2984
    %3208 = vmatpush1.bf16.msra.mxu0 %v2983
    %3209 = vmatprep.subr.bf16.mxu0 %v2981
    %3210 = vmatpush1.bf16.msra.mxu0 %v2980
    %3211 = vmatprep.subr.bf16.mxu0 %v2978
    %3212 = vmatpush1.bf16.msra.mxu0 %v2977
    %3213 = vmatprep.subr.bf16.mxu0 %v2975
    %3214 = vmatpush1.bf16.msra.mxu0 %v2974
    %3215 = vmatprep.subr.bf16.mxu0 %v2972
    %3216 = vmatpush1.bf16.msra.mxu0 %v2971
    %3217 = vmatprep.subr.bf16.mxu0 0
    %3218 = vmatpush2.bf16.msra.mxu0 0
    %3219 = vmatprep.subr.bf16.mxu0 0
    %3220 = vmatpush2.bf16.msra.mxu0 0
    %3221 = vmatprep.subr.bf16.mxu0 0
    %3222 = vmatpush2.bf16.msra.mxu0 0
    %3223 = vmatprep.subr.bf16.mxu0 0
    %3224 = vmatpush2.bf16.msra.mxu0 0
    %3225 = vmatprep.subr.bf16.mxu0 0
    %3226 = vmatpush2.bf16.msra.mxu0 0
    %3227 = vmatprep.subr.bf16.mxu0 0
    %3228 = vmatpush2.bf16.msra.mxu0 0
    %3229 = vmatprep.subr.bf16.mxu0 0
    %3230 = vmatpush2.bf16.msra.mxu0 0
    %3231 = vmatprep.subr.bf16.mxu0 0
    %3232 = vmatpush2.bf16.msra.mxu0 0
    %3233 = vmatprep.mubr.bf16.mxu0 0
    %3234 = vmatmul.mubr.bf16.gmra.mxu0 %v2297
    %v3235 = vpop.f32.mrf.mxu0
    %v3236 = vadd.f32 %v3193, %v3235
    %v3237 = vpop.f32.mrf.mxu0
    %v3238 = vadd.f32 %v3195, %v3237
    %v3239 = vpop.f32.mrf.mxu0
    %v3240 = vadd.f32 %v3197, %v3239
    %v3241 = vpop.f32.mrf.mxu0
    %v3242 = vadd.f32 %v3199, %v3241
    %3243 = vdwg.mxu0
    %3244 = vmatprep.subr.bf16.mxu0 0
    %3245 = vmatpush1.bf16.msra.mxu0 %v2898
    %3246 = vmatprep.subr.bf16.mxu0 0
    %3247 = vmatpush1.bf16.msra.mxu0 %v2895
    %3248 = vmatprep.subr.bf16.mxu0 0
    %3249 = vmatpush1.bf16.msra.mxu0 %v2892
    %3250 = vmatprep.subr.bf16.mxu0 0
    %3251 = vmatpush1.bf16.msra.mxu0 %v2889
    %3252 = vmatprep.subr.bf16.mxu0 0
    %3253 = vmatpush1.bf16.msra.mxu0 %v2886
    %3254 = vmatprep.subr.bf16.mxu0 0
    %3255 = vmatpush1.bf16.msra.mxu0 %v2883
    %3256 = vmatprep.subr.bf16.mxu0 0
    %3257 = vmatpush1.bf16.msra.mxu0 %v2880
    %3258 = vmatprep.subr.bf16.mxu0 0
    %3259 = vmatpush1.bf16.msra.mxu0 %v2877
    %3260 = vmatprep.subr.bf16.mxu0 0
    %3261 = vmatpush2.bf16.msra.mxu0 %v2922
    %3262 = vmatprep.subr.bf16.mxu0 0
    %3263 = vmatpush2.bf16.msra.mxu0 %v2919
    %3264 = vmatprep.subr.bf16.mxu0 0
    %3265 = vmatpush2.bf16.msra.mxu0 %v2916
    %3266 = vmatprep.subr.bf16.mxu0 0
    %3267 = vmatpush2.bf16.msra.mxu0 %v2913
    %3268 = vmatprep.subr.bf16.mxu0 0
    %3269 = vmatpush2.bf16.msra.mxu0 %v2910
    %3270 = vmatprep.subr.bf16.mxu0 0
    %3271 = vmatpush2.bf16.msra.mxu0 %v2907
    %3272 = vmatprep.subr.bf16.mxu0 0
    %3273 = vmatpush2.bf16.msra.mxu0 %v2904
    %3274 = vmatprep.subr.bf16.mxu0 0
    %3275 = vmatpush2.bf16.msra.mxu0 %v2901
    %3276 = vmatprep.mubr.bf16.mxu0 %v2294
    %3277 = vmatmul.mubr.bf16.gmra.mxu0 %v2293
    %v3278 = vpop.f32.mrf.mxu0
    %v3279 = vadd.f32 %v2471, %v3278
    %v3280 = vpop.f32.mrf.mxu0
    %v3281 = vpop.f32.mrf.mxu0
    %v3282 = vadd.f32 %v2471, %v3281
    %v3283 = vpop.f32.mrf.mxu0
    %3284 = vdwg.mxu0
    %3285 = vmatprep.subr.bf16.mxu0 0
    %3286 = vmatpush1.bf16.msra.mxu0 %v2946
    %3287 = vmatprep.subr.bf16.mxu0 0
    %3288 = vmatpush1.bf16.msra.mxu0 %v2943
    %3289 = vmatprep.subr.bf16.mxu0 0
    %3290 = vmatpush1.bf16.msra.mxu0 %v2940
    %3291 = vmatprep.subr.bf16.mxu0 0
    %3292 = vmatpush1.bf16.msra.mxu0 %v2937
    %3293 = vmatprep.subr.bf16.mxu0 0
    %3294 = vmatpush1.bf16.msra.mxu0 %v2934
    %3295 = vmatprep.subr.bf16.mxu0 0
    %3296 = vmatpush1.bf16.msra.mxu0 %v2931
    %3297 = vmatprep.subr.bf16.mxu0 0
    %3298 = vmatpush1.bf16.msra.mxu0 %v2928
    %3299 = vmatprep.subr.bf16.mxu0 0
    %3300 = vmatpush1.bf16.msra.mxu0 %v2925
    %3301 = vmatprep.subr.bf16.mxu0 0
    %3302 = vmatpush2.bf16.msra.mxu0 %v2970
    %3303 = vmatprep.subr.bf16.mxu0 0
    %3304 = vmatpush2.bf16.msra.mxu0 %v2967
    %3305 = vmatprep.subr.bf16.mxu0 0
    %3306 = vmatpush2.bf16.msra.mxu0 %v2964
    %3307 = vmatprep.subr.bf16.mxu0 0
    %3308 = vmatpush2.bf16.msra.mxu0 %v2961
    %3309 = vmatprep.subr.bf16.mxu0 0
    %3310 = vmatpush2.bf16.msra.mxu0 %v2958
    %3311 = vmatprep.subr.bf16.mxu0 0
    %3312 = vmatpush2.bf16.msra.mxu0 %v2955
    %3313 = vmatprep.subr.bf16.mxu0 0
    %3314 = vmatpush2.bf16.msra.mxu0 %v2952
    %3315 = vmatprep.subr.bf16.mxu0 0
    %3316 = vmatpush2.bf16.msra.mxu0 %v2949
    %3317 = vmatprep.mubr.bf16.mxu0 %v2296
    %3318 = vmatmul.mubr.bf16.gmra.mxu0 %v2295
    %v3319 = vpop.f32.mrf.mxu0
    %v3320 = vadd.f32 %v3279, %v3319
    %v3321 = vpop.f32.mrf.mxu0
    %v3322 = vpop.f32.mrf.mxu0
    %v3323 = vadd.f32 %v3282, %v3322
    %v3324 = vpop.f32.mrf.mxu0
    %3325 = vdwg.mxu0
    %3326 = vmatprep.subr.bf16.mxu0 0
    %3327 = vmatpush1.bf16.msra.mxu0 %v2994
    %3328 = vmatprep.subr.bf16.mxu0 0
    %3329 = vmatpush1.bf16.msra.mxu0 %v2991
    %3330 = vmatprep.subr.bf16.mxu0 0
    %3331 = vmatpush1.bf16.msra.mxu0 %v2988
    %3332 = vmatprep.subr.bf16.mxu0 0
    %3333 = vmatpush1.bf16.msra.mxu0 %v2985
    %3334 = vmatprep.subr.bf16.mxu0 0
    %3335 = vmatpush1.bf16.msra.mxu0 %v2982
    %3336 = vmatprep.subr.bf16.mxu0 0
    %3337 = vmatpush1.bf16.msra.mxu0 %v2979
    %3338 = vmatprep.subr.bf16.mxu0 0
    %3339 = vmatpush1.bf16.msra.mxu0 %v2976
    %3340 = vmatprep.subr.bf16.mxu0 0
    %3341 = vmatpush1.bf16.msra.mxu0 %v2973
    %3342 = vmatprep.subr.bf16.mxu0 0
    %3343 = vmatpush2.bf16.msra.mxu0 0
    %3344 = vmatprep.subr.bf16.mxu0 0
    %3345 = vmatpush2.bf16.msra.mxu0 0
    %3346 = vmatprep.subr.bf16.mxu0 0
    %3347 = vmatpush2.bf16.msra.mxu0 0
    %3348 = vmatprep.subr.bf16.mxu0 0
    %3349 = vmatpush2.bf16.msra.mxu0 0
    %3350 = vmatprep.subr.bf16.mxu0 0
    %3351 = vmatpush2.bf16.msra.mxu0 0
    %3352 = vmatprep.subr.bf16.mxu0 0
    %3353 = vmatpush2.bf16.msra.mxu0 0
    %3354 = vmatprep.subr.bf16.mxu0 0
    %3355 = vmatpush2.bf16.msra.mxu0 0
    %3356 = vmatprep.subr.bf16.mxu0 0
    %3357 = vmatpush2.bf16.msra.mxu0 0
    %3358 = vmatprep.mubr.bf16.mxu0 0
    %3359 = vmatmul.mubr.bf16.gmra.mxu0 %v2297
    %v3360 = vpop.f32.mrf.mxu0
    %v3361 = vadd.f32 %v3320, %v3360
    %v3362 = vpop.f32.mrf.mxu0
    %v3363 = vpop.f32.mrf.mxu0
    %v3364 = vadd.f32 %v3323, %v3363
    %v3365 = vpop.f32.mrf.mxu0
    %3366 = vdwg.mxu0
    %v3367 = vmax.f32 %v3236, 0.0
    %v3368 = vmax.f32 %v3238, 0.0
    %v3369 = vmax.f32 %v3361, 0.0
    %v3370 = vmax.f32 %v3240, 0.0
    %v3371 = vmax.f32 %v3242, 0.0
    %v3372 = vmax.f32 %v3364, 0.0
    %v3373 = vpack.c.bf16 %v3370, %v3367
    %v3374 = vpack.c.bf16 %v3371, %v3368
    %v3375 = vpack.c.bf16 %v3372, %v3369
    %v3376 = vld [vmem:[#allocation10] sm:$0xff]
    %v3377 = vld [vmem:[#allocation10 + $0x8] sm:$0xff]
    %v3378 = vld [vmem:[#allocation10 + $0x10] sm:$0xff]
    %v3379 = vld [vmem:[#allocation10 + $0x18] sm:$0xff]
    %v3380 = vld [vmem:[#allocation10 + $0x20] sm:$0xff]
    %v3381 = vld [vmem:[#allocation10 + $0x28] sm:$0xff]
    %v3382 = vld [vmem:[#allocation10 + $0x30] sm:$0xff]
    %v3383 = vld [vmem:[#allocation10 + $0x38] sm:$0xff]
    %v3384 = vld [vmem:[#allocation10 + $0x40] sm:$0xff]
    %v3385 = vld [vmem:[#allocation10 + $0x48] sm:$0xff]
    %v3386 = vld [vmem:[#allocation10 + $0x50] sm:$0xff]
    %v3387 = vld [vmem:[#allocation10 + $0x58] sm:$0xff]
    %v3388 = vld [vmem:[#allocation10 + $0x60] sm:$0xff]
    %v3389 = vld [vmem:[#allocation10 + $0x68] sm:$0xff]
    %v3390 = vld [vmem:[#allocation10 + $0x70] sm:$0xff]
    %v3391 = vld [vmem:[#allocation10 + $0x78] sm:$0xff]
    %v3392 = vld [vmem:[#allocation10 + $0x80] sm:$0xff]
    %v3393 = vld [vmem:[#allocation10 + $0x88] sm:$0xff]
    %v3394 = vld [vmem:[#allocation10 + $0x90] sm:$0xff]
    %v3395 = vld [vmem:[#allocation10 + $0x98] sm:$0xff]
    %v3396 = vld [vmem:[#allocation10 + $0xa0] sm:$0xff]
    %v3397 = vld [vmem:[#allocation10 + $0xa8] sm:$0xff]
    %v3398 = vld [vmem:[#allocation10 + $0xb0] sm:$0xff]
    %v3399 = vld [vmem:[#allocation10 + $0xb8] sm:$0xff]
    %v3400 = vld [vmem:[#allocation10 + $0xc0] sm:$0xff]
    %v3401 = vld [vmem:[#allocation10 + $0xc8] sm:$0xff]
    %v3402 = vld [vmem:[#allocation10 + $0xd0] sm:$0xff]
    %v3403 = vld [vmem:[#allocation10 + $0xd8] sm:$0xff]
    %v3404 = vld [vmem:[#allocation10 + $0xe0] sm:$0xff]
    %v3405 = vld [vmem:[#allocation10 + $0xe8] sm:$0xff]
    %v3406 = vld [vmem:[#allocation10 + $0xf0] sm:$0xff]
    %v3407 = vld [vmem:[#allocation10 + $0xf8] sm:$0xff]
    %v3408 = vld [vmem:[#allocation10 + $0x100] sm:$0xff]
    %v3409 = vld [vmem:[#allocation10 + $0x108] sm:$0xff]
    %v3410 = vld [vmem:[#allocation10 + $0x110] sm:$0xff]
    %v3411 = vld [vmem:[#allocation10 + $0x118] sm:$0xff]
    %v3412 = vld [vmem:[#allocation10 + $0x120] sm:$0xff]
    %v3413 = vld [vmem:[#allocation10 + $0x128] sm:$0xff]
    %v3414 = vld [vmem:[#allocation10 + $0x130] sm:$0xff]
    %v3415 = vld [vmem:[#allocation10 + $0x138] sm:$0xff]
    %v3416 = vld [vmem:[#allocation10 + $0x140] sm:$0xff]
    %v3417 = vld [vmem:[#allocation10 + $0x148] sm:$0xff]
    %v3418 = vld [vmem:[#allocation10 + $0x150] sm:$0xff]
    %v3419 = vld [vmem:[#allocation10 + $0x158] sm:$0xff]
    %v3420 = vld [vmem:[#allocation10 + $0x160] sm:$0xff]
    %v3421 = vld [vmem:[#allocation10 + $0x168] sm:$0xff]
    %v3422 = vld [vmem:[#allocation10 + $0x170] sm:$0xff]
    %v3423 = vld [vmem:[#allocation10 + $0x178] sm:$0xff]
    %v3424 = vld [vmem:[%s6] sm:$0x3]
    %v3426 = vlaneseq
    %v3427 = vshrl.u32 %v3426, 7
    %v3428 = vsub.s32 0, %v3427
    %v3429 = vrot.slane %v3424, %v3428
    %v3430 = vlaneseq
    %v3431 = vshrl.u32 %v3430, 7
    %v3432 = vsub.s32 1, %v3431
    %v3433 = vrot.slane %v3424, %v3432
    %v3484 = vunpack.c.l.b16 %v3376
    %v3485 = vunpack.c.h.b16 %v3376
    %v3486 = vunpack.c.l.b16 %v3377
    %v3487 = vunpack.c.h.b16 %v3377
    %v3488 = vunpack.c.l.b16 %v3378
    %v3489 = vunpack.c.h.b16 %v3378
    %v3490 = vunpack.c.l.b16 %v3379
    %v3491 = vunpack.c.h.b16 %v3379
    %v3492 = vunpack.c.l.b16 %v3380
    %v3493 = vunpack.c.h.b16 %v3380
    %v3494 = vunpack.c.l.b16 %v3381
    %v3495 = vunpack.c.h.b16 %v3381
    %v3496 = vunpack.c.l.b16 %v3382
    %v3497 = vunpack.c.h.b16 %v3382
    %v3498 = vunpack.c.l.b16 %v3383
    %v3499 = vunpack.c.h.b16 %v3383
    %v3500 = vunpack.c.l.b16 %v3384
    %v3501 = vunpack.c.h.b16 %v3384
    %v3502 = vunpack.c.l.b16 %v3385
    %v3503 = vunpack.c.h.b16 %v3385
    %v3504 = vunpack.c.l.b16 %v3386
    %v3505 = vunpack.c.h.b16 %v3386
    %v3506 = vunpack.c.l.b16 %v3387
    %v3507 = vunpack.c.h.b16 %v3387
    %v3508 = vunpack.c.l.b16 %v3388
    %v3509 = vunpack.c.h.b16 %v3388
    %v3510 = vunpack.c.l.b16 %v3389
    %v3511 = vunpack.c.h.b16 %v3389
    %v3512 = vunpack.c.l.b16 %v3390
    %v3513 = vunpack.c.h.b16 %v3390
    %v3514 = vunpack.c.l.b16 %v3391
    %v3515 = vunpack.c.h.b16 %v3391
    %v3516 = vunpack.c.l.b16 %v3392
    %v3517 = vunpack.c.h.b16 %v3392
    %v3518 = vunpack.c.l.b16 %v3393
    %v3519 = vunpack.c.h.b16 %v3393
    %v3520 = vunpack.c.l.b16 %v3394
    %v3521 = vunpack.c.h.b16 %v3394
    %v3522 = vunpack.c.l.b16 %v3395
    %v3523 = vunpack.c.h.b16 %v3395
    %v3524 = vunpack.c.l.b16 %v3396
    %v3525 = vunpack.c.h.b16 %v3396
    %v3526 = vunpack.c.l.b16 %v3397
    %v3527 = vunpack.c.h.b16 %v3397
    %v3528 = vunpack.c.l.b16 %v3398
    %v3529 = vunpack.c.h.b16 %v3398
    %v3530 = vunpack.c.l.b16 %v3399
    %v3531 = vunpack.c.h.b16 %v3399
    %v3532 = vunpack.c.l.b16 %v3400
    %v3533 = vunpack.c.h.b16 %v3400
    %v3534 = vunpack.c.l.b16 %v3401
    %v3535 = vunpack.c.h.b16 %v3401
    %v3536 = vunpack.c.l.b16 %v3402
    %v3537 = vunpack.c.h.b16 %v3402
    %v3538 = vunpack.c.l.b16 %v3403
    %v3539 = vunpack.c.h.b16 %v3403
    %v3540 = vunpack.c.l.b16 %v3404
    %v3541 = vunpack.c.h.b16 %v3404
    %v3542 = vunpack.c.l.b16 %v3405
    %v3543 = vunpack.c.h.b16 %v3405
    %v3544 = vunpack.c.l.b16 %v3406
    %v3545 = vunpack.c.h.b16 %v3406
    %v3546 = vunpack.c.l.b16 %v3407
    %v3547 = vunpack.c.h.b16 %v3407
    %v3548 = vunpack.c.l.b16 %v3408
    %v3549 = vunpack.c.h.b16 %v3408
    %v3550 = vunpack.c.l.b16 %v3409
    %v3551 = vunpack.c.h.b16 %v3409
    %v3552 = vunpack.c.l.b16 %v3410
    %v3553 = vunpack.c.h.b16 %v3410
    %v3554 = vunpack.c.l.b16 %v3411
    %v3555 = vunpack.c.h.b16 %v3411
    %v3556 = vunpack.c.l.b16 %v3412
    %v3557 = vunpack.c.h.b16 %v3412
    %v3558 = vunpack.c.l.b16 %v3413
    %v3559 = vunpack.c.h.b16 %v3413
    %v3560 = vunpack.c.l.b16 %v3414
    %v3561 = vunpack.c.h.b16 %v3414
    %v3562 = vunpack.c.l.b16 %v3415
    %v3563 = vunpack.c.h.b16 %v3415
    %v3564 = vunpack.c.l.b16 %v3416
    %v3565 = vunpack.c.h.b16 %v3416
    %v3566 = vunpack.c.l.b16 %v3417
    %v3567 = vunpack.c.h.b16 %v3417
    %v3568 = vunpack.c.l.b16 %v3418
    %v3569 = vunpack.c.h.b16 %v3418
    %v3570 = vunpack.c.l.b16 %v3419
    %v3571 = vunpack.c.h.b16 %v3419
    %v3572 = vunpack.c.l.b16 %v3420
    %v3573 = vunpack.c.h.b16 %v3420
    %v3574 = vunpack.c.l.b16 %v3421
    %v3575 = vunpack.c.h.b16 %v3421
    %v3576 = vunpack.c.l.b16 %v3422
    %v3577 = vunpack.c.h.b16 %v3422
    %v3578 = vunpack.c.l.b16 %v3423
    %v3579 = vunpack.c.h.b16 %v3423
    %v3580 = vpack.c.b16 %v3486, %v3484
    %v3581 = vpack.c.b16 %v3487, %v3485
    %v3582 = vpack.c.b16 %v3490, %v3488
    %v3583 = vpack.c.b16 %v3491, %v3489
    %v3584 = vpack.c.b16 %v3494, %v3492
    %v3585 = vpack.c.b16 %v3495, %v3493
    %v3586 = vpack.c.b16 %v3498, %v3496
    %v3587 = vpack.c.b16 %v3499, %v3497
    %v3588 = vpack.c.b16 %v3502, %v3500
    %v3589 = vpack.c.b16 %v3503, %v3501
    %v3590 = vpack.c.b16 %v3506, %v3504
    %v3591 = vpack.c.b16 %v3507, %v3505
    %v3592 = vpack.c.b16 %v3510, %v3508
    %v3593 = vpack.c.b16 %v3511, %v3509
    %v3594 = vpack.c.b16 %v3514, %v3512
    %v3595 = vpack.c.b16 %v3515, %v3513
    %v3596 = vpack.c.b16 %v3518, %v3516
    %v3597 = vpack.c.b16 %v3519, %v3517
    %v3598 = vpack.c.b16 %v3522, %v3520
    %v3599 = vpack.c.b16 %v3523, %v3521
    %v3600 = vpack.c.b16 %v3526, %v3524
    %v3601 = vpack.c.b16 %v3527, %v3525
    %v3602 = vpack.c.b16 %v3530, %v3528
    %v3603 = vpack.c.b16 %v3531, %v3529
    %v3604 = vpack.c.b16 %v3534, %v3532
    %v3605 = vpack.c.b16 %v3535, %v3533
    %v3606 = vpack.c.b16 %v3538, %v3536
    %v3607 = vpack.c.b16 %v3539, %v3537
    %v3608 = vpack.c.b16 %v3542, %v3540
    %v3609 = vpack.c.b16 %v3543, %v3541
    %v3610 = vpack.c.b16 %v3546, %v3544
    %v3611 = vpack.c.b16 %v3547, %v3545
    %v3612 = vpack.c.b16 %v3550, %v3548
    %v3613 = vpack.c.b16 %v3551, %v3549
    %v3614 = vpack.c.b16 %v3554, %v3552
    %v3615 = vpack.c.b16 %v3555, %v3553
    %v3616 = vpack.c.b16 %v3558, %v3556
    %v3617 = vpack.c.b16 %v3559, %v3557
    %v3618 = vpack.c.b16 %v3562, %v3560
    %v3619 = vpack.c.b16 %v3563, %v3561
    %v3620 = vpack.c.b16 %v3566, %v3564
    %v3621 = vpack.c.b16 %v3567, %v3565
    %v3622 = vpack.c.b16 %v3570, %v3568
    %v3623 = vpack.c.b16 %v3571, %v3569
    %v3624 = vpack.c.b16 %v3574, %v3572
    %v3625 = vpack.c.b16 %v3575, %v3573
    %v3626 = vpack.c.b16 %v3578, %v3576
    %v3627 = vpack.c.b16 %v3579, %v3577
    %3676 = vmatprep.subr.bf16.mxu0 %v3595
    %3677 = vmatpush1.bf16.msra.mxu0 %v3594
    %3678 = vmatprep.subr.bf16.mxu0 %v3593
    %3679 = vmatpush1.bf16.msra.mxu0 %v3592
    %3680 = vmatprep.subr.bf16.mxu0 %v3591
    %3681 = vmatpush1.bf16.msra.mxu0 %v3590
    %3682 = vmatprep.subr.bf16.mxu0 %v3589
    %3683 = vmatpush1.bf16.msra.mxu0 %v3588
    %3684 = vmatprep.subr.bf16.mxu0 %v3587
    %3685 = vmatpush1.bf16.msra.mxu0 %v3586
    %3686 = vmatprep.subr.bf16.mxu0 %v3585
    %3687 = vmatpush1.bf16.msra.mxu0 %v3584
    %3688 = vmatprep.subr.bf16.mxu0 %v3583
    %3689 = vmatpush1.bf16.msra.mxu0 %v3582
    %3690 = vmatprep.subr.bf16.mxu0 %v3581
    %3691 = vmatpush1.bf16.msra.mxu0 %v3580
    %3692 = vmatprep.subr.bf16.mxu0 %v3611
    %3693 = vmatpush2.bf16.msra.mxu0 %v3610
    %3694 = vmatprep.subr.bf16.mxu0 %v3609
    %3695 = vmatpush2.bf16.msra.mxu0 %v3608
    %3696 = vmatprep.subr.bf16.mxu0 %v3607
    %3697 = vmatpush2.bf16.msra.mxu0 %v3606
    %3698 = vmatprep.subr.bf16.mxu0 %v3605
    %3699 = vmatpush2.bf16.msra.mxu0 %v3604
    %3700 = vmatprep.subr.bf16.mxu0 %v3603
    %3701 = vmatpush2.bf16.msra.mxu0 %v3602
    %3702 = vmatprep.subr.bf16.mxu0 %v3601
    %3703 = vmatpush2.bf16.msra.mxu0 %v3600
    %3704 = vmatprep.subr.bf16.mxu0 %v3599
    %3705 = vmatpush2.bf16.msra.mxu0 %v3598
    %3706 = vmatprep.subr.bf16.mxu0 %v3597
    %3707 = vmatpush2.bf16.msra.mxu0 %v3596
    %3708 = vmatprep.mubr.bf16.mxu0 %v3374
    %3709 = vmatmul.mubr.bf16.gmra.mxu0 %v3373
    %v3710 = vpop.f32.mrf.mxu0
    %v3711 = vadd.f32 %v3429, %v3710
    %v3712 = vpop.f32.mrf.mxu0
    %v3713 = vadd.f32 %v3433, %v3712
    %v3714 = vpop.f32.mrf.mxu0
    %v3715 = vadd.f32 %v3429, %v3714
    %v3716 = vpop.f32.mrf.mxu0
    %v3717 = vadd.f32 %v3433, %v3716
    %3718 = vdwg.mxu0
    %3719 = vmatprep.subr.bf16.mxu0 %v3627
    %3720 = vmatpush1.bf16.msra.mxu0 %v3626
    %3721 = vmatprep.subr.bf16.mxu0 %v3625
    %3722 = vmatpush1.bf16.msra.mxu0 %v3624
    %3723 = vmatprep.subr.bf16.mxu0 %v3623
    %3724 = vmatpush1.bf16.msra.mxu0 %v3622
    %3725 = vmatprep.subr.bf16.mxu0 %v3621
    %3726 = vmatpush1.bf16.msra.mxu0 %v3620
    %3727 = vmatprep.subr.bf16.mxu0 %v3619
    %3728 = vmatpush1.bf16.msra.mxu0 %v3618
    %3729 = vmatprep.subr.bf16.mxu0 %v3617
    %3730 = vmatpush1.bf16.msra.mxu0 %v3616
    %3731 = vmatprep.subr.bf16.mxu0 %v3615
    %3732 = vmatpush1.bf16.msra.mxu0 %v3614
    %3733 = vmatprep.subr.bf16.mxu0 %v3613
    %3734 = vmatpush1.bf16.msra.mxu0 %v3612
    %3735 = vmatprep.subr.bf16.mxu0 0
    %3736 = vmatpush2.bf16.msra.mxu0 0
    %3737 = vmatprep.subr.bf16.mxu0 0
    %3738 = vmatpush2.bf16.msra.mxu0 0
    %3739 = vmatprep.subr.bf16.mxu0 0
    %3740 = vmatpush2.bf16.msra.mxu0 0
    %3741 = vmatprep.subr.bf16.mxu0 0
    %3742 = vmatpush2.bf16.msra.mxu0 0
    %3743 = vmatprep.subr.bf16.mxu0 0
    %3744 = vmatpush2.bf16.msra.mxu0 0
    %3745 = vmatprep.subr.bf16.mxu0 0
    %3746 = vmatpush2.bf16.msra.mxu0 0
    %3747 = vmatprep.subr.bf16.mxu0 0
    %3748 = vmatpush2.bf16.msra.mxu0 0
    %3749 = vmatprep.subr.bf16.mxu0 0
    %3750 = vmatpush2.bf16.msra.mxu0 0
    %3751 = vmatprep.mubr.bf16.mxu0 0
    %3752 = vmatmul.mubr.bf16.gmra.mxu0 %v3375
    %v3753 = vpop.f32.mrf.mxu0
    %v3754 = vadd.f32 %v3711, %v3753
    %v3755 = vpop.f32.mrf.mxu0
    %v3756 = vadd.f32 %v3713, %v3755
    %v3757 = vpop.f32.mrf.mxu0
    %v3758 = vadd.f32 %v3715, %v3757
    %v3759 = vpop.f32.mrf.mxu0
    %v3760 = vadd.f32 %v3717, %v3759
    %3761 = vdwg.mxu0
    %v3762 = vmax.f32 %v3754, 0.0
    %v3763 = vmax.f32 %v3756, 0.0
    %v3764 = vmax.f32 %v3758, 0.0
    %v3765 = vmax.f32 %v3760, 0.0
    %v3766 = vpack.c.bf16 %v3764, %v3762
    %v3767 = vpack.c.bf16 %v3765, %v3763
    %v3768 = vld [vmem:[#allocation11] sm:$0xf]
    %v3769 = vld [vmem:[#allocation11 + $0x4] sm:$0xf]
    %v3770 = vld [vmem:[#allocation11 + $0x8] sm:$0xf]
    %v3771 = vld [vmem:[#allocation11 + $0xc] sm:$0xf]
    %v3772 = vld [vmem:[#allocation11 + $0x10] sm:$0xf]
    %v3773 = vld [vmem:[#allocation11 + $0x14] sm:$0xf]
    %v3774 = vld [vmem:[#allocation11 + $0x18] sm:$0xf]
    %v3775 = vld [vmem:[#allocation11 + $0x1c] sm:$0xf]
    %v3776 = vld [vmem:[#allocation11 + $0x20] sm:$0xf]
    %v3777 = vld [vmem:[#allocation11 + $0x24] sm:$0xf]
    %v3778 = vld [vmem:[#allocation11 + $0x28] sm:$0xf]
    %v3779 = vld [vmem:[#allocation11 + $0x2c] sm:$0xf]
    %v3780 = vld [vmem:[#allocation11 + $0x30] sm:$0xf]
    %v3781 = vld [vmem:[#allocation11 + $0x34] sm:$0xf]
    %v3782 = vld [vmem:[#allocation11 + $0x38] sm:$0xf]
    %v3783 = vld [vmem:[#allocation11 + $0x3c] sm:$0xf]
    %v3784 = vld [vmem:[#allocation11 + $0x40] sm:$0xf]
    %v3785 = vld [vmem:[#allocation11 + $0x44] sm:$0xf]
    %v3786 = vld [vmem:[#allocation11 + $0x48] sm:$0xf]
    %v3787 = vld [vmem:[#allocation11 + $0x4c] sm:$0xf]
    %v3788 = vld [vmem:[#allocation11 + $0x50] sm:$0xf]
    %v3789 = vld [vmem:[#allocation11 + $0x54] sm:$0xf]
    %v3790 = vld [vmem:[#allocation11 + $0x58] sm:$0xf]
    %v3791 = vld [vmem:[#allocation11 + $0x5c] sm:$0xf]
    %v3792 = vld [vmem:[#allocation11 + $0x60] sm:$0xf]
    %v3793 = vld [vmem:[#allocation11 + $0x64] sm:$0xf]
    %v3794 = vld [vmem:[#allocation11 + $0x68] sm:$0xf]
    %v3795 = vld [vmem:[#allocation11 + $0x6c] sm:$0xf]
    %v3796 = vld [vmem:[#allocation11 + $0x70] sm:$0xf]
    %v3797 = vld [vmem:[#allocation11 + $0x74] sm:$0xf]
    %v3798 = vld [vmem:[#allocation11 + $0x78] sm:$0xf]
    %v3799 = vld [vmem:[#allocation11 + $0x7c] sm:$0xf]
    %v3800 = vld [vmem:[%s8] sm:$0x1]
    %v3802 = vlaneseq
    %v3803 = vshrl.u32 %v3802, 7
    %v3804 = vsub.s32 0, %v3803
    %v3805 = vrot.slane %v3800, %v3804
    %v3839 = vunpack.c.l.b16 %v3768
    %v3840 = vunpack.c.l.b16 %v3769
    %v3841 = vunpack.c.l.b16 %v3770
    %v3842 = vunpack.c.l.b16 %v3771
    %v3843 = vunpack.c.l.b16 %v3772
    %v3844 = vunpack.c.l.b16 %v3773
    %v3845 = vunpack.c.l.b16 %v3774
    %v3846 = vunpack.c.l.b16 %v3775
    %v3847 = vunpack.c.l.b16 %v3776
    %v3848 = vunpack.c.l.b16 %v3777
    %v3849 = vunpack.c.l.b16 %v3778
    %v3850 = vunpack.c.l.b16 %v3779
    %v3851 = vunpack.c.l.b16 %v3780
    %v3852 = vunpack.c.l.b16 %v3781
    %v3853 = vunpack.c.l.b16 %v3782
    %v3854 = vunpack.c.l.b16 %v3783
    %v3855 = vunpack.c.l.b16 %v3784
    %v3856 = vunpack.c.l.b16 %v3785
    %v3857 = vunpack.c.l.b16 %v3786
    %v3858 = vunpack.c.l.b16 %v3787
    %v3859 = vunpack.c.l.b16 %v3788
    %v3860 = vunpack.c.l.b16 %v3789
    %v3861 = vunpack.c.l.b16 %v3790
    %v3862 = vunpack.c.l.b16 %v3791
    %v3863 = vunpack.c.l.b16 %v3792
    %v3864 = vunpack.c.l.b16 %v3793
    %v3865 = vunpack.c.l.b16 %v3794
    %v3866 = vunpack.c.l.b16 %v3795
    %v3867 = vunpack.c.l.b16 %v3796
    %v3868 = vunpack.c.l.b16 %v3797
    %v3869 = vunpack.c.l.b16 %v3798
    %v3870 = vunpack.c.l.b16 %v3799
    %v3871 = vpack.c.b16 %v3840, %v3839
    %v3872 = vpack.c.b16 %v3842, %v3841
    %v3873 = vpack.c.b16 %v3844, %v3843
    %v3874 = vpack.c.b16 %v3846, %v3845
    %v3875 = vpack.c.b16 %v3848, %v3847
    %v3876 = vpack.c.b16 %v3850, %v3849
    %v3877 = vpack.c.b16 %v3852, %v3851
    %v3878 = vpack.c.b16 %v3854, %v3853
    %v3879 = vpack.c.b16 %v3856, %v3855
    %v3880 = vpack.c.b16 %v3858, %v3857
    %v3881 = vpack.c.b16 %v3860, %v3859
    %v3882 = vpack.c.b16 %v3862, %v3861
    %v3883 = vpack.c.b16 %v3864, %v3863
    %v3884 = vpack.c.b16 %v3866, %v3865
    %v3885 = vpack.c.b16 %v3868, %v3867
    %v3886 = vpack.c.b16 %v3870, %v3869
    %3903 = vmatprep.subr.bf16.mxu0 0
    %3904 = vmatpush1.bf16.msra.mxu0 %v3878
    %3905 = vmatprep.subr.bf16.mxu0 0
    %3906 = vmatpush1.bf16.msra.mxu0 %v3877
    %3907 = vmatprep.subr.bf16.mxu0 0
    %3908 = vmatpush1.bf16.msra.mxu0 %v3876
    %3909 = vmatprep.subr.bf16.mxu0 0
    %3910 = vmatpush1.bf16.msra.mxu0 %v3875
    %3911 = vmatprep.subr.bf16.mxu0 0
    %3912 = vmatpush1.bf16.msra.mxu0 %v3874
    %3913 = vmatprep.subr.bf16.mxu0 0
    %3914 = vmatpush1.bf16.msra.mxu0 %v3873
    %3915 = vmatprep.subr.bf16.mxu0 0
    %3916 = vmatpush1.bf16.msra.mxu0 %v3872
    %3917 = vmatprep.subr.bf16.mxu0 0
    %3918 = vmatpush1.bf16.msra.mxu0 %v3871
    %3919 = vmatprep.subr.bf16.mxu0 0
    %3920 = vmatpush2.bf16.msra.mxu0 %v3886
    %3921 = vmatprep.subr.bf16.mxu0 0
    %3922 = vmatpush2.bf16.msra.mxu0 %v3885
    %3923 = vmatprep.subr.bf16.mxu0 0
    %3924 = vmatpush2.bf16.msra.mxu0 %v3884
    %3925 = vmatprep.subr.bf16.mxu0 0
    %3926 = vmatpush2.bf16.msra.mxu0 %v3883
    %3927 = vmatprep.subr.bf16.mxu0 0
    %3928 = vmatpush2.bf16.msra.mxu0 %v3882
    %3929 = vmatprep.subr.bf16.mxu0 0
    %3930 = vmatpush2.bf16.msra.mxu0 %v3881
    %3931 = vmatprep.subr.bf16.mxu0 0
    %3932 = vmatpush2.bf16.msra.mxu0 %v3880
    %3933 = vmatprep.subr.bf16.mxu0 0
    %3934 = vmatpush2.bf16.msra.mxu0 %v3879
    %3935 = vmatprep.mubr.bf16.mxu0 %v3767
    %3936 = vmatmul.mubr.bf16.gmra.mxu0 %v3766
    %v3937 = vpop.f32.mrf.mxu0
    %v3938 = vadd.f32 %v3805, %v3937
    %v3939 = vpop.f32.mrf.mxu0
    %v3940 = vpop.f32.mrf.mxu0
    %v3941 = vadd.f32 %v3805, %v3940
    %v3942 = vpop.f32.mrf.mxu0
    %3943 = vdwg.mxu0
    %v3944 = vmax.f32 %v3938, 0.0
    %v3945 = vmax.f32 %v3941, 0.0
    %v3946 = vpack.c.bf16 %v3945, %v3944
    %v3947 = vld [vmem:[#allocation13] sm:$0xf]
    %v3948 = vld [vmem:[#allocation13 + $0x4] sm:$0xf]
    %v3949 = vld [vmem:[#allocation13 + $0x8] sm:$0xf]
    %v3950 = vld [vmem:[#allocation13 + $0xc] sm:$0xf]
    %v3951 = vld [vmem:[#allocation13 + $0x10] sm:$0xf]
    %v3952 = vld [vmem:[#allocation13 + $0x14] sm:$0xf]
    %v3953 = vld [vmem:[#allocation13 + $0x18] sm:$0xf]
    %v3954 = vld [vmem:[#allocation13 + $0x1c] sm:$0xf]
    %v3955 = vld [vmem:[#allocation13 + $0x20] sm:$0xf]
    %v3956 = vld [vmem:[#allocation13 + $0x24] sm:$0xf]
    %v3957 = vld [vmem:[#allocation13 + $0x28] sm:$0xf]
    %v3958 = vld [vmem:[#allocation13 + $0x2c] sm:$0xf]
    %v3959 = vld [vmem:[#allocation13 + $0x30] sm:$0xf]
    %v3960 = vld [vmem:[#allocation13 + $0x34] sm:$0xf]
    %v3961 = vld [vmem:[#allocation13 + $0x38] sm:$0xf]
    %v3962 = vld [vmem:[#allocation13 + $0x3c] sm:$0xf]
    %v3963 = vld [vmem:[%s10] sm:$0x1]
    %v3965 = vlaneseq
    %v3966 = vshrl.u32 %v3965, 7
    %v3967 = vsub.s32 0, %v3966
    %v3968 = vrot.slane %v3963, %v3967
    %v3986 = vunpack.c.l.b16 %v3947
    %v3987 = vunpack.c.l.b16 %v3948
    %v3988 = vunpack.c.l.b16 %v3949
    %v3989 = vunpack.c.l.b16 %v3950
    %v3990 = vunpack.c.l.b16 %v3951
    %v3991 = vunpack.c.l.b16 %v3952
    %v3992 = vunpack.c.l.b16 %v3953
    %v3993 = vunpack.c.l.b16 %v3954
    %v3994 = vunpack.c.l.b16 %v3955
    %v3995 = vunpack.c.l.b16 %v3956
    %v3996 = vunpack.c.l.b16 %v3957
    %v3997 = vunpack.c.l.b16 %v3958
    %v3998 = vunpack.c.l.b16 %v3959
    %v3999 = vunpack.c.l.b16 %v3960
    %v4000 = vunpack.c.l.b16 %v3961
    %v4001 = vunpack.c.l.b16 %v3962
    %v4002 = vpack.c.b16 %v3987, %v3986
    %v4003 = vpack.c.b16 %v3989, %v3988
    %v4004 = vpack.c.b16 %v3991, %v3990
    %v4005 = vpack.c.b16 %v3993, %v3992
    %v4006 = vpack.c.b16 %v3995, %v3994
    %v4007 = vpack.c.b16 %v3997, %v3996
    %v4008 = vpack.c.b16 %v3999, %v3998
    %v4009 = vpack.c.b16 %v4001, %v4000
    %4018 = vmatprep.subr.bf16.mxu0 0
    %4019 = vmatpush1.bf16.msra.mxu0 %v4009
    %4020 = vmatprep.subr.bf16.mxu0 0
    %4021 = vmatpush1.bf16.msra.mxu0 %v4008
    %4022 = vmatprep.subr.bf16.mxu0 0
    %4023 = vmatpush1.bf16.msra.mxu0 %v4007
    %4024 = vmatprep.subr.bf16.mxu0 0
    %4025 = vmatpush1.bf16.msra.mxu0 %v4006
    %4026 = vmatprep.subr.bf16.mxu0 0
    %4027 = vmatpush1.bf16.msra.mxu0 %v4005
    %4028 = vmatprep.subr.bf16.mxu0 0
    %4029 = vmatpush1.bf16.msra.mxu0 %v4004
    %4030 = vmatprep.subr.bf16.mxu0 0
    %4031 = vmatpush1.bf16.msra.mxu0 %v4003
    %4032 = vmatprep.subr.bf16.mxu0 0
    %4033 = vmatpush1.bf16.msra.mxu0 %v4002
    %4034 = vmatprep.subr.bf16.mxu0 0
    %4035 = vmatpush2.bf16.msra.mxu0 0
    %4036 = vmatprep.subr.bf16.mxu0 0
    %4037 = vmatpush2.bf16.msra.mxu0 0
    %4038 = vmatprep.subr.bf16.mxu0 0
    %4039 = vmatpush2.bf16.msra.mxu0 0
    %4040 = vmatprep.subr.bf16.mxu0 0
    %4041 = vmatpush2.bf16.msra.mxu0 0
    %4042 = vmatprep.subr.bf16.mxu0 0
    %4043 = vmatpush2.bf16.msra.mxu0 0
    %4044 = vmatprep.subr.bf16.mxu0 0
    %4045 = vmatpush2.bf16.msra.mxu0 0
    %4046 = vmatprep.subr.bf16.mxu0 0
    %4047 = vmatpush2.bf16.msra.mxu0 0
    %4048 = vmatprep.subr.bf16.mxu0 0
    %4049 = vmatpush2.bf16.msra.mxu0 0
    %4050 = vmatprep.mubr.bf16.mxu0 0
    %4051 = vmatmul.mubr.bf16.gmra.mxu0 %v3946
    %v4052 = vpop.f32.mrf.mxu0
    %v4053 = vadd.f32 %v3968, %v4052
    %v4054 = vpop.f32.mrf.mxu0
    %v4055 = vpop.f32.mrf.mxu0
    %v4056 = vadd.f32 %v3968, %v4055
    %v4057 = vpop.f32.mrf.mxu0
    %4058 = vdwg.mxu0
    %4059 = vst [vmem:[#allocation14] sm:$0xff] %v4053
    %4060 = vst [vmem:[#allocation14 + $0x8] sm:$0xff] %v4056
    // Predicated region
    $region74: #{tpu_custom_call.1} parent=1 // pred_check
      _
    $region75: #{tpu_custom_call.1} parent=1 // pred_check_branch
      %4062 = sbr.rel (0) target = $region77
    $region76: #{tpu_custom_call.1} parent=1 // pred_region
      %s4064 = ssub.s32 256, 256
      %4065 = vsyncadd [#allocation4], %s4064
      %s4066 = sshll.u32 [#allocation14], 4
      %s4067 = int_to_ptr.vmem [resolvable:$true] %s4066
      %4072 = dma.vmem_to_hbm [thread:$0]  %s4067, 256, %s11, [#allocation4], 128, 128, 8
    $region77: #{tpu_custom_call.1} parent=1 // pred_fallthru
      _
    // Predicated region
    $region78: #{tpu_custom_call.1} parent=1 // pred_check
      _
    $region79: #{tpu_custom_call.1} parent=1 // pred_check_branch
      %4074 = sbr.rel (0) target = $region81
    $region80: #{tpu_custom_call.1} parent=1 // pred_region
      %4075 = dma.done [#allocation4], 256
    $region81: #{tpu_custom_call.1} parent=1 // pred_fallthru
      _
    %4076 = vsyncpa [#allocation3], 1
    %4077 = vsyncpa [#allocation6], 1
    %4078 = vsyncpa [#allocation9], 1
    %4079 = vsyncpa [#allocation12], 1
    %4080 = vsyncpa [#allocation4], 1

</llo_original>
